<compile_context>
chip_gen: v6e
topology: v6e:2x2x1
jax: 0.10.0
libtpu: 0.0.40
codegen_flags: <defaults>
</compile_context>

<pallas_src>
import functools

import numpy as np
import jax
import jax.numpy as jnp
from jax import lax
from jax.experimental import pallas as pl
from jax.experimental.pallas import tpu as pltpu


# ----------------------------------------------------------------------------
# Fused kernel
# ----------------------------------------------------------------------------
def _mynet_kernel(x1c_ref, w1_ref, b1_ref, g1_ref, be1_ref, m1_ref,
                  p2_ref, w2_ref, b2_ref, g2_ref, be2_ref, m2_ref,
                  lsel_ref, wcat_ref, m3_ref, lgrp_ref, rl_ref,
                  bf1_ref, wf2_ref, bf2_ref,
                  out_ref, *, N, H, W, eps):
    f32 = jnp.float32
    Hp, Wp = H + 2, W + 2
    R1 = N * Hp * Wp - 2 * Wp - 2            # conv1 output rows (incl. junk rows)
    H2, W2 = H // 2, W // 2
    Hp2, Wp2 = H2 + 2, W2 + 2
    R2 = N * Hp2 * Wp2 - 2 * Wp2 - 2         # conv2 output rows (incl. junk rows)

    # ---- conv1: ONE MXU matmul on the host-built im2col --------------------
    y1 = jnp.dot(x1c_ref[...], w1_ref[...],
                 preferred_element_type=f32) + b1_ref[...]        # (R1, C1)

    # ---- BN1 (training-mode batch stats, single-pass moments) + tanh -------
    inv1 = 1.0 / float(N * H * W)
    mean1 = jnp.dot(m1_ref[...], y1, preferred_element_type=f32) * inv1
    ex2_1 = jnp.dot(m1_ref[...], y1 * y1, preferred_element_type=f32) * inv1
    var1 = jnp.maximum(ex2_1 - mean1 * mean1, 0.0)   # clamp: guards rsqrt
    scale1 = lax.rsqrt(var1 + eps) * g1_ref[...]
    shift1 = be1_ref[...] - mean1 * scale1
    a1 = jnp.tanh(y1 * scale1 + shift1)                           # (R1, C1)

    # ---- pool1 (2x2/2): shifted maxes + 0/1 selection/re-pad matmul --------
    pm = jnp.maximum(a1[0:R1 - 1, :], a1[1:R1, :])
    pm = jnp.maximum(pm[0:R1 - 1 - Wp, :], pm[Wp:R1 - 1, :])      # (R1-1-Wp, C1)
    x2p = jnp.dot(p2_ref[...].astype(f32), pm,
                  preferred_element_type=f32)                     # (N*Hp2*Wp2, C1)

    # ---- conv2: 9 accumulating MXU matmuls (K = C1 each) -------------------
    y2 = None
    for dh in range(3):
        for dw in range(3):
            off = dh * Wp2 + dw
            t = jnp.dot(x2p[off:off + R2, :], w2_ref[dh * 3 + dw],
                        preferred_element_type=f32)
            y2 = t if y2 is None else y2 + t
    y2 = y2 + b2_ref[...]                                         # (R2, C2)

    # ---- BN2 + tanh ---------------------------------------------------------
    inv2 = 1.0 / float(N * H2 * W2)
    mean2 = jnp.dot(m2_ref[...], y2, preferred_element_type=f32) * inv2
    ex2_2 = jnp.dot(m2_ref[...], y2 * y2, preferred_element_type=f32) * inv2
    var2 = jnp.maximum(ex2_2 - mean2 * mean2, 0.0)
    scale2 = lax.rsqrt(var2 + eps) * g2_ref[...]
    shift2 = be2_ref[...] - mean2 * scale2
    a2 = jnp.tanh(y2 * scale2 + shift2)                           # (R2, C2)

    # ---- pool2 --------------------------------------------------------------
    qm = jnp.maximum(a2[0:R2 - 1, :], a2[1:R2, :])
    qm = jnp.maximum(qm[0:R2 - 1 - Wp2, :], qm[Wp2:R2 - 1, :])    # (Rqm, C2)

    # ---- fc1 collapsed into 4 matmuls + mask (NCHW flatten in wcat) --------
    #   sel[(s,n), c]           = pooled(n, c, s)
    #   a2b[(s',n), s*F1+o]     = sum_c sel[(s',n), c] * fc1_w[o, c*S+s]
    #   m3 keeps only s' == s; lgrp sums rows of batch n; rl folds lane groups.
    sel = jnp.dot(lsel_ref[...], qm, preferred_element_type=f32)   # (N*S, C2)
    a2b = jnp.dot(sel, wcat_ref[...], preferred_element_type=f32)  # (N*S, S*F1)
    a2b = a2b * m3_ref[...]
    bsum = jnp.dot(lgrp_ref[...], a2b, preferred_element_type=f32)  # (N, S*F1)
    hpre = jnp.dot(bsum, rl_ref[...], preferred_element_type=f32)   # (N, F1)
    h = jnp.tanh(hpre + bf1_ref[...])
    out = jnp.dot(h, wf2_ref[...], preferred_element_type=f32) + bf2_ref[...]
    out_ref[...] = out.astype(out_ref.dtype)


# ----------------------------------------------------------------------------
# Constant index/selection tables (built once at setup, pure weight plumbing)
# ----------------------------------------------------------------------------
def _build_tables(N, H, W, F1):
    Hp, Wp = H + 2, W + 2
    R1 = N * Hp * Wp - 2 * Wp - 2
    H2, W2 = H // 2, W // 2
    Hp2, Wp2 = H2 + 2, W2 + 2
    R2 = N * Hp2 * Wp2 - 2 * Wp2 - 2
    H4, W4 = H2 // 2, W2 // 2
    S = H4 * W4
    Rqm = R2 - 1 - Wp2

    def valid_mask(n_rows, hp, wp, h, w):
        m = np.zeros((1, n_rows), np.float32)
        for r in range(n_rows):
            rr = r % (hp * wp)
            if (rr // wp) < h and (rr % wp) < w:
                m[0, r] = 1.0
        return m

    mask1 = valid_mask(R1, Hp, Wp, H, W)      # conv1 rows that are real pixels
    mask2 = valid_mask(R2, Hp2, Wp2, H2, W2)  # conv2 rows that are real pixels

    # pool1 output pixel (n, ho, wo) lives at shifted-max row
    # n*Hp*Wp + 2*ho*Wp + 2*wo; route it to padded conv2 row
    # n*Hp2*Wp2 + (ho+1)*Wp2 + (wo+1).  Stored bf16 (exact for 0/1).
    p2 = np.zeros((N * Hp2 * Wp2, R1 - 1 - Wp), np.float32)
    for n in range(N):
        for ho in range(H2):
            for wo in range(W2):
                p2[n * Hp2 * Wp2 + (ho + 1) * Wp2 + (wo + 1),
                   n * Hp * Wp + 2 * ho * Wp + 2 * wo] = 1.0

    # pool2 output pixel (n, ho, wo) lives at stage-2 shifted-max row
    # n*Hp2*Wp2 + 2*ho*Wp2 + 2*wo.  Row order of the selector is (s, n).
    lsel = np.zeros((N * S, Rqm), np.float32)
    for ho in range(H4):
        for wo in range(W4):
            s = ho * W4 + wo
            for n in range(N):
                lsel[s * N + n, n * Hp2 * Wp2 + 2 * ho * Wp2 + 2 * wo] = 1.0

    # m3[(s',n), s*F1+o] = (s' == s)
    m3 = np.zeros((N * S, S * F1), np.float32)
    for r in range(N * S):
        s = r // N
        m3[r, s * F1:(s + 1) * F1] = 1.0

    # lgrp[n, (s,n')] = (n' == n)
    lgrp = np.zeros((N, N * S), np.float32)
    for n in range(N):
        lgrp[n, n::N] = 1.0

    # rl[s*F1+o, o] = 1  (sum over lane groups)
    rl = np.zeros((S * F1, F1), np.float32)
    for s in range(S):
        for o in range(F1):
            rl[s * F1 + o, o] = 1.0

    return mask1, mask2, p2, lsel, m3, lgrp, rl


# ----------------------------------------------------------------------------
# Parameters (PyTorch layout) and conversion to kernel-ready tensors
# ----------------------------------------------------------------------------
def init_params(height, width, n_chans1, key):
    c2 = n_chans1 // 2
    fc_in = (height // 4) * (width // 4) * c2
    ks = jax.random.split(key, 8)
    s = 0.1
    return {
        "conv1_w": s * jax.random.normal(ks[0], (n_chans1, 1, 3, 3), jnp.float32),
        "conv1_b": s * jax.random.normal(ks[1], (n_chans1,), jnp.float32),
        "bn1_g": jnp.ones((n_chans1,), jnp.float32),
        "bn1_b": jnp.zeros((n_chans1,), jnp.float32),
        "conv2_w": s * jax.random.normal(ks[2], (c2, n_chans1, 3, 3), jnp.float32),
        "conv2_b": s * jax.random.normal(ks[3], (c2,), jnp.float32),
        "bn2_g": jnp.ones((c2,), jnp.float32),
        "bn2_b": jnp.zeros((c2,), jnp.float32),
        "fc1_w": s * jax.random.normal(ks[4], (32, fc_in), jnp.float32),  # (out, in)
        "fc1_b": s * jax.random.normal(ks[5], (32,), jnp.float32),
        "fc2_w": s * jax.random.normal(ks[6], (10, 32), jnp.float32),
        "fc2_b": s * jax.random.normal(ks[7], (10,), jnp.float32),
    }


def prepare_kernel_inputs(params, N, H, W, C1, C2):
    H2, W2 = H // 2, W // 2
    H4, W4 = H2 // 2, W2 // 2
    S = H4 * W4
    F1 = int(params["fc1_w"].shape[0])                           # 32
    mask1, mask2, p2, lsel, m3, lgrp, rl = _build_tables(N, H, W, F1)

    # conv1 taps: (kh*kw, Cout) from torch (Cout, 1, 3, 3)
    w1 = np.transpose(np.asarray(params["conv1_w"]), (2, 3, 1, 0)).reshape(9, C1)
    # conv2 taps: (kh*kw, Cin, Cout) from torch (Cout, Cin, 3, 3)
    w2 = np.transpose(np.asarray(params["conv2_w"]), (2, 3, 1, 0)).reshape(9, C1, C2)

    # fc1: torch flattens NCHW -> feature f = c*S + s (s = ho*W4 + wo).
    # wcat[c, s*F1 + o] = fc1_w[o, c*S + s]
    fc1_w = np.asarray(params["fc1_w"])                          # (F1, C2*S)
    wcat = np.zeros((C2, S * F1), np.float32)
    for c in range(C2):
        for s in range(S):
            wcat[c, s * F1:(s + 1) * F1] = fc1_w[:, c * S + s]
    wf2 = np.asarray(params["fc2_w"]).T                          # (F1, 10)

    to = lambda a: jnp.asarray(a, jnp.float32)
    return dict(
        w1=to(w1),
        b1=to(np.asarray(params["conv1_b"]).reshape(1, C1)),
        g1=to(np.asarray(params["bn1_g"]).reshape(1, C1)),
        be1=to(np.asarray(params["bn1_b"]).reshape(1, C1)),
        m1=to(mask1),
        p2=jnp.asarray(p2, jnp.bfloat16),     # exact 0/1 in bf16, half the DMA
        w2=to(w2),
        b2=to(np.asarray(params["conv2_b"]).reshape(1, C2)),
        g2=to(np.asarray(params["bn2_g"]).reshape(1, C2)),
        be2=to(np.asarray(params["bn2_b"]).reshape(1, C2)),
        m2=to(mask2),
        lsel=to(lsel),
        wcat=to(wcat),
        m3=to(m3),
        lgrp=to(lgrp),
        rl=to(rl),
        bf1=to(np.asarray(params["fc1_b"]).reshape(1, -1)),
        wf2=to(wf2),
        bf2=to(np.asarray(params["fc2_b"]).reshape(1, -1)),
    )


# ----------------------------------------------------------------------------
# Forward pass (single pallas_call)
# ----------------------------------------------------------------------------
def my_net_batchnorm_forward(x_nchw, kin, *, n_chans1, eps=1e-5):
    N, Cin, H, W = x_nchw.shape
    assert Cin == 1 and H % 4 == 0 and W % 4 == 0
    Hp, Wp = H + 2, W + 2
    R1 = N * Hp * Wp - 2 * Wp - 2

    # zero-pad once, flatten rows=(n, y, x), and build the (R1, 9) conv1 im2col
    # in the wrapper (tiny) so conv1 is a single MXU matmul inside the kernel.
    xp = jnp.pad(x_nchw[:, 0], ((0, 0), (1, 1), (1, 1)))
    xf = xp.reshape(N * Hp * Wp)
    x1c = jnp.stack([xf[dh * Wp + dw: dh * Wp + dw + R1]
                     for dh in range(3) for dw in range(3)], axis=1)   # (R1, 9)

    def full(shape):
        nd = len(shape)
        return pl.BlockSpec(shape, lambda i: (0,) * nd)

    args = (x1c, kin["w1"], kin["b1"], kin["g1"], kin["be1"], kin["m1"],
            kin["p2"], kin["w2"], kin["b2"], kin["g2"], kin["be2"], kin["m2"],
            kin["lsel"], kin["wcat"], kin["m3"], kin["lgrp"], kin["rl"],
            kin["bf1"], kin["wf2"], kin["bf2"])

    return pl.pallas_call(
        functools.partial(_mynet_kernel, N=N, H=H, W=W, eps=eps),
        out_shape=jax.ShapeDtypeStruct((N, 10), jnp.float32),
        grid=(1,),
        in_specs=[full(a.shape) for a in args],
        out_specs=full((N, 10)),
        compiler_params=pltpu.CompilerParams(
            dimension_semantics=("arbitrary",)),
    )(*args)


if __name__ == "__main__":
    height, width, n_chans1, batch = 16, 16, 32, 2

    key = jax.random.PRNGKey(0)
    k_x, k_p = jax.random.split(key)
    x = jax.random.normal(k_x, (batch, 1, height, width), jnp.float32)

    params = init_params(height, width, n_chans1, k_p)
    kin = prepare_kernel_inputs(params, batch, height, width,
                                n_chans1, n_chans1 // 2)

    out = my_net_batchnorm_forward(x, kin, n_chans1=n_chans1)
    out = jax.block_until_ready(out)
    assert out.shape == (batch, 10)
    assert out.dtype == jnp.float32
    print("KERNEL_OK")
</pallas_src>

<mosaic_0001>
module attributes {stable_mosaic.version = 11 : i64} {
  func.func @_mynet_kernel(%arg0: i32, %arg1: memref<610x9xf32, #tpu.memory_space<vmem>>, %arg2: memref<9x32xf32, #tpu.memory_space<vmem>>, %arg3: memref<1x32xf32, #tpu.memory_space<vmem>>, %arg4: memref<1x32xf32, #tpu.memory_space<vmem>>, %arg5: memref<1x32xf32, #tpu.memory_space<vmem>>, %arg6: memref<1x610xf32, #tpu.memory_space<vmem>>, %arg7: memref<200x591xbf16, #tpu.memory_space<vmem>>, %arg8: memref<9x32x16xf32, #tpu.memory_space<vmem>>, %arg9: memref<1x16xf32, #tpu.memory_space<vmem>>, %arg10: memref<1x16xf32, #tpu.memory_space<vmem>>, %arg11: memref<1x16xf32, #tpu.memory_space<vmem>>, %arg12: memref<1x178xf32, #tpu.memory_space<vmem>>, %arg13: memref<32x167xf32, #tpu.memory_space<vmem>>, %arg14: memref<16x512xf32, #tpu.memory_space<vmem>>, %arg15: memref<32x512xf32, #tpu.memory_space<vmem>>, %arg16: memref<2x32xf32, #tpu.memory_space<vmem>>, %arg17: memref<512x32xf32, #tpu.memory_space<vmem>>, %arg18: memref<1x32xf32, #tpu.memory_space<vmem>>, %arg19: memref<32x10xf32, #tpu.memory_space<vmem>>, %arg20: memref<1x10xf32, #tpu.memory_space<vmem>>, %arg21: memref<2x10xf32, #tpu.memory_space<vmem>>) attributes {dimension_semantics = [#tpu.dimension_semantics<arbitrary>], iteration_bounds = array<i64: 1>, scalar_prefetch = 0 : i64, scratch_operands = 0 : i64, tpu.core_type = #tpu.core_type<tc>, window_params = [{pipeline_mode = #tpu.pipeline_mode<synchronous>, transform_indices = @transform_0, window_bounds = array<i64: 610, 9>}, {pipeline_mode = #tpu.pipeline_mode<synchronous>, transform_indices = @transform_1, window_bounds = array<i64: 9, 32>}, {pipeline_mode = #tpu.pipeline_mode<synchronous>, transform_indices = @transform_2, window_bounds = array<i64: 1, 32>}, {pipeline_mode = #tpu.pipeline_mode<synchronous>, transform_indices = @transform_3, window_bounds = array<i64: 1, 32>}, {pipeline_mode = #tpu.pipeline_mode<synchronous>, transform_indices = @transform_4, window_bounds = array<i64: 1, 32>}, {pipeline_mode = #tpu.pipeline_mode<synchronous>, transform_indices = @transform_5, window_bounds = array<i64: 1, 610>}, {pipeline_mode = #tpu.pipeline_mode<synchronous>, transform_indices = @transform_6, window_bounds = array<i64: 200, 591>}, {pipeline_mode = #tpu.pipeline_mode<synchronous>, transform_indices = @transform_7, window_bounds = array<i64: 9, 32, 16>}, {pipeline_mode = #tpu.pipeline_mode<synchronous>, transform_indices = @transform_8, window_bounds = array<i64: 1, 16>}, {pipeline_mode = #tpu.pipeline_mode<synchronous>, transform_indices = @transform_9, window_bounds = array<i64: 1, 16>}, {pipeline_mode = #tpu.pipeline_mode<synchronous>, transform_indices = @transform_10, window_bounds = array<i64: 1, 16>}, {pipeline_mode = #tpu.pipeline_mode<synchronous>, transform_indices = @transform_11, window_bounds = array<i64: 1, 178>}, {pipeline_mode = #tpu.pipeline_mode<synchronous>, transform_indices = @transform_12, window_bounds = array<i64: 32, 167>}, {pipeline_mode = #tpu.pipeline_mode<synchronous>, transform_indices = @transform_13, window_bounds = array<i64: 16, 512>}, {pipeline_mode = #tpu.pipeline_mode<synchronous>, transform_indices = @transform_14, window_bounds = array<i64: 32, 512>}, {pipeline_mode = #tpu.pipeline_mode<synchronous>, transform_indices = @transform_15, window_bounds = array<i64: 2, 32>}, {pipeline_mode = #tpu.pipeline_mode<synchronous>, transform_indices = @transform_16, window_bounds = array<i64: 512, 32>}, {pipeline_mode = #tpu.pipeline_mode<synchronous>, transform_indices = @transform_17, window_bounds = array<i64: 1, 32>}, {pipeline_mode = #tpu.pipeline_mode<synchronous>, transform_indices = @transform_18, window_bounds = array<i64: 32, 10>}, {pipeline_mode = #tpu.pipeline_mode<synchronous>, transform_indices = @transform_19, window_bounds = array<i64: 1, 10>}, {pipeline_mode = #tpu.pipeline_mode<synchronous>, transform_indices = @transform_20, window_bounds = array<i64: 2, 10>}]} {
    %c0 = arith.constant 0 : index
    %c0_0 = arith.constant 0 : index
    %0 = vector.load %arg1[%c0, %c0_0] : memref<610x9xf32, #tpu.memory_space<vmem>>, vector<610x9xf32>
    %c0_1 = arith.constant 0 : index
    %c0_2 = arith.constant 0 : index
    %1 = vector.load %arg2[%c0_1, %c0_2] : memref<9x32xf32, #tpu.memory_space<vmem>>, vector<9x32xf32>
    %cst = arith.constant dense<0.000000e+00> : vector<610x32xf32>
    %2 = tpu.matmul %0, %1, %cst {dimension_numbers = #tpu.dot_dimension_numbers<[1], [0], [0], [1], [0, 0, 1, 1], [], []>} : vector<610x9xf32>, vector<9x32xf32>, vector<610x32xf32> -> vector<610x32xf32>
    %c0_3 = arith.constant 0 : index
    %c0_4 = arith.constant 0 : index
    %3 = vector.load %arg3[%c0_3, %c0_4] : memref<1x32xf32, #tpu.memory_space<vmem>>, vector<1x32xf32>
    %4 = vector.broadcast %3 : vector<1x32xf32> to vector<610x32xf32>
    %5 = arith.addf %2, %4 : vector<610x32xf32>
    %c0_5 = arith.constant 0 : index
    %c0_6 = arith.constant 0 : index
    %6 = vector.load %arg6[%c0_5, %c0_6] : memref<1x610xf32, #tpu.memory_space<vmem>>, vector<1x610xf32>
    %cst_7 = arith.constant dense<0.000000e+00> : vector<1x32xf32>
    %7 = tpu.matmul %6, %5, %cst_7 {dimension_numbers = #tpu.dot_dimension_numbers<[1], [0], [0], [1], [0, 0, 1, 1], [], []>} : vector<1x610xf32>, vector<610x32xf32>, vector<1x32xf32> -> vector<1x32xf32>
    %cst_8 = arith.constant 0.001953125 : f32
    %8 = vector.broadcast %cst_8 : f32 to vector<1x32xf32>
    %9 = arith.mulf %7, %8 : vector<1x32xf32>
    %c0_9 = arith.constant 0 : index
    %c0_10 = arith.constant 0 : index
    %10 = vector.load %arg6[%c0_9, %c0_10] : memref<1x610xf32, #tpu.memory_space<vmem>>, vector<1x610xf32>
    %11 = arith.mulf %5, %5 : vector<610x32xf32>
    %cst_11 = arith.constant dense<0.000000e+00> : vector<1x32xf32>
    %12 = tpu.matmul %10, %11, %cst_11 {dimension_numbers = #tpu.dot_dimension_numbers<[1], [0], [0], [1], [0, 0, 1, 1], [], []>} : vector<1x610xf32>, vector<610x32xf32>, vector<1x32xf32> -> vector<1x32xf32>
    %cst_12 = arith.constant 0.001953125 : f32
    %13 = vector.broadcast %cst_12 : f32 to vector<1x32xf32>
    %14 = arith.mulf %12, %13 : vector<1x32xf32>
    %15 = arith.mulf %9, %9 : vector<1x32xf32>
    %16 = arith.subf %14, %15 : vector<1x32xf32>
    %cst_13 = arith.constant 0.000000e+00 : f32
    %17 = vector.broadcast %cst_13 : f32 to vector<1x32xf32>
    %18 = arith.maximumf %16, %17 : vector<1x32xf32>
    %cst_14 = arith.constant 9.99999974E-6 : f32
    %19 = vector.broadcast %cst_14 : f32 to vector<1x32xf32>
    %20 = arith.addf %18, %19 : vector<1x32xf32>
    %21 = math.rsqrt %20 : vector<1x32xf32>
    %c0_15 = arith.constant 0 : index
    %c0_16 = arith.constant 0 : index
    %22 = vector.load %arg4[%c0_15, %c0_16] : memref<1x32xf32, #tpu.memory_space<vmem>>, vector<1x32xf32>
    %23 = arith.mulf %21, %22 : vector<1x32xf32>
    %c0_17 = arith.constant 0 : index
    %c0_18 = arith.constant 0 : index
    %24 = vector.load %arg5[%c0_17, %c0_18] : memref<1x32xf32, #tpu.memory_space<vmem>>, vector<1x32xf32>
    %25 = arith.mulf %9, %23 : vector<1x32xf32>
    %26 = arith.subf %24, %25 : vector<1x32xf32>
    %27 = vector.broadcast %23 : vector<1x32xf32> to vector<610x32xf32>
    %28 = arith.mulf %5, %27 : vector<610x32xf32>
    %29 = vector.broadcast %26 : vector<1x32xf32> to vector<610x32xf32>
    %30 = arith.addf %28, %29 : vector<610x32xf32>
    %31 = math.tanh %30 : vector<610x32xf32>
    %32 = vector.extract_strided_slice %31 {offsets = [0, 0], sizes = [609, 32], strides = [1, 1]} : vector<610x32xf32> to vector<609x32xf32>
    %33 = vector.extract_strided_slice %31 {offsets = [1, 0], sizes = [609, 32], strides = [1, 1]} : vector<610x32xf32> to vector<609x32xf32>
    %34 = arith.maximumf %32, %33 : vector<609x32xf32>
    %35 = vector.extract_strided_slice %34 {offsets = [0, 0], sizes = [591, 32], strides = [1, 1]} : vector<609x32xf32> to vector<591x32xf32>
    %36 = vector.extract_strided_slice %34 {offsets = [18, 0], sizes = [591, 32], strides = [1, 1]} : vector<609x32xf32> to vector<591x32xf32>
    %37 = arith.maximumf %35, %36 : vector<591x32xf32>
    %c0_19 = arith.constant 0 : index
    %c0_20 = arith.constant 0 : index
    %38 = vector.load %arg7[%c0_19, %c0_20] : memref<200x591xbf16, #tpu.memory_space<vmem>>, vector<200x591xbf16>
    %39 = arith.extf %38 : vector<200x591xbf16> to vector<200x591xf32>
    %cst_21 = arith.constant dense<0.000000e+00> : vector<200x32xf32>
    %40 = tpu.matmul %39, %37, %cst_21 {dimension_numbers = #tpu.dot_dimension_numbers<[1], [0], [0], [1], [0, 0, 1, 1], [], []>} : vector<200x591xf32>, vector<591x32xf32>, vector<200x32xf32> -> vector<200x32xf32>
    %41 = vector.extract_strided_slice %40 {offsets = [0, 0], sizes = [178, 32], strides = [1, 1]} : vector<200x32xf32> to vector<178x32xf32>
    %c0_22 = arith.constant 0 : index
    %c0_23 = arith.constant 0 : index
    %c0_24 = arith.constant 0 : index
    %42 = vector.load %arg8[%c0_22, %c0_23, %c0_24] : memref<9x32x16xf32, #tpu.memory_space<vmem>>, vector<1x32x16xf32>
    %43 = vector.shape_cast %42 : vector<1x32x16xf32> to vector<32x16xf32>
    %cst_25 = arith.constant dense<0.000000e+00> : vector<178x16xf32>
    %44 = tpu.matmul %41, %43, %cst_25 {dimension_numbers = #tpu.dot_dimension_numbers<[1], [0], [0], [1], [0, 0, 1, 1], [], []>} : vector<178x32xf32>, vector<32x16xf32>, vector<178x16xf32> -> vector<178x16xf32>
    %45 = vector.extract_strided_slice %40 {offsets = [1, 0], sizes = [178, 32], strides = [1, 1]} : vector<200x32xf32> to vector<178x32xf32>
    %c1 = arith.constant 1 : index
    %c0_26 = arith.constant 0 : index
    %c0_27 = arith.constant 0 : index
    %46 = vector.load %arg8[%c1, %c0_26, %c0_27] : memref<9x32x16xf32, #tpu.memory_space<vmem>>, vector<1x32x16xf32>
    %47 = vector.shape_cast %46 : vector<1x32x16xf32> to vector<32x16xf32>
    %cst_28 = arith.constant dense<0.000000e+00> : vector<178x16xf32>
    %48 = tpu.matmul %45, %47, %cst_28 {dimension_numbers = #tpu.dot_dimension_numbers<[1], [0], [0], [1], [0, 0, 1, 1], [], []>} : vector<178x32xf32>, vector<32x16xf32>, vector<178x16xf32> -> vector<178x16xf32>
    %49 = arith.addf %44, %48 : vector<178x16xf32>
    %50 = vector.extract_strided_slice %40 {offsets = [2, 0], sizes = [178, 32], strides = [1, 1]} : vector<200x32xf32> to vector<178x32xf32>
    %c2 = arith.constant 2 : index
    %c0_29 = arith.constant 0 : index
    %c0_30 = arith.constant 0 : index
    %51 = vector.load %arg8[%c2, %c0_29, %c0_30] : memref<9x32x16xf32, #tpu.memory_space<vmem>>, vector<1x32x16xf32>
    %52 = vector.shape_cast %51 : vector<1x32x16xf32> to vector<32x16xf32>
    %cst_31 = arith.constant dense<0.000000e+00> : vector<178x16xf32>
    %53 = tpu.matmul %50, %52, %cst_31 {dimension_numbers = #tpu.dot_dimension_numbers<[1], [0], [0], [1], [0, 0, 1, 1], [], []>} : vector<178x32xf32>, vector<32x16xf32>, vector<178x16xf32> -> vector<178x16xf32>
    %54 = arith.addf %49, %53 : vector<178x16xf32>
    %55 = vector.extract_strided_slice %40 {offsets = [10, 0], sizes = [178, 32], strides = [1, 1]} : vector<200x32xf32> to vector<178x32xf32>
    %c3 = arith.constant 3 : index
    %c0_32 = arith.constant 0 : index
    %c0_33 = arith.constant 0 : index
    %56 = vector.load %arg8[%c3, %c0_32, %c0_33] : memref<9x32x16xf32, #tpu.memory_space<vmem>>, vector<1x32x16xf32>
    %57 = vector.shape_cast %56 : vector<1x32x16xf32> to vector<32x16xf32>
    %cst_34 = arith.constant dense<0.000000e+00> : vector<178x16xf32>
    %58 = tpu.matmul %55, %57, %cst_34 {dimension_numbers = #tpu.dot_dimension_numbers<[1], [0], [0], [1], [0, 0, 1, 1], [], []>} : vector<178x32xf32>, vector<32x16xf32>, vector<178x16xf32> -> vector<178x16xf32>
    %59 = arith.addf %54, %58 : vector<178x16xf32>
    %60 = vector.extract_strided_slice %40 {offsets = [11, 0], sizes = [178, 32], strides = [1, 1]} : vector<200x32xf32> to vector<178x32xf32>
    %c4 = arith.constant 4 : index
    %c0_35 = arith.constant 0 : index
    %c0_36 = arith.constant 0 : index
    %61 = vector.load %arg8[%c4, %c0_35, %c0_36] : memref<9x32x16xf32, #tpu.memory_space<vmem>>, vector<1x32x16xf32>
    %62 = vector.shape_cast %61 : vector<1x32x16xf32> to vector<32x16xf32>
    %cst_37 = arith.constant dense<0.000000e+00> : vector<178x16xf32>
    %63 = tpu.matmul %60, %62, %cst_37 {dimension_numbers = #tpu.dot_dimension_numbers<[1], [0], [0], [1], [0, 0, 1, 1], [], []>} : vector<178x32xf32>, vector<32x16xf32>, vector<178x16xf32> -> vector<178x16xf32>
    %64 = arith.addf %59, %63 : vector<178x16xf32>
    %65 = vector.extract_strided_slice %40 {offsets = [12, 0], sizes = [178, 32], strides = [1, 1]} : vector<200x32xf32> to vector<178x32xf32>
    %c5 = arith.constant 5 : index
    %c0_38 = arith.constant 0 : index
    %c0_39 = arith.constant 0 : index
    %66 = vector.load %arg8[%c5, %c0_38, %c0_39] : memref<9x32x16xf32, #tpu.memory_space<vmem>>, vector<1x32x16xf32>
    %67 = vector.shape_cast %66 : vector<1x32x16xf32> to vector<32x16xf32>
    %cst_40 = arith.constant dense<0.000000e+00> : vector<178x16xf32>
    %68 = tpu.matmul %65, %67, %cst_40 {dimension_numbers = #tpu.dot_dimension_numbers<[1], [0], [0], [1], [0, 0, 1, 1], [], []>} : vector<178x32xf32>, vector<32x16xf32>, vector<178x16xf32> -> vector<178x16xf32>
    %69 = arith.addf %64, %68 : vector<178x16xf32>
    %70 = vector.extract_strided_slice %40 {offsets = [20, 0], sizes = [178, 32], strides = [1, 1]} : vector<200x32xf32> to vector<178x32xf32>
    %c6 = arith.constant 6 : index
    %c0_41 = arith.constant 0 : index
    %c0_42 = arith.constant 0 : index
    %71 = vector.load %arg8[%c6, %c0_41, %c0_42] : memref<9x32x16xf32, #tpu.memory_space<vmem>>, vector<1x32x16xf32>
    %72 = vector.shape_cast %71 : vector<1x32x16xf32> to vector<32x16xf32>
    %cst_43 = arith.constant dense<0.000000e+00> : vector<178x16xf32>
    %73 = tpu.matmul %70, %72, %cst_43 {dimension_numbers = #tpu.dot_dimension_numbers<[1], [0], [0], [1], [0, 0, 1, 1], [], []>} : vector<178x32xf32>, vector<32x16xf32>, vector<178x16xf32> -> vector<178x16xf32>
    %74 = arith.addf %69, %73 : vector<178x16xf32>
    %75 = vector.extract_strided_slice %40 {offsets = [21, 0], sizes = [178, 32], strides = [1, 1]} : vector<200x32xf32> to vector<178x32xf32>
    %c7 = arith.constant 7 : index
    %c0_44 = arith.constant 0 : index
    %c0_45 = arith.constant 0 : index
    %76 = vector.load %arg8[%c7, %c0_44, %c0_45] : memref<9x32x16xf32, #tpu.memory_space<vmem>>, vector<1x32x16xf32>
    %77 = vector.shape_cast %76 : vector<1x32x16xf32> to vector<32x16xf32>
    %cst_46 = arith.constant dense<0.000000e+00> : vector<178x16xf32>
    %78 = tpu.matmul %75, %77, %cst_46 {dimension_numbers = #tpu.dot_dimension_numbers<[1], [0], [0], [1], [0, 0, 1, 1], [], []>} : vector<178x32xf32>, vector<32x16xf32>, vector<178x16xf32> -> vector<178x16xf32>
    %79 = arith.addf %74, %78 : vector<178x16xf32>
    %80 = vector.extract_strided_slice %40 {offsets = [22, 0], sizes = [178, 32], strides = [1, 1]} : vector<200x32xf32> to vector<178x32xf32>
    %c8 = arith.constant 8 : index
    %c0_47 = arith.constant 0 : index
    %c0_48 = arith.constant 0 : index
    %81 = vector.load %arg8[%c8, %c0_47, %c0_48] : memref<9x32x16xf32, #tpu.memory_space<vmem>>, vector<1x32x16xf32>
    %82 = vector.shape_cast %81 : vector<1x32x16xf32> to vector<32x16xf32>
    %cst_49 = arith.constant dense<0.000000e+00> : vector<178x16xf32>
    %83 = tpu.matmul %80, %82, %cst_49 {dimension_numbers = #tpu.dot_dimension_numbers<[1], [0], [0], [1], [0, 0, 1, 1], [], []>} : vector<178x32xf32>, vector<32x16xf32>, vector<178x16xf32> -> vector<178x16xf32>
    %84 = arith.addf %79, %83 : vector<178x16xf32>
    %c0_50 = arith.constant 0 : index
    %c0_51 = arith.constant 0 : index
    %85 = vector.load %arg9[%c0_50, %c0_51] : memref<1x16xf32, #tpu.memory_space<vmem>>, vector<1x16xf32>
    %86 = vector.broadcast %85 : vector<1x16xf32> to vector<178x16xf32>
    %87 = arith.addf %84, %86 : vector<178x16xf32>
    %c0_52 = arith.constant 0 : index
    %c0_53 = arith.constant 0 : index
    %88 = vector.load %arg12[%c0_52, %c0_53] : memref<1x178xf32, #tpu.memory_space<vmem>>, vector<1x178xf32>
    %cst_54 = arith.constant dense<0.000000e+00> : vector<1x16xf32>
    %89 = tpu.matmul %88, %87, %cst_54 {dimension_numbers = #tpu.dot_dimension_numbers<[1], [0], [0], [1], [0, 0, 1, 1], [], []>} : vector<1x178xf32>, vector<178x16xf32>, vector<1x16xf32> -> vector<1x16xf32>
    %cst_55 = arith.constant 7.812500e-03 : f32
    %90 = vector.broadcast %cst_55 : f32 to vector<1x16xf32>
    %91 = arith.mulf %89, %90 : vector<1x16xf32>
    %c0_56 = arith.constant 0 : index
    %c0_57 = arith.constant 0 : index
    %92 = vector.load %arg12[%c0_56, %c0_57] : memref<1x178xf32, #tpu.memory_space<vmem>>, vector<1x178xf32>
    %93 = arith.mulf %87, %87 : vector<178x16xf32>
    %cst_58 = arith.constant dense<0.000000e+00> : vector<1x16xf32>
    %94 = tpu.matmul %92, %93, %cst_58 {dimension_numbers = #tpu.dot_dimension_numbers<[1], [0], [0], [1], [0, 0, 1, 1], [], []>} : vector<1x178xf32>, vector<178x16xf32>, vector<1x16xf32> -> vector<1x16xf32>
    %cst_59 = arith.constant 7.812500e-03 : f32
    %95 = vector.broadcast %cst_59 : f32 to vector<1x16xf32>
    %96 = arith.mulf %94, %95 : vector<1x16xf32>
    %97 = arith.mulf %91, %91 : vector<1x16xf32>
    %98 = arith.subf %96, %97 : vector<1x16xf32>
    %cst_60 = arith.constant 0.000000e+00 : f32
    %99 = vector.broadcast %cst_60 : f32 to vector<1x16xf32>
    %100 = arith.maximumf %98, %99 : vector<1x16xf32>
    %cst_61 = arith.constant 9.99999974E-6 : f32
    %101 = vector.broadcast %cst_61 : f32 to vector<1x16xf32>
    %102 = arith.addf %100, %101 : vector<1x16xf32>
    %103 = math.rsqrt %102 : vector<1x16xf32>
    %c0_62 = arith.constant 0 : index
    %c0_63 = arith.constant 0 : index
    %104 = vector.load %arg10[%c0_62, %c0_63] : memref<1x16xf32, #tpu.memory_space<vmem>>, vector<1x16xf32>
    %105 = arith.mulf %103, %104 : vector<1x16xf32>
    %c0_64 = arith.constant 0 : index
    %c0_65 = arith.constant 0 : index
    %106 = vector.load %arg11[%c0_64, %c0_65] : memref<1x16xf32, #tpu.memory_space<vmem>>, vector<1x16xf32>
    %107 = arith.mulf %91, %105 : vector<1x16xf32>
    %108 = arith.subf %106, %107 : vector<1x16xf32>
    %109 = vector.broadcast %105 : vector<1x16xf32> to vector<178x16xf32>
    %110 = arith.mulf %87, %109 : vector<178x16xf32>
    %111 = vector.broadcast %108 : vector<1x16xf32> to vector<178x16xf32>
    %112 = arith.addf %110, %111 : vector<178x16xf32>
    %113 = math.tanh %112 : vector<178x16xf32>
    %114 = vector.extract_strided_slice %113 {offsets = [0, 0], sizes = [177, 16], strides = [1, 1]} : vector<178x16xf32> to vector<177x16xf32>
    %115 = vector.extract_strided_slice %113 {offsets = [1, 0], sizes = [177, 16], strides = [1, 1]} : vector<178x16xf32> to vector<177x16xf32>
    %116 = arith.maximumf %114, %115 : vector<177x16xf32>
    %117 = vector.extract_strided_slice %116 {offsets = [0, 0], sizes = [167, 16], strides = [1, 1]} : vector<177x16xf32> to vector<167x16xf32>
    %118 = vector.extract_strided_slice %116 {offsets = [10, 0], sizes = [167, 16], strides = [1, 1]} : vector<177x16xf32> to vector<167x16xf32>
    %119 = arith.maximumf %117, %118 : vector<167x16xf32>
    %c0_66 = arith.constant 0 : index
    %c0_67 = arith.constant 0 : index
    %120 = vector.load %arg13[%c0_66, %c0_67] : memref<32x167xf32, #tpu.memory_space<vmem>>, vector<32x167xf32>
    %cst_68 = arith.constant dense<0.000000e+00> : vector<32x16xf32>
    %121 = tpu.matmul %120, %119, %cst_68 {dimension_numbers = #tpu.dot_dimension_numbers<[1], [0], [0], [1], [0, 0, 1, 1], [], []>} : vector<32x167xf32>, vector<167x16xf32>, vector<32x16xf32> -> vector<32x16xf32>
    %c0_69 = arith.constant 0 : index
    %c0_70 = arith.constant 0 : index
    %122 = vector.load %arg14[%c0_69, %c0_70] : memref<16x512xf32, #tpu.memory_space<vmem>>, vector<16x512xf32>
    %cst_71 = arith.constant dense<0.000000e+00> : vector<32x512xf32>
    %123 = tpu.matmul %121, %122, %cst_71 {dimension_numbers = #tpu.dot_dimension_numbers<[1], [0], [0], [1], [0, 0, 1, 1], [], []>} : vector<32x16xf32>, vector<16x512xf32>, vector<32x512xf32> -> vector<32x512xf32>
    %c0_72 = arith.constant 0 : index
    %c0_73 = arith.constant 0 : index
    %124 = vector.load %arg15[%c0_72, %c0_73] : memref<32x512xf32, #tpu.memory_space<vmem>>, vector<32x512xf32>
    %125 = arith.mulf %123, %124 : vector<32x512xf32>
    %c0_74 = arith.constant 0 : index
    %c0_75 = arith.constant 0 : index
    %126 = vector.load %arg16[%c0_74, %c0_75] : memref<2x32xf32, #tpu.memory_space<vmem>>, vector<2x32xf32>
    %cst_76 = arith.constant dense<0.000000e+00> : vector<2x512xf32>
    %127 = tpu.matmul %126, %125, %cst_76 {dimension_numbers = #tpu.dot_dimension_numbers<[1], [0], [0], [1], [0, 0, 1, 1], [], []>} : vector<2x32xf32>, vector<32x512xf32>, vector<2x512xf32> -> vector<2x512xf32>
    %c0_77 = arith.constant 0 : index
    %c0_78 = arith.constant 0 : index
    %128 = vector.load %arg17[%c0_77, %c0_78] : memref<512x32xf32, #tpu.memory_space<vmem>>, vector<512x32xf32>
    %cst_79 = arith.constant dense<0.000000e+00> : vector<2x32xf32>
    %129 = tpu.matmul %127, %128, %cst_79 {dimension_numbers = #tpu.dot_dimension_numbers<[1], [0], [0], [1], [0, 0, 1, 1], [], []>} : vector<2x512xf32>, vector<512x32xf32>, vector<2x32xf32> -> vector<2x32xf32>
    %c0_80 = arith.constant 0 : index
    %c0_81 = arith.constant 0 : index
    %130 = vector.load %arg18[%c0_80, %c0_81] : memref<1x32xf32, #tpu.memory_space<vmem>>, vector<1x32xf32>
    %131 = vector.broadcast %130 : vector<1x32xf32> to vector<2x32xf32>
    %132 = arith.addf %129, %131 : vector<2x32xf32>
    %133 = math.tanh %132 : vector<2x32xf32>
    %c0_82 = arith.constant 0 : index
    %c0_83 = arith.constant 0 : index
    %134 = vector.load %arg19[%c0_82, %c0_83] : memref<32x10xf32, #tpu.memory_space<vmem>>, vector<32x10xf32>
    %cst_84 = arith.constant dense<0.000000e+00> : vector<2x10xf32>
    %135 = tpu.matmul %133, %134, %cst_84 {dimension_numbers = #tpu.dot_dimension_numbers<[1], [0], [0], [1], [0, 0, 1, 1], [], []>} : vector<2x32xf32>, vector<32x10xf32>, vector<2x10xf32> -> vector<2x10xf32>
    %c0_85 = arith.constant 0 : index
    %c0_86 = arith.constant 0 : index
    %136 = vector.load %arg20[%c0_85, %c0_86] : memref<1x10xf32, #tpu.memory_space<vmem>>, vector<1x10xf32>
    %137 = vector.broadcast %136 : vector<1x10xf32> to vector<2x10xf32>
    %138 = arith.addf %135, %137 : vector<2x10xf32>
    %c0_87 = arith.constant 0 : index
    %c0_88 = arith.constant 0 : index
    %139 = vector.load %arg21[%c0_87, %c0_88] : memref<2x10xf32, #tpu.memory_space<vmem>>, vector<2x10xf32>
    tpu.vector_store %arg21[%c0_87, %c0_88], %138 {strides = array<i32>} : memref<2x10xf32, #tpu.memory_space<vmem>>, vector<2x10xf32>,
    return
  }
  func.func @transform_0(%arg0: i32) -> (i32, i32) {
    %c0_i32 = arith.constant 0 : i32
    %c0_i32_0 = arith.constant 0 : i32
    %c0_i32_1 = arith.constant 0 : i32
    return %c0_i32, %c0_i32_0 : i32, i32
  }
  func.func @transform_1(%arg0: i32) -> (i32, i32) {
    %c0_i32 = arith.constant 0 : i32
    %c0_i32_0 = arith.constant 0 : i32
    %c0_i32_1 = arith.constant 0 : i32
    return %c0_i32, %c0_i32_0 : i32, i32
  }
  func.func @transform_2(%arg0: i32) -> (i32, i32) {
    %c0_i32 = arith.constant 0 : i32
    %c0_i32_0 = arith.constant 0 : i32
    %c0_i32_1 = arith.constant 0 : i32
    return %c0_i32, %c0_i32_0 : i32, i32
  }
  func.func @transform_3(%arg0: i32) -> (i32, i32) {
    %c0_i32 = arith.constant 0 : i32
    %c0_i32_0 = arith.constant 0 : i32
    %c0_i32_1 = arith.constant 0 : i32
    return %c0_i32, %c0_i32_0 : i32, i32
  }
  func.func @transform_4(%arg0: i32) -> (i32, i32) {
    %c0_i32 = arith.constant 0 : i32
    %c0_i32_0 = arith.constant 0 : i32
    %c0_i32_1 = arith.constant 0 : i32
    return %c0_i32, %c0_i32_0 : i32, i32
  }
  func.func @transform_5(%arg0: i32) -> (i32, i32) {
    %c0_i32 = arith.constant 0 : i32
    %c0_i32_0 = arith.constant 0 : i32
    %c0_i32_1 = arith.constant 0 : i32
    return %c0_i32, %c0_i32_0 : i32, i32
  }
  func.func @transform_6(%arg0: i32) -> (i32, i32) {
    %c0_i32 = arith.constant 0 : i32
    %c0_i32_0 = arith.constant 0 : i32
    %c0_i32_1 = arith.constant 0 : i32
    return %c0_i32, %c0_i32_0 : i32, i32
  }
  func.func @transform_7(%arg0: i32) -> (i32, i32, i32) {
    %c0_i32 = arith.constant 0 : i32
    %c0_i32_0 = arith.constant 0 : i32
    %c0_i32_1 = arith.constant 0 : i32
    %c0_i32_2 = arith.constant 0 : i32
    return %c0_i32, %c0_i32_0, %c0_i32_1 : i32, i32, i32
  }
  func.func @transform_8(%arg0: i32) -> (i32, i32) {
    %c0_i32 = arith.constant 0 : i32
    %c0_i32_0 = arith.constant 0 : i32
    %c0_i32_1 = arith.constant 0 : i32
    return %c0_i32, %c0_i32_0 : i32, i32
  }
  func.func @transform_9(%arg0: i32) -> (i32, i32) {
    %c0_i32 = arith.constant 0 : i32
    %c0_i32_0 = arith.constant 0 : i32
    %c0_i32_1 = arith.constant 0 : i32
    return %c0_i32, %c0_i32_0 : i32, i32
  }
  func.func @transform_10(%arg0: i32) -> (i32, i32) {
    %c0_i32 = arith.constant 0 : i32
    %c0_i32_0 = arith.constant 0 : i32
    %c0_i32_1 = arith.constant 0 : i32
    return %c0_i32, %c0_i32_0 : i32, i32
  }
  func.func @transform_11(%arg0: i32) -> (i32, i32) {
    %c0_i32 = arith.constant 0 : i32
    %c0_i32_0 = arith.constant 0 : i32
    %c0_i32_1 = arith.constant 0 : i32
    return %c0_i32, %c0_i32_0 : i32, i32
  }
  func.func @transform_12(%arg0: i32) -> (i32, i32) {
    %c0_i32 = arith.constant 0 : i32
    %c0_i32_0 = arith.constant 0 : i32
    %c0_i32_1 = arith.constant 0 : i32
    return %c0_i32, %c0_i32_0 : i32, i32
  }
  func.func @transform_13(%arg0: i32) -> (i32, i32) {
    %c0_i32 = arith.constant 0 : i32
    %c0_i32_0 = arith.constant 0 : i32
    %c0_i32_1 = arith.constant 0 : i32
    return %c0_i32, %c0_i32_0 : i32, i32
  }
  func.func @transform_14(%arg0: i32) -> (i32, i32) {
    %c0_i32 = arith.constant 0 : i32
    %c0_i32_0 = arith.constant 0 : i32
    %c0_i32_1 = arith.constant 0 : i32
    return %c0_i32, %c0_i32_0 : i32, i32
  }
  func.func @transform_15(%arg0: i32) -> (i32, i32) {
    %c0_i32 = arith.constant 0 : i32
    %c0_i32_0 = arith.constant 0 : i32
    %c0_i32_1 = arith.constant 0 : i32
    return %c0_i32, %c0_i32_0 : i32, i32
  }
  func.func @transform_16(%arg0: i32) -> (i32, i32) {
    %c0_i32 = arith.constant 0 : i32
    %c0_i32_0 = arith.constant 0 : i32
    %c0_i32_1 = arith.constant 0 : i32
    return %c0_i32, %c0_i32_0 : i32, i32
  }
  func.func @transform_17(%arg0: i32) -> (i32, i32) {
    %c0_i32 = arith.constant 0 : i32
    %c0_i32_0 = arith.constant 0 : i32
    %c0_i32_1 = arith.constant 0 : i32
    return %c0_i32, %c0_i32_0 : i32, i32
  }
  func.func @transform_18(%arg0: i32) -> (i32, i32) {
    %c0_i32 = arith.constant 0 : i32
    %c0_i32_0 = arith.constant 0 : i32
    %c0_i32_1 = arith.constant 0 : i32
    return %c0_i32, %c0_i32_0 : i32, i32
  }
  func.func @transform_19(%arg0: i32) -> (i32, i32) {
    %c0_i32 = arith.constant 0 : i32
    %c0_i32_0 = arith.constant 0 : i32
    %c0_i32_1 = arith.constant 0 : i32
    return %c0_i32, %c0_i32_0 : i32, i32
  }
  func.func @transform_20(%arg0: i32) -> (i32, i32) {
    %c0_i32 = arith.constant 0 : i32
    %c0_i32_0 = arith.constant 0 : i32
    %c0_i32_1 = arith.constant 0 : i32
    return %c0_i32, %c0_i32_0 : i32, i32
  }
}

</mosaic_0001>

<llo_original>
// kernel: tpu_custom_call.1
$region0: #{tpu_custom_call.1}
  #allocation0 [shape = 'u32[]', space=smem, size = 0x4, offset = 0x4, fixed_abs, tag = 'smem constant byte address 0x4 - core index']
  #allocation1 [shape = 'u32[144,128]{1,0:T(1,128)}', space=vmem, size = 0x12000, scoped, tag = 'internal scratch']
  %s0 = inlined_call_operand.vmem [shape: f32[610,9], index: 0, kind: input, shape index: {}]
  %s1 = inlined_call_operand.vmem [shape: f32[9,32], index: 1, kind: input, shape index: {}]
  %s2 = inlined_call_operand.vmem [shape: f32[1,32], index: 2, kind: input, shape index: {}]
  %s3 = inlined_call_operand.vmem [shape: f32[1,32], index: 3, kind: input, shape index: {}]
  %s4 = inlined_call_operand.vmem [shape: f32[1,32], index: 4, kind: input, shape index: {}]
  %s5 = inlined_call_operand.vmem [shape: f32[1,610], index: 5, kind: input, shape index: {}]
  %s6 = inlined_call_operand.vmem [shape: bf16[200,591], index: 6, kind: input, shape index: {}]
  %s7 = inlined_call_operand.vmem [shape: f32[9,32,16], index: 7, kind: input, shape index: {}]
  %s8 = inlined_call_operand.vmem [shape: f32[1,16], index: 8, kind: input, shape index: {}]
  %s9 = inlined_call_operand.vmem [shape: f32[1,16], index: 9, kind: input, shape index: {}]
  %s10 = inlined_call_operand.vmem [shape: f32[1,16], index: 10, kind: input, shape index: {}]
  %s11 = inlined_call_operand.vmem [shape: f32[1,178], index: 11, kind: input, shape index: {}]
  %s12 = inlined_call_operand.vmem [shape: f32[32,167], index: 12, kind: input, shape index: {}]
  %s13 = inlined_call_operand.vmem [shape: f32[16,512], index: 13, kind: input, shape index: {}]
  %s14 = inlined_call_operand.vmem [shape: f32[32,512], index: 14, kind: input, shape index: {}]
  %s15 = inlined_call_operand.vmem [shape: f32[2,32], index: 15, kind: input, shape index: {}]
  %s16 = inlined_call_operand.vmem [shape: f32[512,32], index: 16, kind: input, shape index: {}]
  %s17 = inlined_call_operand.vmem [shape: f32[1,32], index: 17, kind: input, shape index: {}]
  %s18 = inlined_call_operand.vmem [shape: f32[32,10], index: 18, kind: input, shape index: {}]
  %s19 = inlined_call_operand.vmem [shape: f32[1,10], index: 19, kind: input, shape index: {}]
  %s20 = inlined_call_operand.hbm [shape: f32[2,10], index: 20, kind: output, shape index: {}]
  %s21 = sld [smem:[#allocation0]]
  $region90: #{tpu_custom_call.1} parent=0
    _
  %s23 = ssub.s32 1, %s21
  %s24 = scalar_select 0, %s23, %s21
  $region1: #{tpu_custom_call.1} parent=0
    #allocation2 [shape = 'u8[1024]{0}', space=vmem, size = 0x400, scoped, tag = 'output window, operand 0, single buffered']
    #allocation3 [shape = 's32[1]{0}', space=sflag, size = 0x4, scoped, tag = 'scoped memory for tpu_custom_call.1']
    %25 = vsyncpa [#allocation3], 0
    // Predicated region
    $region2: #{tpu_custom_call.1} parent=1 // pred_check
      _
    $region3: #{tpu_custom_call.1} parent=1 // pred_check_branch
      %27 = sbr.rel (0) target = $region5
    $region4: #{tpu_custom_call.1} parent=1 // pred_region
      _
    $region5: #{tpu_custom_call.1} parent=1 // pred_fallthru
      _
    // Predicated region
    $region6: #{tpu_custom_call.1} parent=1 // pred_check
      _
    $region7: #{tpu_custom_call.1} parent=1 // pred_check_branch
      %29 = sbr.rel (0) target = $region9
    $region8: #{tpu_custom_call.1} parent=1 // pred_region
      _
    $region9: #{tpu_custom_call.1} parent=1 // pred_fallthru
      _
    // Predicated region
    $region10: #{tpu_custom_call.1} parent=1 // pred_check
      _
    $region11: #{tpu_custom_call.1} parent=1 // pred_check_branch
      %31 = sbr.rel (0) target = $region13
    $region12: #{tpu_custom_call.1} parent=1 // pred_region
      _
    $region13: #{tpu_custom_call.1} parent=1 // pred_fallthru
      _
    // Predicated region
    $region14: #{tpu_custom_call.1} parent=1 // pred_check
      _
    $region15: #{tpu_custom_call.1} parent=1 // pred_check_branch
      %33 = sbr.rel (0) target = $region17
    $region16: #{tpu_custom_call.1} parent=1 // pred_region
      _
    $region17: #{tpu_custom_call.1} parent=1 // pred_fallthru
      _
    // Predicated region
    $region18: #{tpu_custom_call.1} parent=1 // pred_check
      _
    $region19: #{tpu_custom_call.1} parent=1 // pred_check_branch
      %35 = sbr.rel (0) target = $region21
    $region20: #{tpu_custom_call.1} parent=1 // pred_region
      _
    $region21: #{tpu_custom_call.1} parent=1 // pred_fallthru
      _
    // Predicated region
    $region22: #{tpu_custom_call.1} parent=1 // pred_check
      _
    $region23: #{tpu_custom_call.1} parent=1 // pred_check_branch
      %37 = sbr.rel (0) target = $region25
    $region24: #{tpu_custom_call.1} parent=1 // pred_region
      _
    $region25: #{tpu_custom_call.1} parent=1 // pred_fallthru
      _
    // Predicated region
    $region26: #{tpu_custom_call.1} parent=1 // pred_check
      _
    $region27: #{tpu_custom_call.1} parent=1 // pred_check_branch
      %39 = sbr.rel (0) target = $region29
    $region28: #{tpu_custom_call.1} parent=1 // pred_region
      _
    $region29: #{tpu_custom_call.1} parent=1 // pred_fallthru
      _
    // Predicated region
    $region30: #{tpu_custom_call.1} parent=1 // pred_check
      _
    $region31: #{tpu_custom_call.1} parent=1 // pred_check_branch
      %41 = sbr.rel (0) target = $region33
    $region32: #{tpu_custom_call.1} parent=1 // pred_region
      _
    $region33: #{tpu_custom_call.1} parent=1 // pred_fallthru
      _
    // Predicated region
    $region34: #{tpu_custom_call.1} parent=1 // pred_check
      _
    $region35: #{tpu_custom_call.1} parent=1 // pred_check_branch
      %43 = sbr.rel (0) target = $region37
    $region36: #{tpu_custom_call.1} parent=1 // pred_region
      _
    $region37: #{tpu_custom_call.1} parent=1 // pred_fallthru
      _
    // Predicated region
    $region38: #{tpu_custom_call.1} parent=1 // pred_check
      _
    $region39: #{tpu_custom_call.1} parent=1 // pred_check_branch
      %45 = sbr.rel (0) target = $region41
    $region40: #{tpu_custom_call.1} parent=1 // pred_region
      _
    $region41: #{tpu_custom_call.1} parent=1 // pred_fallthru
      _
    // Predicated region
    $region42: #{tpu_custom_call.1} parent=1 // pred_check
      _
    $region43: #{tpu_custom_call.1} parent=1 // pred_check_branch
      %47 = sbr.rel (0) target = $region45
    $region44: #{tpu_custom_call.1} parent=1 // pred_region
      _
    $region45: #{tpu_custom_call.1} parent=1 // pred_fallthru
      _
    // Predicated region
    $region46: #{tpu_custom_call.1} parent=1 // pred_check
      _
    $region47: #{tpu_custom_call.1} parent=1 // pred_check_branch
      %49 = sbr.rel (0) target = $region49
    $region48: #{tpu_custom_call.1} parent=1 // pred_region
      _
    $region49: #{tpu_custom_call.1} parent=1 // pred_fallthru
      _
    // Predicated region
    $region50: #{tpu_custom_call.1} parent=1 // pred_check
      _
    $region51: #{tpu_custom_call.1} parent=1 // pred_check_branch
      %51 = sbr.rel (0) target = $region53
    $region52: #{tpu_custom_call.1} parent=1 // pred_region
      _
    $region53: #{tpu_custom_call.1} parent=1 // pred_fallthru
      _
    // Predicated region
    $region54: #{tpu_custom_call.1} parent=1 // pred_check
      _
    $region55: #{tpu_custom_call.1} parent=1 // pred_check_branch
      %53 = sbr.rel (0) target = $region57
    $region56: #{tpu_custom_call.1} parent=1 // pred_region
      _
    $region57: #{tpu_custom_call.1} parent=1 // pred_fallthru
      _
    // Predicated region
    $region58: #{tpu_custom_call.1} parent=1 // pred_check
      _
    $region59: #{tpu_custom_call.1} parent=1 // pred_check_branch
      %55 = sbr.rel (0) target = $region61
    $region60: #{tpu_custom_call.1} parent=1 // pred_region
      _
    $region61: #{tpu_custom_call.1} parent=1 // pred_fallthru
      _
    // Predicated region
    $region62: #{tpu_custom_call.1} parent=1 // pred_check
      _
    $region63: #{tpu_custom_call.1} parent=1 // pred_check_branch
      %57 = sbr.rel (0) target = $region65
    $region64: #{tpu_custom_call.1} parent=1 // pred_region
      _
    $region65: #{tpu_custom_call.1} parent=1 // pred_fallthru
      _
    // Predicated region
    $region66: #{tpu_custom_call.1} parent=1 // pred_check
      _
    $region67: #{tpu_custom_call.1} parent=1 // pred_check_branch
      %59 = sbr.rel (0) target = $region69
    $region68: #{tpu_custom_call.1} parent=1 // pred_region
      _
    $region69: #{tpu_custom_call.1} parent=1 // pred_fallthru
      _
    // Predicated region
    $region70: #{tpu_custom_call.1} parent=1 // pred_check
      _
    $region71: #{tpu_custom_call.1} parent=1 // pred_check_branch
      %61 = sbr.rel (0) target = $region73
    $region72: #{tpu_custom_call.1} parent=1 // pred_region
      _
    $region73: #{tpu_custom_call.1} parent=1 // pred_fallthru
      _
    // Predicated region
    $region74: #{tpu_custom_call.1} parent=1 // pred_check
      _
    $region75: #{tpu_custom_call.1} parent=1 // pred_check_branch
      %63 = sbr.rel (0) target = $region77
    $region76: #{tpu_custom_call.1} parent=1 // pred_region
      _
    $region77: #{tpu_custom_call.1} parent=1 // pred_fallthru
      _
    // Predicated region
    $region78: #{tpu_custom_call.1} parent=1 // pred_check
      _
    $region79: #{tpu_custom_call.1} parent=1 // pred_check_branch
      %65 = sbr.rel (0) target = $region81
    $region80: #{tpu_custom_call.1} parent=1 // pred_region
      _
    $region81: #{tpu_custom_call.1} parent=1 // pred_fallthru
      _
    %v66 = vld [vmem:[%s0] sm:$0xff]
    %v67 = vld [vmem:[%s0 + $0x8] sm:$0xff]
    %v68 = vld [vmem:[%s0 + $0x10] sm:$0xff]
    %v69 = vld [vmem:[%s0 + $0x18] sm:$0xff]
    %v70 = vld [vmem:[%s0 + $0x20] sm:$0xff]
    %v71 = vld [vmem:[%s0 + $0x28] sm:$0xff]
    %v72 = vld [vmem:[%s0 + $0x30] sm:$0xff]
    %v73 = vld [vmem:[%s0 + $0x38] sm:$0xff]
    %v74 = vld [vmem:[%s0 + $0x40] sm:$0xff]
    %v75 = vld [vmem:[%s0 + $0x48] sm:$0xff]
    %v76 = vld [vmem:[%s0 + $0x50] sm:$0xff]
    %v77 = vld [vmem:[%s0 + $0x58] sm:$0xff]
    %v78 = vld [vmem:[%s0 + $0x60] sm:$0xff]
    %v79 = vld [vmem:[%s0 + $0x68] sm:$0xff]
    %v80 = vld [vmem:[%s0 + $0x70] sm:$0xff]
    %v81 = vld [vmem:[%s0 + $0x78] sm:$0xff]
    %v82 = vld [vmem:[%s0 + $0x80] sm:$0xff]
    %v83 = vld [vmem:[%s0 + $0x88] sm:$0xff]
    %v84 = vld [vmem:[%s0 + $0x90] sm:$0xff]
    %v85 = vld [vmem:[%s0 + $0x98] sm:$0xff]
    %v86 = vld [vmem:[%s0 + $0xa0] sm:$0xff]
    %v87 = vld [vmem:[%s0 + $0xa8] sm:$0xff]
    %v88 = vld [vmem:[%s0 + $0xb0] sm:$0xff]
    %v89 = vld [vmem:[%s0 + $0xb8] sm:$0xff]
    %v90 = vld [vmem:[%s0 + $0xc0] sm:$0xff]
    %v91 = vld [vmem:[%s0 + $0xc8] sm:$0xff]
    %v92 = vld [vmem:[%s0 + $0xd0] sm:$0xff]
    %v93 = vld [vmem:[%s0 + $0xd8] sm:$0xff]
    %v94 = vld [vmem:[%s0 + $0xe0] sm:$0xff]
    %v95 = vld [vmem:[%s0 + $0xe8] sm:$0xff]
    %v96 = vld [vmem:[%s0 + $0xf0] sm:$0xff]
    %v97 = vld [vmem:[%s0 + $0xf8] sm:$0xff]
    %v98 = vld [vmem:[%s0 + $0x100] sm:$0xff]
    %v99 = vld [vmem:[%s0 + $0x108] sm:$0xff]
    %v100 = vld [vmem:[%s0 + $0x110] sm:$0xff]
    %v101 = vld [vmem:[%s0 + $0x118] sm:$0xff]
    %v102 = vld [vmem:[%s0 + $0x120] sm:$0xff]
    %v103 = vld [vmem:[%s0 + $0x128] sm:$0xff]
    %v104 = vld [vmem:[%s0 + $0x130] sm:$0xff]
    %v105 = vld [vmem:[%s0 + $0x138] sm:$0xff]
    %v106 = vld [vmem:[%s0 + $0x140] sm:$0xff]
    %v107 = vld [vmem:[%s0 + $0x148] sm:$0xff]
    %v108 = vld [vmem:[%s0 + $0x150] sm:$0xff]
    %v109 = vld [vmem:[%s0 + $0x158] sm:$0xff]
    %v110 = vld [vmem:[%s0 + $0x160] sm:$0xff]
    %v111 = vld [vmem:[%s0 + $0x168] sm:$0xff]
    %v112 = vld [vmem:[%s0 + $0x170] sm:$0xff]
    %v113 = vld [vmem:[%s0 + $0x178] sm:$0xff]
    %v114 = vld [vmem:[%s0 + $0x180] sm:$0xff]
    %v115 = vld [vmem:[%s0 + $0x188] sm:$0xff]
    %v116 = vld [vmem:[%s0 + $0x190] sm:$0xff]
    %v117 = vld [vmem:[%s0 + $0x198] sm:$0xff]
    %v118 = vld [vmem:[%s0 + $0x1a0] sm:$0xff]
    %v119 = vld [vmem:[%s0 + $0x1a8] sm:$0xff]
    %v120 = vld [vmem:[%s0 + $0x1b0] sm:$0xff]
    %v121 = vld [vmem:[%s0 + $0x1b8] sm:$0xff]
    %v122 = vld [vmem:[%s0 + $0x1c0] sm:$0xff]
    %v123 = vld [vmem:[%s0 + $0x1c8] sm:$0xff]
    %v124 = vld [vmem:[%s0 + $0x1d0] sm:$0xff]
    %v125 = vld [vmem:[%s0 + $0x1d8] sm:$0xff]
    %v126 = vld [vmem:[%s0 + $0x1e0] sm:$0xff]
    %v127 = vld [vmem:[%s0 + $0x1e8] sm:$0xff]
    %v128 = vld [vmem:[%s0 + $0x1f0] sm:$0xff]
    %v129 = vld [vmem:[%s0 + $0x1f8] sm:$0xff]
    %v130 = vld [vmem:[%s0 + $0x200] sm:$0xff]
    %v131 = vld [vmem:[%s0 + $0x208] sm:$0xff]
    %v132 = vld [vmem:[%s0 + $0x210] sm:$0xff]
    %v133 = vld [vmem:[%s0 + $0x218] sm:$0xff]
    %v134 = vld [vmem:[%s0 + $0x220] sm:$0xff]
    %v135 = vld [vmem:[%s0 + $0x228] sm:$0xff]
    %v136 = vld [vmem:[%s0 + $0x230] sm:$0xff]
    %v137 = vld [vmem:[%s0 + $0x238] sm:$0xff]
    %v138 = vld [vmem:[%s0 + $0x240] sm:$0xff]
    %v139 = vld [vmem:[%s0 + $0x248] sm:$0xff]
    %v140 = vld [vmem:[%s0 + $0x250] sm:$0xff]
    %v141 = vld [vmem:[%s0 + $0x258] sm:$0xff]
    %v142 = vld [vmem:[%s0 + $0x260] sm:$0x3]
    %v143 = vld [vmem:[%s1] sm:$0xff]
    %v144 = vld [vmem:[%s1 + $0x8] sm:$0x1]
    %v145 = vld [vmem:[%s2] sm:$0x1]
    %v147 = vlaneseq
    %v148 = vshrl.u32 %v147, 7
    %v149 = vsub.s32 0, %v148
    %v150 = vrot.slane %v145, %v149
    %vm152 = vcmask 72704
    %v154 = vsel %vm152, %v66, 0
    %v157 = vsel %vm152, %v67, 0
    %v160 = vsel %vm152, %v68, 0
    %v163 = vsel %vm152, %v69, 0
    %v166 = vsel %vm152, %v70, 0
    %v169 = vsel %vm152, %v71, 0
    %v172 = vsel %vm152, %v72, 0
    %v175 = vsel %vm152, %v73, 0
    %v178 = vsel %vm152, %v74, 0
    %v181 = vsel %vm152, %v75, 0
    %v184 = vsel %vm152, %v76, 0
    %v187 = vsel %vm152, %v77, 0
    %v190 = vsel %vm152, %v78, 0
    %v193 = vsel %vm152, %v79, 0
    %v196 = vsel %vm152, %v80, 0
    %v199 = vsel %vm152, %v81, 0
    %v202 = vsel %vm152, %v82, 0
    %v205 = vsel %vm152, %v83, 0
    %v208 = vsel %vm152, %v84, 0
    %v211 = vsel %vm152, %v85, 0
    %v214 = vsel %vm152, %v86, 0
    %v217 = vsel %vm152, %v87, 0
    %v220 = vsel %vm152, %v88, 0
    %v223 = vsel %vm152, %v89, 0
    %v226 = vsel %vm152, %v90, 0
    %v229 = vsel %vm152, %v91, 0
    %v232 = vsel %vm152, %v92, 0
    %v235 = vsel %vm152, %v93, 0
    %v238 = vsel %vm152, %v94, 0
    %v241 = vsel %vm152, %v95, 0
    %v244 = vsel %vm152, %v96, 0
    %v247 = vsel %vm152, %v97, 0
    %v250 = vsel %vm152, %v98, 0
    %v253 = vsel %vm152, %v99, 0
    %v256 = vsel %vm152, %v100, 0
    %v259 = vsel %vm152, %v101, 0
    %v262 = vsel %vm152, %v102, 0
    %v265 = vsel %vm152, %v103, 0
    %v268 = vsel %vm152, %v104, 0
    %v271 = vsel %vm152, %v105, 0
    %v274 = vsel %vm152, %v106, 0
    %v277 = vsel %vm152, %v107, 0
    %v280 = vsel %vm152, %v108, 0
    %v283 = vsel %vm152, %v109, 0
    %v286 = vsel %vm152, %v110, 0
    %v289 = vsel %vm152, %v111, 0
    %v292 = vsel %vm152, %v112, 0
    %v295 = vsel %vm152, %v113, 0
    %v298 = vsel %vm152, %v114, 0
    %v301 = vsel %vm152, %v115, 0
    %v304 = vsel %vm152, %v116, 0
    %v307 = vsel %vm152, %v117, 0
    %v310 = vsel %vm152, %v118, 0
    %v313 = vsel %vm152, %v119, 0
    %v316 = vsel %vm152, %v120, 0
    %v319 = vsel %vm152, %v121, 0
    %v322 = vsel %vm152, %v122, 0
    %v325 = vsel %vm152, %v123, 0
    %v328 = vsel %vm152, %v124, 0
    %v331 = vsel %vm152, %v125, 0
    %v334 = vsel %vm152, %v126, 0
    %v337 = vsel %vm152, %v127, 0
    %v340 = vsel %vm152, %v128, 0
    %v343 = vsel %vm152, %v129, 0
    %v346 = vsel %vm152, %v130, 0
    %v349 = vsel %vm152, %v131, 0
    %v352 = vsel %vm152, %v132, 0
    %v355 = vsel %vm152, %v133, 0
    %v358 = vsel %vm152, %v134, 0
    %v361 = vsel %vm152, %v135, 0
    %v364 = vsel %vm152, %v136, 0
    %v367 = vsel %vm152, %v137, 0
    %v370 = vsel %vm152, %v138, 0
    %v373 = vsel %vm152, %v139, 0
    %v376 = vsel %vm152, %v140, 0
    %v379 = vsel %vm152, %v141, 0
    %v382 = vsel %vm152, %v142, 0
    %vm384 = vcmask 1040384
    %v386 = vsel %vm384, %v144, 0
    %388 = vmatprep.subr.mxu0 0.0
    %389 = vmatpush1.msra.mxu0 0.0
    %390 = vmatprep.subr.mxu0 0.0
    %391 = vmatpush1.msra.mxu0 0.0
    %392 = vmatprep.subr.mxu0 0.0
    %393 = vmatpush1.msra.mxu0 0.0
    %394 = vmatprep.subr.mxu0 0.0
    %395 = vmatpush1.msra.mxu0 0.0
    %396 = vmatprep.subr.mxu0 0.0
    %397 = vmatpush1.msra.mxu0 0.0
    %398 = vmatprep.subr.mxu0 0.0
    %399 = vmatpush1.msra.mxu0 0.0
    %400 = vmatprep.subr.mxu0 0.0
    %401 = vmatpush1.msra.mxu0 0.0
    %402 = vmatprep.subr.mxu0 0.0
    %403 = vmatpush1.msra.mxu0 0.0
    %404 = vmatprep.subr.mxu0 0.0
    %405 = vmatpush1.msra.mxu0 0.0
    %406 = vmatprep.subr.mxu0 0.0
    %407 = vmatpush1.msra.mxu0 0.0
    %408 = vmatprep.subr.mxu0 0.0
    %409 = vmatpush1.msra.mxu0 0.0
    %410 = vmatprep.subr.mxu0 0.0
    %411 = vmatpush1.msra.mxu0 0.0
    %412 = vmatprep.subr.mxu0 0.0
    %413 = vmatpush1.msra.mxu0 0.0
    %414 = vmatprep.subr.mxu0 0.0
    %415 = vmatpush1.msra.mxu0 0.0
    %416 = vmatprep.subr.mxu0 0.0
    %417 = vmatpush1.msra.mxu0 %v386
    %418 = vmatprep.subr.mxu0 0.0
    %419 = vmatpush1.msra.mxu0 %v143
    %420 = vmatprep.subr.mxu0 0.0
    %421 = vmatpush2.msra.mxu0 0.0
    %422 = vmatprep.subr.mxu0 0.0
    %423 = vmatpush2.msra.mxu0 0.0
    %424 = vmatprep.subr.mxu0 0.0
    %425 = vmatpush2.msra.mxu0 0.0
    %426 = vmatprep.subr.mxu0 0.0
    %427 = vmatpush2.msra.mxu0 0.0
    %428 = vmatprep.subr.mxu0 0.0
    %429 = vmatpush2.msra.mxu0 0.0
    %430 = vmatprep.subr.mxu0 0.0
    %431 = vmatpush2.msra.mxu0 0.0
    %432 = vmatprep.subr.mxu0 0.0
    %433 = vmatpush2.msra.mxu0 0.0
    %434 = vmatprep.subr.mxu0 0.0
    %435 = vmatpush2.msra.mxu0 0.0
    %436 = vmatprep.subr.mxu0 0.0
    %437 = vmatpush2.msra.mxu0 0.0
    %438 = vmatprep.subr.mxu0 0.0
    %439 = vmatpush2.msra.mxu0 0.0
    %440 = vmatprep.subr.mxu0 0.0
    %441 = vmatpush2.msra.mxu0 0.0
    %442 = vmatprep.subr.mxu0 0.0
    %443 = vmatpush2.msra.mxu0 0.0
    %444 = vmatprep.subr.mxu0 0.0
    %445 = vmatpush2.msra.mxu0 0.0
    %446 = vmatprep.subr.mxu0 0.0
    %447 = vmatpush2.msra.mxu0 0.0
    %448 = vmatprep.subr.mxu0 0.0
    %449 = vmatpush2.msra.mxu0 0.0
    %450 = vmatprep.subr.mxu0 0.0
    %451 = vmatpush2.msra.mxu0 0.0
    %452 = vmatprep.mubr.f32.mxu0 0.0
    %453 = vmatmul.mubr.f32.gmra.mxu0 %v154
    %v454 = vpop.f32.mrf.mxu0
    %v455 = vadd.f32 %v150, %v454
    %v456 = vpop.f32.mrf.mxu0
    %457 = vmatprep.mubr.f32.mxu0 0.0
    %458 = vmatmul.mubr.f32.gmra.mxu0 %v157
    %v459 = vpop.f32.mrf.mxu0
    %v460 = vadd.f32 %v150, %v459
    %v461 = vpop.f32.mrf.mxu0
    %462 = vmatprep.mubr.f32.mxu0 0.0
    %463 = vmatmul.mubr.f32.gmra.mxu0 %v160
    %v464 = vpop.f32.mrf.mxu0
    %v465 = vadd.f32 %v150, %v464
    %v466 = vpop.f32.mrf.mxu0
    %467 = vmatprep.mubr.f32.mxu0 0.0
    %468 = vmatmul.mubr.f32.gmra.mxu0 %v163
    %v469 = vpop.f32.mrf.mxu0
    %v470 = vadd.f32 %v150, %v469
    %v471 = vpop.f32.mrf.mxu0
    %472 = vmatprep.mubr.f32.mxu0 0.0
    %473 = vmatmul.mubr.f32.gmra.mxu0 %v166
    %v474 = vpop.f32.mrf.mxu0
    %v475 = vadd.f32 %v150, %v474
    %v476 = vpop.f32.mrf.mxu0
    %477 = vmatprep.mubr.f32.mxu0 0.0
    %478 = vmatmul.mubr.f32.gmra.mxu0 %v169
    %v479 = vpop.f32.mrf.mxu0
    %v480 = vadd.f32 %v150, %v479
    %v481 = vpop.f32.mrf.mxu0
    %482 = vmatprep.mubr.f32.mxu0 0.0
    %483 = vmatmul.mubr.f32.gmra.mxu0 %v172
    %v484 = vpop.f32.mrf.mxu0
    %v485 = vadd.f32 %v150, %v484
    %v486 = vpop.f32.mrf.mxu0
    %487 = vmatprep.mubr.f32.mxu0 0.0
    %488 = vmatmul.mubr.f32.gmra.mxu0 %v175
    %v489 = vpop.f32.mrf.mxu0
    %v490 = vadd.f32 %v150, %v489
    %v491 = vpop.f32.mrf.mxu0
    %492 = vmatprep.mubr.f32.mxu0 0.0
    %493 = vmatmul.mubr.f32.gmra.mxu0 %v178
    %v494 = vpop.f32.mrf.mxu0
    %v495 = vadd.f32 %v150, %v494
    %v496 = vpop.f32.mrf.mxu0
    %497 = vmatprep.mubr.f32.mxu0 0.0
    %498 = vmatmul.mubr.f32.gmra.mxu0 %v181
    %v499 = vpop.f32.mrf.mxu0
    %v500 = vadd.f32 %v150, %v499
    %v501 = vpop.f32.mrf.mxu0
    %502 = vmatprep.mubr.f32.mxu0 0.0
    %503 = vmatmul.mubr.f32.gmra.mxu0 %v184
    %v504 = vpop.f32.mrf.mxu0
    %v505 = vadd.f32 %v150, %v504
    %v506 = vpop.f32.mrf.mxu0
    %507 = vmatprep.mubr.f32.mxu0 0.0
    %508 = vmatmul.mubr.f32.gmra.mxu0 %v187
    %v509 = vpop.f32.mrf.mxu0
    %v510 = vadd.f32 %v150, %v509
    %v511 = vpop.f32.mrf.mxu0
    %512 = vmatprep.mubr.f32.mxu0 0.0
    %513 = vmatmul.mubr.f32.gmra.mxu0 %v190
    %v514 = vpop.f32.mrf.mxu0
    %v515 = vadd.f32 %v150, %v514
    %v516 = vpop.f32.mrf.mxu0
    %517 = vmatprep.mubr.f32.mxu0 0.0
    %518 = vmatmul.mubr.f32.gmra.mxu0 %v193
    %v519 = vpop.f32.mrf.mxu0
    %v520 = vadd.f32 %v150, %v519
    %v521 = vpop.f32.mrf.mxu0
    %522 = vmatprep.mubr.f32.mxu0 0.0
    %523 = vmatmul.mubr.f32.gmra.mxu0 %v196
    %v524 = vpop.f32.mrf.mxu0
    %v525 = vadd.f32 %v150, %v524
    %v526 = vpop.f32.mrf.mxu0
    %527 = vmatprep.mubr.f32.mxu0 0.0
    %528 = vmatmul.mubr.f32.gmra.mxu0 %v199
    %v529 = vpop.f32.mrf.mxu0
    %v530 = vadd.f32 %v150, %v529
    %v531 = vpop.f32.mrf.mxu0
    %532 = vmatprep.mubr.f32.mxu0 0.0
    %533 = vmatmul.mubr.f32.gmra.mxu0 %v202
    %v534 = vpop.f32.mrf.mxu0
    %v535 = vadd.f32 %v150, %v534
    %v536 = vpop.f32.mrf.mxu0
    %537 = vmatprep.mubr.f32.mxu0 0.0
    %538 = vmatmul.mubr.f32.gmra.mxu0 %v205
    %v539 = vpop.f32.mrf.mxu0
    %v540 = vadd.f32 %v150, %v539
    %v541 = vpop.f32.mrf.mxu0
    %542 = vmatprep.mubr.f32.mxu0 0.0
    %543 = vmatmul.mubr.f32.gmra.mxu0 %v208
    %v544 = vpop.f32.mrf.mxu0
    %v545 = vadd.f32 %v150, %v544
    %v546 = vpop.f32.mrf.mxu0
    %547 = vmatprep.mubr.f32.mxu0 0.0
    %548 = vmatmul.mubr.f32.gmra.mxu0 %v211
    %v549 = vpop.f32.mrf.mxu0
    %v550 = vadd.f32 %v150, %v549
    %v551 = vpop.f32.mrf.mxu0
    %552 = vmatprep.mubr.f32.mxu0 0.0
    %553 = vmatmul.mubr.f32.gmra.mxu0 %v214
    %v554 = vpop.f32.mrf.mxu0
    %v555 = vadd.f32 %v150, %v554
    %v556 = vpop.f32.mrf.mxu0
    %557 = vmatprep.mubr.f32.mxu0 0.0
    %558 = vmatmul.mubr.f32.gmra.mxu0 %v217
    %v559 = vpop.f32.mrf.mxu0
    %v560 = vadd.f32 %v150, %v559
    %v561 = vpop.f32.mrf.mxu0
    %562 = vmatprep.mubr.f32.mxu0 0.0
    %563 = vmatmul.mubr.f32.gmra.mxu0 %v220
    %v564 = vpop.f32.mrf.mxu0
    %v565 = vadd.f32 %v150, %v564
    %v566 = vpop.f32.mrf.mxu0
    %567 = vmatprep.mubr.f32.mxu0 0.0
    %568 = vmatmul.mubr.f32.gmra.mxu0 %v223
    %v569 = vpop.f32.mrf.mxu0
    %v570 = vadd.f32 %v150, %v569
    %v571 = vpop.f32.mrf.mxu0
    %572 = vmatprep.mubr.f32.mxu0 0.0
    %573 = vmatmul.mubr.f32.gmra.mxu0 %v226
    %v574 = vpop.f32.mrf.mxu0
    %v575 = vadd.f32 %v150, %v574
    %v576 = vpop.f32.mrf.mxu0
    %577 = vmatprep.mubr.f32.mxu0 0.0
    %578 = vmatmul.mubr.f32.gmra.mxu0 %v229
    %v579 = vpop.f32.mrf.mxu0
    %v580 = vadd.f32 %v150, %v579
    %v581 = vpop.f32.mrf.mxu0
    %582 = vmatprep.mubr.f32.mxu0 0.0
    %583 = vmatmul.mubr.f32.gmra.mxu0 %v232
    %v584 = vpop.f32.mrf.mxu0
    %v585 = vadd.f32 %v150, %v584
    %v586 = vpop.f32.mrf.mxu0
    %587 = vmatprep.mubr.f32.mxu0 0.0
    %588 = vmatmul.mubr.f32.gmra.mxu0 %v235
    %v589 = vpop.f32.mrf.mxu0
    %v590 = vadd.f32 %v150, %v589
    %v591 = vpop.f32.mrf.mxu0
    %592 = vmatprep.mubr.f32.mxu0 0.0
    %593 = vmatmul.mubr.f32.gmra.mxu0 %v238
    %v594 = vpop.f32.mrf.mxu0
    %v595 = vadd.f32 %v150, %v594
    %v596 = vpop.f32.mrf.mxu0
    %597 = vmatprep.mubr.f32.mxu0 0.0
    %598 = vmatmul.mubr.f32.gmra.mxu0 %v241
    %v599 = vpop.f32.mrf.mxu0
    %v600 = vadd.f32 %v150, %v599
    %v601 = vpop.f32.mrf.mxu0
    %602 = vmatprep.mubr.f32.mxu0 0.0
    %603 = vmatmul.mubr.f32.gmra.mxu0 %v244
    %v604 = vpop.f32.mrf.mxu0
    %v605 = vadd.f32 %v150, %v604
    %v606 = vpop.f32.mrf.mxu0
    %607 = vmatprep.mubr.f32.mxu0 0.0
    %608 = vmatmul.mubr.f32.gmra.mxu0 %v247
    %v609 = vpop.f32.mrf.mxu0
    %v610 = vadd.f32 %v150, %v609
    %v611 = vpop.f32.mrf.mxu0
    %612 = vmatprep.mubr.f32.mxu0 0.0
    %613 = vmatmul.mubr.f32.gmra.mxu0 %v250
    %v614 = vpop.f32.mrf.mxu0
    %v615 = vadd.f32 %v150, %v614
    %v616 = vpop.f32.mrf.mxu0
    %617 = vmatprep.mubr.f32.mxu0 0.0
    %618 = vmatmul.mubr.f32.gmra.mxu0 %v253
    %v619 = vpop.f32.mrf.mxu0
    %v620 = vadd.f32 %v150, %v619
    %v621 = vpop.f32.mrf.mxu0
    %622 = vmatprep.mubr.f32.mxu0 0.0
    %623 = vmatmul.mubr.f32.gmra.mxu0 %v256
    %v624 = vpop.f32.mrf.mxu0
    %v625 = vadd.f32 %v150, %v624
    %v626 = vpop.f32.mrf.mxu0
    %627 = vmatprep.mubr.f32.mxu0 0.0
    %628 = vmatmul.mubr.f32.gmra.mxu0 %v259
    %v629 = vpop.f32.mrf.mxu0
    %v630 = vadd.f32 %v150, %v629
    %v631 = vpop.f32.mrf.mxu0
    %632 = vmatprep.mubr.f32.mxu0 0.0
    %633 = vmatmul.mubr.f32.gmra.mxu0 %v262
    %v634 = vpop.f32.mrf.mxu0
    %v635 = vadd.f32 %v150, %v634
    %v636 = vpop.f32.mrf.mxu0
    %637 = vmatprep.mubr.f32.mxu0 0.0
    %638 = vmatmul.mubr.f32.gmra.mxu0 %v265
    %v639 = vpop.f32.mrf.mxu0
    %v640 = vadd.f32 %v150, %v639
    %v641 = vpop.f32.mrf.mxu0
    %642 = vmatprep.mubr.f32.mxu0 0.0
    %643 = vmatmul.mubr.f32.gmra.mxu0 %v268
    %v644 = vpop.f32.mrf.mxu0
    %v645 = vadd.f32 %v150, %v644
    %v646 = vpop.f32.mrf.mxu0
    %647 = vmatprep.mubr.f32.mxu0 0.0
    %648 = vmatmul.mubr.f32.gmra.mxu0 %v271
    %v649 = vpop.f32.mrf.mxu0
    %v650 = vadd.f32 %v150, %v649
    %v651 = vpop.f32.mrf.mxu0
    %652 = vmatprep.mubr.f32.mxu0 0.0
    %653 = vmatmul.mubr.f32.gmra.mxu0 %v274
    %v654 = vpop.f32.mrf.mxu0
    %v655 = vadd.f32 %v150, %v654
    %v656 = vpop.f32.mrf.mxu0
    %657 = vmatprep.mubr.f32.mxu0 0.0
    %658 = vmatmul.mubr.f32.gmra.mxu0 %v277
    %v659 = vpop.f32.mrf.mxu0
    %v660 = vadd.f32 %v150, %v659
    %v661 = vpop.f32.mrf.mxu0
    %662 = vmatprep.mubr.f32.mxu0 0.0
    %663 = vmatmul.mubr.f32.gmra.mxu0 %v280
    %v664 = vpop.f32.mrf.mxu0
    %v665 = vadd.f32 %v150, %v664
    %v666 = vpop.f32.mrf.mxu0
    %667 = vmatprep.mubr.f32.mxu0 0.0
    %668 = vmatmul.mubr.f32.gmra.mxu0 %v283
    %v669 = vpop.f32.mrf.mxu0
    %v670 = vadd.f32 %v150, %v669
    %v671 = vpop.f32.mrf.mxu0
    %672 = vmatprep.mubr.f32.mxu0 0.0
    %673 = vmatmul.mubr.f32.gmra.mxu0 %v286
    %v674 = vpop.f32.mrf.mxu0
    %v675 = vadd.f32 %v150, %v674
    %v676 = vpop.f32.mrf.mxu0
    %677 = vmatprep.mubr.f32.mxu0 0.0
    %678 = vmatmul.mubr.f32.gmra.mxu0 %v289
    %v679 = vpop.f32.mrf.mxu0
    %v680 = vadd.f32 %v150, %v679
    %v681 = vpop.f32.mrf.mxu0
    %682 = vmatprep.mubr.f32.mxu0 0.0
    %683 = vmatmul.mubr.f32.gmra.mxu0 %v292
    %v684 = vpop.f32.mrf.mxu0
    %v685 = vadd.f32 %v150, %v684
    %v686 = vpop.f32.mrf.mxu0
    %687 = vmatprep.mubr.f32.mxu0 0.0
    %688 = vmatmul.mubr.f32.gmra.mxu0 %v295
    %v689 = vpop.f32.mrf.mxu0
    %v690 = vadd.f32 %v150, %v689
    %v691 = vpop.f32.mrf.mxu0
    %692 = vmatprep.mubr.f32.mxu0 0.0
    %693 = vmatmul.mubr.f32.gmra.mxu0 %v298
    %v694 = vpop.f32.mrf.mxu0
    %v695 = vadd.f32 %v150, %v694
    %v696 = vpop.f32.mrf.mxu0
    %697 = vmatprep.mubr.f32.mxu0 0.0
    %698 = vmatmul.mubr.f32.gmra.mxu0 %v301
    %v699 = vpop.f32.mrf.mxu0
    %v700 = vadd.f32 %v150, %v699
    %v701 = vpop.f32.mrf.mxu0
    %702 = vmatprep.mubr.f32.mxu0 0.0
    %703 = vmatmul.mubr.f32.gmra.mxu0 %v304
    %v704 = vpop.f32.mrf.mxu0
    %v705 = vadd.f32 %v150, %v704
    %v706 = vpop.f32.mrf.mxu0
    %707 = vmatprep.mubr.f32.mxu0 0.0
    %708 = vmatmul.mubr.f32.gmra.mxu0 %v307
    %v709 = vpop.f32.mrf.mxu0
    %v710 = vadd.f32 %v150, %v709
    %v711 = vpop.f32.mrf.mxu0
    %712 = vmatprep.mubr.f32.mxu0 0.0
    %713 = vmatmul.mubr.f32.gmra.mxu0 %v310
    %v714 = vpop.f32.mrf.mxu0
    %v715 = vadd.f32 %v150, %v714
    %v716 = vpop.f32.mrf.mxu0
    %717 = vmatprep.mubr.f32.mxu0 0.0
    %718 = vmatmul.mubr.f32.gmra.mxu0 %v313
    %v719 = vpop.f32.mrf.mxu0
    %v720 = vadd.f32 %v150, %v719
    %v721 = vpop.f32.mrf.mxu0
    %722 = vmatprep.mubr.f32.mxu0 0.0
    %723 = vmatmul.mubr.f32.gmra.mxu0 %v316
    %v724 = vpop.f32.mrf.mxu0
    %v725 = vadd.f32 %v150, %v724
    %v726 = vpop.f32.mrf.mxu0
    %727 = vmatprep.mubr.f32.mxu0 0.0
    %728 = vmatmul.mubr.f32.gmra.mxu0 %v319
    %v729 = vpop.f32.mrf.mxu0
    %v730 = vadd.f32 %v150, %v729
    %v731 = vpop.f32.mrf.mxu0
    %732 = vmatprep.mubr.f32.mxu0 0.0
    %733 = vmatmul.mubr.f32.gmra.mxu0 %v322
    %v734 = vpop.f32.mrf.mxu0
    %v735 = vadd.f32 %v150, %v734
    %v736 = vpop.f32.mrf.mxu0
    %737 = vmatprep.mubr.f32.mxu0 0.0
    %738 = vmatmul.mubr.f32.gmra.mxu0 %v325
    %v739 = vpop.f32.mrf.mxu0
    %v740 = vadd.f32 %v150, %v739
    %v741 = vpop.f32.mrf.mxu0
    %742 = vmatprep.mubr.f32.mxu0 0.0
    %743 = vmatmul.mubr.f32.gmra.mxu0 %v328
    %v744 = vpop.f32.mrf.mxu0
    %v745 = vadd.f32 %v150, %v744
    %v746 = vpop.f32.mrf.mxu0
    %747 = vmatprep.mubr.f32.mxu0 0.0
    %748 = vmatmul.mubr.f32.gmra.mxu0 %v331
    %v749 = vpop.f32.mrf.mxu0
    %v750 = vadd.f32 %v150, %v749
    %v751 = vpop.f32.mrf.mxu0
    %752 = vmatprep.mubr.f32.mxu0 0.0
    %753 = vmatmul.mubr.f32.gmra.mxu0 %v334
    %v754 = vpop.f32.mrf.mxu0
    %v755 = vadd.f32 %v150, %v754
    %v756 = vpop.f32.mrf.mxu0
    %757 = vmatprep.mubr.f32.mxu0 0.0
    %758 = vmatmul.mubr.f32.gmra.mxu0 %v337
    %v759 = vpop.f32.mrf.mxu0
    %v760 = vadd.f32 %v150, %v759
    %v761 = vpop.f32.mrf.mxu0
    %762 = vmatprep.mubr.f32.mxu0 0.0
    %763 = vmatmul.mubr.f32.gmra.mxu0 %v340
    %v764 = vpop.f32.mrf.mxu0
    %v765 = vadd.f32 %v150, %v764
    %v766 = vpop.f32.mrf.mxu0
    %767 = vmatprep.mubr.f32.mxu0 0.0
    %768 = vmatmul.mubr.f32.gmra.mxu0 %v343
    %v769 = vpop.f32.mrf.mxu0
    %v770 = vadd.f32 %v150, %v769
    %v771 = vpop.f32.mrf.mxu0
    %772 = vmatprep.mubr.f32.mxu0 0.0
    %773 = vmatmul.mubr.f32.gmra.mxu0 %v346
    %v774 = vpop.f32.mrf.mxu0
    %v775 = vadd.f32 %v150, %v774
    %v776 = vpop.f32.mrf.mxu0
    %777 = vmatprep.mubr.f32.mxu0 0.0
    %778 = vmatmul.mubr.f32.gmra.mxu0 %v349
    %v779 = vpop.f32.mrf.mxu0
    %v780 = vadd.f32 %v150, %v779
    %v781 = vpop.f32.mrf.mxu0
    %782 = vmatprep.mubr.f32.mxu0 0.0
    %783 = vmatmul.mubr.f32.gmra.mxu0 %v352
    %v784 = vpop.f32.mrf.mxu0
    %v785 = vadd.f32 %v150, %v784
    %v786 = vpop.f32.mrf.mxu0
    %787 = vmatprep.mubr.f32.mxu0 0.0
    %788 = vmatmul.mubr.f32.gmra.mxu0 %v355
    %v789 = vpop.f32.mrf.mxu0
    %v790 = vadd.f32 %v150, %v789
    %v791 = vpop.f32.mrf.mxu0
    %792 = vmatprep.mubr.f32.mxu0 0.0
    %793 = vmatmul.mubr.f32.gmra.mxu0 %v358
    %v794 = vpop.f32.mrf.mxu0
    %v795 = vadd.f32 %v150, %v794
    %v796 = vpop.f32.mrf.mxu0
    %797 = vmatprep.mubr.f32.mxu0 0.0
    %798 = vmatmul.mubr.f32.gmra.mxu0 %v361
    %v799 = vpop.f32.mrf.mxu0
    %v800 = vadd.f32 %v150, %v799
    %v801 = vpop.f32.mrf.mxu0
    %802 = vmatprep.mubr.f32.mxu0 0.0
    %803 = vmatmul.mubr.f32.gmra.mxu0 %v364
    %v804 = vpop.f32.mrf.mxu0
    %v805 = vadd.f32 %v150, %v804
    %v806 = vpop.f32.mrf.mxu0
    %807 = vmatprep.mubr.f32.mxu0 0.0
    %808 = vmatmul.mubr.f32.gmra.mxu0 %v367
    %v809 = vpop.f32.mrf.mxu0
    %v810 = vadd.f32 %v150, %v809
    %v811 = vpop.f32.mrf.mxu0
    %812 = vmatprep.mubr.f32.mxu0 0.0
    %813 = vmatmul.mubr.f32.gmra.mxu0 %v370
    %v814 = vpop.f32.mrf.mxu0
    %v815 = vadd.f32 %v150, %v814
    %v816 = vpop.f32.mrf.mxu0
    %817 = vmatprep.mubr.f32.mxu0 0.0
    %818 = vmatmul.mubr.f32.gmra.mxu0 %v373
    %v819 = vpop.f32.mrf.mxu0
    %v820 = vadd.f32 %v150, %v819
    %v821 = vpop.f32.mrf.mxu0
    %822 = vmatprep.mubr.f32.mxu0 0.0
    %823 = vmatmul.mubr.f32.gmra.mxu0 %v376
    %v824 = vpop.f32.mrf.mxu0
    %v825 = vadd.f32 %v150, %v824
    %v826 = vpop.f32.mrf.mxu0
    %827 = vmatprep.mubr.f32.mxu0 0.0
    %828 = vmatmul.mubr.f32.gmra.mxu0 %v379
    %v829 = vpop.f32.mrf.mxu0
    %v830 = vadd.f32 %v150, %v829
    %v831 = vpop.f32.mrf.mxu0
    %832 = vmatprep.mubr.f32.mxu0 0.0
    %833 = vmatmul.mubr.f32.gmra.mxu0 %v382
    %v834 = vpop.f32.mrf.mxu0
    %v835 = vadd.f32 %v150, %v834
    %v836 = vpop.f32.mrf.mxu0
    %837 = vdwg.mxu0
    %v838 = vld [vmem:[%s5] sm:$0x1f]
    %v840 = vlaneseq
    %v841 = vshrl.u32 %v840, 7
    %v842 = vsub.s32 0, %v841
    %v843 = vrot.slane %v838, %v842
    %v844 = vlaneseq
    %v845 = vshrl.u32 %v844, 7
    %v846 = vsub.s32 1, %v845
    %v847 = vrot.slane %v838, %v846
    %v848 = vlaneseq
    %v849 = vshrl.u32 %v848, 7
    %v850 = vsub.s32 2, %v849
    %v851 = vrot.slane %v838, %v850
    %v852 = vlaneseq
    %v853 = vshrl.u32 %v852, 7
    %v854 = vsub.s32 3, %v853
    %v855 = vrot.slane %v838, %v854
    %v856 = vlaneseq
    %v857 = vshrl.u32 %v856, 7
    %v858 = vsub.s32 4, %v857
    %v859 = vrot.slane %v838, %v858
    %vm864 = vcmask 801792
    %v865 = vsel %vm864, %v859, 0
    %vm867 = vcmask 1041408
    %v869 = vsel %vm867, %v835, 0
    %871 = vmatprep.subr.mxu0 0.0
    %872 = vmatpush1.msra.mxu0 %v530
    %873 = vmatprep.subr.mxu0 0.0
    %874 = vmatpush1.msra.mxu0 %v525
    %875 = vmatprep.subr.mxu0 0.0
    %876 = vmatpush1.msra.mxu0 %v520
    %877 = vmatprep.subr.mxu0 0.0
    %878 = vmatpush1.msra.mxu0 %v515
    %879 = vmatprep.subr.mxu0 0.0
    %880 = vmatpush1.msra.mxu0 %v510
    %881 = vmatprep.subr.mxu0 0.0
    %882 = vmatpush1.msra.mxu0 %v505
    %883 = vmatprep.subr.mxu0 0.0
    %884 = vmatpush1.msra.mxu0 %v500
    %885 = vmatprep.subr.mxu0 0.0
    %886 = vmatpush1.msra.mxu0 %v495
    %887 = vmatprep.subr.mxu0 0.0
    %888 = vmatpush1.msra.mxu0 %v490
    %889 = vmatprep.subr.mxu0 0.0
    %890 = vmatpush1.msra.mxu0 %v485
    %891 = vmatprep.subr.mxu0 0.0
    %892 = vmatpush1.msra.mxu0 %v480
    %893 = vmatprep.subr.mxu0 0.0
    %894 = vmatpush1.msra.mxu0 %v475
    %895 = vmatprep.subr.mxu0 0.0
    %896 = vmatpush1.msra.mxu0 %v470
    %897 = vmatprep.subr.mxu0 0.0
    %898 = vmatpush1.msra.mxu0 %v465
    %899 = vmatprep.subr.mxu0 0.0
    %900 = vmatpush1.msra.mxu0 %v460
    %901 = vmatprep.subr.mxu0 0.0
    %902 = vmatpush1.msra.mxu0 %v455
    %903 = vmatprep.subr.mxu0 0.0
    %904 = vmatpush2.msra.mxu0 %v610
    %905 = vmatprep.subr.mxu0 0.0
    %906 = vmatpush2.msra.mxu0 %v605
    %907 = vmatprep.subr.mxu0 0.0
    %908 = vmatpush2.msra.mxu0 %v600
    %909 = vmatprep.subr.mxu0 0.0
    %910 = vmatpush2.msra.mxu0 %v595
    %911 = vmatprep.subr.mxu0 0.0
    %912 = vmatpush2.msra.mxu0 %v590
    %913 = vmatprep.subr.mxu0 0.0
    %914 = vmatpush2.msra.mxu0 %v585
    %915 = vmatprep.subr.mxu0 0.0
    %916 = vmatpush2.msra.mxu0 %v580
    %917 = vmatprep.subr.mxu0 0.0
    %918 = vmatpush2.msra.mxu0 %v575
    %919 = vmatprep.subr.mxu0 0.0
    %920 = vmatpush2.msra.mxu0 %v570
    %921 = vmatprep.subr.mxu0 0.0
    %922 = vmatpush2.msra.mxu0 %v565
    %923 = vmatprep.subr.mxu0 0.0
    %924 = vmatpush2.msra.mxu0 %v560
    %925 = vmatprep.subr.mxu0 0.0
    %926 = vmatpush2.msra.mxu0 %v555
    %927 = vmatprep.subr.mxu0 0.0
    %928 = vmatpush2.msra.mxu0 %v550
    %929 = vmatprep.subr.mxu0 0.0
    %930 = vmatpush2.msra.mxu0 %v545
    %931 = vmatprep.subr.mxu0 0.0
    %932 = vmatpush2.msra.mxu0 %v540
    %933 = vmatprep.subr.mxu0 0.0
    %934 = vmatpush2.msra.mxu0 %v535
    %935 = vmatprep.mubr.f32.mxu0 %v847
    %936 = vmatmul.mubr.f32.gmra.mxu0 %v843
    %v937 = vpop.f32.mrf.mxu0
    %v938 = vadd.f32 0.0, %v937
    %v939 = vpop.f32.mrf.mxu0
    %940 = vdwg.mxu0
    %941 = vmatprep.subr.mxu0 0.0
    %942 = vmatpush1.msra.mxu0 %v690
    %943 = vmatprep.subr.mxu0 0.0
    %944 = vmatpush1.msra.mxu0 %v685
    %945 = vmatprep.subr.mxu0 0.0
    %946 = vmatpush1.msra.mxu0 %v680
    %947 = vmatprep.subr.mxu0 0.0
    %948 = vmatpush1.msra.mxu0 %v675
    %949 = vmatprep.subr.mxu0 0.0
    %950 = vmatpush1.msra.mxu0 %v670
    %951 = vmatprep.subr.mxu0 0.0
    %952 = vmatpush1.msra.mxu0 %v665
    %953 = vmatprep.subr.mxu0 0.0
    %954 = vmatpush1.msra.mxu0 %v660
    %955 = vmatprep.subr.mxu0 0.0
    %956 = vmatpush1.msra.mxu0 %v655
    %957 = vmatprep.subr.mxu0 0.0
    %958 = vmatpush1.msra.mxu0 %v650
    %959 = vmatprep.subr.mxu0 0.0
    %960 = vmatpush1.msra.mxu0 %v645
    %961 = vmatprep.subr.mxu0 0.0
    %962 = vmatpush1.msra.mxu0 %v640
    %963 = vmatprep.subr.mxu0 0.0
    %964 = vmatpush1.msra.mxu0 %v635
    %965 = vmatprep.subr.mxu0 0.0
    %966 = vmatpush1.msra.mxu0 %v630
    %967 = vmatprep.subr.mxu0 0.0
    %968 = vmatpush1.msra.mxu0 %v625
    %969 = vmatprep.subr.mxu0 0.0
    %970 = vmatpush1.msra.mxu0 %v620
    %971 = vmatprep.subr.mxu0 0.0
    %972 = vmatpush1.msra.mxu0 %v615
    %973 = vmatprep.subr.mxu0 0.0
    %974 = vmatpush2.msra.mxu0 %v770
    %975 = vmatprep.subr.mxu0 0.0
    %976 = vmatpush2.msra.mxu0 %v765
    %977 = vmatprep.subr.mxu0 0.0
    %978 = vmatpush2.msra.mxu0 %v760
    %979 = vmatprep.subr.mxu0 0.0
    %980 = vmatpush2.msra.mxu0 %v755
    %981 = vmatprep.subr.mxu0 0.0
    %982 = vmatpush2.msra.mxu0 %v750
    %983 = vmatprep.subr.mxu0 0.0
    %984 = vmatpush2.msra.mxu0 %v745
    %985 = vmatprep.subr.mxu0 0.0
    %986 = vmatpush2.msra.mxu0 %v740
    %987 = vmatprep.subr.mxu0 0.0
    %988 = vmatpush2.msra.mxu0 %v735
    %989 = vmatprep.subr.mxu0 0.0
    %990 = vmatpush2.msra.mxu0 %v730
    %991 = vmatprep.subr.mxu0 0.0
    %992 = vmatpush2.msra.mxu0 %v725
    %993 = vmatprep.subr.mxu0 0.0
    %994 = vmatpush2.msra.mxu0 %v720
    %995 = vmatprep.subr.mxu0 0.0
    %996 = vmatpush2.msra.mxu0 %v715
    %997 = vmatprep.subr.mxu0 0.0
    %998 = vmatpush2.msra.mxu0 %v710
    %999 = vmatprep.subr.mxu0 0.0
    %1000 = vmatpush2.msra.mxu0 %v705
    %1001 = vmatprep.subr.mxu0 0.0
    %1002 = vmatpush2.msra.mxu0 %v700
    %1003 = vmatprep.subr.mxu0 0.0
    %1004 = vmatpush2.msra.mxu0 %v695
    %1005 = vmatprep.mubr.f32.mxu0 %v855
    %1006 = vmatmul.mubr.f32.gmra.mxu0 %v851
    %v1007 = vpop.f32.mrf.mxu0
    %v1008 = vadd.f32 %v938, %v1007
    %v1009 = vpop.f32.mrf.mxu0
    %1010 = vdwg.mxu0
    %1011 = vmatprep.subr.mxu0 0.0
    %1012 = vmatpush1.msra.mxu0 0.0
    %1013 = vmatprep.subr.mxu0 0.0
    %1014 = vmatpush1.msra.mxu0 0.0
    %1015 = vmatprep.subr.mxu0 0.0
    %1016 = vmatpush1.msra.mxu0 0.0
    %1017 = vmatprep.subr.mxu0 0.0
    %1018 = vmatpush1.msra.mxu0 %v869
    %1019 = vmatprep.subr.mxu0 0.0
    %1020 = vmatpush1.msra.mxu0 %v830
    %1021 = vmatprep.subr.mxu0 0.0
    %1022 = vmatpush1.msra.mxu0 %v825
    %1023 = vmatprep.subr.mxu0 0.0
    %1024 = vmatpush1.msra.mxu0 %v820
    %1025 = vmatprep.subr.mxu0 0.0
    %1026 = vmatpush1.msra.mxu0 %v815
    %1027 = vmatprep.subr.mxu0 0.0
    %1028 = vmatpush1.msra.mxu0 %v810
    %1029 = vmatprep.subr.mxu0 0.0
    %1030 = vmatpush1.msra.mxu0 %v805
    %1031 = vmatprep.subr.mxu0 0.0
    %1032 = vmatpush1.msra.mxu0 %v800
    %1033 = vmatprep.subr.mxu0 0.0
    %1034 = vmatpush1.msra.mxu0 %v795
    %1035 = vmatprep.subr.mxu0 0.0
    %1036 = vmatpush1.msra.mxu0 %v790
    %1037 = vmatprep.subr.mxu0 0.0
    %1038 = vmatpush1.msra.mxu0 %v785
    %1039 = vmatprep.subr.mxu0 0.0
    %1040 = vmatpush1.msra.mxu0 %v780
    %1041 = vmatprep.subr.mxu0 0.0
    %1042 = vmatpush1.msra.mxu0 %v775
    %1043 = vmatprep.subr.mxu0 0.0
    %1044 = vmatpush2.msra.mxu0 0.0
    %1045 = vmatprep.subr.mxu0 0.0
    %1046 = vmatpush2.msra.mxu0 0.0
    %1047 = vmatprep.subr.mxu0 0.0
    %1048 = vmatpush2.msra.mxu0 0.0
    %1049 = vmatprep.subr.mxu0 0.0
    %1050 = vmatpush2.msra.mxu0 0.0
    %1051 = vmatprep.subr.mxu0 0.0
    %1052 = vmatpush2.msra.mxu0 0.0
    %1053 = vmatprep.subr.mxu0 0.0
    %1054 = vmatpush2.msra.mxu0 0.0
    %1055 = vmatprep.subr.mxu0 0.0
    %1056 = vmatpush2.msra.mxu0 0.0
    %1057 = vmatprep.subr.mxu0 0.0
    %1058 = vmatpush2.msra.mxu0 0.0
    %1059 = vmatprep.subr.mxu0 0.0
    %1060 = vmatpush2.msra.mxu0 0.0
    %1061 = vmatprep.subr.mxu0 0.0
    %1062 = vmatpush2.msra.mxu0 0.0
    %1063 = vmatprep.subr.mxu0 0.0
    %1064 = vmatpush2.msra.mxu0 0.0
    %1065 = vmatprep.subr.mxu0 0.0
    %1066 = vmatpush2.msra.mxu0 0.0
    %1067 = vmatprep.subr.mxu0 0.0
    %1068 = vmatpush2.msra.mxu0 0.0
    %1069 = vmatprep.subr.mxu0 0.0
    %1070 = vmatpush2.msra.mxu0 0.0
    %1071 = vmatprep.subr.mxu0 0.0
    %1072 = vmatpush2.msra.mxu0 0.0
    %1073 = vmatprep.subr.mxu0 0.0
    %1074 = vmatpush2.msra.mxu0 0.0
    %1075 = vmatprep.mubr.f32.mxu0 0.0
    %1076 = vmatmul.mubr.f32.gmra.mxu0 %v865
    %v1077 = vpop.f32.mrf.mxu0
    %v1078 = vadd.f32 %v1008, %v1077
    %v1079 = vpop.f32.mrf.mxu0
    %1080 = vdwg.mxu0
    %v1081 = vmul.f32 %v1078, 0.001953125
    %v1082 = vmul.f32 %v455, %v455
    %v1083 = vmul.f32 %v460, %v460
    %v1084 = vmul.f32 %v465, %v465
    %v1085 = vmul.f32 %v470, %v470
    %v1086 = vmul.f32 %v475, %v475
    %v1087 = vmul.f32 %v480, %v480
    %v1088 = vmul.f32 %v485, %v485
    %v1089 = vmul.f32 %v490, %v490
    %v1090 = vmul.f32 %v495, %v495
    %v1091 = vmul.f32 %v500, %v500
    %v1092 = vmul.f32 %v505, %v505
    %v1093 = vmul.f32 %v510, %v510
    %v1094 = vmul.f32 %v515, %v515
    %v1095 = vmul.f32 %v520, %v520
    %v1096 = vmul.f32 %v525, %v525
    %v1097 = vmul.f32 %v530, %v530
    %v1098 = vmul.f32 %v535, %v535
    %v1099 = vmul.f32 %v540, %v540
    %v1100 = vmul.f32 %v545, %v545
    %v1101 = vmul.f32 %v550, %v550
    %v1102 = vmul.f32 %v555, %v555
    %v1103 = vmul.f32 %v560, %v560
    %v1104 = vmul.f32 %v565, %v565
    %v1105 = vmul.f32 %v570, %v570
    %v1106 = vmul.f32 %v575, %v575
    %v1107 = vmul.f32 %v580, %v580
    %v1108 = vmul.f32 %v585, %v585
    %v1109 = vmul.f32 %v590, %v590
    %v1110 = vmul.f32 %v595, %v595
    %v1111 = vmul.f32 %v600, %v600
    %v1112 = vmul.f32 %v605, %v605
    %v1113 = vmul.f32 %v610, %v610
    %v1114 = vmul.f32 %v615, %v615
    %v1115 = vmul.f32 %v620, %v620
    %v1116 = vmul.f32 %v625, %v625
    %v1117 = vmul.f32 %v630, %v630
    %v1118 = vmul.f32 %v635, %v635
    %v1119 = vmul.f32 %v640, %v640
    %v1120 = vmul.f32 %v645, %v645
    %v1121 = vmul.f32 %v650, %v650
    %v1122 = vmul.f32 %v655, %v655
    %v1123 = vmul.f32 %v660, %v660
    %v1124 = vmul.f32 %v665, %v665
    %v1125 = vmul.f32 %v670, %v670
    %v1126 = vmul.f32 %v675, %v675
    %v1127 = vmul.f32 %v680, %v680
    %v1128 = vmul.f32 %v685, %v685
    %v1129 = vmul.f32 %v690, %v690
    %v1130 = vmul.f32 %v695, %v695
    %v1131 = vmul.f32 %v700, %v700
    %v1132 = vmul.f32 %v705, %v705
    %v1133 = vmul.f32 %v710, %v710
    %v1134 = vmul.f32 %v715, %v715
    %v1135 = vmul.f32 %v720, %v720
    %v1136 = vmul.f32 %v725, %v725
    %v1137 = vmul.f32 %v730, %v730
    %v1138 = vmul.f32 %v735, %v735
    %v1139 = vmul.f32 %v740, %v740
    %v1140 = vmul.f32 %v745, %v745
    %v1141 = vmul.f32 %v750, %v750
    %v1142 = vmul.f32 %v755, %v755
    %v1143 = vmul.f32 %v760, %v760
    %v1144 = vmul.f32 %v765, %v765
    %v1145 = vmul.f32 %v770, %v770
    %v1146 = vmul.f32 %v775, %v775
    %v1147 = vmul.f32 %v780, %v780
    %v1148 = vmul.f32 %v785, %v785
    %v1149 = vmul.f32 %v790, %v790
    %v1150 = vmul.f32 %v795, %v795
    %v1151 = vmul.f32 %v800, %v800
    %v1152 = vmul.f32 %v805, %v805
    %v1153 = vmul.f32 %v810, %v810
    %v1154 = vmul.f32 %v815, %v815
    %v1155 = vmul.f32 %v820, %v820
    %v1156 = vmul.f32 %v825, %v825
    %v1157 = vmul.f32 %v830, %v830
    %v1158 = vmul.f32 %v835, %v835
    %v1160 = vsel %vm867, %v1158, 0
    %1162 = vmatprep.subr.mxu0 0.0
    %1163 = vmatpush1.msra.mxu0 %v1097
    %1164 = vmatprep.subr.mxu0 0.0
    %1165 = vmatpush1.msra.mxu0 %v1096
    %1166 = vmatprep.subr.mxu0 0.0
    %1167 = vmatpush1.msra.mxu0 %v1095
    %1168 = vmatprep.subr.mxu0 0.0
    %1169 = vmatpush1.msra.mxu0 %v1094
    %1170 = vmatprep.subr.mxu0 0.0
    %1171 = vmatpush1.msra.mxu0 %v1093
    %1172 = vmatprep.subr.mxu0 0.0
    %1173 = vmatpush1.msra.mxu0 %v1092
    %1174 = vmatprep.subr.mxu0 0.0
    %1175 = vmatpush1.msra.mxu0 %v1091
    %1176 = vmatprep.subr.mxu0 0.0
    %1177 = vmatpush1.msra.mxu0 %v1090
    %1178 = vmatprep.subr.mxu0 0.0
    %1179 = vmatpush1.msra.mxu0 %v1089
    %1180 = vmatprep.subr.mxu0 0.0
    %1181 = vmatpush1.msra.mxu0 %v1088
    %1182 = vmatprep.subr.mxu0 0.0
    %1183 = vmatpush1.msra.mxu0 %v1087
    %1184 = vmatprep.subr.mxu0 0.0
    %1185 = vmatpush1.msra.mxu0 %v1086
    %1186 = vmatprep.subr.mxu0 0.0
    %1187 = vmatpush1.msra.mxu0 %v1085
    %1188 = vmatprep.subr.mxu0 0.0
    %1189 = vmatpush1.msra.mxu0 %v1084
    %1190 = vmatprep.subr.mxu0 0.0
    %1191 = vmatpush1.msra.mxu0 %v1083
    %1192 = vmatprep.subr.mxu0 0.0
    %1193 = vmatpush1.msra.mxu0 %v1082
    %1194 = vmatprep.subr.mxu0 0.0
    %1195 = vmatpush2.msra.mxu0 %v1113
    %1196 = vmatprep.subr.mxu0 0.0
    %1197 = vmatpush2.msra.mxu0 %v1112
    %1198 = vmatprep.subr.mxu0 0.0
    %1199 = vmatpush2.msra.mxu0 %v1111
    %1200 = vmatprep.subr.mxu0 0.0
    %1201 = vmatpush2.msra.mxu0 %v1110
    %1202 = vmatprep.subr.mxu0 0.0
    %1203 = vmatpush2.msra.mxu0 %v1109
    %1204 = vmatprep.subr.mxu0 0.0
    %1205 = vmatpush2.msra.mxu0 %v1108
    %1206 = vmatprep.subr.mxu0 0.0
    %1207 = vmatpush2.msra.mxu0 %v1107
    %1208 = vmatprep.subr.mxu0 0.0
    %1209 = vmatpush2.msra.mxu0 %v1106
    %1210 = vmatprep.subr.mxu0 0.0
    %1211 = vmatpush2.msra.mxu0 %v1105
    %1212 = vmatprep.subr.mxu0 0.0
    %1213 = vmatpush2.msra.mxu0 %v1104
    %1214 = vmatprep.subr.mxu0 0.0
    %1215 = vmatpush2.msra.mxu0 %v1103
    %1216 = vmatprep.subr.mxu0 0.0
    %1217 = vmatpush2.msra.mxu0 %v1102
    %1218 = vmatprep.subr.mxu0 0.0
    %1219 = vmatpush2.msra.mxu0 %v1101
    %1220 = vmatprep.subr.mxu0 0.0
    %1221 = vmatpush2.msra.mxu0 %v1100
    %1222 = vmatprep.subr.mxu0 0.0
    %1223 = vmatpush2.msra.mxu0 %v1099
    %1224 = vmatprep.subr.mxu0 0.0
    %1225 = vmatpush2.msra.mxu0 %v1098
    %1226 = vmatprep.mubr.f32.mxu0 %v847
    %1227 = vmatmul.mubr.f32.gmra.mxu0 %v843
    %v1228 = vpop.f32.mrf.mxu0
    %v1229 = vadd.f32 0.0, %v1228
    %v1230 = vpop.f32.mrf.mxu0
    %1231 = vdwg.mxu0
    %1232 = vmatprep.subr.mxu0 0.0
    %1233 = vmatpush1.msra.mxu0 %v1129
    %1234 = vmatprep.subr.mxu0 0.0
    %1235 = vmatpush1.msra.mxu0 %v1128
    %1236 = vmatprep.subr.mxu0 0.0
    %1237 = vmatpush1.msra.mxu0 %v1127
    %1238 = vmatprep.subr.mxu0 0.0
    %1239 = vmatpush1.msra.mxu0 %v1126
    %1240 = vmatprep.subr.mxu0 0.0
    %1241 = vmatpush1.msra.mxu0 %v1125
    %1242 = vmatprep.subr.mxu0 0.0
    %1243 = vmatpush1.msra.mxu0 %v1124
    %1244 = vmatprep.subr.mxu0 0.0
    %1245 = vmatpush1.msra.mxu0 %v1123
    %1246 = vmatprep.subr.mxu0 0.0
    %1247 = vmatpush1.msra.mxu0 %v1122
    %1248 = vmatprep.subr.mxu0 0.0
    %1249 = vmatpush1.msra.mxu0 %v1121
    %1250 = vmatprep.subr.mxu0 0.0
    %1251 = vmatpush1.msra.mxu0 %v1120
    %1252 = vmatprep.subr.mxu0 0.0
    %1253 = vmatpush1.msra.mxu0 %v1119
    %1254 = vmatprep.subr.mxu0 0.0
    %1255 = vmatpush1.msra.mxu0 %v1118
    %1256 = vmatprep.subr.mxu0 0.0
    %1257 = vmatpush1.msra.mxu0 %v1117
    %1258 = vmatprep.subr.mxu0 0.0
    %1259 = vmatpush1.msra.mxu0 %v1116
    %1260 = vmatprep.subr.mxu0 0.0
    %1261 = vmatpush1.msra.mxu0 %v1115
    %1262 = vmatprep.subr.mxu0 0.0
    %1263 = vmatpush1.msra.mxu0 %v1114
    %1264 = vmatprep.subr.mxu0 0.0
    %1265 = vmatpush2.msra.mxu0 %v1145
    %1266 = vmatprep.subr.mxu0 0.0
    %1267 = vmatpush2.msra.mxu0 %v1144
    %1268 = vmatprep.subr.mxu0 0.0
    %1269 = vmatpush2.msra.mxu0 %v1143
    %1270 = vmatprep.subr.mxu0 0.0
    %1271 = vmatpush2.msra.mxu0 %v1142
    %1272 = vmatprep.subr.mxu0 0.0
    %1273 = vmatpush2.msra.mxu0 %v1141
    %1274 = vmatprep.subr.mxu0 0.0
    %1275 = vmatpush2.msra.mxu0 %v1140
    %1276 = vmatprep.subr.mxu0 0.0
    %1277 = vmatpush2.msra.mxu0 %v1139
    %1278 = vmatprep.subr.mxu0 0.0
    %1279 = vmatpush2.msra.mxu0 %v1138
    %1280 = vmatprep.subr.mxu0 0.0
    %1281 = vmatpush2.msra.mxu0 %v1137
    %1282 = vmatprep.subr.mxu0 0.0
    %1283 = vmatpush2.msra.mxu0 %v1136
    %1284 = vmatprep.subr.mxu0 0.0
    %1285 = vmatpush2.msra.mxu0 %v1135
    %1286 = vmatprep.subr.mxu0 0.0
    %1287 = vmatpush2.msra.mxu0 %v1134
    %1288 = vmatprep.subr.mxu0 0.0
    %1289 = vmatpush2.msra.mxu0 %v1133
    %1290 = vmatprep.subr.mxu0 0.0
    %1291 = vmatpush2.msra.mxu0 %v1132
    %1292 = vmatprep.subr.mxu0 0.0
    %1293 = vmatpush2.msra.mxu0 %v1131
    %1294 = vmatprep.subr.mxu0 0.0
    %1295 = vmatpush2.msra.mxu0 %v1130
    %1296 = vmatprep.mubr.f32.mxu0 %v855
    %1297 = vmatmul.mubr.f32.gmra.mxu0 %v851
    %v1298 = vpop.f32.mrf.mxu0
    %v1299 = vadd.f32 %v1229, %v1298
    %v1300 = vpop.f32.mrf.mxu0
    %1301 = vdwg.mxu0
    %1302 = vmatprep.subr.mxu0 0.0
    %1303 = vmatpush1.msra.mxu0 0.0
    %1304 = vmatprep.subr.mxu0 0.0
    %1305 = vmatpush1.msra.mxu0 0.0
    %1306 = vmatprep.subr.mxu0 0.0
    %1307 = vmatpush1.msra.mxu0 0.0
    %1308 = vmatprep.subr.mxu0 0.0
    %1309 = vmatpush1.msra.mxu0 %v1160
    %1310 = vmatprep.subr.mxu0 0.0
    %1311 = vmatpush1.msra.mxu0 %v1157
    %1312 = vmatprep.subr.mxu0 0.0
    %1313 = vmatpush1.msra.mxu0 %v1156
    %1314 = vmatprep.subr.mxu0 0.0
    %1315 = vmatpush1.msra.mxu0 %v1155
    %1316 = vmatprep.subr.mxu0 0.0
    %1317 = vmatpush1.msra.mxu0 %v1154
    %1318 = vmatprep.subr.mxu0 0.0
    %1319 = vmatpush1.msra.mxu0 %v1153
    %1320 = vmatprep.subr.mxu0 0.0
    %1321 = vmatpush1.msra.mxu0 %v1152
    %1322 = vmatprep.subr.mxu0 0.0
    %1323 = vmatpush1.msra.mxu0 %v1151
    %1324 = vmatprep.subr.mxu0 0.0
    %1325 = vmatpush1.msra.mxu0 %v1150
    %1326 = vmatprep.subr.mxu0 0.0
    %1327 = vmatpush1.msra.mxu0 %v1149
    %1328 = vmatprep.subr.mxu0 0.0
    %1329 = vmatpush1.msra.mxu0 %v1148
    %1330 = vmatprep.subr.mxu0 0.0
    %1331 = vmatpush1.msra.mxu0 %v1147
    %1332 = vmatprep.subr.mxu0 0.0
    %1333 = vmatpush1.msra.mxu0 %v1146
    %1334 = vmatprep.subr.mxu0 0.0
    %1335 = vmatpush2.msra.mxu0 0.0
    %1336 = vmatprep.subr.mxu0 0.0
    %1337 = vmatpush2.msra.mxu0 0.0
    %1338 = vmatprep.subr.mxu0 0.0
    %1339 = vmatpush2.msra.mxu0 0.0
    %1340 = vmatprep.subr.mxu0 0.0
    %1341 = vmatpush2.msra.mxu0 0.0
    %1342 = vmatprep.subr.mxu0 0.0
    %1343 = vmatpush2.msra.mxu0 0.0
    %1344 = vmatprep.subr.mxu0 0.0
    %1345 = vmatpush2.msra.mxu0 0.0
    %1346 = vmatprep.subr.mxu0 0.0
    %1347 = vmatpush2.msra.mxu0 0.0
    %1348 = vmatprep.subr.mxu0 0.0
    %1349 = vmatpush2.msra.mxu0 0.0
    %1350 = vmatprep.subr.mxu0 0.0
    %1351 = vmatpush2.msra.mxu0 0.0
    %1352 = vmatprep.subr.mxu0 0.0
    %1353 = vmatpush2.msra.mxu0 0.0
    %1354 = vmatprep.subr.mxu0 0.0
    %1355 = vmatpush2.msra.mxu0 0.0
    %1356 = vmatprep.subr.mxu0 0.0
    %1357 = vmatpush2.msra.mxu0 0.0
    %1358 = vmatprep.subr.mxu0 0.0
    %1359 = vmatpush2.msra.mxu0 0.0
    %1360 = vmatprep.subr.mxu0 0.0
    %1361 = vmatpush2.msra.mxu0 0.0
    %1362 = vmatprep.subr.mxu0 0.0
    %1363 = vmatpush2.msra.mxu0 0.0
    %1364 = vmatprep.subr.mxu0 0.0
    %1365 = vmatpush2.msra.mxu0 0.0
    %1366 = vmatprep.mubr.f32.mxu0 0.0
    %1367 = vmatmul.mubr.f32.gmra.mxu0 %v865
    %v1368 = vpop.f32.mrf.mxu0
    %v1369 = vadd.f32 %v1299, %v1368
    %v1370 = vpop.f32.mrf.mxu0
    %1371 = vdwg.mxu0
    %v1372 = vmul.f32 %v1369, 0.001953125
    %v1373 = vmul.f32 %v1081, %v1081
    %v1374 = vsub.f32 %v1372, %v1373
    %v1375 = vmax.f32 %v1374, 0.0
    %v1376 = vadd.f32 %v1375, 1e-05
    %v1377 = vrsqrt.pop %v1376
    %v1378 = vld [vmem:[%s3] sm:$0x1]
    %v1379 = vmul.f32 %v1377, %v1378
    %v1380 = vld [vmem:[%s4] sm:$0x1]
    %v1381 = vmul.f32 %v1081, %v1379
    %v1382 = vsub.f32 %v1380, %v1381
    %v1383 = vlaneseq
    %v1384 = vshrl.u32 %v1383, 7
    %v1385 = vsub.s32 0, %v1384
    %v1386 = vrot.slane %v1379, %v1385
    %v1387 = vmul.f32 %v455, %v1386
    %v1388 = vmul.f32 %v460, %v1386
    %v1389 = vmul.f32 %v465, %v1386
    %v1390 = vmul.f32 %v470, %v1386
    %v1391 = vmul.f32 %v475, %v1386
    %v1392 = vmul.f32 %v480, %v1386
    %v1393 = vmul.f32 %v485, %v1386
    %v1394 = vmul.f32 %v490, %v1386
    %v1395 = vmul.f32 %v495, %v1386
    %v1396 = vmul.f32 %v500, %v1386
    %v1397 = vmul.f32 %v505, %v1386
    %v1398 = vmul.f32 %v510, %v1386
    %v1399 = vmul.f32 %v515, %v1386
    %v1400 = vmul.f32 %v520, %v1386
    %v1401 = vmul.f32 %v525, %v1386
    %v1402 = vmul.f32 %v530, %v1386
    %v1403 = vmul.f32 %v535, %v1386
    %v1404 = vmul.f32 %v540, %v1386
    %v1405 = vmul.f32 %v545, %v1386
    %v1406 = vmul.f32 %v550, %v1386
    %v1407 = vmul.f32 %v555, %v1386
    %v1408 = vmul.f32 %v560, %v1386
    %v1409 = vmul.f32 %v565, %v1386
    %v1410 = vmul.f32 %v570, %v1386
    %v1411 = vmul.f32 %v575, %v1386
    %v1412 = vmul.f32 %v580, %v1386
    %v1413 = vmul.f32 %v585, %v1386
    %v1414 = vmul.f32 %v590, %v1386
    %v1415 = vmul.f32 %v595, %v1386
    %v1416 = vmul.f32 %v600, %v1386
    %v1417 = vmul.f32 %v605, %v1386
    %v1418 = vmul.f32 %v610, %v1386
    %v1419 = vmul.f32 %v615, %v1386
    %v1420 = vmul.f32 %v620, %v1386
    %v1421 = vmul.f32 %v625, %v1386
    %v1422 = vmul.f32 %v630, %v1386
    %v1423 = vmul.f32 %v635, %v1386
    %v1424 = vmul.f32 %v640, %v1386
    %v1425 = vmul.f32 %v645, %v1386
    %v1426 = vmul.f32 %v650, %v1386
    %v1427 = vmul.f32 %v655, %v1386
    %v1428 = vmul.f32 %v660, %v1386
    %v1429 = vmul.f32 %v665, %v1386
    %v1430 = vmul.f32 %v670, %v1386
    %v1431 = vmul.f32 %v675, %v1386
    %v1432 = vmul.f32 %v680, %v1386
    %v1433 = vmul.f32 %v685, %v1386
    %v1434 = vmul.f32 %v690, %v1386
    %v1435 = vmul.f32 %v695, %v1386
    %v1436 = vmul.f32 %v700, %v1386
    %v1437 = vmul.f32 %v705, %v1386
    %v1438 = vmul.f32 %v710, %v1386
    %v1439 = vmul.f32 %v715, %v1386
    %v1440 = vmul.f32 %v720, %v1386
    %v1441 = vmul.f32 %v725, %v1386
    %v1442 = vmul.f32 %v730, %v1386
    %v1443 = vmul.f32 %v735, %v1386
    %v1444 = vmul.f32 %v740, %v1386
    %v1445 = vmul.f32 %v745, %v1386
    %v1446 = vmul.f32 %v750, %v1386
    %v1447 = vmul.f32 %v755, %v1386
    %v1448 = vmul.f32 %v760, %v1386
    %v1449 = vmul.f32 %v765, %v1386
    %v1450 = vmul.f32 %v770, %v1386
    %v1451 = vmul.f32 %v775, %v1386
    %v1452 = vmul.f32 %v780, %v1386
    %v1453 = vmul.f32 %v785, %v1386
    %v1454 = vmul.f32 %v790, %v1386
    %v1455 = vmul.f32 %v795, %v1386
    %v1456 = vmul.f32 %v800, %v1386
    %v1457 = vmul.f32 %v805, %v1386
    %v1458 = vmul.f32 %v810, %v1386
    %v1459 = vmul.f32 %v815, %v1386
    %v1460 = vmul.f32 %v820, %v1386
    %v1461 = vmul.f32 %v825, %v1386
    %v1462 = vmul.f32 %v830, %v1386
    %v1463 = vmul.f32 %v835, %v1386
    %v1465 = vlaneseq
    %v1466 = vshrl.u32 %v1465, 7
    %v1467 = vsub.s32 0, %v1466
    %v1468 = vrot.slane %v1382, %v1467
    %v1470 = vadd.f32 %v1387, %v1468
    %v1471 = vadd.f32 %v1388, %v1468
    %v1472 = vadd.f32 %v1389, %v1468
    %v1473 = vadd.f32 %v1390, %v1468
    %v1474 = vadd.f32 %v1391, %v1468
    %v1475 = vadd.f32 %v1392, %v1468
    %v1476 = vadd.f32 %v1393, %v1468
    %v1477 = vadd.f32 %v1394, %v1468
    %v1478 = vadd.f32 %v1395, %v1468
    %v1479 = vadd.f32 %v1396, %v1468
    %v1480 = vadd.f32 %v1397, %v1468
    %v1481 = vadd.f32 %v1398, %v1468
    %v1482 = vadd.f32 %v1399, %v1468
    %v1483 = vadd.f32 %v1400, %v1468
    %v1484 = vadd.f32 %v1401, %v1468
    %v1485 = vadd.f32 %v1402, %v1468
    %v1486 = vadd.f32 %v1403, %v1468
    %v1487 = vadd.f32 %v1404, %v1468
    %v1488 = vadd.f32 %v1405, %v1468
    %v1489 = vadd.f32 %v1406, %v1468
    %v1490 = vadd.f32 %v1407, %v1468
    %v1491 = vadd.f32 %v1408, %v1468
    %v1492 = vadd.f32 %v1409, %v1468
    %v1493 = vadd.f32 %v1410, %v1468
    %v1494 = vadd.f32 %v1411, %v1468
    %v1495 = vadd.f32 %v1412, %v1468
    %v1496 = vadd.f32 %v1413, %v1468
    %v1497 = vadd.f32 %v1414, %v1468
    %v1498 = vadd.f32 %v1415, %v1468
    %v1499 = vadd.f32 %v1416, %v1468
    %v1500 = vadd.f32 %v1417, %v1468
    %v1501 = vadd.f32 %v1418, %v1468
    %v1502 = vadd.f32 %v1419, %v1468
    %v1503 = vadd.f32 %v1420, %v1468
    %v1504 = vadd.f32 %v1421, %v1468
    %v1505 = vadd.f32 %v1422, %v1468
    %v1506 = vadd.f32 %v1423, %v1468
    %v1507 = vadd.f32 %v1424, %v1468
    %v1508 = vadd.f32 %v1425, %v1468
    %v1509 = vadd.f32 %v1426, %v1468
    %v1510 = vadd.f32 %v1427, %v1468
    %v1511 = vadd.f32 %v1428, %v1468
    %v1512 = vadd.f32 %v1429, %v1468
    %v1513 = vadd.f32 %v1430, %v1468
    %v1514 = vadd.f32 %v1431, %v1468
    %v1515 = vadd.f32 %v1432, %v1468
    %v1516 = vadd.f32 %v1433, %v1468
    %v1517 = vadd.f32 %v1434, %v1468
    %v1518 = vadd.f32 %v1435, %v1468
    %v1519 = vadd.f32 %v1436, %v1468
    %v1520 = vadd.f32 %v1437, %v1468
    %v1521 = vadd.f32 %v1438, %v1468
    %v1522 = vadd.f32 %v1439, %v1468
    %v1523 = vadd.f32 %v1440, %v1468
    %v1524 = vadd.f32 %v1441, %v1468
    %v1525 = vadd.f32 %v1442, %v1468
    %v1526 = vadd.f32 %v1443, %v1468
    %v1527 = vadd.f32 %v1444, %v1468
    %v1528 = vadd.f32 %v1445, %v1468
    %v1529 = vadd.f32 %v1446, %v1468
    %v1530 = vadd.f32 %v1447, %v1468
    %v1531 = vadd.f32 %v1448, %v1468
    %v1532 = vadd.f32 %v1449, %v1468
    %v1533 = vadd.f32 %v1450, %v1468
    %v1534 = vadd.f32 %v1451, %v1468
    %v1535 = vadd.f32 %v1452, %v1468
    %v1536 = vadd.f32 %v1453, %v1468
    %v1537 = vadd.f32 %v1454, %v1468
    %v1538 = vadd.f32 %v1455, %v1468
    %v1539 = vadd.f32 %v1456, %v1468
    %v1540 = vadd.f32 %v1457, %v1468
    %v1541 = vadd.f32 %v1458, %v1468
    %v1542 = vadd.f32 %v1459, %v1468
    %v1543 = vadd.f32 %v1460, %v1468
    %v1544 = vadd.f32 %v1461, %v1468
    %v1545 = vadd.f32 %v1462, %v1468
    %v1546 = vadd.f32 %v1463, %v1468
    %v1547 = vtanh.pop %v1470
    %v1548 = vtanh.pop %v1471
    %v1549 = vtanh.pop %v1472
    %v1550 = vtanh.pop %v1473
    %v1551 = vtanh.pop %v1474
    %v1552 = vtanh.pop %v1475
    %v1553 = vtanh.pop %v1476
    %v1554 = vtanh.pop %v1477
    %v1555 = vtanh.pop %v1478
    %v1556 = vtanh.pop %v1479
    %v1557 = vtanh.pop %v1480
    %v1558 = vtanh.pop %v1481
    %v1559 = vtanh.pop %v1482
    %v1560 = vtanh.pop %v1483
    %v1561 = vtanh.pop %v1484
    %v1562 = vtanh.pop %v1485
    %v1563 = vtanh.pop %v1486
    %v1564 = vtanh.pop %v1487
    %v1565 = vtanh.pop %v1488
    %v1566 = vtanh.pop %v1489
    %v1567 = vtanh.pop %v1490
    %v1568 = vtanh.pop %v1491
    %v1569 = vtanh.pop %v1492
    %v1570 = vtanh.pop %v1493
    %v1571 = vtanh.pop %v1494
    %v1572 = vtanh.pop %v1495
    %v1573 = vtanh.pop %v1496
    %v1574 = vtanh.pop %v1497
    %v1575 = vtanh.pop %v1498
    %v1576 = vtanh.pop %v1499
    %v1577 = vtanh.pop %v1500
    %v1578 = vtanh.pop %v1501
    %v1579 = vtanh.pop %v1502
    %v1580 = vtanh.pop %v1503
    %v1581 = vtanh.pop %v1504
    %v1582 = vtanh.pop %v1505
    %v1583 = vtanh.pop %v1506
    %v1584 = vtanh.pop %v1507
    %v1585 = vtanh.pop %v1508
    %v1586 = vtanh.pop %v1509
    %v1587 = vtanh.pop %v1510
    %v1588 = vtanh.pop %v1511
    %v1589 = vtanh.pop %v1512
    %v1590 = vtanh.pop %v1513
    %v1591 = vtanh.pop %v1514
    %v1592 = vtanh.pop %v1515
    %v1593 = vtanh.pop %v1516
    %v1594 = vtanh.pop %v1517
    %v1595 = vtanh.pop %v1518
    %v1596 = vtanh.pop %v1519
    %v1597 = vtanh.pop %v1520
    %v1598 = vtanh.pop %v1521
    %v1599 = vtanh.pop %v1522
    %v1600 = vtanh.pop %v1523
    %v1601 = vtanh.pop %v1524
    %v1602 = vtanh.pop %v1525
    %v1603 = vtanh.pop %v1526
    %v1604 = vtanh.pop %v1527
    %v1605 = vtanh.pop %v1528
    %v1606 = vtanh.pop %v1529
    %v1607 = vtanh.pop %v1530
    %v1608 = vtanh.pop %v1531
    %v1609 = vtanh.pop %v1532
    %v1610 = vtanh.pop %v1533
    %v1611 = vtanh.pop %v1534
    %v1612 = vtanh.pop %v1535
    %v1613 = vtanh.pop %v1536
    %v1614 = vtanh.pop %v1537
    %v1615 = vtanh.pop %v1538
    %v1616 = vtanh.pop %v1539
    %v1617 = vtanh.pop %v1540
    %v1618 = vtanh.pop %v1541
    %v1619 = vtanh.pop %v1542
    %v1620 = vtanh.pop %v1543
    %v1621 = vtanh.pop %v1544
    %v1622 = vtanh.pop %v1545
    %v1623 = vtanh.pop %v1546
    %vm1701 = vcmask 1046528
    %v1702 = vrot.slane %v1547, 1
    %v1703 = vrot.slane %v1548, 1
    %v1704 = vsel %vm1701, %v1702, %v1703
    %v1705 = vrot.slane %v1549, 1
    %v1706 = vsel %vm1701, %v1703, %v1705
    %v1707 = vrot.slane %v1550, 1
    %v1708 = vsel %vm1701, %v1705, %v1707
    %v1709 = vrot.slane %v1551, 1
    %v1710 = vsel %vm1701, %v1707, %v1709
    %v1711 = vrot.slane %v1552, 1
    %v1712 = vsel %vm1701, %v1709, %v1711
    %v1713 = vrot.slane %v1553, 1
    %v1714 = vsel %vm1701, %v1711, %v1713
    %v1715 = vrot.slane %v1554, 1
    %v1716 = vsel %vm1701, %v1713, %v1715
    %v1717 = vrot.slane %v1555, 1
    %v1718 = vsel %vm1701, %v1715, %v1717
    %v1719 = vrot.slane %v1556, 1
    %v1720 = vsel %vm1701, %v1717, %v1719
    %v1721 = vrot.slane %v1557, 1
    %v1722 = vsel %vm1701, %v1719, %v1721
    %v1723 = vrot.slane %v1558, 1
    %v1724 = vsel %vm1701, %v1721, %v1723
    %v1725 = vrot.slane %v1559, 1
    %v1726 = vsel %vm1701, %v1723, %v1725
    %v1727 = vrot.slane %v1560, 1
    %v1728 = vsel %vm1701, %v1725, %v1727
    %v1729 = vrot.slane %v1561, 1
    %v1730 = vsel %vm1701, %v1727, %v1729
    %v1731 = vrot.slane %v1562, 1
    %v1732 = vsel %vm1701, %v1729, %v1731
    %v1733 = vrot.slane %v1563, 1
    %v1734 = vsel %vm1701, %v1731, %v1733
    %v1735 = vrot.slane %v1564, 1
    %v1736 = vsel %vm1701, %v1733, %v1735
    %v1737 = vrot.slane %v1565, 1
    %v1738 = vsel %vm1701, %v1735, %v1737
    %v1739 = vrot.slane %v1566, 1
    %v1740 = vsel %vm1701, %v1737, %v1739
    %v1741 = vrot.slane %v1567, 1
    %v1742 = vsel %vm1701, %v1739, %v1741
    %v1743 = vrot.slane %v1568, 1
    %v1744 = vsel %vm1701, %v1741, %v1743
    %v1745 = vrot.slane %v1569, 1
    %v1746 = vsel %vm1701, %v1743, %v1745
    %v1747 = vrot.slane %v1570, 1
    %v1748 = vsel %vm1701, %v1745, %v1747
    %v1749 = vrot.slane %v1571, 1
    %v1750 = vsel %vm1701, %v1747, %v1749
    %v1751 = vrot.slane %v1572, 1
    %v1752 = vsel %vm1701, %v1749, %v1751
    %v1753 = vrot.slane %v1573, 1
    %v1754 = vsel %vm1701, %v1751, %v1753
    %v1755 = vrot.slane %v1574, 1
    %v1756 = vsel %vm1701, %v1753, %v1755
    %v1757 = vrot.slane %v1575, 1
    %v1758 = vsel %vm1701, %v1755, %v1757
    %v1759 = vrot.slane %v1576, 1
    %v1760 = vsel %vm1701, %v1757, %v1759
    %v1761 = vrot.slane %v1577, 1
    %v1762 = vsel %vm1701, %v1759, %v1761
    %v1763 = vrot.slane %v1578, 1
    %v1764 = vsel %vm1701, %v1761, %v1763
    %v1765 = vrot.slane %v1579, 1
    %v1766 = vsel %vm1701, %v1763, %v1765
    %v1767 = vrot.slane %v1580, 1
    %v1768 = vsel %vm1701, %v1765, %v1767
    %v1769 = vrot.slane %v1581, 1
    %v1770 = vsel %vm1701, %v1767, %v1769
    %v1771 = vrot.slane %v1582, 1
    %v1772 = vsel %vm1701, %v1769, %v1771
    %v1773 = vrot.slane %v1583, 1
    %v1774 = vsel %vm1701, %v1771, %v1773
    %v1775 = vrot.slane %v1584, 1
    %v1776 = vsel %vm1701, %v1773, %v1775
    %v1777 = vrot.slane %v1585, 1
    %v1778 = vsel %vm1701, %v1775, %v1777
    %v1779 = vrot.slane %v1586, 1
    %v1780 = vsel %vm1701, %v1777, %v1779
    %v1781 = vrot.slane %v1587, 1
    %v1782 = vsel %vm1701, %v1779, %v1781
    %v1783 = vrot.slane %v1588, 1
    %v1784 = vsel %vm1701, %v1781, %v1783
    %v1785 = vrot.slane %v1589, 1
    %v1786 = vsel %vm1701, %v1783, %v1785
    %v1787 = vrot.slane %v1590, 1
    %v1788 = vsel %vm1701, %v1785, %v1787
    %v1789 = vrot.slane %v1591, 1
    %v1790 = vsel %vm1701, %v1787, %v1789
    %v1791 = vrot.slane %v1592, 1
    %v1792 = vsel %vm1701, %v1789, %v1791
    %v1793 = vrot.slane %v1593, 1
    %v1794 = vsel %vm1701, %v1791, %v1793
    %v1795 = vrot.slane %v1594, 1
    %v1796 = vsel %vm1701, %v1793, %v1795
    %v1797 = vrot.slane %v1595, 1
    %v1798 = vsel %vm1701, %v1795, %v1797
    %v1799 = vrot.slane %v1596, 1
    %v1800 = vsel %vm1701, %v1797, %v1799
    %v1801 = vrot.slane %v1597, 1
    %v1802 = vsel %vm1701, %v1799, %v1801
    %v1803 = vrot.slane %v1598, 1
    %v1804 = vsel %vm1701, %v1801, %v1803
    %v1805 = vrot.slane %v1599, 1
    %v1806 = vsel %vm1701, %v1803, %v1805
    %v1807 = vrot.slane %v1600, 1
    %v1808 = vsel %vm1701, %v1805, %v1807
    %v1809 = vrot.slane %v1601, 1
    %v1810 = vsel %vm1701, %v1807, %v1809
    %v1811 = vrot.slane %v1602, 1
    %v1812 = vsel %vm1701, %v1809, %v1811
    %v1813 = vrot.slane %v1603, 1
    %v1814 = vsel %vm1701, %v1811, %v1813
    %v1815 = vrot.slane %v1604, 1
    %v1816 = vsel %vm1701, %v1813, %v1815
    %v1817 = vrot.slane %v1605, 1
    %v1818 = vsel %vm1701, %v1815, %v1817
    %v1819 = vrot.slane %v1606, 1
    %v1820 = vsel %vm1701, %v1817, %v1819
    %v1821 = vrot.slane %v1607, 1
    %v1822 = vsel %vm1701, %v1819, %v1821
    %v1823 = vrot.slane %v1608, 1
    %v1824 = vsel %vm1701, %v1821, %v1823
    %v1825 = vrot.slane %v1609, 1
    %v1826 = vsel %vm1701, %v1823, %v1825
    %v1827 = vrot.slane %v1610, 1
    %v1828 = vsel %vm1701, %v1825, %v1827
    %v1829 = vrot.slane %v1611, 1
    %v1830 = vsel %vm1701, %v1827, %v1829
    %v1831 = vrot.slane %v1612, 1
    %v1832 = vsel %vm1701, %v1829, %v1831
    %v1833 = vrot.slane %v1613, 1
    %v1834 = vsel %vm1701, %v1831, %v1833
    %v1835 = vrot.slane %v1614, 1
    %v1836 = vsel %vm1701, %v1833, %v1835
    %v1837 = vrot.slane %v1615, 1
    %v1838 = vsel %vm1701, %v1835, %v1837
    %v1839 = vrot.slane %v1616, 1
    %v1840 = vsel %vm1701, %v1837, %v1839
    %v1841 = vrot.slane %v1617, 1
    %v1842 = vsel %vm1701, %v1839, %v1841
    %v1843 = vrot.slane %v1618, 1
    %v1844 = vsel %vm1701, %v1841, %v1843
    %v1845 = vrot.slane %v1619, 1
    %v1846 = vsel %vm1701, %v1843, %v1845
    %v1847 = vrot.slane %v1620, 1
    %v1848 = vsel %vm1701, %v1845, %v1847
    %v1849 = vrot.slane %v1621, 1
    %v1850 = vsel %vm1701, %v1847, %v1849
    %v1851 = vrot.slane %v1622, 1
    %v1852 = vsel %vm1701, %v1849, %v1851
    %v1853 = vrot.slane %v1623, 1
    %v1854 = vsel %vm1701, %v1851, %v1853
    %v1932 = vmax.f32 %v1547, %v1704
    %v1933 = vmax.f32 %v1548, %v1706
    %v1934 = vmax.f32 %v1549, %v1708
    %v1935 = vmax.f32 %v1550, %v1710
    %v1936 = vmax.f32 %v1551, %v1712
    %v1937 = vmax.f32 %v1552, %v1714
    %v1938 = vmax.f32 %v1553, %v1716
    %v1939 = vmax.f32 %v1554, %v1718
    %v1940 = vmax.f32 %v1555, %v1720
    %v1941 = vmax.f32 %v1556, %v1722
    %v1942 = vmax.f32 %v1557, %v1724
    %v1943 = vmax.f32 %v1558, %v1726
    %v1944 = vmax.f32 %v1559, %v1728
    %v1945 = vmax.f32 %v1560, %v1730
    %v1946 = vmax.f32 %v1561, %v1732
    %v1947 = vmax.f32 %v1562, %v1734
    %v1948 = vmax.f32 %v1563, %v1736
    %v1949 = vmax.f32 %v1564, %v1738
    %v1950 = vmax.f32 %v1565, %v1740
    %v1951 = vmax.f32 %v1566, %v1742
    %v1952 = vmax.f32 %v1567, %v1744
    %v1953 = vmax.f32 %v1568, %v1746
    %v1954 = vmax.f32 %v1569, %v1748
    %v1955 = vmax.f32 %v1570, %v1750
    %v1956 = vmax.f32 %v1571, %v1752
    %v1957 = vmax.f32 %v1572, %v1754
    %v1958 = vmax.f32 %v1573, %v1756
    %v1959 = vmax.f32 %v1574, %v1758
    %v1960 = vmax.f32 %v1575, %v1760
    %v1961 = vmax.f32 %v1576, %v1762
    %v1962 = vmax.f32 %v1577, %v1764
    %v1963 = vmax.f32 %v1578, %v1766
    %v1964 = vmax.f32 %v1579, %v1768
    %v1965 = vmax.f32 %v1580, %v1770
    %v1966 = vmax.f32 %v1581, %v1772
    %v1967 = vmax.f32 %v1582, %v1774
    %v1968 = vmax.f32 %v1583, %v1776
    %v1969 = vmax.f32 %v1584, %v1778
    %v1970 = vmax.f32 %v1585, %v1780
    %v1971 = vmax.f32 %v1586, %v1782
    %v1972 = vmax.f32 %v1587, %v1784
    %v1973 = vmax.f32 %v1588, %v1786
    %v1974 = vmax.f32 %v1589, %v1788
    %v1975 = vmax.f32 %v1590, %v1790
    %v1976 = vmax.f32 %v1591, %v1792
    %v1977 = vmax.f32 %v1592, %v1794
    %v1978 = vmax.f32 %v1593, %v1796
    %v1979 = vmax.f32 %v1594, %v1798
    %v1980 = vmax.f32 %v1595, %v1800
    %v1981 = vmax.f32 %v1596, %v1802
    %v1982 = vmax.f32 %v1597, %v1804
    %v1983 = vmax.f32 %v1598, %v1806
    %v1984 = vmax.f32 %v1599, %v1808
    %v1985 = vmax.f32 %v1600, %v1810
    %v1986 = vmax.f32 %v1601, %v1812
    %v1987 = vmax.f32 %v1602, %v1814
    %v1988 = vmax.f32 %v1603, %v1816
    %v1989 = vmax.f32 %v1604, %v1818
    %v1990 = vmax.f32 %v1605, %v1820
    %v1991 = vmax.f32 %v1606, %v1822
    %v1992 = vmax.f32 %v1607, %v1824
    %v1993 = vmax.f32 %v1608, %v1826
    %v1994 = vmax.f32 %v1609, %v1828
    %v1995 = vmax.f32 %v1610, %v1830
    %v1996 = vmax.f32 %v1611, %v1832
    %v1997 = vmax.f32 %v1612, %v1834
    %v1998 = vmax.f32 %v1613, %v1836
    %v1999 = vmax.f32 %v1614, %v1838
    %v2000 = vmax.f32 %v1615, %v1840
    %v2001 = vmax.f32 %v1616, %v1842
    %v2002 = vmax.f32 %v1617, %v1844
    %v2003 = vmax.f32 %v1618, %v1846
    %v2004 = vmax.f32 %v1619, %v1848
    %v2005 = vmax.f32 %v1620, %v1850
    %v2006 = vmax.f32 %v1621, %v1852
    %v2007 = vmax.f32 %v1622, %v1854
    %v2008 = vmax.f32 %v1623, %v1853
    %vm2084 = vcmask 1045504
    %v2085 = vrot.slane %v1934, 2
    %v2086 = vrot.slane %v1935, 2
    %v2087 = vsel %vm2084, %v2085, %v2086
    %v2088 = vrot.slane %v1936, 2
    %v2089 = vsel %vm2084, %v2086, %v2088
    %v2090 = vrot.slane %v1937, 2
    %v2091 = vsel %vm2084, %v2088, %v2090
    %v2092 = vrot.slane %v1938, 2
    %v2093 = vsel %vm2084, %v2090, %v2092
    %v2094 = vrot.slane %v1939, 2
    %v2095 = vsel %vm2084, %v2092, %v2094
    %v2096 = vrot.slane %v1940, 2
    %v2097 = vsel %vm2084, %v2094, %v2096
    %v2098 = vrot.slane %v1941, 2
    %v2099 = vsel %vm2084, %v2096, %v2098
    %v2100 = vrot.slane %v1942, 2
    %v2101 = vsel %vm2084, %v2098, %v2100
    %v2102 = vrot.slane %v1943, 2
    %v2103 = vsel %vm2084, %v2100, %v2102
    %v2104 = vrot.slane %v1944, 2
    %v2105 = vsel %vm2084, %v2102, %v2104
    %v2106 = vrot.slane %v1945, 2
    %v2107 = vsel %vm2084, %v2104, %v2106
    %v2108 = vrot.slane %v1946, 2
    %v2109 = vsel %vm2084, %v2106, %v2108
    %v2110 = vrot.slane %v1947, 2
    %v2111 = vsel %vm2084, %v2108, %v2110
    %v2112 = vrot.slane %v1948, 2
    %v2113 = vsel %vm2084, %v2110, %v2112
    %v2114 = vrot.slane %v1949, 2
    %v2115 = vsel %vm2084, %v2112, %v2114
    %v2116 = vrot.slane %v1950, 2
    %v2117 = vsel %vm2084, %v2114, %v2116
    %v2118 = vrot.slane %v1951, 2
    %v2119 = vsel %vm2084, %v2116, %v2118
    %v2120 = vrot.slane %v1952, 2
    %v2121 = vsel %vm2084, %v2118, %v2120
    %v2122 = vrot.slane %v1953, 2
    %v2123 = vsel %vm2084, %v2120, %v2122
    %v2124 = vrot.slane %v1954, 2
    %v2125 = vsel %vm2084, %v2122, %v2124
    %v2126 = vrot.slane %v1955, 2
    %v2127 = vsel %vm2084, %v2124, %v2126
    %v2128 = vrot.slane %v1956, 2
    %v2129 = vsel %vm2084, %v2126, %v2128
    %v2130 = vrot.slane %v1957, 2
    %v2131 = vsel %vm2084, %v2128, %v2130
    %v2132 = vrot.slane %v1958, 2
    %v2133 = vsel %vm2084, %v2130, %v2132
    %v2134 = vrot.slane %v1959, 2
    %v2135 = vsel %vm2084, %v2132, %v2134
    %v2136 = vrot.slane %v1960, 2
    %v2137 = vsel %vm2084, %v2134, %v2136
    %v2138 = vrot.slane %v1961, 2
    %v2139 = vsel %vm2084, %v2136, %v2138
    %v2140 = vrot.slane %v1962, 2
    %v2141 = vsel %vm2084, %v2138, %v2140
    %v2142 = vrot.slane %v1963, 2
    %v2143 = vsel %vm2084, %v2140, %v2142
    %v2144 = vrot.slane %v1964, 2
    %v2145 = vsel %vm2084, %v2142, %v2144
    %v2146 = vrot.slane %v1965, 2
    %v2147 = vsel %vm2084, %v2144, %v2146
    %v2148 = vrot.slane %v1966, 2
    %v2149 = vsel %vm2084, %v2146, %v2148
    %v2150 = vrot.slane %v1967, 2
    %v2151 = vsel %vm2084, %v2148, %v2150
    %v2152 = vrot.slane %v1968, 2
    %v2153 = vsel %vm2084, %v2150, %v2152
    %v2154 = vrot.slane %v1969, 2
    %v2155 = vsel %vm2084, %v2152, %v2154
    %v2156 = vrot.slane %v1970, 2
    %v2157 = vsel %vm2084, %v2154, %v2156
    %v2158 = vrot.slane %v1971, 2
    %v2159 = vsel %vm2084, %v2156, %v2158
    %v2160 = vrot.slane %v1972, 2
    %v2161 = vsel %vm2084, %v2158, %v2160
    %v2162 = vrot.slane %v1973, 2
    %v2163 = vsel %vm2084, %v2160, %v2162
    %v2164 = vrot.slane %v1974, 2
    %v2165 = vsel %vm2084, %v2162, %v2164
    %v2166 = vrot.slane %v1975, 2
    %v2167 = vsel %vm2084, %v2164, %v2166
    %v2168 = vrot.slane %v1976, 2
    %v2169 = vsel %vm2084, %v2166, %v2168
    %v2170 = vrot.slane %v1977, 2
    %v2171 = vsel %vm2084, %v2168, %v2170
    %v2172 = vrot.slane %v1978, 2
    %v2173 = vsel %vm2084, %v2170, %v2172
    %v2174 = vrot.slane %v1979, 2
    %v2175 = vsel %vm2084, %v2172, %v2174
    %v2176 = vrot.slane %v1980, 2
    %v2177 = vsel %vm2084, %v2174, %v2176
    %v2178 = vrot.slane %v1981, 2
    %v2179 = vsel %vm2084, %v2176, %v2178
    %v2180 = vrot.slane %v1982, 2
    %v2181 = vsel %vm2084, %v2178, %v2180
    %v2182 = vrot.slane %v1983, 2
    %v2183 = vsel %vm2084, %v2180, %v2182
    %v2184 = vrot.slane %v1984, 2
    %v2185 = vsel %vm2084, %v2182, %v2184
    %v2186 = vrot.slane %v1985, 2
    %v2187 = vsel %vm2084, %v2184, %v2186
    %v2188 = vrot.slane %v1986, 2
    %v2189 = vsel %vm2084, %v2186, %v2188
    %v2190 = vrot.slane %v1987, 2
    %v2191 = vsel %vm2084, %v2188, %v2190
    %v2192 = vrot.slane %v1988, 2
    %v2193 = vsel %vm2084, %v2190, %v2192
    %v2194 = vrot.slane %v1989, 2
    %v2195 = vsel %vm2084, %v2192, %v2194
    %v2196 = vrot.slane %v1990, 2
    %v2197 = vsel %vm2084, %v2194, %v2196
    %v2198 = vrot.slane %v1991, 2
    %v2199 = vsel %vm2084, %v2196, %v2198
    %v2200 = vrot.slane %v1992, 2
    %v2201 = vsel %vm2084, %v2198, %v2200
    %v2202 = vrot.slane %v1993, 2
    %v2203 = vsel %vm2084, %v2200, %v2202
    %v2204 = vrot.slane %v1994, 2
    %v2205 = vsel %vm2084, %v2202, %v2204
    %v2206 = vrot.slane %v1995, 2
    %v2207 = vsel %vm2084, %v2204, %v2206
    %v2208 = vrot.slane %v1996, 2
    %v2209 = vsel %vm2084, %v2206, %v2208
    %v2210 = vrot.slane %v1997, 2
    %v2211 = vsel %vm2084, %v2208, %v2210
    %v2212 = vrot.slane %v1998, 2
    %v2213 = vsel %vm2084, %v2210, %v2212
    %v2214 = vrot.slane %v1999, 2
    %v2215 = vsel %vm2084, %v2212, %v2214
    %v2216 = vrot.slane %v2000, 2
    %v2217 = vsel %vm2084, %v2214, %v2216
    %v2218 = vrot.slane %v2001, 2
    %v2219 = vsel %vm2084, %v2216, %v2218
    %v2220 = vrot.slane %v2002, 2
    %v2221 = vsel %vm2084, %v2218, %v2220
    %v2222 = vrot.slane %v2003, 2
    %v2223 = vsel %vm2084, %v2220, %v2222
    %v2224 = vrot.slane %v2004, 2
    %v2225 = vsel %vm2084, %v2222, %v2224
    %v2226 = vrot.slane %v2005, 2
    %v2227 = vsel %vm2084, %v2224, %v2226
    %v2228 = vrot.slane %v2006, 2
    %v2229 = vsel %vm2084, %v2226, %v2228
    %v2230 = vrot.slane %v2007, 2
    %v2231 = vsel %vm2084, %v2228, %v2230
    %v2232 = vrot.slane %v2008, 2
    %v2233 = vsel %vm2084, %v2230, %v2232
    %v2308 = vmax.f32 %v1932, %v2087
    %v2309 = vmax.f32 %v1933, %v2089
    %v2310 = vmax.f32 %v1934, %v2091
    %v2311 = vmax.f32 %v1935, %v2093
    %v2312 = vmax.f32 %v1936, %v2095
    %v2313 = vmax.f32 %v1937, %v2097
    %v2314 = vmax.f32 %v1938, %v2099
    %v2315 = vmax.f32 %v1939, %v2101
    %v2316 = vmax.f32 %v1940, %v2103
    %v2317 = vmax.f32 %v1941, %v2105
    %v2318 = vmax.f32 %v1942, %v2107
    %v2319 = vmax.f32 %v1943, %v2109
    %v2320 = vmax.f32 %v1944, %v2111
    %v2321 = vmax.f32 %v1945, %v2113
    %v2322 = vmax.f32 %v1946, %v2115
    %v2323 = vmax.f32 %v1947, %v2117
    %v2324 = vmax.f32 %v1948, %v2119
    %v2325 = vmax.f32 %v1949, %v2121
    %v2326 = vmax.f32 %v1950, %v2123
    %v2327 = vmax.f32 %v1951, %v2125
    %v2328 = vmax.f32 %v1952, %v2127
    %v2329 = vmax.f32 %v1953, %v2129
    %v2330 = vmax.f32 %v1954, %v2131
    %v2331 = vmax.f32 %v1955, %v2133
    %v2332 = vmax.f32 %v1956, %v2135
    %v2333 = vmax.f32 %v1957, %v2137
    %v2334 = vmax.f32 %v1958, %v2139
    %v2335 = vmax.f32 %v1959, %v2141
    %v2336 = vmax.f32 %v1960, %v2143
    %v2337 = vmax.f32 %v1961, %v2145
    %v2338 = vmax.f32 %v1962, %v2147
    %v2339 = vmax.f32 %v1963, %v2149
    %v2340 = vmax.f32 %v1964, %v2151
    %v2341 = vmax.f32 %v1965, %v2153
    %v2342 = vmax.f32 %v1966, %v2155
    %v2343 = vmax.f32 %v1967, %v2157
    %v2344 = vmax.f32 %v1968, %v2159
    %v2345 = vmax.f32 %v1969, %v2161
    %v2346 = vmax.f32 %v1970, %v2163
    %v2347 = vmax.f32 %v1971, %v2165
    %v2348 = vmax.f32 %v1972, %v2167
    %v2349 = vmax.f32 %v1973, %v2169
    %v2350 = vmax.f32 %v1974, %v2171
    %v2351 = vmax.f32 %v1975, %v2173
    %v2352 = vmax.f32 %v1976, %v2175
    %v2353 = vmax.f32 %v1977, %v2177
    %v2354 = vmax.f32 %v1978, %v2179
    %v2355 = vmax.f32 %v1979, %v2181
    %v2356 = vmax.f32 %v1980, %v2183
    %v2357 = vmax.f32 %v1981, %v2185
    %v2358 = vmax.f32 %v1982, %v2187
    %v2359 = vmax.f32 %v1983, %v2189
    %v2360 = vmax.f32 %v1984, %v2191
    %v2361 = vmax.f32 %v1985, %v2193
    %v2362 = vmax.f32 %v1986, %v2195
    %v2363 = vmax.f32 %v1987, %v2197
    %v2364 = vmax.f32 %v1988, %v2199
    %v2365 = vmax.f32 %v1989, %v2201
    %v2366 = vmax.f32 %v1990, %v2203
    %v2367 = vmax.f32 %v1991, %v2205
    %v2368 = vmax.f32 %v1992, %v2207
    %v2369 = vmax.f32 %v1993, %v2209
    %v2370 = vmax.f32 %v1994, %v2211
    %v2371 = vmax.f32 %v1995, %v2213
    %v2372 = vmax.f32 %v1996, %v2215
    %v2373 = vmax.f32 %v1997, %v2217
    %v2374 = vmax.f32 %v1998, %v2219
    %v2375 = vmax.f32 %v1999, %v2221
    %v2376 = vmax.f32 %v2000, %v2223
    %v2377 = vmax.f32 %v2001, %v2225
    %v2378 = vmax.f32 %v2002, %v2227
    %v2379 = vmax.f32 %v2003, %v2229
    %v2380 = vmax.f32 %v2004, %v2231
    %v2381 = vmax.f32 %v2005, %v2233
    %v2382 = vld [vmem:[%s6] sm:$0xff]
    %v2383 = vld [vmem:[%s6 + $0x8] sm:$0xff]
    %v2384 = vld [vmem:[%s6 + $0x10] sm:$0xf]
    %v2385 = vld [vmem:[%s6 + $0x14] sm:$0xff]
    %v2386 = vld [vmem:[%s6 + $0x1c] sm:$0xff]
    %v2387 = vld [vmem:[%s6 + $0x24] sm:$0xf]
    %v2388 = vld [vmem:[%s6 + $0x28] sm:$0xff]
    %v2389 = vld [vmem:[%s6 + $0x30] sm:$0xff]
    %v2390 = vld [vmem:[%s6 + $0x38] sm:$0xf]
    %v2391 = vld [vmem:[%s6 + $0x3c] sm:$0xff]
    %v2392 = vld [vmem:[%s6 + $0x44] sm:$0xff]
    %v2393 = vld [vmem:[%s6 + $0x4c] sm:$0xf]
    %v2394 = vld [vmem:[%s6 + $0x50] sm:$0xff]
    %v2395 = vld [vmem:[%s6 + $0x58] sm:$0xff]
    %v2396 = vld [vmem:[%s6 + $0x60] sm:$0xf]
    %v2397 = vld [vmem:[%s6 + $0x64] sm:$0xff]
    %v2398 = vld [vmem:[%s6 + $0x6c] sm:$0xff]
    %v2399 = vld [vmem:[%s6 + $0x74] sm:$0xf]
    %v2400 = vld [vmem:[%s6 + $0x78] sm:$0xff]
    %v2401 = vld [vmem:[%s6 + $0x80] sm:$0xff]
    %v2402 = vld [vmem:[%s6 + $0x88] sm:$0xf]
    %v2403 = vld [vmem:[%s6 + $0x8c] sm:$0xff]
    %v2404 = vld [vmem:[%s6 + $0x94] sm:$0xff]
    %v2405 = vld [vmem:[%s6 + $0x9c] sm:$0xf]
    %v2406 = vld [vmem:[%s6 + $0xa0] sm:$0xff]
    %v2407 = vld [vmem:[%s6 + $0xa8] sm:$0xff]
    %v2408 = vld [vmem:[%s6 + $0xb0] sm:$0xf]
    %v2409 = vld [vmem:[%s6 + $0xb4] sm:$0xff]
    %v2410 = vld [vmem:[%s6 + $0xbc] sm:$0xff]
    %v2411 = vld [vmem:[%s6 + $0xc4] sm:$0xf]
    %v2412 = vld [vmem:[%s6 + $0xc8] sm:$0xff]
    %v2413 = vld [vmem:[%s6 + $0xd0] sm:$0xff]
    %v2414 = vld [vmem:[%s6 + $0xd8] sm:$0xf]
    %v2415 = vld [vmem:[%s6 + $0xdc] sm:$0xff]
    %v2416 = vld [vmem:[%s6 + $0xe4] sm:$0xff]
    %v2417 = vld [vmem:[%s6 + $0xec] sm:$0xf]
    %v2418 = vld [vmem:[%s6 + $0xf0] sm:$0xff]
    %v2419 = vld [vmem:[%s6 + $0xf8] sm:$0xff]
    %v2420 = vld [vmem:[%s6 + $0x100] sm:$0xf]
    %v2421 = vld [vmem:[%s6 + $0x104] sm:$0xff]
    %v2422 = vld [vmem:[%s6 + $0x10c] sm:$0xff]
    %v2423 = vld [vmem:[%s6 + $0x114] sm:$0xf]
    %v2424 = vld [vmem:[%s6 + $0x118] sm:$0xff]
    %v2425 = vld [vmem:[%s6 + $0x120] sm:$0xff]
    %v2426 = vld [vmem:[%s6 + $0x128] sm:$0xf]
    %v2427 = vld [vmem:[%s6 + $0x12c] sm:$0xff]
    %v2428 = vld [vmem:[%s6 + $0x134] sm:$0xff]
    %v2429 = vld [vmem:[%s6 + $0x13c] sm:$0xf]
    %v2430 = vld [vmem:[%s6 + $0x140] sm:$0xff]
    %v2431 = vld [vmem:[%s6 + $0x148] sm:$0xff]
    %v2432 = vld [vmem:[%s6 + $0x150] sm:$0xf]
    %v2433 = vld [vmem:[%s6 + $0x154] sm:$0xff]
    %v2434 = vld [vmem:[%s6 + $0x15c] sm:$0xff]
    %v2435 = vld [vmem:[%s6 + $0x164] sm:$0xf]
    %v2436 = vld [vmem:[%s6 + $0x168] sm:$0xff]
    %v2437 = vld [vmem:[%s6 + $0x170] sm:$0xff]
    %v2438 = vld [vmem:[%s6 + $0x178] sm:$0xf]
    %v2439 = vld [vmem:[%s6 + $0x17c] sm:$0xff]
    %v2440 = vld [vmem:[%s6 + $0x184] sm:$0xff]
    %v2441 = vld [vmem:[%s6 + $0x18c] sm:$0xf]
    %v2442 = vld [vmem:[%s6 + $0x190] sm:$0xff]
    %v2443 = vld [vmem:[%s6 + $0x198] sm:$0xff]
    %v2444 = vld [vmem:[%s6 + $0x1a0] sm:$0xf]
    %v2445 = vld [vmem:[%s6 + $0x1a4] sm:$0xff]
    %v2446 = vld [vmem:[%s6 + $0x1ac] sm:$0xff]
    %v2447 = vld [vmem:[%s6 + $0x1b4] sm:$0xf]
    %v2448 = vld [vmem:[%s6 + $0x1b8] sm:$0xff]
    %v2449 = vld [vmem:[%s6 + $0x1c0] sm:$0xff]
    %v2450 = vld [vmem:[%s6 + $0x1c8] sm:$0xf]
    %v2451 = vld [vmem:[%s6 + $0x1cc] sm:$0xff]
    %v2452 = vld [vmem:[%s6 + $0x1d4] sm:$0xff]
    %v2453 = vld [vmem:[%s6 + $0x1dc] sm:$0xf]
    %v2454 = vld [vmem:[%s6 + $0x1e0] sm:$0xff]
    %v2455 = vld [vmem:[%s6 + $0x1e8] sm:$0xff]
    %v2456 = vld [vmem:[%s6 + $0x1f0] sm:$0xf]
    %v2457 = vunpack.c.l.bf16 %v2382
    %v2458 = vunpack.c.h.bf16 %v2382
    %v2459 = vunpack.c.l.bf16 %v2383
    %v2460 = vunpack.c.h.bf16 %v2383
    %v2461 = vunpack.c.l.bf16 %v2384
    %v2462 = vunpack.c.l.bf16 %v2385
    %v2463 = vunpack.c.h.bf16 %v2385
    %v2464 = vunpack.c.l.bf16 %v2386
    %v2465 = vunpack.c.h.bf16 %v2386
    %v2466 = vunpack.c.l.bf16 %v2387
    %v2467 = vunpack.c.l.bf16 %v2388
    %v2468 = vunpack.c.h.bf16 %v2388
    %v2469 = vunpack.c.l.bf16 %v2389
    %v2470 = vunpack.c.h.bf16 %v2389
    %v2471 = vunpack.c.l.bf16 %v2390
    %v2472 = vunpack.c.l.bf16 %v2391
    %v2473 = vunpack.c.h.bf16 %v2391
    %v2474 = vunpack.c.l.bf16 %v2392
    %v2475 = vunpack.c.h.bf16 %v2392
    %v2476 = vunpack.c.l.bf16 %v2393
    %v2477 = vunpack.c.l.bf16 %v2394
    %v2478 = vunpack.c.h.bf16 %v2394
    %v2479 = vunpack.c.l.bf16 %v2395
    %v2480 = vunpack.c.h.bf16 %v2395
    %v2481 = vunpack.c.l.bf16 %v2396
    %v2482 = vunpack.c.l.bf16 %v2397
    %v2483 = vunpack.c.h.bf16 %v2397
    %v2484 = vunpack.c.l.bf16 %v2398
    %v2485 = vunpack.c.h.bf16 %v2398
    %v2486 = vunpack.c.l.bf16 %v2399
    %v2487 = vunpack.c.l.bf16 %v2400
    %v2488 = vunpack.c.h.bf16 %v2400
    %v2489 = vunpack.c.l.bf16 %v2401
    %v2490 = vunpack.c.h.bf16 %v2401
    %v2491 = vunpack.c.l.bf16 %v2402
    %v2492 = vunpack.c.l.bf16 %v2403
    %v2493 = vunpack.c.h.bf16 %v2403
    %v2494 = vunpack.c.l.bf16 %v2404
    %v2495 = vunpack.c.h.bf16 %v2404
    %v2496 = vunpack.c.l.bf16 %v2405
    %v2497 = vunpack.c.l.bf16 %v2406
    %v2498 = vunpack.c.h.bf16 %v2406
    %v2499 = vunpack.c.l.bf16 %v2407
    %v2500 = vunpack.c.h.bf16 %v2407
    %v2501 = vunpack.c.l.bf16 %v2408
    %v2502 = vunpack.c.l.bf16 %v2409
    %v2503 = vunpack.c.h.bf16 %v2409
    %v2504 = vunpack.c.l.bf16 %v2410
    %v2505 = vunpack.c.h.bf16 %v2410
    %v2506 = vunpack.c.l.bf16 %v2411
    %v2507 = vunpack.c.l.bf16 %v2412
    %v2508 = vunpack.c.h.bf16 %v2412
    %v2509 = vunpack.c.l.bf16 %v2413
    %v2510 = vunpack.c.h.bf16 %v2413
    %v2511 = vunpack.c.l.bf16 %v2414
    %v2512 = vunpack.c.l.bf16 %v2415
    %v2513 = vunpack.c.h.bf16 %v2415
    %v2514 = vunpack.c.l.bf16 %v2416
    %v2515 = vunpack.c.h.bf16 %v2416
    %v2516 = vunpack.c.l.bf16 %v2417
    %v2517 = vunpack.c.l.bf16 %v2418
    %v2518 = vunpack.c.h.bf16 %v2418
    %v2519 = vunpack.c.l.bf16 %v2419
    %v2520 = vunpack.c.h.bf16 %v2419
    %v2521 = vunpack.c.l.bf16 %v2420
    %v2522 = vunpack.c.l.bf16 %v2421
    %v2523 = vunpack.c.h.bf16 %v2421
    %v2524 = vunpack.c.l.bf16 %v2422
    %v2525 = vunpack.c.h.bf16 %v2422
    %v2526 = vunpack.c.l.bf16 %v2423
    %v2527 = vunpack.c.l.bf16 %v2424
    %v2528 = vunpack.c.h.bf16 %v2424
    %v2529 = vunpack.c.l.bf16 %v2425
    %v2530 = vunpack.c.h.bf16 %v2425
    %v2531 = vunpack.c.l.bf16 %v2426
    %v2532 = vunpack.c.l.bf16 %v2427
    %v2533 = vunpack.c.h.bf16 %v2427
    %v2534 = vunpack.c.l.bf16 %v2428
    %v2535 = vunpack.c.h.bf16 %v2428
    %v2536 = vunpack.c.l.bf16 %v2429
    %v2537 = vunpack.c.l.bf16 %v2430
    %v2538 = vunpack.c.h.bf16 %v2430
    %v2539 = vunpack.c.l.bf16 %v2431
    %v2540 = vunpack.c.h.bf16 %v2431
    %v2541 = vunpack.c.l.bf16 %v2432
    %v2542 = vunpack.c.l.bf16 %v2433
    %v2543 = vunpack.c.h.bf16 %v2433
    %v2544 = vunpack.c.l.bf16 %v2434
    %v2545 = vunpack.c.h.bf16 %v2434
    %v2546 = vunpack.c.l.bf16 %v2435
    %v2547 = vunpack.c.l.bf16 %v2436
    %v2548 = vunpack.c.h.bf16 %v2436
    %v2549 = vunpack.c.l.bf16 %v2437
    %v2550 = vunpack.c.h.bf16 %v2437
    %v2551 = vunpack.c.l.bf16 %v2438
    %v2552 = vunpack.c.l.bf16 %v2439
    %v2553 = vunpack.c.h.bf16 %v2439
    %v2554 = vunpack.c.l.bf16 %v2440
    %v2555 = vunpack.c.h.bf16 %v2440
    %v2556 = vunpack.c.l.bf16 %v2441
    %v2557 = vunpack.c.l.bf16 %v2442
    %v2558 = vunpack.c.h.bf16 %v2442
    %v2559 = vunpack.c.l.bf16 %v2443
    %v2560 = vunpack.c.h.bf16 %v2443
    %v2561 = vunpack.c.l.bf16 %v2444
    %v2562 = vunpack.c.l.bf16 %v2445
    %v2563 = vunpack.c.h.bf16 %v2445
    %v2564 = vunpack.c.l.bf16 %v2446
    %v2565 = vunpack.c.h.bf16 %v2446
    %v2566 = vunpack.c.l.bf16 %v2447
    %v2567 = vunpack.c.l.bf16 %v2448
    %v2568 = vunpack.c.h.bf16 %v2448
    %v2569 = vunpack.c.l.bf16 %v2449
    %v2570 = vunpack.c.h.bf16 %v2449
    %v2571 = vunpack.c.l.bf16 %v2450
    %v2572 = vunpack.c.l.bf16 %v2451
    %v2573 = vunpack.c.h.bf16 %v2451
    %v2574 = vunpack.c.l.bf16 %v2452
    %v2575 = vunpack.c.h.bf16 %v2452
    %v2576 = vunpack.c.l.bf16 %v2453
    %v2577 = vunpack.c.l.bf16 %v2454
    %v2578 = vunpack.c.h.bf16 %v2454
    %v2579 = vunpack.c.l.bf16 %v2455
    %v2580 = vunpack.c.h.bf16 %v2455
    %v2581 = vunpack.c.l.bf16 %v2456
    %vm2582 = vcmask 646144
    %v2584 = vsel %vm2582, %v2461, 0
    %v2587 = vsel %vm2582, %v2466, 0
    %v2590 = vsel %vm2582, %v2471, 0
    %v2593 = vsel %vm2582, %v2476, 0
    %v2596 = vsel %vm2582, %v2481, 0
    %v2599 = vsel %vm2582, %v2486, 0
    %v2602 = vsel %vm2582, %v2491, 0
    %v2605 = vsel %vm2582, %v2496, 0
    %v2608 = vsel %vm2582, %v2501, 0
    %v2611 = vsel %vm2582, %v2506, 0
    %v2614 = vsel %vm2582, %v2511, 0
    %v2617 = vsel %vm2582, %v2516, 0
    %v2620 = vsel %vm2582, %v2521, 0
    %v2623 = vsel %vm2582, %v2526, 0
    %v2626 = vsel %vm2582, %v2531, 0
    %v2629 = vsel %vm2582, %v2536, 0
    %v2632 = vsel %vm2582, %v2541, 0
    %v2635 = vsel %vm2582, %v2546, 0
    %v2638 = vsel %vm2582, %v2551, 0
    %v2641 = vsel %vm2582, %v2556, 0
    %v2644 = vsel %vm2582, %v2561, 0
    %v2647 = vsel %vm2582, %v2566, 0
    %v2650 = vsel %vm2582, %v2571, 0
    %v2653 = vsel %vm2582, %v2576, 0
    %v2656 = vsel %vm2582, %v2581, 0
    %v2659 = vsel %vm1701, %v2381, 0
    %2661 = vmatprep.subr.mxu0 0.0
    %2662 = vmatpush1.msra.mxu0 %v2323
    %2663 = vmatprep.subr.mxu0 0.0
    %2664 = vmatpush1.msra.mxu0 %v2322
    %2665 = vmatprep.subr.mxu0 0.0
    %2666 = vmatpush1.msra.mxu0 %v2321
    %2667 = vmatprep.subr.mxu0 0.0
    %2668 = vmatpush1.msra.mxu0 %v2320
    %2669 = vmatprep.subr.mxu0 0.0
    %2670 = vmatpush1.msra.mxu0 %v2319
    %2671 = vmatprep.subr.mxu0 0.0
    %2672 = vmatpush1.msra.mxu0 %v2318
    %2673 = vmatprep.subr.mxu0 0.0
    %2674 = vmatpush1.msra.mxu0 %v2317
    %2675 = vmatprep.subr.mxu0 0.0
    %2676 = vmatpush1.msra.mxu0 %v2316
    %2677 = vmatprep.subr.mxu0 0.0
    %2678 = vmatpush1.msra.mxu0 %v2315
    %2679 = vmatprep.subr.mxu0 0.0
    %2680 = vmatpush1.msra.mxu0 %v2314
    %2681 = vmatprep.subr.mxu0 0.0
    %2682 = vmatpush1.msra.mxu0 %v2313
    %2683 = vmatprep.subr.mxu0 0.0
    %2684 = vmatpush1.msra.mxu0 %v2312
    %2685 = vmatprep.subr.mxu0 0.0
    %2686 = vmatpush1.msra.mxu0 %v2311
    %2687 = vmatprep.subr.mxu0 0.0
    %2688 = vmatpush1.msra.mxu0 %v2310
    %2689 = vmatprep.subr.mxu0 0.0
    %2690 = vmatpush1.msra.mxu0 %v2309
    %2691 = vmatprep.subr.mxu0 0.0
    %2692 = vmatpush1.msra.mxu0 %v2308
    %2693 = vmatprep.subr.mxu0 0.0
    %2694 = vmatpush2.msra.mxu0 %v2339
    %2695 = vmatprep.subr.mxu0 0.0
    %2696 = vmatpush2.msra.mxu0 %v2338
    %2697 = vmatprep.subr.mxu0 0.0
    %2698 = vmatpush2.msra.mxu0 %v2337
    %2699 = vmatprep.subr.mxu0 0.0
    %2700 = vmatpush2.msra.mxu0 %v2336
    %2701 = vmatprep.subr.mxu0 0.0
    %2702 = vmatpush2.msra.mxu0 %v2335
    %2703 = vmatprep.subr.mxu0 0.0
    %2704 = vmatpush2.msra.mxu0 %v2334
    %2705 = vmatprep.subr.mxu0 0.0
    %2706 = vmatpush2.msra.mxu0 %v2333
    %2707 = vmatprep.subr.mxu0 0.0
    %2708 = vmatpush2.msra.mxu0 %v2332
    %2709 = vmatprep.subr.mxu0 0.0
    %2710 = vmatpush2.msra.mxu0 %v2331
    %2711 = vmatprep.subr.mxu0 0.0
    %2712 = vmatpush2.msra.mxu0 %v2330
    %2713 = vmatprep.subr.mxu0 0.0
    %2714 = vmatpush2.msra.mxu0 %v2329
    %2715 = vmatprep.subr.mxu0 0.0
    %2716 = vmatpush2.msra.mxu0 %v2328
    %2717 = vmatprep.subr.mxu0 0.0
    %2718 = vmatpush2.msra.mxu0 %v2327
    %2719 = vmatprep.subr.mxu0 0.0
    %2720 = vmatpush2.msra.mxu0 %v2326
    %2721 = vmatprep.subr.mxu0 0.0
    %2722 = vmatpush2.msra.mxu0 %v2325
    %2723 = vmatprep.subr.mxu0 0.0
    %2724 = vmatpush2.msra.mxu0 %v2324
    %2725 = vmatprep.mubr.f32.mxu0 %v2458
    %2726 = vmatmul.mubr.f32.gmra.mxu0 %v2457
    %v2727 = vpop.f32.mrf.mxu0
    %v2728 = vadd.f32 0.0, %v2727
    %v2729 = vpop.f32.mrf.mxu0
    %2730 = vmatprep.mubr.f32.mxu0 %v2463
    %2731 = vmatmul.mubr.f32.gmra.mxu0 %v2462
    %v2732 = vpop.f32.mrf.mxu0
    %v2733 = vadd.f32 0.0, %v2732
    %v2734 = vpop.f32.mrf.mxu0
    %2735 = vmatprep.mubr.f32.mxu0 %v2468
    %2736 = vmatmul.mubr.f32.gmra.mxu0 %v2467
    %v2737 = vpop.f32.mrf.mxu0
    %v2738 = vadd.f32 0.0, %v2737
    %v2739 = vpop.f32.mrf.mxu0
    %2740 = vmatprep.mubr.f32.mxu0 %v2473
    %2741 = vmatmul.mubr.f32.gmra.mxu0 %v2472
    %v2742 = vpop.f32.mrf.mxu0
    %v2743 = vadd.f32 0.0, %v2742
    %v2744 = vpop.f32.mrf.mxu0
    %2745 = vmatprep.mubr.f32.mxu0 %v2478
    %2746 = vmatmul.mubr.f32.gmra.mxu0 %v2477
    %v2747 = vpop.f32.mrf.mxu0
    %v2748 = vadd.f32 0.0, %v2747
    %v2749 = vpop.f32.mrf.mxu0
    %2750 = vmatprep.mubr.f32.mxu0 %v2483
    %2751 = vmatmul.mubr.f32.gmra.mxu0 %v2482
    %v2752 = vpop.f32.mrf.mxu0
    %v2753 = vadd.f32 0.0, %v2752
    %v2754 = vpop.f32.mrf.mxu0
    %2755 = vmatprep.mubr.f32.mxu0 %v2488
    %2756 = vmatmul.mubr.f32.gmra.mxu0 %v2487
    %v2757 = vpop.f32.mrf.mxu0
    %v2758 = vadd.f32 0.0, %v2757
    %v2759 = vpop.f32.mrf.mxu0
    %2760 = vmatprep.mubr.f32.mxu0 %v2493
    %2761 = vmatmul.mubr.f32.gmra.mxu0 %v2492
    %v2762 = vpop.f32.mrf.mxu0
    %v2763 = vadd.f32 0.0, %v2762
    %v2764 = vpop.f32.mrf.mxu0
    %2765 = vmatprep.mubr.f32.mxu0 %v2498
    %2766 = vmatmul.mubr.f32.gmra.mxu0 %v2497
    %v2767 = vpop.f32.mrf.mxu0
    %v2768 = vadd.f32 0.0, %v2767
    %v2769 = vpop.f32.mrf.mxu0
    %2770 = vmatprep.mubr.f32.mxu0 %v2503
    %2771 = vmatmul.mubr.f32.gmra.mxu0 %v2502
    %v2772 = vpop.f32.mrf.mxu0
    %v2773 = vadd.f32 0.0, %v2772
    %v2774 = vpop.f32.mrf.mxu0
    %2775 = vmatprep.mubr.f32.mxu0 %v2508
    %2776 = vmatmul.mubr.f32.gmra.mxu0 %v2507
    %v2777 = vpop.f32.mrf.mxu0
    %v2778 = vadd.f32 0.0, %v2777
    %v2779 = vpop.f32.mrf.mxu0
    %2780 = vmatprep.mubr.f32.mxu0 %v2513
    %2781 = vmatmul.mubr.f32.gmra.mxu0 %v2512
    %v2782 = vpop.f32.mrf.mxu0
    %v2783 = vadd.f32 0.0, %v2782
    %v2784 = vpop.f32.mrf.mxu0
    %2785 = vmatprep.mubr.f32.mxu0 %v2518
    %2786 = vmatmul.mubr.f32.gmra.mxu0 %v2517
    %v2787 = vpop.f32.mrf.mxu0
    %v2788 = vadd.f32 0.0, %v2787
    %v2789 = vpop.f32.mrf.mxu0
    %2790 = vmatprep.mubr.f32.mxu0 %v2523
    %2791 = vmatmul.mubr.f32.gmra.mxu0 %v2522
    %v2792 = vpop.f32.mrf.mxu0
    %v2793 = vadd.f32 0.0, %v2792
    %v2794 = vpop.f32.mrf.mxu0
    %2795 = vmatprep.mubr.f32.mxu0 %v2528
    %2796 = vmatmul.mubr.f32.gmra.mxu0 %v2527
    %v2797 = vpop.f32.mrf.mxu0
    %v2798 = vadd.f32 0.0, %v2797
    %v2799 = vpop.f32.mrf.mxu0
    %2800 = vmatprep.mubr.f32.mxu0 %v2533
    %2801 = vmatmul.mubr.f32.gmra.mxu0 %v2532
    %v2802 = vpop.f32.mrf.mxu0
    %v2803 = vadd.f32 0.0, %v2802
    %v2804 = vpop.f32.mrf.mxu0
    %2805 = vmatprep.mubr.f32.mxu0 %v2538
    %2806 = vmatmul.mubr.f32.gmra.mxu0 %v2537
    %v2807 = vpop.f32.mrf.mxu0
    %v2808 = vadd.f32 0.0, %v2807
    %v2809 = vpop.f32.mrf.mxu0
    %2810 = vmatprep.mubr.f32.mxu0 %v2543
    %2811 = vmatmul.mubr.f32.gmra.mxu0 %v2542
    %v2812 = vpop.f32.mrf.mxu0
    %v2813 = vadd.f32 0.0, %v2812
    %v2814 = vpop.f32.mrf.mxu0
    %2815 = vmatprep.mubr.f32.mxu0 %v2548
    %2816 = vmatmul.mubr.f32.gmra.mxu0 %v2547
    %v2817 = vpop.f32.mrf.mxu0
    %v2818 = vadd.f32 0.0, %v2817
    %v2819 = vpop.f32.mrf.mxu0
    %2820 = vmatprep.mubr.f32.mxu0 %v2553
    %2821 = vmatmul.mubr.f32.gmra.mxu0 %v2552
    %v2822 = vpop.f32.mrf.mxu0
    %v2823 = vadd.f32 0.0, %v2822
    %v2824 = vpop.f32.mrf.mxu0
    %2825 = vmatprep.mubr.f32.mxu0 %v2558
    %2826 = vmatmul.mubr.f32.gmra.mxu0 %v2557
    %v2827 = vpop.f32.mrf.mxu0
    %v2828 = vadd.f32 0.0, %v2827
    %v2829 = vpop.f32.mrf.mxu0
    %2830 = vmatprep.mubr.f32.mxu0 %v2563
    %2831 = vmatmul.mubr.f32.gmra.mxu0 %v2562
    %v2832 = vpop.f32.mrf.mxu0
    %v2833 = vadd.f32 0.0, %v2832
    %v2834 = vpop.f32.mrf.mxu0
    %2835 = vmatprep.mubr.f32.mxu0 %v2568
    %2836 = vmatmul.mubr.f32.gmra.mxu0 %v2567
    %v2837 = vpop.f32.mrf.mxu0
    %v2838 = vadd.f32 0.0, %v2837
    %v2839 = vpop.f32.mrf.mxu0
    %2840 = vmatprep.mubr.f32.mxu0 %v2573
    %2841 = vmatmul.mubr.f32.gmra.mxu0 %v2572
    %v2842 = vpop.f32.mrf.mxu0
    %v2843 = vadd.f32 0.0, %v2842
    %v2844 = vpop.f32.mrf.mxu0
    %2845 = vmatprep.mubr.f32.mxu0 %v2578
    %2846 = vmatmul.mubr.f32.gmra.mxu0 %v2577
    %v2847 = vpop.f32.mrf.mxu0
    %v2848 = vadd.f32 0.0, %v2847
    %v2849 = vpop.f32.mrf.mxu0
    %2850 = vdwg.mxu0
    %2851 = vmatprep.subr.mxu0 0.0
    %2852 = vmatpush1.msra.mxu0 %v2355
    %2853 = vmatprep.subr.mxu0 0.0
    %2854 = vmatpush1.msra.mxu0 %v2354
    %2855 = vmatprep.subr.mxu0 0.0
    %2856 = vmatpush1.msra.mxu0 %v2353
    %2857 = vmatprep.subr.mxu0 0.0
    %2858 = vmatpush1.msra.mxu0 %v2352
    %2859 = vmatprep.subr.mxu0 0.0
    %2860 = vmatpush1.msra.mxu0 %v2351
    %2861 = vmatprep.subr.mxu0 0.0
    %2862 = vmatpush1.msra.mxu0 %v2350
    %2863 = vmatprep.subr.mxu0 0.0
    %2864 = vmatpush1.msra.mxu0 %v2349
    %2865 = vmatprep.subr.mxu0 0.0
    %2866 = vmatpush1.msra.mxu0 %v2348
    %2867 = vmatprep.subr.mxu0 0.0
    %2868 = vmatpush1.msra.mxu0 %v2347
    %2869 = vmatprep.subr.mxu0 0.0
    %2870 = vmatpush1.msra.mxu0 %v2346
    %2871 = vmatprep.subr.mxu0 0.0
    %2872 = vmatpush1.msra.mxu0 %v2345
    %2873 = vmatprep.subr.mxu0 0.0
    %2874 = vmatpush1.msra.mxu0 %v2344
    %2875 = vmatprep.subr.mxu0 0.0
    %2876 = vmatpush1.msra.mxu0 %v2343
    %2877 = vmatprep.subr.mxu0 0.0
    %2878 = vmatpush1.msra.mxu0 %v2342
    %2879 = vmatprep.subr.mxu0 0.0
    %2880 = vmatpush1.msra.mxu0 %v2341
    %2881 = vmatprep.subr.mxu0 0.0
    %2882 = vmatpush1.msra.mxu0 %v2340
    %2883 = vmatprep.subr.mxu0 0.0
    %2884 = vmatpush2.msra.mxu0 %v2371
    %2885 = vmatprep.subr.mxu0 0.0
    %2886 = vmatpush2.msra.mxu0 %v2370
    %2887 = vmatprep.subr.mxu0 0.0
    %2888 = vmatpush2.msra.mxu0 %v2369
    %2889 = vmatprep.subr.mxu0 0.0
    %2890 = vmatpush2.msra.mxu0 %v2368
    %2891 = vmatprep.subr.mxu0 0.0
    %2892 = vmatpush2.msra.mxu0 %v2367
    %2893 = vmatprep.subr.mxu0 0.0
    %2894 = vmatpush2.msra.mxu0 %v2366
    %2895 = vmatprep.subr.mxu0 0.0
    %2896 = vmatpush2.msra.mxu0 %v2365
    %2897 = vmatprep.subr.mxu0 0.0
    %2898 = vmatpush2.msra.mxu0 %v2364
    %2899 = vmatprep.subr.mxu0 0.0
    %2900 = vmatpush2.msra.mxu0 %v2363
    %2901 = vmatprep.subr.mxu0 0.0
    %2902 = vmatpush2.msra.mxu0 %v2362
    %2903 = vmatprep.subr.mxu0 0.0
    %2904 = vmatpush2.msra.mxu0 %v2361
    %2905 = vmatprep.subr.mxu0 0.0
    %2906 = vmatpush2.msra.mxu0 %v2360
    %2907 = vmatprep.subr.mxu0 0.0
    %2908 = vmatpush2.msra.mxu0 %v2359
    %2909 = vmatprep.subr.mxu0 0.0
    %2910 = vmatpush2.msra.mxu0 %v2358
    %2911 = vmatprep.subr.mxu0 0.0
    %2912 = vmatpush2.msra.mxu0 %v2357
    %2913 = vmatprep.subr.mxu0 0.0
    %2914 = vmatpush2.msra.mxu0 %v2356
    %2915 = vmatprep.mubr.f32.mxu0 %v2460
    %2916 = vmatmul.mubr.f32.gmra.mxu0 %v2459
    %v2917 = vpop.f32.mrf.mxu0
    %v2918 = vadd.f32 %v2728, %v2917
    %v2919 = vpop.f32.mrf.mxu0
    %2920 = vmatprep.mubr.f32.mxu0 %v2465
    %2921 = vmatmul.mubr.f32.gmra.mxu0 %v2464
    %v2922 = vpop.f32.mrf.mxu0
    %v2923 = vadd.f32 %v2733, %v2922
    %v2924 = vpop.f32.mrf.mxu0
    %2925 = vmatprep.mubr.f32.mxu0 %v2470
    %2926 = vmatmul.mubr.f32.gmra.mxu0 %v2469
    %v2927 = vpop.f32.mrf.mxu0
    %v2928 = vadd.f32 %v2738, %v2927
    %v2929 = vpop.f32.mrf.mxu0
    %2930 = vmatprep.mubr.f32.mxu0 %v2475
    %2931 = vmatmul.mubr.f32.gmra.mxu0 %v2474
    %v2932 = vpop.f32.mrf.mxu0
    %v2933 = vadd.f32 %v2743, %v2932
    %v2934 = vpop.f32.mrf.mxu0
    %2935 = vmatprep.mubr.f32.mxu0 %v2480
    %2936 = vmatmul.mubr.f32.gmra.mxu0 %v2479
    %v2937 = vpop.f32.mrf.mxu0
    %v2938 = vadd.f32 %v2748, %v2937
    %v2939 = vpop.f32.mrf.mxu0
    %2940 = vmatprep.mubr.f32.mxu0 %v2485
    %2941 = vmatmul.mubr.f32.gmra.mxu0 %v2484
    %v2942 = vpop.f32.mrf.mxu0
    %v2943 = vadd.f32 %v2753, %v2942
    %v2944 = vpop.f32.mrf.mxu0
    %2945 = vmatprep.mubr.f32.mxu0 %v2490
    %2946 = vmatmul.mubr.f32.gmra.mxu0 %v2489
    %v2947 = vpop.f32.mrf.mxu0
    %v2948 = vadd.f32 %v2758, %v2947
    %v2949 = vpop.f32.mrf.mxu0
    %2950 = vmatprep.mubr.f32.mxu0 %v2495
    %2951 = vmatmul.mubr.f32.gmra.mxu0 %v2494
    %v2952 = vpop.f32.mrf.mxu0
    %v2953 = vadd.f32 %v2763, %v2952
    %v2954 = vpop.f32.mrf.mxu0
    %2955 = vmatprep.mubr.f32.mxu0 %v2500
    %2956 = vmatmul.mubr.f32.gmra.mxu0 %v2499
    %v2957 = vpop.f32.mrf.mxu0
    %v2958 = vadd.f32 %v2768, %v2957
    %v2959 = vpop.f32.mrf.mxu0
    %2960 = vmatprep.mubr.f32.mxu0 %v2505
    %2961 = vmatmul.mubr.f32.gmra.mxu0 %v2504
    %v2962 = vpop.f32.mrf.mxu0
    %v2963 = vadd.f32 %v2773, %v2962
    %v2964 = vpop.f32.mrf.mxu0
    %2965 = vmatprep.mubr.f32.mxu0 %v2510
    %2966 = vmatmul.mubr.f32.gmra.mxu0 %v2509
    %v2967 = vpop.f32.mrf.mxu0
    %v2968 = vadd.f32 %v2778, %v2967
    %v2969 = vpop.f32.mrf.mxu0
    %2970 = vmatprep.mubr.f32.mxu0 %v2515
    %2971 = vmatmul.mubr.f32.gmra.mxu0 %v2514
    %v2972 = vpop.f32.mrf.mxu0
    %v2973 = vadd.f32 %v2783, %v2972
    %v2974 = vpop.f32.mrf.mxu0
    %2975 = vmatprep.mubr.f32.mxu0 %v2520
    %2976 = vmatmul.mubr.f32.gmra.mxu0 %v2519
    %v2977 = vpop.f32.mrf.mxu0
    %v2978 = vadd.f32 %v2788, %v2977
    %v2979 = vpop.f32.mrf.mxu0
    %2980 = vmatprep.mubr.f32.mxu0 %v2525
    %2981 = vmatmul.mubr.f32.gmra.mxu0 %v2524
    %v2982 = vpop.f32.mrf.mxu0
    %v2983 = vadd.f32 %v2793, %v2982
    %v2984 = vpop.f32.mrf.mxu0
    %2985 = vmatprep.mubr.f32.mxu0 %v2530
    %2986 = vmatmul.mubr.f32.gmra.mxu0 %v2529
    %v2987 = vpop.f32.mrf.mxu0
    %v2988 = vadd.f32 %v2798, %v2987
    %v2989 = vpop.f32.mrf.mxu0
    %2990 = vmatprep.mubr.f32.mxu0 %v2535
    %2991 = vmatmul.mubr.f32.gmra.mxu0 %v2534
    %v2992 = vpop.f32.mrf.mxu0
    %v2993 = vadd.f32 %v2803, %v2992
    %v2994 = vpop.f32.mrf.mxu0
    %2995 = vmatprep.mubr.f32.mxu0 %v2540
    %2996 = vmatmul.mubr.f32.gmra.mxu0 %v2539
    %v2997 = vpop.f32.mrf.mxu0
    %v2998 = vadd.f32 %v2808, %v2997
    %v2999 = vpop.f32.mrf.mxu0
    %3000 = vmatprep.mubr.f32.mxu0 %v2545
    %3001 = vmatmul.mubr.f32.gmra.mxu0 %v2544
    %v3002 = vpop.f32.mrf.mxu0
    %v3003 = vadd.f32 %v2813, %v3002
    %v3004 = vpop.f32.mrf.mxu0
    %3005 = vmatprep.mubr.f32.mxu0 %v2550
    %3006 = vmatmul.mubr.f32.gmra.mxu0 %v2549
    %v3007 = vpop.f32.mrf.mxu0
    %v3008 = vadd.f32 %v2818, %v3007
    %v3009 = vpop.f32.mrf.mxu0
    %3010 = vmatprep.mubr.f32.mxu0 %v2555
    %3011 = vmatmul.mubr.f32.gmra.mxu0 %v2554
    %v3012 = vpop.f32.mrf.mxu0
    %v3013 = vadd.f32 %v2823, %v3012
    %v3014 = vpop.f32.mrf.mxu0
    %3015 = vmatprep.mubr.f32.mxu0 %v2560
    %3016 = vmatmul.mubr.f32.gmra.mxu0 %v2559
    %v3017 = vpop.f32.mrf.mxu0
    %v3018 = vadd.f32 %v2828, %v3017
    %v3019 = vpop.f32.mrf.mxu0
    %3020 = vmatprep.mubr.f32.mxu0 %v2565
    %3021 = vmatmul.mubr.f32.gmra.mxu0 %v2564
    %v3022 = vpop.f32.mrf.mxu0
    %v3023 = vadd.f32 %v2833, %v3022
    %v3024 = vpop.f32.mrf.mxu0
    %3025 = vmatprep.mubr.f32.mxu0 %v2570
    %3026 = vmatmul.mubr.f32.gmra.mxu0 %v2569
    %v3027 = vpop.f32.mrf.mxu0
    %v3028 = vadd.f32 %v2838, %v3027
    %v3029 = vpop.f32.mrf.mxu0
    %3030 = vmatprep.mubr.f32.mxu0 %v2575
    %3031 = vmatmul.mubr.f32.gmra.mxu0 %v2574
    %v3032 = vpop.f32.mrf.mxu0
    %v3033 = vadd.f32 %v2843, %v3032
    %v3034 = vpop.f32.mrf.mxu0
    %3035 = vmatprep.mubr.f32.mxu0 %v2580
    %3036 = vmatmul.mubr.f32.gmra.mxu0 %v2579
    %v3037 = vpop.f32.mrf.mxu0
    %v3038 = vadd.f32 %v2848, %v3037
    %v3039 = vpop.f32.mrf.mxu0
    %3040 = vdwg.mxu0
    %3041 = vmatprep.subr.mxu0 0.0
    %3042 = vmatpush1.msra.mxu0 0.0
    %3043 = vmatprep.subr.mxu0 0.0
    %3044 = vmatpush1.msra.mxu0 0.0
    %3045 = vmatprep.subr.mxu0 0.0
    %3046 = vmatpush1.msra.mxu0 0.0
    %3047 = vmatprep.subr.mxu0 0.0
    %3048 = vmatpush1.msra.mxu0 0.0
    %3049 = vmatprep.subr.mxu0 0.0
    %3050 = vmatpush1.msra.mxu0 0.0
    %3051 = vmatprep.subr.mxu0 0.0
    %3052 = vmatpush1.msra.mxu0 0.0
    %3053 = vmatprep.subr.mxu0 0.0
    %3054 = vmatpush1.msra.mxu0 %v2659
    %3055 = vmatprep.subr.mxu0 0.0
    %3056 = vmatpush1.msra.mxu0 %v2380
    %3057 = vmatprep.subr.mxu0 0.0
    %3058 = vmatpush1.msra.mxu0 %v2379
    %3059 = vmatprep.subr.mxu0 0.0
    %3060 = vmatpush1.msra.mxu0 %v2378
    %3061 = vmatprep.subr.mxu0 0.0
    %3062 = vmatpush1.msra.mxu0 %v2377
    %3063 = vmatprep.subr.mxu0 0.0
    %3064 = vmatpush1.msra.mxu0 %v2376
    %3065 = vmatprep.subr.mxu0 0.0
    %3066 = vmatpush1.msra.mxu0 %v2375
    %3067 = vmatprep.subr.mxu0 0.0
    %3068 = vmatpush1.msra.mxu0 %v2374
    %3069 = vmatprep.subr.mxu0 0.0
    %3070 = vmatpush1.msra.mxu0 %v2373
    %3071 = vmatprep.subr.mxu0 0.0
    %3072 = vmatpush1.msra.mxu0 %v2372
    %3073 = vmatprep.subr.mxu0 0.0
    %3074 = vmatpush2.msra.mxu0 0.0
    %3075 = vmatprep.subr.mxu0 0.0
    %3076 = vmatpush2.msra.mxu0 0.0
    %3077 = vmatprep.subr.mxu0 0.0
    %3078 = vmatpush2.msra.mxu0 0.0
    %3079 = vmatprep.subr.mxu0 0.0
    %3080 = vmatpush2.msra.mxu0 0.0
    %3081 = vmatprep.subr.mxu0 0.0
    %3082 = vmatpush2.msra.mxu0 0.0
    %3083 = vmatprep.subr.mxu0 0.0
    %3084 = vmatpush2.msra.mxu0 0.0
    %3085 = vmatprep.subr.mxu0 0.0
    %3086 = vmatpush2.msra.mxu0 0.0
    %3087 = vmatprep.subr.mxu0 0.0
    %3088 = vmatpush2.msra.mxu0 0.0
    %3089 = vmatprep.subr.mxu0 0.0
    %3090 = vmatpush2.msra.mxu0 0.0
    %3091 = vmatprep.subr.mxu0 0.0
    %3092 = vmatpush2.msra.mxu0 0.0
    %3093 = vmatprep.subr.mxu0 0.0
    %3094 = vmatpush2.msra.mxu0 0.0
    %3095 = vmatprep.subr.mxu0 0.0
    %3096 = vmatpush2.msra.mxu0 0.0
    %3097 = vmatprep.subr.mxu0 0.0
    %3098 = vmatpush2.msra.mxu0 0.0
    %3099 = vmatprep.subr.mxu0 0.0
    %3100 = vmatpush2.msra.mxu0 0.0
    %3101 = vmatprep.subr.mxu0 0.0
    %3102 = vmatpush2.msra.mxu0 0.0
    %3103 = vmatprep.subr.mxu0 0.0
    %3104 = vmatpush2.msra.mxu0 0.0
    %3105 = vmatprep.mubr.f32.mxu0 0.0
    %3106 = vmatmul.mubr.f32.gmra.mxu0 %v2584
    %v3107 = vpop.f32.mrf.mxu0
    %v3108 = vadd.f32 %v2918, %v3107
    %v3109 = vpop.f32.mrf.mxu0
    %3110 = vmatprep.mubr.f32.mxu0 0.0
    %3111 = vmatmul.mubr.f32.gmra.mxu0 %v2587
    %v3112 = vpop.f32.mrf.mxu0
    %v3113 = vadd.f32 %v2923, %v3112
    %v3114 = vpop.f32.mrf.mxu0
    %3115 = vmatprep.mubr.f32.mxu0 0.0
    %3116 = vmatmul.mubr.f32.gmra.mxu0 %v2590
    %v3117 = vpop.f32.mrf.mxu0
    %v3118 = vadd.f32 %v2928, %v3117
    %v3119 = vpop.f32.mrf.mxu0
    %3120 = vmatprep.mubr.f32.mxu0 0.0
    %3121 = vmatmul.mubr.f32.gmra.mxu0 %v2593
    %v3122 = vpop.f32.mrf.mxu0
    %v3123 = vadd.f32 %v2933, %v3122
    %v3124 = vpop.f32.mrf.mxu0
    %3125 = vmatprep.mubr.f32.mxu0 0.0
    %3126 = vmatmul.mubr.f32.gmra.mxu0 %v2596
    %v3127 = vpop.f32.mrf.mxu0
    %v3128 = vadd.f32 %v2938, %v3127
    %v3129 = vpop.f32.mrf.mxu0
    %3130 = vmatprep.mubr.f32.mxu0 0.0
    %3131 = vmatmul.mubr.f32.gmra.mxu0 %v2599
    %v3132 = vpop.f32.mrf.mxu0
    %v3133 = vadd.f32 %v2943, %v3132
    %v3134 = vpop.f32.mrf.mxu0
    %3135 = vmatprep.mubr.f32.mxu0 0.0
    %3136 = vmatmul.mubr.f32.gmra.mxu0 %v2602
    %v3137 = vpop.f32.mrf.mxu0
    %v3138 = vadd.f32 %v2948, %v3137
    %v3139 = vpop.f32.mrf.mxu0
    %3140 = vmatprep.mubr.f32.mxu0 0.0
    %3141 = vmatmul.mubr.f32.gmra.mxu0 %v2605
    %v3142 = vpop.f32.mrf.mxu0
    %v3143 = vadd.f32 %v2953, %v3142
    %v3144 = vpop.f32.mrf.mxu0
    %3145 = vmatprep.mubr.f32.mxu0 0.0
    %3146 = vmatmul.mubr.f32.gmra.mxu0 %v2608
    %v3147 = vpop.f32.mrf.mxu0
    %v3148 = vadd.f32 %v2958, %v3147
    %v3149 = vpop.f32.mrf.mxu0
    %3150 = vmatprep.mubr.f32.mxu0 0.0
    %3151 = vmatmul.mubr.f32.gmra.mxu0 %v2611
    %v3152 = vpop.f32.mrf.mxu0
    %v3153 = vadd.f32 %v2963, %v3152
    %v3154 = vpop.f32.mrf.mxu0
    %3155 = vmatprep.mubr.f32.mxu0 0.0
    %3156 = vmatmul.mubr.f32.gmra.mxu0 %v2614
    %v3157 = vpop.f32.mrf.mxu0
    %v3158 = vadd.f32 %v2968, %v3157
    %v3159 = vpop.f32.mrf.mxu0
    %3160 = vmatprep.mubr.f32.mxu0 0.0
    %3161 = vmatmul.mubr.f32.gmra.mxu0 %v2617
    %v3162 = vpop.f32.mrf.mxu0
    %v3163 = vadd.f32 %v2973, %v3162
    %v3164 = vpop.f32.mrf.mxu0
    %3165 = vmatprep.mubr.f32.mxu0 0.0
    %3166 = vmatmul.mubr.f32.gmra.mxu0 %v2620
    %v3167 = vpop.f32.mrf.mxu0
    %v3168 = vadd.f32 %v2978, %v3167
    %v3169 = vpop.f32.mrf.mxu0
    %3170 = vmatprep.mubr.f32.mxu0 0.0
    %3171 = vmatmul.mubr.f32.gmra.mxu0 %v2623
    %v3172 = vpop.f32.mrf.mxu0
    %v3173 = vadd.f32 %v2983, %v3172
    %v3174 = vpop.f32.mrf.mxu0
    %3175 = vmatprep.mubr.f32.mxu0 0.0
    %3176 = vmatmul.mubr.f32.gmra.mxu0 %v2626
    %v3177 = vpop.f32.mrf.mxu0
    %v3178 = vadd.f32 %v2988, %v3177
    %v3179 = vpop.f32.mrf.mxu0
    %3180 = vmatprep.mubr.f32.mxu0 0.0
    %3181 = vmatmul.mubr.f32.gmra.mxu0 %v2629
    %v3182 = vpop.f32.mrf.mxu0
    %v3183 = vadd.f32 %v2993, %v3182
    %v3184 = vpop.f32.mrf.mxu0
    %3185 = vmatprep.mubr.f32.mxu0 0.0
    %3186 = vmatmul.mubr.f32.gmra.mxu0 %v2632
    %v3187 = vpop.f32.mrf.mxu0
    %v3188 = vadd.f32 %v2998, %v3187
    %v3189 = vpop.f32.mrf.mxu0
    %3190 = vmatprep.mubr.f32.mxu0 0.0
    %3191 = vmatmul.mubr.f32.gmra.mxu0 %v2635
    %v3192 = vpop.f32.mrf.mxu0
    %v3193 = vadd.f32 %v3003, %v3192
    %v3194 = vpop.f32.mrf.mxu0
    %3195 = vmatprep.mubr.f32.mxu0 0.0
    %3196 = vmatmul.mubr.f32.gmra.mxu0 %v2638
    %v3197 = vpop.f32.mrf.mxu0
    %v3198 = vadd.f32 %v3008, %v3197
    %v3199 = vpop.f32.mrf.mxu0
    %3200 = vmatprep.mubr.f32.mxu0 0.0
    %3201 = vmatmul.mubr.f32.gmra.mxu0 %v2641
    %v3202 = vpop.f32.mrf.mxu0
    %v3203 = vadd.f32 %v3013, %v3202
    %v3204 = vpop.f32.mrf.mxu0
    %3205 = vmatprep.mubr.f32.mxu0 0.0
    %3206 = vmatmul.mubr.f32.gmra.mxu0 %v2644
    %v3207 = vpop.f32.mrf.mxu0
    %v3208 = vadd.f32 %v3018, %v3207
    %v3209 = vpop.f32.mrf.mxu0
    %3210 = vmatprep.mubr.f32.mxu0 0.0
    %3211 = vmatmul.mubr.f32.gmra.mxu0 %v2647
    %v3212 = vpop.f32.mrf.mxu0
    %v3213 = vadd.f32 %v3023, %v3212
    %v3214 = vpop.f32.mrf.mxu0
    %3215 = vmatprep.mubr.f32.mxu0 0.0
    %3216 = vmatmul.mubr.f32.gmra.mxu0 %v2650
    %v3217 = vpop.f32.mrf.mxu0
    %v3218 = vadd.f32 %v3028, %v3217
    %v3219 = vpop.f32.mrf.mxu0
    %3220 = vmatprep.mubr.f32.mxu0 0.0
    %3221 = vmatmul.mubr.f32.gmra.mxu0 %v2653
    %v3222 = vpop.f32.mrf.mxu0
    %v3223 = vadd.f32 %v3033, %v3222
    %v3224 = vpop.f32.mrf.mxu0
    %3225 = vmatprep.mubr.f32.mxu0 0.0
    %3226 = vmatmul.mubr.f32.gmra.mxu0 %v2656
    %v3227 = vpop.f32.mrf.mxu0
    %v3228 = vadd.f32 %v3038, %v3227
    %v3229 = vpop.f32.mrf.mxu0
    %3230 = vdwg.mxu0
    %v3231 = vld [vmem:[%s7] sm:$0xff]
    %v3232 = vld [vmem:[%s7 + $0x8] sm:$0xff]
    %v3233 = vld [vmem:[%s7 + $0x10] sm:$0xff]
    %v3234 = vld [vmem:[%s7 + $0x18] sm:$0xff]
    %s3235 = scalar_lea.vmem %s7, 32
    %v3236 = vld [vmem:[%s3235] sm:$0xff]
    %v3237 = vld [vmem:[%s3235 + $0x8] sm:$0xff]
    %v3238 = vld [vmem:[%s3235 + $0x10] sm:$0xff]
    %v3239 = vld [vmem:[%s3235 + $0x18] sm:$0xff]
    %v3263 = vrot.slane %v3108, 1
    %v3264 = vrot.slane %v3113, 1
    %v3265 = vsel %vm1701, %v3263, %v3264
    %v3266 = vrot.slane %v3118, 1
    %v3267 = vsel %vm1701, %v3264, %v3266
    %v3268 = vrot.slane %v3123, 1
    %v3269 = vsel %vm1701, %v3266, %v3268
    %v3270 = vrot.slane %v3128, 1
    %v3271 = vsel %vm1701, %v3268, %v3270
    %v3272 = vrot.slane %v3133, 1
    %v3273 = vsel %vm1701, %v3270, %v3272
    %v3274 = vrot.slane %v3138, 1
    %v3275 = vsel %vm1701, %v3272, %v3274
    %v3276 = vrot.slane %v3143, 1
    %v3277 = vsel %vm1701, %v3274, %v3276
    %v3278 = vrot.slane %v3148, 1
    %v3279 = vsel %vm1701, %v3276, %v3278
    %v3280 = vrot.slane %v3153, 1
    %v3281 = vsel %vm1701, %v3278, %v3280
    %v3282 = vrot.slane %v3158, 1
    %v3283 = vsel %vm1701, %v3280, %v3282
    %v3284 = vrot.slane %v3163, 1
    %v3285 = vsel %vm1701, %v3282, %v3284
    %v3286 = vrot.slane %v3168, 1
    %v3287 = vsel %vm1701, %v3284, %v3286
    %v3288 = vrot.slane %v3173, 1
    %v3289 = vsel %vm1701, %v3286, %v3288
    %v3290 = vrot.slane %v3178, 1
    %v3291 = vsel %vm1701, %v3288, %v3290
    %v3292 = vrot.slane %v3183, 1
    %v3293 = vsel %vm1701, %v3290, %v3292
    %v3294 = vrot.slane %v3188, 1
    %v3295 = vsel %vm1701, %v3292, %v3294
    %v3296 = vrot.slane %v3193, 1
    %v3297 = vsel %vm1701, %v3294, %v3296
    %v3298 = vrot.slane %v3198, 1
    %v3299 = vsel %vm1701, %v3296, %v3298
    %v3300 = vrot.slane %v3203, 1
    %v3301 = vsel %vm1701, %v3298, %v3300
    %v3302 = vrot.slane %v3208, 1
    %v3303 = vsel %vm1701, %v3300, %v3302
    %v3304 = vrot.slane %v3213, 1
    %v3305 = vsel %vm1701, %v3302, %v3304
    %v3306 = vrot.slane %v3218, 1
    %v3307 = vsel %vm1701, %v3304, %v3306
    %vm3308 = vcmask 261120
    %v3309 = vsel %vm3308, %v3265, 0
    %v3311 = vsel %vm3308, %v3267, 0
    %v3313 = vsel %vm3308, %v3269, 0
    %v3315 = vsel %vm3308, %v3271, 0
    %v3317 = vsel %vm3308, %v3273, 0
    %v3319 = vsel %vm3308, %v3275, 0
    %v3321 = vsel %vm3308, %v3277, 0
    %v3323 = vsel %vm3308, %v3279, 0
    %v3325 = vsel %vm3308, %v3281, 0
    %v3327 = vsel %vm3308, %v3283, 0
    %v3329 = vsel %vm3308, %v3285, 0
    %v3331 = vsel %vm3308, %v3287, 0
    %v3333 = vsel %vm3308, %v3289, 0
    %v3335 = vsel %vm3308, %v3291, 0
    %v3337 = vsel %vm3308, %v3293, 0
    %v3339 = vsel %vm3308, %v3295, 0
    %v3341 = vsel %vm3308, %v3297, 0
    %v3343 = vsel %vm3308, %v3299, 0
    %v3345 = vsel %vm3308, %v3301, 0
    %v3347 = vsel %vm3308, %v3303, 0
    %v3349 = vsel %vm3308, %v3305, 0
    %v3351 = vsel %vm3308, %v3307, 0
    %v3353 = vsel %vm3308, %v3306, 0
    %3355 = vmatprep.subr.mxu0 0.0
    %3356 = vmatpush1.msra.mxu0 0.0
    %3357 = vmatprep.subr.mxu0 0.0
    %3358 = vmatpush1.msra.mxu0 0.0
    %3359 = vmatprep.subr.mxu0 0.0
    %3360 = vmatpush1.msra.mxu0 0.0
    %3361 = vmatprep.subr.mxu0 0.0
    %3362 = vmatpush1.msra.mxu0 0.0
    %3363 = vmatprep.subr.mxu0 0.0
    %3364 = vmatpush1.msra.mxu0 0.0
    %3365 = vmatprep.subr.mxu0 0.0
    %3366 = vmatpush1.msra.mxu0 0.0
    %3367 = vmatprep.subr.mxu0 0.0
    %3368 = vmatpush1.msra.mxu0 0.0
    %3369 = vmatprep.subr.mxu0 0.0
    %3370 = vmatpush1.msra.mxu0 0.0
    %3371 = vmatprep.subr.mxu0 0.0
    %3372 = vmatpush1.msra.mxu0 0.0
    %3373 = vmatprep.subr.mxu0 0.0
    %3374 = vmatpush1.msra.mxu0 0.0
    %3375 = vmatprep.subr.mxu0 0.0
    %3376 = vmatpush1.msra.mxu0 0.0
    %3377 = vmatprep.subr.mxu0 0.0
    %3378 = vmatpush1.msra.mxu0 0.0
    %3379 = vmatprep.subr.mxu0 0.0
    %3380 = vmatpush1.msra.mxu0 %v3239
    %3381 = vmatprep.subr.mxu0 0.0
    %3382 = vmatpush1.msra.mxu0 %v3238
    %3383 = vmatprep.subr.mxu0 0.0
    %3384 = vmatpush1.msra.mxu0 %v3237
    %3385 = vmatprep.subr.mxu0 0.0
    %3386 = vmatpush1.msra.mxu0 %v3236
    %3387 = vmatprep.subr.mxu0 0.0
    %3388 = vmatpush2.msra.mxu0 0.0
    %3389 = vmatprep.subr.mxu0 0.0
    %3390 = vmatpush2.msra.mxu0 0.0
    %3391 = vmatprep.subr.mxu0 0.0
    %3392 = vmatpush2.msra.mxu0 0.0
    %3393 = vmatprep.subr.mxu0 0.0
    %3394 = vmatpush2.msra.mxu0 0.0
    %3395 = vmatprep.subr.mxu0 0.0
    %3396 = vmatpush2.msra.mxu0 0.0
    %3397 = vmatprep.subr.mxu0 0.0
    %3398 = vmatpush2.msra.mxu0 0.0
    %3399 = vmatprep.subr.mxu0 0.0
    %3400 = vmatpush2.msra.mxu0 0.0
    %3401 = vmatprep.subr.mxu0 0.0
    %3402 = vmatpush2.msra.mxu0 0.0
    %3403 = vmatprep.subr.mxu0 0.0
    %3404 = vmatpush2.msra.mxu0 0.0
    %3405 = vmatprep.subr.mxu0 0.0
    %3406 = vmatpush2.msra.mxu0 0.0
    %3407 = vmatprep.subr.mxu0 0.0
    %3408 = vmatpush2.msra.mxu0 0.0
    %3409 = vmatprep.subr.mxu0 0.0
    %3410 = vmatpush2.msra.mxu0 0.0
    %3411 = vmatprep.subr.mxu0 0.0
    %3412 = vmatpush2.msra.mxu0 0.0
    %3413 = vmatprep.subr.mxu0 0.0
    %3414 = vmatpush2.msra.mxu0 0.0
    %3415 = vmatprep.subr.mxu0 0.0
    %3416 = vmatpush2.msra.mxu0 0.0
    %3417 = vmatprep.subr.mxu0 0.0
    %3418 = vmatpush2.msra.mxu0 0.0
    %3419 = vmatprep.mubr.f32.mxu0 0.0
    %3420 = vmatmul.mubr.f32.gmra.mxu0 %v3309
    %v3421 = vpop.f32.mrf.mxu0
    %v3422 = vadd.f32 0.0, %v3421
    %v3423 = vpop.f32.mrf.mxu0
    %3424 = vmatprep.mubr.f32.mxu0 0.0
    %3425 = vmatmul.mubr.f32.gmra.mxu0 %v3311
    %v3426 = vpop.f32.mrf.mxu0
    %v3427 = vadd.f32 0.0, %v3426
    %v3428 = vpop.f32.mrf.mxu0
    %3429 = vmatprep.mubr.f32.mxu0 0.0
    %3430 = vmatmul.mubr.f32.gmra.mxu0 %v3313
    %v3431 = vpop.f32.mrf.mxu0
    %v3432 = vadd.f32 0.0, %v3431
    %v3433 = vpop.f32.mrf.mxu0
    %3434 = vmatprep.mubr.f32.mxu0 0.0
    %3435 = vmatmul.mubr.f32.gmra.mxu0 %v3315
    %v3436 = vpop.f32.mrf.mxu0
    %v3437 = vadd.f32 0.0, %v3436
    %v3438 = vpop.f32.mrf.mxu0
    %3439 = vmatprep.mubr.f32.mxu0 0.0
    %3440 = vmatmul.mubr.f32.gmra.mxu0 %v3317
    %v3441 = vpop.f32.mrf.mxu0
    %v3442 = vadd.f32 0.0, %v3441
    %v3443 = vpop.f32.mrf.mxu0
    %3444 = vmatprep.mubr.f32.mxu0 0.0
    %3445 = vmatmul.mubr.f32.gmra.mxu0 %v3319
    %v3446 = vpop.f32.mrf.mxu0
    %v3447 = vadd.f32 0.0, %v3446
    %v3448 = vpop.f32.mrf.mxu0
    %3449 = vmatprep.mubr.f32.mxu0 0.0
    %3450 = vmatmul.mubr.f32.gmra.mxu0 %v3321
    %v3451 = vpop.f32.mrf.mxu0
    %v3452 = vadd.f32 0.0, %v3451
    %v3453 = vpop.f32.mrf.mxu0
    %3454 = vmatprep.mubr.f32.mxu0 0.0
    %3455 = vmatmul.mubr.f32.gmra.mxu0 %v3323
    %v3456 = vpop.f32.mrf.mxu0
    %v3457 = vadd.f32 0.0, %v3456
    %v3458 = vpop.f32.mrf.mxu0
    %3459 = vmatprep.mubr.f32.mxu0 0.0
    %3460 = vmatmul.mubr.f32.gmra.mxu0 %v3325
    %v3461 = vpop.f32.mrf.mxu0
    %v3462 = vadd.f32 0.0, %v3461
    %v3463 = vpop.f32.mrf.mxu0
    %3464 = vmatprep.mubr.f32.mxu0 0.0
    %3465 = vmatmul.mubr.f32.gmra.mxu0 %v3327
    %v3466 = vpop.f32.mrf.mxu0
    %v3467 = vadd.f32 0.0, %v3466
    %v3468 = vpop.f32.mrf.mxu0
    %3469 = vmatprep.mubr.f32.mxu0 0.0
    %3470 = vmatmul.mubr.f32.gmra.mxu0 %v3329
    %v3471 = vpop.f32.mrf.mxu0
    %v3472 = vadd.f32 0.0, %v3471
    %v3473 = vpop.f32.mrf.mxu0
    %3474 = vmatprep.mubr.f32.mxu0 0.0
    %3475 = vmatmul.mubr.f32.gmra.mxu0 %v3331
    %v3476 = vpop.f32.mrf.mxu0
    %v3477 = vadd.f32 0.0, %v3476
    %v3478 = vpop.f32.mrf.mxu0
    %3479 = vmatprep.mubr.f32.mxu0 0.0
    %3480 = vmatmul.mubr.f32.gmra.mxu0 %v3333
    %v3481 = vpop.f32.mrf.mxu0
    %v3482 = vadd.f32 0.0, %v3481
    %v3483 = vpop.f32.mrf.mxu0
    %3484 = vmatprep.mubr.f32.mxu0 0.0
    %3485 = vmatmul.mubr.f32.gmra.mxu0 %v3335
    %v3486 = vpop.f32.mrf.mxu0
    %v3487 = vadd.f32 0.0, %v3486
    %v3488 = vpop.f32.mrf.mxu0
    %3489 = vmatprep.mubr.f32.mxu0 0.0
    %3490 = vmatmul.mubr.f32.gmra.mxu0 %v3337
    %v3491 = vpop.f32.mrf.mxu0
    %v3492 = vadd.f32 0.0, %v3491
    %v3493 = vpop.f32.mrf.mxu0
    %3494 = vmatprep.mubr.f32.mxu0 0.0
    %3495 = vmatmul.mubr.f32.gmra.mxu0 %v3339
    %v3496 = vpop.f32.mrf.mxu0
    %v3497 = vadd.f32 0.0, %v3496
    %v3498 = vpop.f32.mrf.mxu0
    %3499 = vmatprep.mubr.f32.mxu0 0.0
    %3500 = vmatmul.mubr.f32.gmra.mxu0 %v3341
    %v3501 = vpop.f32.mrf.mxu0
    %v3502 = vadd.f32 0.0, %v3501
    %v3503 = vpop.f32.mrf.mxu0
    %3504 = vmatprep.mubr.f32.mxu0 0.0
    %3505 = vmatmul.mubr.f32.gmra.mxu0 %v3343
    %v3506 = vpop.f32.mrf.mxu0
    %v3507 = vadd.f32 0.0, %v3506
    %v3508 = vpop.f32.mrf.mxu0
    %3509 = vmatprep.mubr.f32.mxu0 0.0
    %3510 = vmatmul.mubr.f32.gmra.mxu0 %v3345
    %v3511 = vpop.f32.mrf.mxu0
    %v3512 = vadd.f32 0.0, %v3511
    %v3513 = vpop.f32.mrf.mxu0
    %3514 = vmatprep.mubr.f32.mxu0 0.0
    %3515 = vmatmul.mubr.f32.gmra.mxu0 %v3347
    %v3516 = vpop.f32.mrf.mxu0
    %v3517 = vadd.f32 0.0, %v3516
    %v3518 = vpop.f32.mrf.mxu0
    %3519 = vmatprep.mubr.f32.mxu0 0.0
    %3520 = vmatmul.mubr.f32.gmra.mxu0 %v3349
    %v3521 = vpop.f32.mrf.mxu0
    %v3522 = vadd.f32 0.0, %v3521
    %v3523 = vpop.f32.mrf.mxu0
    %3524 = vmatprep.mubr.f32.mxu0 0.0
    %3525 = vmatmul.mubr.f32.gmra.mxu0 %v3351
    %v3526 = vpop.f32.mrf.mxu0
    %v3527 = vadd.f32 0.0, %v3526
    %v3528 = vpop.f32.mrf.mxu0
    %3529 = vmatprep.mubr.f32.mxu0 0.0
    %3530 = vmatmul.mubr.f32.gmra.mxu0 %v3353
    %v3531 = vpop.f32.mrf.mxu0
    %v3532 = vadd.f32 0.0, %v3531
    %v3533 = vpop.f32.mrf.mxu0
    %3534 = vdwg.mxu0
    %v3535 = vsel %vm3308, %v3108, 0
    %v3537 = vsel %vm3308, %v3113, 0
    %v3539 = vsel %vm3308, %v3118, 0
    %v3541 = vsel %vm3308, %v3123, 0
    %v3543 = vsel %vm3308, %v3128, 0
    %v3545 = vsel %vm3308, %v3133, 0
    %v3547 = vsel %vm3308, %v3138, 0
    %v3549 = vsel %vm3308, %v3143, 0
    %v3551 = vsel %vm3308, %v3148, 0
    %v3553 = vsel %vm3308, %v3153, 0
    %v3555 = vsel %vm3308, %v3158, 0
    %v3557 = vsel %vm3308, %v3163, 0
    %v3559 = vsel %vm3308, %v3168, 0
    %v3561 = vsel %vm3308, %v3173, 0
    %v3563 = vsel %vm3308, %v3178, 0
    %v3565 = vsel %vm3308, %v3183, 0
    %v3567 = vsel %vm3308, %v3188, 0
    %v3569 = vsel %vm3308, %v3193, 0
    %v3571 = vsel %vm3308, %v3198, 0
    %v3573 = vsel %vm3308, %v3203, 0
    %v3575 = vsel %vm3308, %v3208, 0
    %v3577 = vsel %vm3308, %v3213, 0
    %v3579 = vsel %vm3308, %v3218, 0
    %3581 = vmatprep.subr.mxu0 0.0
    %3582 = vmatpush1.msra.mxu0 0.0
    %3583 = vmatprep.subr.mxu0 0.0
    %3584 = vmatpush1.msra.mxu0 0.0
    %3585 = vmatprep.subr.mxu0 0.0
    %3586 = vmatpush1.msra.mxu0 0.0
    %3587 = vmatprep.subr.mxu0 0.0
    %3588 = vmatpush1.msra.mxu0 0.0
    %3589 = vmatprep.subr.mxu0 0.0
    %3590 = vmatpush1.msra.mxu0 0.0
    %3591 = vmatprep.subr.mxu0 0.0
    %3592 = vmatpush1.msra.mxu0 0.0
    %3593 = vmatprep.subr.mxu0 0.0
    %3594 = vmatpush1.msra.mxu0 0.0
    %3595 = vmatprep.subr.mxu0 0.0
    %3596 = vmatpush1.msra.mxu0 0.0
    %3597 = vmatprep.subr.mxu0 0.0
    %3598 = vmatpush1.msra.mxu0 0.0
    %3599 = vmatprep.subr.mxu0 0.0
    %3600 = vmatpush1.msra.mxu0 0.0
    %3601 = vmatprep.subr.mxu0 0.0
    %3602 = vmatpush1.msra.mxu0 0.0
    %3603 = vmatprep.subr.mxu0 0.0
    %3604 = vmatpush1.msra.mxu0 0.0
    %3605 = vmatprep.subr.mxu0 0.0
    %3606 = vmatpush1.msra.mxu0 %v3234
    %3607 = vmatprep.subr.mxu0 0.0
    %3608 = vmatpush1.msra.mxu0 %v3233
    %3609 = vmatprep.subr.mxu0 0.0
    %3610 = vmatpush1.msra.mxu0 %v3232
    %3611 = vmatprep.subr.mxu0 0.0
    %3612 = vmatpush1.msra.mxu0 %v3231
    %3613 = vmatprep.subr.mxu0 0.0
    %3614 = vmatpush2.msra.mxu0 0.0
    %3615 = vmatprep.subr.mxu0 0.0
    %3616 = vmatpush2.msra.mxu0 0.0
    %3617 = vmatprep.subr.mxu0 0.0
    %3618 = vmatpush2.msra.mxu0 0.0
    %3619 = vmatprep.subr.mxu0 0.0
    %3620 = vmatpush2.msra.mxu0 0.0
    %3621 = vmatprep.subr.mxu0 0.0
    %3622 = vmatpush2.msra.mxu0 0.0
    %3623 = vmatprep.subr.mxu0 0.0
    %3624 = vmatpush2.msra.mxu0 0.0
    %3625 = vmatprep.subr.mxu0 0.0
    %3626 = vmatpush2.msra.mxu0 0.0
    %3627 = vmatprep.subr.mxu0 0.0
    %3628 = vmatpush2.msra.mxu0 0.0
    %3629 = vmatprep.subr.mxu0 0.0
    %3630 = vmatpush2.msra.mxu0 0.0
    %3631 = vmatprep.subr.mxu0 0.0
    %3632 = vmatpush2.msra.mxu0 0.0
    %3633 = vmatprep.subr.mxu0 0.0
    %3634 = vmatpush2.msra.mxu0 0.0
    %3635 = vmatprep.subr.mxu0 0.0
    %3636 = vmatpush2.msra.mxu0 0.0
    %3637 = vmatprep.subr.mxu0 0.0
    %3638 = vmatpush2.msra.mxu0 0.0
    %3639 = vmatprep.subr.mxu0 0.0
    %3640 = vmatpush2.msra.mxu0 0.0
    %3641 = vmatprep.subr.mxu0 0.0
    %3642 = vmatpush2.msra.mxu0 0.0
    %3643 = vmatprep.subr.mxu0 0.0
    %3644 = vmatpush2.msra.mxu0 0.0
    %3645 = vmatprep.mubr.f32.mxu0 0.0
    %3646 = vmatmul.mubr.f32.gmra.mxu0 %v3535
    %v3647 = vpop.f32.mrf.mxu0
    %v3648 = vadd.f32 %v3422, %v3647
    %v3649 = vpop.f32.mrf.mxu0
    %3650 = vmatprep.mubr.f32.mxu0 0.0
    %3651 = vmatmul.mubr.f32.gmra.mxu0 %v3537
    %v3652 = vpop.f32.mrf.mxu0
    %v3653 = vadd.f32 %v3427, %v3652
    %v3654 = vpop.f32.mrf.mxu0
    %3655 = vmatprep.mubr.f32.mxu0 0.0
    %3656 = vmatmul.mubr.f32.gmra.mxu0 %v3539
    %v3657 = vpop.f32.mrf.mxu0
    %v3658 = vadd.f32 %v3432, %v3657
    %v3659 = vpop.f32.mrf.mxu0
    %3660 = vmatprep.mubr.f32.mxu0 0.0
    %3661 = vmatmul.mubr.f32.gmra.mxu0 %v3541
    %v3662 = vpop.f32.mrf.mxu0
    %v3663 = vadd.f32 %v3437, %v3662
    %v3664 = vpop.f32.mrf.mxu0
    %3665 = vmatprep.mubr.f32.mxu0 0.0
    %3666 = vmatmul.mubr.f32.gmra.mxu0 %v3543
    %v3667 = vpop.f32.mrf.mxu0
    %v3668 = vadd.f32 %v3442, %v3667
    %v3669 = vpop.f32.mrf.mxu0
    %3670 = vmatprep.mubr.f32.mxu0 0.0
    %3671 = vmatmul.mubr.f32.gmra.mxu0 %v3545
    %v3672 = vpop.f32.mrf.mxu0
    %v3673 = vadd.f32 %v3447, %v3672
    %v3674 = vpop.f32.mrf.mxu0
    %3675 = vmatprep.mubr.f32.mxu0 0.0
    %3676 = vmatmul.mubr.f32.gmra.mxu0 %v3547
    %v3677 = vpop.f32.mrf.mxu0
    %v3678 = vadd.f32 %v3452, %v3677
    %v3679 = vpop.f32.mrf.mxu0
    %3680 = vmatprep.mubr.f32.mxu0 0.0
    %3681 = vmatmul.mubr.f32.gmra.mxu0 %v3549
    %v3682 = vpop.f32.mrf.mxu0
    %v3683 = vadd.f32 %v3457, %v3682
    %v3684 = vpop.f32.mrf.mxu0
    %3685 = vmatprep.mubr.f32.mxu0 0.0
    %3686 = vmatmul.mubr.f32.gmra.mxu0 %v3551
    %v3687 = vpop.f32.mrf.mxu0
    %v3688 = vadd.f32 %v3462, %v3687
    %v3689 = vpop.f32.mrf.mxu0
    %3690 = vmatprep.mubr.f32.mxu0 0.0
    %3691 = vmatmul.mubr.f32.gmra.mxu0 %v3553
    %v3692 = vpop.f32.mrf.mxu0
    %v3693 = vadd.f32 %v3467, %v3692
    %v3694 = vpop.f32.mrf.mxu0
    %3695 = vmatprep.mubr.f32.mxu0 0.0
    %3696 = vmatmul.mubr.f32.gmra.mxu0 %v3555
    %v3697 = vpop.f32.mrf.mxu0
    %v3698 = vadd.f32 %v3472, %v3697
    %v3699 = vpop.f32.mrf.mxu0
    %3700 = vmatprep.mubr.f32.mxu0 0.0
    %3701 = vmatmul.mubr.f32.gmra.mxu0 %v3557
    %v3702 = vpop.f32.mrf.mxu0
    %v3703 = vadd.f32 %v3477, %v3702
    %v3704 = vpop.f32.mrf.mxu0
    %3705 = vmatprep.mubr.f32.mxu0 0.0
    %3706 = vmatmul.mubr.f32.gmra.mxu0 %v3559
    %v3707 = vpop.f32.mrf.mxu0
    %v3708 = vadd.f32 %v3482, %v3707
    %v3709 = vpop.f32.mrf.mxu0
    %3710 = vmatprep.mubr.f32.mxu0 0.0
    %3711 = vmatmul.mubr.f32.gmra.mxu0 %v3561
    %v3712 = vpop.f32.mrf.mxu0
    %v3713 = vadd.f32 %v3487, %v3712
    %v3714 = vpop.f32.mrf.mxu0
    %3715 = vmatprep.mubr.f32.mxu0 0.0
    %3716 = vmatmul.mubr.f32.gmra.mxu0 %v3563
    %v3717 = vpop.f32.mrf.mxu0
    %v3718 = vadd.f32 %v3492, %v3717
    %v3719 = vpop.f32.mrf.mxu0
    %3720 = vmatprep.mubr.f32.mxu0 0.0
    %3721 = vmatmul.mubr.f32.gmra.mxu0 %v3565
    %v3722 = vpop.f32.mrf.mxu0
    %v3723 = vadd.f32 %v3497, %v3722
    %v3724 = vpop.f32.mrf.mxu0
    %3725 = vmatprep.mubr.f32.mxu0 0.0
    %3726 = vmatmul.mubr.f32.gmra.mxu0 %v3567
    %v3727 = vpop.f32.mrf.mxu0
    %v3728 = vadd.f32 %v3502, %v3727
    %v3729 = vpop.f32.mrf.mxu0
    %3730 = vmatprep.mubr.f32.mxu0 0.0
    %3731 = vmatmul.mubr.f32.gmra.mxu0 %v3569
    %v3732 = vpop.f32.mrf.mxu0
    %v3733 = vadd.f32 %v3507, %v3732
    %v3734 = vpop.f32.mrf.mxu0
    %3735 = vmatprep.mubr.f32.mxu0 0.0
    %3736 = vmatmul.mubr.f32.gmra.mxu0 %v3571
    %v3737 = vpop.f32.mrf.mxu0
    %v3738 = vadd.f32 %v3512, %v3737
    %v3739 = vpop.f32.mrf.mxu0
    %3740 = vmatprep.mubr.f32.mxu0 0.0
    %3741 = vmatmul.mubr.f32.gmra.mxu0 %v3573
    %v3742 = vpop.f32.mrf.mxu0
    %v3743 = vadd.f32 %v3517, %v3742
    %v3744 = vpop.f32.mrf.mxu0
    %3745 = vmatprep.mubr.f32.mxu0 0.0
    %3746 = vmatmul.mubr.f32.gmra.mxu0 %v3575
    %v3747 = vpop.f32.mrf.mxu0
    %v3748 = vadd.f32 %v3522, %v3747
    %v3749 = vpop.f32.mrf.mxu0
    %3750 = vmatprep.mubr.f32.mxu0 0.0
    %3751 = vmatmul.mubr.f32.gmra.mxu0 %v3577
    %v3752 = vpop.f32.mrf.mxu0
    %v3753 = vadd.f32 %v3527, %v3752
    %v3754 = vpop.f32.mrf.mxu0
    %3755 = vmatprep.mubr.f32.mxu0 0.0
    %3756 = vmatmul.mubr.f32.gmra.mxu0 %v3579
    %v3757 = vpop.f32.mrf.mxu0
    %v3758 = vadd.f32 %v3532, %v3757
    %v3759 = vpop.f32.mrf.mxu0
    %3760 = vdwg.mxu0
    %s3761 = scalar_lea.vmem %s7, 64
    %v3762 = vld [vmem:[%s3761] sm:$0xff]
    %v3763 = vld [vmem:[%s3761 + $0x8] sm:$0xff]
    %v3764 = vld [vmem:[%s3761 + $0x10] sm:$0xff]
    %v3765 = vld [vmem:[%s3761 + $0x18] sm:$0xff]
    %v3766 = vrot.slane %v3108, 2
    %v3767 = vrot.slane %v3113, 2
    %v3768 = vsel %vm2084, %v3766, %v3767
    %v3769 = vrot.slane %v3118, 2
    %v3770 = vsel %vm2084, %v3767, %v3769
    %v3771 = vrot.slane %v3123, 2
    %v3772 = vsel %vm2084, %v3769, %v3771
    %v3773 = vrot.slane %v3128, 2
    %v3774 = vsel %vm2084, %v3771, %v3773
    %v3775 = vrot.slane %v3133, 2
    %v3776 = vsel %vm2084, %v3773, %v3775
    %v3777 = vrot.slane %v3138, 2
    %v3778 = vsel %vm2084, %v3775, %v3777
    %v3779 = vrot.slane %v3143, 2
    %v3780 = vsel %vm2084, %v3777, %v3779
    %v3781 = vrot.slane %v3148, 2
    %v3782 = vsel %vm2084, %v3779, %v3781
    %v3783 = vrot.slane %v3153, 2
    %v3784 = vsel %vm2084, %v3781, %v3783
    %v3785 = vrot.slane %v3158, 2
    %v3786 = vsel %vm2084, %v3783, %v3785
    %v3787 = vrot.slane %v3163, 2
    %v3788 = vsel %vm2084, %v3785, %v3787
    %v3789 = vrot.slane %v3168, 2
    %v3790 = vsel %vm2084, %v3787, %v3789
    %v3791 = vrot.slane %v3173, 2
    %v3792 = vsel %vm2084, %v3789, %v3791
    %v3793 = vrot.slane %v3178, 2
    %v3794 = vsel %vm2084, %v3791, %v3793
    %v3795 = vrot.slane %v3183, 2
    %v3796 = vsel %vm2084, %v3793, %v3795
    %v3797 = vrot.slane %v3188, 2
    %v3798 = vsel %vm2084, %v3795, %v3797
    %v3799 = vrot.slane %v3193, 2
    %v3800 = vsel %vm2084, %v3797, %v3799
    %v3801 = vrot.slane %v3198, 2
    %v3802 = vsel %vm2084, %v3799, %v3801
    %v3803 = vrot.slane %v3203, 2
    %v3804 = vsel %vm2084, %v3801, %v3803
    %v3805 = vrot.slane %v3208, 2
    %v3806 = vsel %vm2084, %v3803, %v3805
    %v3807 = vrot.slane %v3213, 2
    %v3808 = vsel %vm2084, %v3805, %v3807
    %v3809 = vrot.slane %v3218, 2
    %v3810 = vsel %vm2084, %v3807, %v3809
    %v3811 = vsel %vm3308, %v3768, 0
    %v3813 = vsel %vm3308, %v3770, 0
    %v3815 = vsel %vm3308, %v3772, 0
    %v3817 = vsel %vm3308, %v3774, 0
    %v3819 = vsel %vm3308, %v3776, 0
    %v3821 = vsel %vm3308, %v3778, 0
    %v3823 = vsel %vm3308, %v3780, 0
    %v3825 = vsel %vm3308, %v3782, 0
    %v3827 = vsel %vm3308, %v3784, 0
    %v3829 = vsel %vm3308, %v3786, 0
    %v3831 = vsel %vm3308, %v3788, 0
    %v3833 = vsel %vm3308, %v3790, 0
    %v3835 = vsel %vm3308, %v3792, 0
    %v3837 = vsel %vm3308, %v3794, 0
    %v3839 = vsel %vm3308, %v3796, 0
    %v3841 = vsel %vm3308, %v3798, 0
    %v3843 = vsel %vm3308, %v3800, 0
    %v3845 = vsel %vm3308, %v3802, 0
    %v3847 = vsel %vm3308, %v3804, 0
    %v3849 = vsel %vm3308, %v3806, 0
    %v3851 = vsel %vm3308, %v3808, 0
    %v3853 = vsel %vm3308, %v3810, 0
    %v3855 = vsel %vm3308, %v3809, 0
    %3857 = vmatprep.subr.mxu0 0.0
    %3858 = vmatpush1.msra.mxu0 0.0
    %3859 = vmatprep.subr.mxu0 0.0
    %3860 = vmatpush1.msra.mxu0 0.0
    %3861 = vmatprep.subr.mxu0 0.0
    %3862 = vmatpush1.msra.mxu0 0.0
    %3863 = vmatprep.subr.mxu0 0.0
    %3864 = vmatpush1.msra.mxu0 0.0
    %3865 = vmatprep.subr.mxu0 0.0
    %3866 = vmatpush1.msra.mxu0 0.0
    %3867 = vmatprep.subr.mxu0 0.0
    %3868 = vmatpush1.msra.mxu0 0.0
    %3869 = vmatprep.subr.mxu0 0.0
    %3870 = vmatpush1.msra.mxu0 0.0
    %3871 = vmatprep.subr.mxu0 0.0
    %3872 = vmatpush1.msra.mxu0 0.0
    %3873 = vmatprep.subr.mxu0 0.0
    %3874 = vmatpush1.msra.mxu0 0.0
    %3875 = vmatprep.subr.mxu0 0.0
    %3876 = vmatpush1.msra.mxu0 0.0
    %3877 = vmatprep.subr.mxu0 0.0
    %3878 = vmatpush1.msra.mxu0 0.0
    %3879 = vmatprep.subr.mxu0 0.0
    %3880 = vmatpush1.msra.mxu0 0.0
    %3881 = vmatprep.subr.mxu0 0.0
    %3882 = vmatpush1.msra.mxu0 %v3765
    %3883 = vmatprep.subr.mxu0 0.0
    %3884 = vmatpush1.msra.mxu0 %v3764
    %3885 = vmatprep.subr.mxu0 0.0
    %3886 = vmatpush1.msra.mxu0 %v3763
    %3887 = vmatprep.subr.mxu0 0.0
    %3888 = vmatpush1.msra.mxu0 %v3762
    %3889 = vmatprep.subr.mxu0 0.0
    %3890 = vmatpush2.msra.mxu0 0.0
    %3891 = vmatprep.subr.mxu0 0.0
    %3892 = vmatpush2.msra.mxu0 0.0
    %3893 = vmatprep.subr.mxu0 0.0
    %3894 = vmatpush2.msra.mxu0 0.0
    %3895 = vmatprep.subr.mxu0 0.0
    %3896 = vmatpush2.msra.mxu0 0.0
    %3897 = vmatprep.subr.mxu0 0.0
    %3898 = vmatpush2.msra.mxu0 0.0
    %3899 = vmatprep.subr.mxu0 0.0
    %3900 = vmatpush2.msra.mxu0 0.0
    %3901 = vmatprep.subr.mxu0 0.0
    %3902 = vmatpush2.msra.mxu0 0.0
    %3903 = vmatprep.subr.mxu0 0.0
    %3904 = vmatpush2.msra.mxu0 0.0
    %3905 = vmatprep.subr.mxu0 0.0
    %3906 = vmatpush2.msra.mxu0 0.0
    %3907 = vmatprep.subr.mxu0 0.0
    %3908 = vmatpush2.msra.mxu0 0.0
    %3909 = vmatprep.subr.mxu0 0.0
    %3910 = vmatpush2.msra.mxu0 0.0
    %3911 = vmatprep.subr.mxu0 0.0
    %3912 = vmatpush2.msra.mxu0 0.0
    %3913 = vmatprep.subr.mxu0 0.0
    %3914 = vmatpush2.msra.mxu0 0.0
    %3915 = vmatprep.subr.mxu0 0.0
    %3916 = vmatpush2.msra.mxu0 0.0
    %3917 = vmatprep.subr.mxu0 0.0
    %3918 = vmatpush2.msra.mxu0 0.0
    %3919 = vmatprep.subr.mxu0 0.0
    %3920 = vmatpush2.msra.mxu0 0.0
    %3921 = vmatprep.mubr.f32.mxu0 0.0
    %3922 = vmatmul.mubr.f32.gmra.mxu0 %v3811
    %v3923 = vpop.f32.mrf.mxu0
    %v3924 = vadd.f32 0.0, %v3923
    %v3925 = vpop.f32.mrf.mxu0
    %3926 = vmatprep.mubr.f32.mxu0 0.0
    %3927 = vmatmul.mubr.f32.gmra.mxu0 %v3813
    %v3928 = vpop.f32.mrf.mxu0
    %v3929 = vadd.f32 0.0, %v3928
    %v3930 = vpop.f32.mrf.mxu0
    %3931 = vmatprep.mubr.f32.mxu0 0.0
    %3932 = vmatmul.mubr.f32.gmra.mxu0 %v3815
    %v3933 = vpop.f32.mrf.mxu0
    %v3934 = vadd.f32 0.0, %v3933
    %v3935 = vpop.f32.mrf.mxu0
    %3936 = vmatprep.mubr.f32.mxu0 0.0
    %3937 = vmatmul.mubr.f32.gmra.mxu0 %v3817
    %v3938 = vpop.f32.mrf.mxu0
    %v3939 = vadd.f32 0.0, %v3938
    %v3940 = vpop.f32.mrf.mxu0
    %3941 = vmatprep.mubr.f32.mxu0 0.0
    %3942 = vmatmul.mubr.f32.gmra.mxu0 %v3819
    %v3943 = vpop.f32.mrf.mxu0
    %v3944 = vadd.f32 0.0, %v3943
    %v3945 = vpop.f32.mrf.mxu0
    %3946 = vmatprep.mubr.f32.mxu0 0.0
    %3947 = vmatmul.mubr.f32.gmra.mxu0 %v3821
    %v3948 = vpop.f32.mrf.mxu0
    %v3949 = vadd.f32 0.0, %v3948
    %v3950 = vpop.f32.mrf.mxu0
    %3951 = vmatprep.mubr.f32.mxu0 0.0
    %3952 = vmatmul.mubr.f32.gmra.mxu0 %v3823
    %v3953 = vpop.f32.mrf.mxu0
    %v3954 = vadd.f32 0.0, %v3953
    %v3955 = vpop.f32.mrf.mxu0
    %3956 = vmatprep.mubr.f32.mxu0 0.0
    %3957 = vmatmul.mubr.f32.gmra.mxu0 %v3825
    %v3958 = vpop.f32.mrf.mxu0
    %v3959 = vadd.f32 0.0, %v3958
    %v3960 = vpop.f32.mrf.mxu0
    %3961 = vmatprep.mubr.f32.mxu0 0.0
    %3962 = vmatmul.mubr.f32.gmra.mxu0 %v3827
    %v3963 = vpop.f32.mrf.mxu0
    %v3964 = vadd.f32 0.0, %v3963
    %v3965 = vpop.f32.mrf.mxu0
    %3966 = vmatprep.mubr.f32.mxu0 0.0
    %3967 = vmatmul.mubr.f32.gmra.mxu0 %v3829
    %v3968 = vpop.f32.mrf.mxu0
    %v3969 = vadd.f32 0.0, %v3968
    %v3970 = vpop.f32.mrf.mxu0
    %3971 = vmatprep.mubr.f32.mxu0 0.0
    %3972 = vmatmul.mubr.f32.gmra.mxu0 %v3831
    %v3973 = vpop.f32.mrf.mxu0
    %v3974 = vadd.f32 0.0, %v3973
    %v3975 = vpop.f32.mrf.mxu0
    %3976 = vmatprep.mubr.f32.mxu0 0.0
    %3977 = vmatmul.mubr.f32.gmra.mxu0 %v3833
    %v3978 = vpop.f32.mrf.mxu0
    %v3979 = vadd.f32 0.0, %v3978
    %v3980 = vpop.f32.mrf.mxu0
    %3981 = vmatprep.mubr.f32.mxu0 0.0
    %3982 = vmatmul.mubr.f32.gmra.mxu0 %v3835
    %v3983 = vpop.f32.mrf.mxu0
    %v3984 = vadd.f32 0.0, %v3983
    %v3985 = vpop.f32.mrf.mxu0
    %3986 = vmatprep.mubr.f32.mxu0 0.0
    %3987 = vmatmul.mubr.f32.gmra.mxu0 %v3837
    %v3988 = vpop.f32.mrf.mxu0
    %v3989 = vadd.f32 0.0, %v3988
    %v3990 = vpop.f32.mrf.mxu0
    %3991 = vmatprep.mubr.f32.mxu0 0.0
    %3992 = vmatmul.mubr.f32.gmra.mxu0 %v3839
    %v3993 = vpop.f32.mrf.mxu0
    %v3994 = vadd.f32 0.0, %v3993
    %v3995 = vpop.f32.mrf.mxu0
    %3996 = vmatprep.mubr.f32.mxu0 0.0
    %3997 = vmatmul.mubr.f32.gmra.mxu0 %v3841
    %v3998 = vpop.f32.mrf.mxu0
    %v3999 = vadd.f32 0.0, %v3998
    %v4000 = vpop.f32.mrf.mxu0
    %4001 = vmatprep.mubr.f32.mxu0 0.0
    %4002 = vmatmul.mubr.f32.gmra.mxu0 %v3843
    %v4003 = vpop.f32.mrf.mxu0
    %v4004 = vadd.f32 0.0, %v4003
    %v4005 = vpop.f32.mrf.mxu0
    %4006 = vmatprep.mubr.f32.mxu0 0.0
    %4007 = vmatmul.mubr.f32.gmra.mxu0 %v3845
    %v4008 = vpop.f32.mrf.mxu0
    %v4009 = vadd.f32 0.0, %v4008
    %v4010 = vpop.f32.mrf.mxu0
    %4011 = vmatprep.mubr.f32.mxu0 0.0
    %4012 = vmatmul.mubr.f32.gmra.mxu0 %v3847
    %v4013 = vpop.f32.mrf.mxu0
    %v4014 = vadd.f32 0.0, %v4013
    %v4015 = vpop.f32.mrf.mxu0
    %4016 = vmatprep.mubr.f32.mxu0 0.0
    %4017 = vmatmul.mubr.f32.gmra.mxu0 %v3849
    %v4018 = vpop.f32.mrf.mxu0
    %v4019 = vadd.f32 0.0, %v4018
    %v4020 = vpop.f32.mrf.mxu0
    %4021 = vmatprep.mubr.f32.mxu0 0.0
    %4022 = vmatmul.mubr.f32.gmra.mxu0 %v3851
    %v4023 = vpop.f32.mrf.mxu0
    %v4024 = vadd.f32 0.0, %v4023
    %v4025 = vpop.f32.mrf.mxu0
    %4026 = vmatprep.mubr.f32.mxu0 0.0
    %4027 = vmatmul.mubr.f32.gmra.mxu0 %v3853
    %v4028 = vpop.f32.mrf.mxu0
    %v4029 = vadd.f32 0.0, %v4028
    %v4030 = vpop.f32.mrf.mxu0
    %4031 = vmatprep.mubr.f32.mxu0 0.0
    %4032 = vmatmul.mubr.f32.gmra.mxu0 %v3855
    %v4033 = vpop.f32.mrf.mxu0
    %v4034 = vadd.f32 0.0, %v4033
    %v4035 = vpop.f32.mrf.mxu0
    %4036 = vdwg.mxu0
    %v4037 = vadd.f32 %v3648, %v3924
    %v4038 = vadd.f32 %v3653, %v3929
    %v4039 = vadd.f32 %v3658, %v3934
    %v4040 = vadd.f32 %v3663, %v3939
    %v4041 = vadd.f32 %v3668, %v3944
    %v4042 = vadd.f32 %v3673, %v3949
    %v4043 = vadd.f32 %v3678, %v3954
    %v4044 = vadd.f32 %v3683, %v3959
    %v4045 = vadd.f32 %v3688, %v3964
    %v4046 = vadd.f32 %v3693, %v3969
    %v4047 = vadd.f32 %v3698, %v3974
    %v4048 = vadd.f32 %v3703, %v3979
    %v4049 = vadd.f32 %v3708, %v3984
    %v4050 = vadd.f32 %v3713, %v3989
    %v4051 = vadd.f32 %v3718, %v3994
    %v4052 = vadd.f32 %v3723, %v3999
    %v4053 = vadd.f32 %v3728, %v4004
    %v4054 = vadd.f32 %v3733, %v4009
    %v4055 = vadd.f32 %v3738, %v4014
    %v4056 = vadd.f32 %v3743, %v4019
    %v4057 = vadd.f32 %v3748, %v4024
    %v4058 = vadd.f32 %v3753, %v4029
    %v4059 = vadd.f32 %v3758, %v4034
    %s4060 = scalar_lea.vmem %s7, 96
    %v4061 = vld [vmem:[%s4060] sm:$0xff]
    %v4062 = vld [vmem:[%s4060 + $0x8] sm:$0xff]
    %v4063 = vld [vmem:[%s4060 + $0x10] sm:$0xff]
    %v4064 = vld [vmem:[%s4060 + $0x18] sm:$0xff]
    %v4066 = vrot.slane %v3223, 2
    %v4067 = vsel %vm2084, %v3809, %v4066
    %v4068 = vsel %vm3308, %v4067, 0
    %v4070 = vsel %vm3308, %v4066, 0
    %4072 = vmatprep.subr.mxu0 0.0
    %4073 = vmatpush1.msra.mxu0 0.0
    %4074 = vmatprep.subr.mxu0 0.0
    %4075 = vmatpush1.msra.mxu0 0.0
    %4076 = vmatprep.subr.mxu0 0.0
    %4077 = vmatpush1.msra.mxu0 0.0
    %4078 = vmatprep.subr.mxu0 0.0
    %4079 = vmatpush1.msra.mxu0 0.0
    %4080 = vmatprep.subr.mxu0 0.0
    %4081 = vmatpush1.msra.mxu0 0.0
    %4082 = vmatprep.subr.mxu0 0.0
    %4083 = vmatpush1.msra.mxu0 0.0
    %4084 = vmatprep.subr.mxu0 0.0
    %4085 = vmatpush1.msra.mxu0 0.0
    %4086 = vmatprep.subr.mxu0 0.0
    %4087 = vmatpush1.msra.mxu0 0.0
    %4088 = vmatprep.subr.mxu0 0.0
    %4089 = vmatpush1.msra.mxu0 0.0
    %4090 = vmatprep.subr.mxu0 0.0
    %4091 = vmatpush1.msra.mxu0 0.0
    %4092 = vmatprep.subr.mxu0 0.0
    %4093 = vmatpush1.msra.mxu0 0.0
    %4094 = vmatprep.subr.mxu0 0.0
    %4095 = vmatpush1.msra.mxu0 0.0
    %4096 = vmatprep.subr.mxu0 0.0
    %4097 = vmatpush1.msra.mxu0 %v4064
    %4098 = vmatprep.subr.mxu0 0.0
    %4099 = vmatpush1.msra.mxu0 %v4063
    %4100 = vmatprep.subr.mxu0 0.0
    %4101 = vmatpush1.msra.mxu0 %v4062
    %4102 = vmatprep.subr.mxu0 0.0
    %4103 = vmatpush1.msra.mxu0 %v4061
    %4104 = vmatprep.subr.mxu0 0.0
    %4105 = vmatpush2.msra.mxu0 0.0
    %4106 = vmatprep.subr.mxu0 0.0
    %4107 = vmatpush2.msra.mxu0 0.0
    %4108 = vmatprep.subr.mxu0 0.0
    %4109 = vmatpush2.msra.mxu0 0.0
    %4110 = vmatprep.subr.mxu0 0.0
    %4111 = vmatpush2.msra.mxu0 0.0
    %4112 = vmatprep.subr.mxu0 0.0
    %4113 = vmatpush2.msra.mxu0 0.0
    %4114 = vmatprep.subr.mxu0 0.0
    %4115 = vmatpush2.msra.mxu0 0.0
    %4116 = vmatprep.subr.mxu0 0.0
    %4117 = vmatpush2.msra.mxu0 0.0
    %4118 = vmatprep.subr.mxu0 0.0
    %4119 = vmatpush2.msra.mxu0 0.0
    %4120 = vmatprep.subr.mxu0 0.0
    %4121 = vmatpush2.msra.mxu0 0.0
    %4122 = vmatprep.subr.mxu0 0.0
    %4123 = vmatpush2.msra.mxu0 0.0
    %4124 = vmatprep.subr.mxu0 0.0
    %4125 = vmatpush2.msra.mxu0 0.0
    %4126 = vmatprep.subr.mxu0 0.0
    %4127 = vmatpush2.msra.mxu0 0.0
    %4128 = vmatprep.subr.mxu0 0.0
    %4129 = vmatpush2.msra.mxu0 0.0
    %4130 = vmatprep.subr.mxu0 0.0
    %4131 = vmatpush2.msra.mxu0 0.0
    %4132 = vmatprep.subr.mxu0 0.0
    %4133 = vmatpush2.msra.mxu0 0.0
    %4134 = vmatprep.subr.mxu0 0.0
    %4135 = vmatpush2.msra.mxu0 0.0
    %4136 = vmatprep.mubr.f32.mxu0 0.0
    %4137 = vmatmul.mubr.f32.gmra.mxu0 %v3813
    %v4138 = vpop.f32.mrf.mxu0
    %v4139 = vadd.f32 0.0, %v4138
    %v4140 = vpop.f32.mrf.mxu0
    %4141 = vmatprep.mubr.f32.mxu0 0.0
    %4142 = vmatmul.mubr.f32.gmra.mxu0 %v3815
    %v4143 = vpop.f32.mrf.mxu0
    %v4144 = vadd.f32 0.0, %v4143
    %v4145 = vpop.f32.mrf.mxu0
    %4146 = vmatprep.mubr.f32.mxu0 0.0
    %4147 = vmatmul.mubr.f32.gmra.mxu0 %v3817
    %v4148 = vpop.f32.mrf.mxu0
    %v4149 = vadd.f32 0.0, %v4148
    %v4150 = vpop.f32.mrf.mxu0
    %4151 = vmatprep.mubr.f32.mxu0 0.0
    %4152 = vmatmul.mubr.f32.gmra.mxu0 %v3819
    %v4153 = vpop.f32.mrf.mxu0
    %v4154 = vadd.f32 0.0, %v4153
    %v4155 = vpop.f32.mrf.mxu0
    %4156 = vmatprep.mubr.f32.mxu0 0.0
    %4157 = vmatmul.mubr.f32.gmra.mxu0 %v3821
    %v4158 = vpop.f32.mrf.mxu0
    %v4159 = vadd.f32 0.0, %v4158
    %v4160 = vpop.f32.mrf.mxu0
    %4161 = vmatprep.mubr.f32.mxu0 0.0
    %4162 = vmatmul.mubr.f32.gmra.mxu0 %v3823
    %v4163 = vpop.f32.mrf.mxu0
    %v4164 = vadd.f32 0.0, %v4163
    %v4165 = vpop.f32.mrf.mxu0
    %4166 = vmatprep.mubr.f32.mxu0 0.0
    %4167 = vmatmul.mubr.f32.gmra.mxu0 %v3825
    %v4168 = vpop.f32.mrf.mxu0
    %v4169 = vadd.f32 0.0, %v4168
    %v4170 = vpop.f32.mrf.mxu0
    %4171 = vmatprep.mubr.f32.mxu0 0.0
    %4172 = vmatmul.mubr.f32.gmra.mxu0 %v3827
    %v4173 = vpop.f32.mrf.mxu0
    %v4174 = vadd.f32 0.0, %v4173
    %v4175 = vpop.f32.mrf.mxu0
    %4176 = vmatprep.mubr.f32.mxu0 0.0
    %4177 = vmatmul.mubr.f32.gmra.mxu0 %v3829
    %v4178 = vpop.f32.mrf.mxu0
    %v4179 = vadd.f32 0.0, %v4178
    %v4180 = vpop.f32.mrf.mxu0
    %4181 = vmatprep.mubr.f32.mxu0 0.0
    %4182 = vmatmul.mubr.f32.gmra.mxu0 %v3831
    %v4183 = vpop.f32.mrf.mxu0
    %v4184 = vadd.f32 0.0, %v4183
    %v4185 = vpop.f32.mrf.mxu0
    %4186 = vmatprep.mubr.f32.mxu0 0.0
    %4187 = vmatmul.mubr.f32.gmra.mxu0 %v3833
    %v4188 = vpop.f32.mrf.mxu0
    %v4189 = vadd.f32 0.0, %v4188
    %v4190 = vpop.f32.mrf.mxu0
    %4191 = vmatprep.mubr.f32.mxu0 0.0
    %4192 = vmatmul.mubr.f32.gmra.mxu0 %v3835
    %v4193 = vpop.f32.mrf.mxu0
    %v4194 = vadd.f32 0.0, %v4193
    %v4195 = vpop.f32.mrf.mxu0
    %4196 = vmatprep.mubr.f32.mxu0 0.0
    %4197 = vmatmul.mubr.f32.gmra.mxu0 %v3837
    %v4198 = vpop.f32.mrf.mxu0
    %v4199 = vadd.f32 0.0, %v4198
    %v4200 = vpop.f32.mrf.mxu0
    %4201 = vmatprep.mubr.f32.mxu0 0.0
    %4202 = vmatmul.mubr.f32.gmra.mxu0 %v3839
    %v4203 = vpop.f32.mrf.mxu0
    %v4204 = vadd.f32 0.0, %v4203
    %v4205 = vpop.f32.mrf.mxu0
    %4206 = vmatprep.mubr.f32.mxu0 0.0
    %4207 = vmatmul.mubr.f32.gmra.mxu0 %v3841
    %v4208 = vpop.f32.mrf.mxu0
    %v4209 = vadd.f32 0.0, %v4208
    %v4210 = vpop.f32.mrf.mxu0
    %4211 = vmatprep.mubr.f32.mxu0 0.0
    %4212 = vmatmul.mubr.f32.gmra.mxu0 %v3843
    %v4213 = vpop.f32.mrf.mxu0
    %v4214 = vadd.f32 0.0, %v4213
    %v4215 = vpop.f32.mrf.mxu0
    %4216 = vmatprep.mubr.f32.mxu0 0.0
    %4217 = vmatmul.mubr.f32.gmra.mxu0 %v3845
    %v4218 = vpop.f32.mrf.mxu0
    %v4219 = vadd.f32 0.0, %v4218
    %v4220 = vpop.f32.mrf.mxu0
    %4221 = vmatprep.mubr.f32.mxu0 0.0
    %4222 = vmatmul.mubr.f32.gmra.mxu0 %v3847
    %v4223 = vpop.f32.mrf.mxu0
    %v4224 = vadd.f32 0.0, %v4223
    %v4225 = vpop.f32.mrf.mxu0
    %4226 = vmatprep.mubr.f32.mxu0 0.0
    %4227 = vmatmul.mubr.f32.gmra.mxu0 %v3849
    %v4228 = vpop.f32.mrf.mxu0
    %v4229 = vadd.f32 0.0, %v4228
    %v4230 = vpop.f32.mrf.mxu0
    %4231 = vmatprep.mubr.f32.mxu0 0.0
    %4232 = vmatmul.mubr.f32.gmra.mxu0 %v3851
    %v4233 = vpop.f32.mrf.mxu0
    %v4234 = vadd.f32 0.0, %v4233
    %v4235 = vpop.f32.mrf.mxu0
    %4236 = vmatprep.mubr.f32.mxu0 0.0
    %4237 = vmatmul.mubr.f32.gmra.mxu0 %v3853
    %v4238 = vpop.f32.mrf.mxu0
    %v4239 = vadd.f32 0.0, %v4238
    %v4240 = vpop.f32.mrf.mxu0
    %4241 = vmatprep.mubr.f32.mxu0 0.0
    %4242 = vmatmul.mubr.f32.gmra.mxu0 %v4068
    %v4243 = vpop.f32.mrf.mxu0
    %v4244 = vadd.f32 0.0, %v4243
    %v4245 = vpop.f32.mrf.mxu0
    %4246 = vmatprep.mubr.f32.mxu0 0.0
    %4247 = vmatmul.mubr.f32.gmra.mxu0 %v4070
    %v4248 = vpop.f32.mrf.mxu0
    %v4249 = vadd.f32 0.0, %v4248
    %v4250 = vpop.f32.mrf.mxu0
    %4251 = vdwg.mxu0
    %v4252 = vadd.f32 %v4037, %v4139
    %v4253 = vadd.f32 %v4038, %v4144
    %v4254 = vadd.f32 %v4039, %v4149
    %v4255 = vadd.f32 %v4040, %v4154
    %v4256 = vadd.f32 %v4041, %v4159
    %v4257 = vadd.f32 %v4042, %v4164
    %v4258 = vadd.f32 %v4043, %v4169
    %v4259 = vadd.f32 %v4044, %v4174
    %v4260 = vadd.f32 %v4045, %v4179
    %v4261 = vadd.f32 %v4046, %v4184
    %v4262 = vadd.f32 %v4047, %v4189
    %v4263 = vadd.f32 %v4048, %v4194
    %v4264 = vadd.f32 %v4049, %v4199
    %v4265 = vadd.f32 %v4050, %v4204
    %v4266 = vadd.f32 %v4051, %v4209
    %v4267 = vadd.f32 %v4052, %v4214
    %v4268 = vadd.f32 %v4053, %v4219
    %v4269 = vadd.f32 %v4054, %v4224
    %v4270 = vadd.f32 %v4055, %v4229
    %v4271 = vadd.f32 %v4056, %v4234
    %v4272 = vadd.f32 %v4057, %v4239
    %v4273 = vadd.f32 %v4058, %v4244
    %v4274 = vadd.f32 %v4059, %v4249
    %s4275 = scalar_lea.vmem %s7, 128
    %v4276 = vld [vmem:[%s4275] sm:$0xff]
    %v4277 = vld [vmem:[%s4275 + $0x8] sm:$0xff]
    %v4278 = vld [vmem:[%s4275 + $0x10] sm:$0xff]
    %v4279 = vld [vmem:[%s4275 + $0x18] sm:$0xff]
    %vm4280 = vcmask 1044480
    %v4281 = vrot.slane %v3113, 3
    %v4282 = vrot.slane %v3118, 3
    %v4283 = vsel %vm4280, %v4281, %v4282
    %v4284 = vrot.slane %v3123, 3
    %v4285 = vsel %vm4280, %v4282, %v4284
    %v4286 = vrot.slane %v3128, 3
    %v4287 = vsel %vm4280, %v4284, %v4286
    %v4288 = vrot.slane %v3133, 3
    %v4289 = vsel %vm4280, %v4286, %v4288
    %v4290 = vrot.slane %v3138, 3
    %v4291 = vsel %vm4280, %v4288, %v4290
    %v4292 = vrot.slane %v3143, 3
    %v4293 = vsel %vm4280, %v4290, %v4292
    %v4294 = vrot.slane %v3148, 3
    %v4295 = vsel %vm4280, %v4292, %v4294
    %v4296 = vrot.slane %v3153, 3
    %v4297 = vsel %vm4280, %v4294, %v4296
    %v4298 = vrot.slane %v3158, 3
    %v4299 = vsel %vm4280, %v4296, %v4298
    %v4300 = vrot.slane %v3163, 3
    %v4301 = vsel %vm4280, %v4298, %v4300
    %v4302 = vrot.slane %v3168, 3
    %v4303 = vsel %vm4280, %v4300, %v4302
    %v4304 = vrot.slane %v3173, 3
    %v4305 = vsel %vm4280, %v4302, %v4304
    %v4306 = vrot.slane %v3178, 3
    %v4307 = vsel %vm4280, %v4304, %v4306
    %v4308 = vrot.slane %v3183, 3
    %v4309 = vsel %vm4280, %v4306, %v4308
    %v4310 = vrot.slane %v3188, 3
    %v4311 = vsel %vm4280, %v4308, %v4310
    %v4312 = vrot.slane %v3193, 3
    %v4313 = vsel %vm4280, %v4310, %v4312
    %v4314 = vrot.slane %v3198, 3
    %v4315 = vsel %vm4280, %v4312, %v4314
    %v4316 = vrot.slane %v3203, 3
    %v4317 = vsel %vm4280, %v4314, %v4316
    %v4318 = vrot.slane %v3208, 3
    %v4319 = vsel %vm4280, %v4316, %v4318
    %v4320 = vrot.slane %v3213, 3
    %v4321 = vsel %vm4280, %v4318, %v4320
    %v4322 = vrot.slane %v3218, 3
    %v4323 = vsel %vm4280, %v4320, %v4322
    %v4324 = vrot.slane %v3223, 3
    %v4325 = vsel %vm4280, %v4322, %v4324
    %v4326 = vsel %vm3308, %v4283, 0
    %v4328 = vsel %vm3308, %v4285, 0
    %v4330 = vsel %vm3308, %v4287, 0
    %v4332 = vsel %vm3308, %v4289, 0
    %v4334 = vsel %vm3308, %v4291, 0
    %v4336 = vsel %vm3308, %v4293, 0
    %v4338 = vsel %vm3308, %v4295, 0
    %v4340 = vsel %vm3308, %v4297, 0
    %v4342 = vsel %vm3308, %v4299, 0
    %v4344 = vsel %vm3308, %v4301, 0
    %v4346 = vsel %vm3308, %v4303, 0
    %v4348 = vsel %vm3308, %v4305, 0
    %v4350 = vsel %vm3308, %v4307, 0
    %v4352 = vsel %vm3308, %v4309, 0
    %v4354 = vsel %vm3308, %v4311, 0
    %v4356 = vsel %vm3308, %v4313, 0
    %v4358 = vsel %vm3308, %v4315, 0
    %v4360 = vsel %vm3308, %v4317, 0
    %v4362 = vsel %vm3308, %v4319, 0
    %v4364 = vsel %vm3308, %v4321, 0
    %v4366 = vsel %vm3308, %v4323, 0
    %v4368 = vsel %vm3308, %v4325, 0
    %v4370 = vsel %vm3308, %v4324, 0
    %4372 = vmatprep.subr.mxu0 0.0
    %4373 = vmatpush1.msra.mxu0 0.0
    %4374 = vmatprep.subr.mxu0 0.0
    %4375 = vmatpush1.msra.mxu0 0.0
    %4376 = vmatprep.subr.mxu0 0.0
    %4377 = vmatpush1.msra.mxu0 0.0
    %4378 = vmatprep.subr.mxu0 0.0
    %4379 = vmatpush1.msra.mxu0 0.0
    %4380 = vmatprep.subr.mxu0 0.0
    %4381 = vmatpush1.msra.mxu0 0.0
    %4382 = vmatprep.subr.mxu0 0.0
    %4383 = vmatpush1.msra.mxu0 0.0
    %4384 = vmatprep.subr.mxu0 0.0
    %4385 = vmatpush1.msra.mxu0 0.0
    %4386 = vmatprep.subr.mxu0 0.0
    %4387 = vmatpush1.msra.mxu0 0.0
    %4388 = vmatprep.subr.mxu0 0.0
    %4389 = vmatpush1.msra.mxu0 0.0
    %4390 = vmatprep.subr.mxu0 0.0
    %4391 = vmatpush1.msra.mxu0 0.0
    %4392 = vmatprep.subr.mxu0 0.0
    %4393 = vmatpush1.msra.mxu0 0.0
    %4394 = vmatprep.subr.mxu0 0.0
    %4395 = vmatpush1.msra.mxu0 0.0
    %4396 = vmatprep.subr.mxu0 0.0
    %4397 = vmatpush1.msra.mxu0 %v4279
    %4398 = vmatprep.subr.mxu0 0.0
    %4399 = vmatpush1.msra.mxu0 %v4278
    %4400 = vmatprep.subr.mxu0 0.0
    %4401 = vmatpush1.msra.mxu0 %v4277
    %4402 = vmatprep.subr.mxu0 0.0
    %4403 = vmatpush1.msra.mxu0 %v4276
    %4404 = vmatprep.subr.mxu0 0.0
    %4405 = vmatpush2.msra.mxu0 0.0
    %4406 = vmatprep.subr.mxu0 0.0
    %4407 = vmatpush2.msra.mxu0 0.0
    %4408 = vmatprep.subr.mxu0 0.0
    %4409 = vmatpush2.msra.mxu0 0.0
    %4410 = vmatprep.subr.mxu0 0.0
    %4411 = vmatpush2.msra.mxu0 0.0
    %4412 = vmatprep.subr.mxu0 0.0
    %4413 = vmatpush2.msra.mxu0 0.0
    %4414 = vmatprep.subr.mxu0 0.0
    %4415 = vmatpush2.msra.mxu0 0.0
    %4416 = vmatprep.subr.mxu0 0.0
    %4417 = vmatpush2.msra.mxu0 0.0
    %4418 = vmatprep.subr.mxu0 0.0
    %4419 = vmatpush2.msra.mxu0 0.0
    %4420 = vmatprep.subr.mxu0 0.0
    %4421 = vmatpush2.msra.mxu0 0.0
    %4422 = vmatprep.subr.mxu0 0.0
    %4423 = vmatpush2.msra.mxu0 0.0
    %4424 = vmatprep.subr.mxu0 0.0
    %4425 = vmatpush2.msra.mxu0 0.0
    %4426 = vmatprep.subr.mxu0 0.0
    %4427 = vmatpush2.msra.mxu0 0.0
    %4428 = vmatprep.subr.mxu0 0.0
    %4429 = vmatpush2.msra.mxu0 0.0
    %4430 = vmatprep.subr.mxu0 0.0
    %4431 = vmatpush2.msra.mxu0 0.0
    %4432 = vmatprep.subr.mxu0 0.0
    %4433 = vmatpush2.msra.mxu0 0.0
    %4434 = vmatprep.subr.mxu0 0.0
    %4435 = vmatpush2.msra.mxu0 0.0
    %4436 = vmatprep.mubr.f32.mxu0 0.0
    %4437 = vmatmul.mubr.f32.gmra.mxu0 %v4326
    %v4438 = vpop.f32.mrf.mxu0
    %v4439 = vadd.f32 0.0, %v4438
    %v4440 = vpop.f32.mrf.mxu0
    %4441 = vmatprep.mubr.f32.mxu0 0.0
    %4442 = vmatmul.mubr.f32.gmra.mxu0 %v4328
    %v4443 = vpop.f32.mrf.mxu0
    %v4444 = vadd.f32 0.0, %v4443
    %v4445 = vpop.f32.mrf.mxu0
    %4446 = vmatprep.mubr.f32.mxu0 0.0
    %4447 = vmatmul.mubr.f32.gmra.mxu0 %v4330
    %v4448 = vpop.f32.mrf.mxu0
    %v4449 = vadd.f32 0.0, %v4448
    %v4450 = vpop.f32.mrf.mxu0
    %4451 = vmatprep.mubr.f32.mxu0 0.0
    %4452 = vmatmul.mubr.f32.gmra.mxu0 %v4332
    %v4453 = vpop.f32.mrf.mxu0
    %v4454 = vadd.f32 0.0, %v4453
    %v4455 = vpop.f32.mrf.mxu0
    %4456 = vmatprep.mubr.f32.mxu0 0.0
    %4457 = vmatmul.mubr.f32.gmra.mxu0 %v4334
    %v4458 = vpop.f32.mrf.mxu0
    %v4459 = vadd.f32 0.0, %v4458
    %v4460 = vpop.f32.mrf.mxu0
    %4461 = vmatprep.mubr.f32.mxu0 0.0
    %4462 = vmatmul.mubr.f32.gmra.mxu0 %v4336
    %v4463 = vpop.f32.mrf.mxu0
    %v4464 = vadd.f32 0.0, %v4463
    %v4465 = vpop.f32.mrf.mxu0
    %4466 = vmatprep.mubr.f32.mxu0 0.0
    %4467 = vmatmul.mubr.f32.gmra.mxu0 %v4338
    %v4468 = vpop.f32.mrf.mxu0
    %v4469 = vadd.f32 0.0, %v4468
    %v4470 = vpop.f32.mrf.mxu0
    %4471 = vmatprep.mubr.f32.mxu0 0.0
    %4472 = vmatmul.mubr.f32.gmra.mxu0 %v4340
    %v4473 = vpop.f32.mrf.mxu0
    %v4474 = vadd.f32 0.0, %v4473
    %v4475 = vpop.f32.mrf.mxu0
    %4476 = vmatprep.mubr.f32.mxu0 0.0
    %4477 = vmatmul.mubr.f32.gmra.mxu0 %v4342
    %v4478 = vpop.f32.mrf.mxu0
    %v4479 = vadd.f32 0.0, %v4478
    %v4480 = vpop.f32.mrf.mxu0
    %4481 = vmatprep.mubr.f32.mxu0 0.0
    %4482 = vmatmul.mubr.f32.gmra.mxu0 %v4344
    %v4483 = vpop.f32.mrf.mxu0
    %v4484 = vadd.f32 0.0, %v4483
    %v4485 = vpop.f32.mrf.mxu0
    %4486 = vmatprep.mubr.f32.mxu0 0.0
    %4487 = vmatmul.mubr.f32.gmra.mxu0 %v4346
    %v4488 = vpop.f32.mrf.mxu0
    %v4489 = vadd.f32 0.0, %v4488
    %v4490 = vpop.f32.mrf.mxu0
    %4491 = vmatprep.mubr.f32.mxu0 0.0
    %4492 = vmatmul.mubr.f32.gmra.mxu0 %v4348
    %v4493 = vpop.f32.mrf.mxu0
    %v4494 = vadd.f32 0.0, %v4493
    %v4495 = vpop.f32.mrf.mxu0
    %4496 = vmatprep.mubr.f32.mxu0 0.0
    %4497 = vmatmul.mubr.f32.gmra.mxu0 %v4350
    %v4498 = vpop.f32.mrf.mxu0
    %v4499 = vadd.f32 0.0, %v4498
    %v4500 = vpop.f32.mrf.mxu0
    %4501 = vmatprep.mubr.f32.mxu0 0.0
    %4502 = vmatmul.mubr.f32.gmra.mxu0 %v4352
    %v4503 = vpop.f32.mrf.mxu0
    %v4504 = vadd.f32 0.0, %v4503
    %v4505 = vpop.f32.mrf.mxu0
    %4506 = vmatprep.mubr.f32.mxu0 0.0
    %4507 = vmatmul.mubr.f32.gmra.mxu0 %v4354
    %v4508 = vpop.f32.mrf.mxu0
    %v4509 = vadd.f32 0.0, %v4508
    %v4510 = vpop.f32.mrf.mxu0
    %4511 = vmatprep.mubr.f32.mxu0 0.0
    %4512 = vmatmul.mubr.f32.gmra.mxu0 %v4356
    %v4513 = vpop.f32.mrf.mxu0
    %v4514 = vadd.f32 0.0, %v4513
    %v4515 = vpop.f32.mrf.mxu0
    %4516 = vmatprep.mubr.f32.mxu0 0.0
    %4517 = vmatmul.mubr.f32.gmra.mxu0 %v4358
    %v4518 = vpop.f32.mrf.mxu0
    %v4519 = vadd.f32 0.0, %v4518
    %v4520 = vpop.f32.mrf.mxu0
    %4521 = vmatprep.mubr.f32.mxu0 0.0
    %4522 = vmatmul.mubr.f32.gmra.mxu0 %v4360
    %v4523 = vpop.f32.mrf.mxu0
    %v4524 = vadd.f32 0.0, %v4523
    %v4525 = vpop.f32.mrf.mxu0
    %4526 = vmatprep.mubr.f32.mxu0 0.0
    %4527 = vmatmul.mubr.f32.gmra.mxu0 %v4362
    %v4528 = vpop.f32.mrf.mxu0
    %v4529 = vadd.f32 0.0, %v4528
    %v4530 = vpop.f32.mrf.mxu0
    %4531 = vmatprep.mubr.f32.mxu0 0.0
    %4532 = vmatmul.mubr.f32.gmra.mxu0 %v4364
    %v4533 = vpop.f32.mrf.mxu0
    %v4534 = vadd.f32 0.0, %v4533
    %v4535 = vpop.f32.mrf.mxu0
    %4536 = vmatprep.mubr.f32.mxu0 0.0
    %4537 = vmatmul.mubr.f32.gmra.mxu0 %v4366
    %v4538 = vpop.f32.mrf.mxu0
    %v4539 = vadd.f32 0.0, %v4538
    %v4540 = vpop.f32.mrf.mxu0
    %4541 = vmatprep.mubr.f32.mxu0 0.0
    %4542 = vmatmul.mubr.f32.gmra.mxu0 %v4368
    %v4543 = vpop.f32.mrf.mxu0
    %v4544 = vadd.f32 0.0, %v4543
    %v4545 = vpop.f32.mrf.mxu0
    %4546 = vmatprep.mubr.f32.mxu0 0.0
    %4547 = vmatmul.mubr.f32.gmra.mxu0 %v4370
    %v4548 = vpop.f32.mrf.mxu0
    %v4549 = vadd.f32 0.0, %v4548
    %v4550 = vpop.f32.mrf.mxu0
    %4551 = vdwg.mxu0
    %v4552 = vadd.f32 %v4252, %v4439
    %v4553 = vadd.f32 %v4253, %v4444
    %v4554 = vadd.f32 %v4254, %v4449
    %v4555 = vadd.f32 %v4255, %v4454
    %v4556 = vadd.f32 %v4256, %v4459
    %v4557 = vadd.f32 %v4257, %v4464
    %v4558 = vadd.f32 %v4258, %v4469
    %v4559 = vadd.f32 %v4259, %v4474
    %v4560 = vadd.f32 %v4260, %v4479
    %v4561 = vadd.f32 %v4261, %v4484
    %v4562 = vadd.f32 %v4262, %v4489
    %v4563 = vadd.f32 %v4263, %v4494
    %v4564 = vadd.f32 %v4264, %v4499
    %v4565 = vadd.f32 %v4265, %v4504
    %v4566 = vadd.f32 %v4266, %v4509
    %v4567 = vadd.f32 %v4267, %v4514
    %v4568 = vadd.f32 %v4268, %v4519
    %v4569 = vadd.f32 %v4269, %v4524
    %v4570 = vadd.f32 %v4270, %v4529
    %v4571 = vadd.f32 %v4271, %v4534
    %v4572 = vadd.f32 %v4272, %v4539
    %v4573 = vadd.f32 %v4273, %v4544
    %v4574 = vadd.f32 %v4274, %v4549
    %s4575 = scalar_lea.vmem %s7, 160
    %v4576 = vld [vmem:[%s4575] sm:$0xff]
    %v4577 = vld [vmem:[%s4575 + $0x8] sm:$0xff]
    %v4578 = vld [vmem:[%s4575 + $0x10] sm:$0xff]
    %v4579 = vld [vmem:[%s4575 + $0x18] sm:$0xff]
    %vm4580 = vcmask 1043456
    %v4581 = vrot.slane %v3113, 4
    %v4582 = vrot.slane %v3118, 4
    %v4583 = vsel %vm4580, %v4581, %v4582
    %v4584 = vrot.slane %v3123, 4
    %v4585 = vsel %vm4580, %v4582, %v4584
    %v4586 = vrot.slane %v3128, 4
    %v4587 = vsel %vm4580, %v4584, %v4586
    %v4588 = vrot.slane %v3133, 4
    %v4589 = vsel %vm4580, %v4586, %v4588
    %v4590 = vrot.slane %v3138, 4
    %v4591 = vsel %vm4580, %v4588, %v4590
    %v4592 = vrot.slane %v3143, 4
    %v4593 = vsel %vm4580, %v4590, %v4592
    %v4594 = vrot.slane %v3148, 4
    %v4595 = vsel %vm4580, %v4592, %v4594
    %v4596 = vrot.slane %v3153, 4
    %v4597 = vsel %vm4580, %v4594, %v4596
    %v4598 = vrot.slane %v3158, 4
    %v4599 = vsel %vm4580, %v4596, %v4598
    %v4600 = vrot.slane %v3163, 4
    %v4601 = vsel %vm4580, %v4598, %v4600
    %v4602 = vrot.slane %v3168, 4
    %v4603 = vsel %vm4580, %v4600, %v4602
    %v4604 = vrot.slane %v3173, 4
    %v4605 = vsel %vm4580, %v4602, %v4604
    %v4606 = vrot.slane %v3178, 4
    %v4607 = vsel %vm4580, %v4604, %v4606
    %v4608 = vrot.slane %v3183, 4
    %v4609 = vsel %vm4580, %v4606, %v4608
    %v4610 = vrot.slane %v3188, 4
    %v4611 = vsel %vm4580, %v4608, %v4610
    %v4612 = vrot.slane %v3193, 4
    %v4613 = vsel %vm4580, %v4610, %v4612
    %v4614 = vrot.slane %v3198, 4
    %v4615 = vsel %vm4580, %v4612, %v4614
    %v4616 = vrot.slane %v3203, 4
    %v4617 = vsel %vm4580, %v4614, %v4616
    %v4618 = vrot.slane %v3208, 4
    %v4619 = vsel %vm4580, %v4616, %v4618
    %v4620 = vrot.slane %v3213, 4
    %v4621 = vsel %vm4580, %v4618, %v4620
    %v4622 = vrot.slane %v3218, 4
    %v4623 = vsel %vm4580, %v4620, %v4622
    %v4624 = vrot.slane %v3223, 4
    %v4625 = vsel %vm4580, %v4622, %v4624
    %v4626 = vsel %vm3308, %v4583, 0
    %v4628 = vsel %vm3308, %v4585, 0
    %v4630 = vsel %vm3308, %v4587, 0
    %v4632 = vsel %vm3308, %v4589, 0
    %v4634 = vsel %vm3308, %v4591, 0
    %v4636 = vsel %vm3308, %v4593, 0
    %v4638 = vsel %vm3308, %v4595, 0
    %v4640 = vsel %vm3308, %v4597, 0
    %v4642 = vsel %vm3308, %v4599, 0
    %v4644 = vsel %vm3308, %v4601, 0
    %v4646 = vsel %vm3308, %v4603, 0
    %v4648 = vsel %vm3308, %v4605, 0
    %v4650 = vsel %vm3308, %v4607, 0
    %v4652 = vsel %vm3308, %v4609, 0
    %v4654 = vsel %vm3308, %v4611, 0
    %v4656 = vsel %vm3308, %v4613, 0
    %v4658 = vsel %vm3308, %v4615, 0
    %v4660 = vsel %vm3308, %v4617, 0
    %v4662 = vsel %vm3308, %v4619, 0
    %v4664 = vsel %vm3308, %v4621, 0
    %v4666 = vsel %vm3308, %v4623, 0
    %v4668 = vsel %vm3308, %v4625, 0
    %v4670 = vsel %vm3308, %v4624, 0
    %4672 = vmatprep.subr.mxu0 0.0
    %4673 = vmatpush1.msra.mxu0 0.0
    %4674 = vmatprep.subr.mxu0 0.0
    %4675 = vmatpush1.msra.mxu0 0.0
    %4676 = vmatprep.subr.mxu0 0.0
    %4677 = vmatpush1.msra.mxu0 0.0
    %4678 = vmatprep.subr.mxu0 0.0
    %4679 = vmatpush1.msra.mxu0 0.0
    %4680 = vmatprep.subr.mxu0 0.0
    %4681 = vmatpush1.msra.mxu0 0.0
    %4682 = vmatprep.subr.mxu0 0.0
    %4683 = vmatpush1.msra.mxu0 0.0
    %4684 = vmatprep.subr.mxu0 0.0
    %4685 = vmatpush1.msra.mxu0 0.0
    %4686 = vmatprep.subr.mxu0 0.0
    %4687 = vmatpush1.msra.mxu0 0.0
    %4688 = vmatprep.subr.mxu0 0.0
    %4689 = vmatpush1.msra.mxu0 0.0
    %4690 = vmatprep.subr.mxu0 0.0
    %4691 = vmatpush1.msra.mxu0 0.0
    %4692 = vmatprep.subr.mxu0 0.0
    %4693 = vmatpush1.msra.mxu0 0.0
    %4694 = vmatprep.subr.mxu0 0.0
    %4695 = vmatpush1.msra.mxu0 0.0
    %4696 = vmatprep.subr.mxu0 0.0
    %4697 = vmatpush1.msra.mxu0 %v4579
    %4698 = vmatprep.subr.mxu0 0.0
    %4699 = vmatpush1.msra.mxu0 %v4578
    %4700 = vmatprep.subr.mxu0 0.0
    %4701 = vmatpush1.msra.mxu0 %v4577
    %4702 = vmatprep.subr.mxu0 0.0
    %4703 = vmatpush1.msra.mxu0 %v4576
    %4704 = vmatprep.subr.mxu0 0.0
    %4705 = vmatpush2.msra.mxu0 0.0
    %4706 = vmatprep.subr.mxu0 0.0
    %4707 = vmatpush2.msra.mxu0 0.0
    %4708 = vmatprep.subr.mxu0 0.0
    %4709 = vmatpush2.msra.mxu0 0.0
    %4710 = vmatprep.subr.mxu0 0.0
    %4711 = vmatpush2.msra.mxu0 0.0
    %4712 = vmatprep.subr.mxu0 0.0
    %4713 = vmatpush2.msra.mxu0 0.0
    %4714 = vmatprep.subr.mxu0 0.0
    %4715 = vmatpush2.msra.mxu0 0.0
    %4716 = vmatprep.subr.mxu0 0.0
    %4717 = vmatpush2.msra.mxu0 0.0
    %4718 = vmatprep.subr.mxu0 0.0
    %4719 = vmatpush2.msra.mxu0 0.0
    %4720 = vmatprep.subr.mxu0 0.0
    %4721 = vmatpush2.msra.mxu0 0.0
    %4722 = vmatprep.subr.mxu0 0.0
    %4723 = vmatpush2.msra.mxu0 0.0
    %4724 = vmatprep.subr.mxu0 0.0
    %4725 = vmatpush2.msra.mxu0 0.0
    %4726 = vmatprep.subr.mxu0 0.0
    %4727 = vmatpush2.msra.mxu0 0.0
    %4728 = vmatprep.subr.mxu0 0.0
    %4729 = vmatpush2.msra.mxu0 0.0
    %4730 = vmatprep.subr.mxu0 0.0
    %4731 = vmatpush2.msra.mxu0 0.0
    %4732 = vmatprep.subr.mxu0 0.0
    %4733 = vmatpush2.msra.mxu0 0.0
    %4734 = vmatprep.subr.mxu0 0.0
    %4735 = vmatpush2.msra.mxu0 0.0
    %4736 = vmatprep.mubr.f32.mxu0 0.0
    %4737 = vmatmul.mubr.f32.gmra.mxu0 %v4626
    %v4738 = vpop.f32.mrf.mxu0
    %v4739 = vadd.f32 0.0, %v4738
    %v4740 = vpop.f32.mrf.mxu0
    %4741 = vmatprep.mubr.f32.mxu0 0.0
    %4742 = vmatmul.mubr.f32.gmra.mxu0 %v4628
    %v4743 = vpop.f32.mrf.mxu0
    %v4744 = vadd.f32 0.0, %v4743
    %v4745 = vpop.f32.mrf.mxu0
    %4746 = vmatprep.mubr.f32.mxu0 0.0
    %4747 = vmatmul.mubr.f32.gmra.mxu0 %v4630
    %v4748 = vpop.f32.mrf.mxu0
    %v4749 = vadd.f32 0.0, %v4748
    %v4750 = vpop.f32.mrf.mxu0
    %4751 = vmatprep.mubr.f32.mxu0 0.0
    %4752 = vmatmul.mubr.f32.gmra.mxu0 %v4632
    %v4753 = vpop.f32.mrf.mxu0
    %v4754 = vadd.f32 0.0, %v4753
    %v4755 = vpop.f32.mrf.mxu0
    %4756 = vmatprep.mubr.f32.mxu0 0.0
    %4757 = vmatmul.mubr.f32.gmra.mxu0 %v4634
    %v4758 = vpop.f32.mrf.mxu0
    %v4759 = vadd.f32 0.0, %v4758
    %v4760 = vpop.f32.mrf.mxu0
    %4761 = vmatprep.mubr.f32.mxu0 0.0
    %4762 = vmatmul.mubr.f32.gmra.mxu0 %v4636
    %v4763 = vpop.f32.mrf.mxu0
    %v4764 = vadd.f32 0.0, %v4763
    %v4765 = vpop.f32.mrf.mxu0
    %4766 = vmatprep.mubr.f32.mxu0 0.0
    %4767 = vmatmul.mubr.f32.gmra.mxu0 %v4638
    %v4768 = vpop.f32.mrf.mxu0
    %v4769 = vadd.f32 0.0, %v4768
    %v4770 = vpop.f32.mrf.mxu0
    %4771 = vmatprep.mubr.f32.mxu0 0.0
    %4772 = vmatmul.mubr.f32.gmra.mxu0 %v4640
    %v4773 = vpop.f32.mrf.mxu0
    %v4774 = vadd.f32 0.0, %v4773
    %v4775 = vpop.f32.mrf.mxu0
    %4776 = vmatprep.mubr.f32.mxu0 0.0
    %4777 = vmatmul.mubr.f32.gmra.mxu0 %v4642
    %v4778 = vpop.f32.mrf.mxu0
    %v4779 = vadd.f32 0.0, %v4778
    %v4780 = vpop.f32.mrf.mxu0
    %4781 = vmatprep.mubr.f32.mxu0 0.0
    %4782 = vmatmul.mubr.f32.gmra.mxu0 %v4644
    %v4783 = vpop.f32.mrf.mxu0
    %v4784 = vadd.f32 0.0, %v4783
    %v4785 = vpop.f32.mrf.mxu0
    %4786 = vmatprep.mubr.f32.mxu0 0.0
    %4787 = vmatmul.mubr.f32.gmra.mxu0 %v4646
    %v4788 = vpop.f32.mrf.mxu0
    %v4789 = vadd.f32 0.0, %v4788
    %v4790 = vpop.f32.mrf.mxu0
    %4791 = vmatprep.mubr.f32.mxu0 0.0
    %4792 = vmatmul.mubr.f32.gmra.mxu0 %v4648
    %v4793 = vpop.f32.mrf.mxu0
    %v4794 = vadd.f32 0.0, %v4793
    %v4795 = vpop.f32.mrf.mxu0
    %4796 = vmatprep.mubr.f32.mxu0 0.0
    %4797 = vmatmul.mubr.f32.gmra.mxu0 %v4650
    %v4798 = vpop.f32.mrf.mxu0
    %v4799 = vadd.f32 0.0, %v4798
    %v4800 = vpop.f32.mrf.mxu0
    %4801 = vmatprep.mubr.f32.mxu0 0.0
    %4802 = vmatmul.mubr.f32.gmra.mxu0 %v4652
    %v4803 = vpop.f32.mrf.mxu0
    %v4804 = vadd.f32 0.0, %v4803
    %v4805 = vpop.f32.mrf.mxu0
    %4806 = vmatprep.mubr.f32.mxu0 0.0
    %4807 = vmatmul.mubr.f32.gmra.mxu0 %v4654
    %v4808 = vpop.f32.mrf.mxu0
    %v4809 = vadd.f32 0.0, %v4808
    %v4810 = vpop.f32.mrf.mxu0
    %4811 = vmatprep.mubr.f32.mxu0 0.0
    %4812 = vmatmul.mubr.f32.gmra.mxu0 %v4656
    %v4813 = vpop.f32.mrf.mxu0
    %v4814 = vadd.f32 0.0, %v4813
    %v4815 = vpop.f32.mrf.mxu0
    %4816 = vmatprep.mubr.f32.mxu0 0.0
    %4817 = vmatmul.mubr.f32.gmra.mxu0 %v4658
    %v4818 = vpop.f32.mrf.mxu0
    %v4819 = vadd.f32 0.0, %v4818
    %v4820 = vpop.f32.mrf.mxu0
    %4821 = vmatprep.mubr.f32.mxu0 0.0
    %4822 = vmatmul.mubr.f32.gmra.mxu0 %v4660
    %v4823 = vpop.f32.mrf.mxu0
    %v4824 = vadd.f32 0.0, %v4823
    %v4825 = vpop.f32.mrf.mxu0
    %4826 = vmatprep.mubr.f32.mxu0 0.0
    %4827 = vmatmul.mubr.f32.gmra.mxu0 %v4662
    %v4828 = vpop.f32.mrf.mxu0
    %v4829 = vadd.f32 0.0, %v4828
    %v4830 = vpop.f32.mrf.mxu0
    %4831 = vmatprep.mubr.f32.mxu0 0.0
    %4832 = vmatmul.mubr.f32.gmra.mxu0 %v4664
    %v4833 = vpop.f32.mrf.mxu0
    %v4834 = vadd.f32 0.0, %v4833
    %v4835 = vpop.f32.mrf.mxu0
    %4836 = vmatprep.mubr.f32.mxu0 0.0
    %4837 = vmatmul.mubr.f32.gmra.mxu0 %v4666
    %v4838 = vpop.f32.mrf.mxu0
    %v4839 = vadd.f32 0.0, %v4838
    %v4840 = vpop.f32.mrf.mxu0
    %4841 = vmatprep.mubr.f32.mxu0 0.0
    %4842 = vmatmul.mubr.f32.gmra.mxu0 %v4668
    %v4843 = vpop.f32.mrf.mxu0
    %v4844 = vadd.f32 0.0, %v4843
    %v4845 = vpop.f32.mrf.mxu0
    %4846 = vmatprep.mubr.f32.mxu0 0.0
    %4847 = vmatmul.mubr.f32.gmra.mxu0 %v4670
    %v4848 = vpop.f32.mrf.mxu0
    %v4849 = vadd.f32 0.0, %v4848
    %v4850 = vpop.f32.mrf.mxu0
    %4851 = vdwg.mxu0
    %v4852 = vadd.f32 %v4552, %v4739
    %v4853 = vadd.f32 %v4553, %v4744
    %v4854 = vadd.f32 %v4554, %v4749
    %v4855 = vadd.f32 %v4555, %v4754
    %v4856 = vadd.f32 %v4556, %v4759
    %v4857 = vadd.f32 %v4557, %v4764
    %v4858 = vadd.f32 %v4558, %v4769
    %v4859 = vadd.f32 %v4559, %v4774
    %v4860 = vadd.f32 %v4560, %v4779
    %v4861 = vadd.f32 %v4561, %v4784
    %v4862 = vadd.f32 %v4562, %v4789
    %v4863 = vadd.f32 %v4563, %v4794
    %v4864 = vadd.f32 %v4564, %v4799
    %v4865 = vadd.f32 %v4565, %v4804
    %v4866 = vadd.f32 %v4566, %v4809
    %v4867 = vadd.f32 %v4567, %v4814
    %v4868 = vadd.f32 %v4568, %v4819
    %v4869 = vadd.f32 %v4569, %v4824
    %v4870 = vadd.f32 %v4570, %v4829
    %v4871 = vadd.f32 %v4571, %v4834
    %v4872 = vadd.f32 %v4572, %v4839
    %v4873 = vadd.f32 %v4573, %v4844
    %v4874 = vadd.f32 %v4574, %v4849
    %s4875 = scalar_lea.vmem %s7, 192
    %v4876 = vld [vmem:[%s4875] sm:$0xff]
    %v4877 = vld [vmem:[%s4875 + $0x8] sm:$0xff]
    %v4878 = vld [vmem:[%s4875 + $0x10] sm:$0xff]
    %v4879 = vld [vmem:[%s4875 + $0x18] sm:$0xff]
    %v4881 = vrot.slane %v3228, 4
    %v4882 = vsel %vm4580, %v4624, %v4881
    %v4883 = vsel %vm3308, %v4882, 0
    %v4885 = vsel %vm3308, %v4881, 0
    %4887 = vmatprep.subr.mxu0 0.0
    %4888 = vmatpush1.msra.mxu0 0.0
    %4889 = vmatprep.subr.mxu0 0.0
    %4890 = vmatpush1.msra.mxu0 0.0
    %4891 = vmatprep.subr.mxu0 0.0
    %4892 = vmatpush1.msra.mxu0 0.0
    %4893 = vmatprep.subr.mxu0 0.0
    %4894 = vmatpush1.msra.mxu0 0.0
    %4895 = vmatprep.subr.mxu0 0.0
    %4896 = vmatpush1.msra.mxu0 0.0
    %4897 = vmatprep.subr.mxu0 0.0
    %4898 = vmatpush1.msra.mxu0 0.0
    %4899 = vmatprep.subr.mxu0 0.0
    %4900 = vmatpush1.msra.mxu0 0.0
    %4901 = vmatprep.subr.mxu0 0.0
    %4902 = vmatpush1.msra.mxu0 0.0
    %4903 = vmatprep.subr.mxu0 0.0
    %4904 = vmatpush1.msra.mxu0 0.0
    %4905 = vmatprep.subr.mxu0 0.0
    %4906 = vmatpush1.msra.mxu0 0.0
    %4907 = vmatprep.subr.mxu0 0.0
    %4908 = vmatpush1.msra.mxu0 0.0
    %4909 = vmatprep.subr.mxu0 0.0
    %4910 = vmatpush1.msra.mxu0 0.0
    %4911 = vmatprep.subr.mxu0 0.0
    %4912 = vmatpush1.msra.mxu0 %v4879
    %4913 = vmatprep.subr.mxu0 0.0
    %4914 = vmatpush1.msra.mxu0 %v4878
    %4915 = vmatprep.subr.mxu0 0.0
    %4916 = vmatpush1.msra.mxu0 %v4877
    %4917 = vmatprep.subr.mxu0 0.0
    %4918 = vmatpush1.msra.mxu0 %v4876
    %4919 = vmatprep.subr.mxu0 0.0
    %4920 = vmatpush2.msra.mxu0 0.0
    %4921 = vmatprep.subr.mxu0 0.0
    %4922 = vmatpush2.msra.mxu0 0.0
    %4923 = vmatprep.subr.mxu0 0.0
    %4924 = vmatpush2.msra.mxu0 0.0
    %4925 = vmatprep.subr.mxu0 0.0
    %4926 = vmatpush2.msra.mxu0 0.0
    %4927 = vmatprep.subr.mxu0 0.0
    %4928 = vmatpush2.msra.mxu0 0.0
    %4929 = vmatprep.subr.mxu0 0.0
    %4930 = vmatpush2.msra.mxu0 0.0
    %4931 = vmatprep.subr.mxu0 0.0
    %4932 = vmatpush2.msra.mxu0 0.0
    %4933 = vmatprep.subr.mxu0 0.0
    %4934 = vmatpush2.msra.mxu0 0.0
    %4935 = vmatprep.subr.mxu0 0.0
    %4936 = vmatpush2.msra.mxu0 0.0
    %4937 = vmatprep.subr.mxu0 0.0
    %4938 = vmatpush2.msra.mxu0 0.0
    %4939 = vmatprep.subr.mxu0 0.0
    %4940 = vmatpush2.msra.mxu0 0.0
    %4941 = vmatprep.subr.mxu0 0.0
    %4942 = vmatpush2.msra.mxu0 0.0
    %4943 = vmatprep.subr.mxu0 0.0
    %4944 = vmatpush2.msra.mxu0 0.0
    %4945 = vmatprep.subr.mxu0 0.0
    %4946 = vmatpush2.msra.mxu0 0.0
    %4947 = vmatprep.subr.mxu0 0.0
    %4948 = vmatpush2.msra.mxu0 0.0
    %4949 = vmatprep.subr.mxu0 0.0
    %4950 = vmatpush2.msra.mxu0 0.0
    %4951 = vmatprep.mubr.f32.mxu0 0.0
    %4952 = vmatmul.mubr.f32.gmra.mxu0 %v4628
    %v4953 = vpop.f32.mrf.mxu0
    %v4954 = vadd.f32 0.0, %v4953
    %v4955 = vpop.f32.mrf.mxu0
    %4956 = vmatprep.mubr.f32.mxu0 0.0
    %4957 = vmatmul.mubr.f32.gmra.mxu0 %v4630
    %v4958 = vpop.f32.mrf.mxu0
    %v4959 = vadd.f32 0.0, %v4958
    %v4960 = vpop.f32.mrf.mxu0
    %4961 = vmatprep.mubr.f32.mxu0 0.0
    %4962 = vmatmul.mubr.f32.gmra.mxu0 %v4632
    %v4963 = vpop.f32.mrf.mxu0
    %v4964 = vadd.f32 0.0, %v4963
    %v4965 = vpop.f32.mrf.mxu0
    %4966 = vmatprep.mubr.f32.mxu0 0.0
    %4967 = vmatmul.mubr.f32.gmra.mxu0 %v4634
    %v4968 = vpop.f32.mrf.mxu0
    %v4969 = vadd.f32 0.0, %v4968
    %v4970 = vpop.f32.mrf.mxu0
    %4971 = vmatprep.mubr.f32.mxu0 0.0
    %4972 = vmatmul.mubr.f32.gmra.mxu0 %v4636
    %v4973 = vpop.f32.mrf.mxu0
    %v4974 = vadd.f32 0.0, %v4973
    %v4975 = vpop.f32.mrf.mxu0
    %4976 = vmatprep.mubr.f32.mxu0 0.0
    %4977 = vmatmul.mubr.f32.gmra.mxu0 %v4638
    %v4978 = vpop.f32.mrf.mxu0
    %v4979 = vadd.f32 0.0, %v4978
    %v4980 = vpop.f32.mrf.mxu0
    %4981 = vmatprep.mubr.f32.mxu0 0.0
    %4982 = vmatmul.mubr.f32.gmra.mxu0 %v4640
    %v4983 = vpop.f32.mrf.mxu0
    %v4984 = vadd.f32 0.0, %v4983
    %v4985 = vpop.f32.mrf.mxu0
    %4986 = vmatprep.mubr.f32.mxu0 0.0
    %4987 = vmatmul.mubr.f32.gmra.mxu0 %v4642
    %v4988 = vpop.f32.mrf.mxu0
    %v4989 = vadd.f32 0.0, %v4988
    %v4990 = vpop.f32.mrf.mxu0
    %4991 = vmatprep.mubr.f32.mxu0 0.0
    %4992 = vmatmul.mubr.f32.gmra.mxu0 %v4644
    %v4993 = vpop.f32.mrf.mxu0
    %v4994 = vadd.f32 0.0, %v4993
    %v4995 = vpop.f32.mrf.mxu0
    %4996 = vmatprep.mubr.f32.mxu0 0.0
    %4997 = vmatmul.mubr.f32.gmra.mxu0 %v4646
    %v4998 = vpop.f32.mrf.mxu0
    %v4999 = vadd.f32 0.0, %v4998
    %v5000 = vpop.f32.mrf.mxu0
    %5001 = vmatprep.mubr.f32.mxu0 0.0
    %5002 = vmatmul.mubr.f32.gmra.mxu0 %v4648
    %v5003 = vpop.f32.mrf.mxu0
    %v5004 = vadd.f32 0.0, %v5003
    %v5005 = vpop.f32.mrf.mxu0
    %5006 = vmatprep.mubr.f32.mxu0 0.0
    %5007 = vmatmul.mubr.f32.gmra.mxu0 %v4650
    %v5008 = vpop.f32.mrf.mxu0
    %v5009 = vadd.f32 0.0, %v5008
    %v5010 = vpop.f32.mrf.mxu0
    %5011 = vmatprep.mubr.f32.mxu0 0.0
    %5012 = vmatmul.mubr.f32.gmra.mxu0 %v4652
    %v5013 = vpop.f32.mrf.mxu0
    %v5014 = vadd.f32 0.0, %v5013
    %v5015 = vpop.f32.mrf.mxu0
    %5016 = vmatprep.mubr.f32.mxu0 0.0
    %5017 = vmatmul.mubr.f32.gmra.mxu0 %v4654
    %v5018 = vpop.f32.mrf.mxu0
    %v5019 = vadd.f32 0.0, %v5018
    %v5020 = vpop.f32.mrf.mxu0
    %5021 = vmatprep.mubr.f32.mxu0 0.0
    %5022 = vmatmul.mubr.f32.gmra.mxu0 %v4656
    %v5023 = vpop.f32.mrf.mxu0
    %v5024 = vadd.f32 0.0, %v5023
    %v5025 = vpop.f32.mrf.mxu0
    %5026 = vmatprep.mubr.f32.mxu0 0.0
    %5027 = vmatmul.mubr.f32.gmra.mxu0 %v4658
    %v5028 = vpop.f32.mrf.mxu0
    %v5029 = vadd.f32 0.0, %v5028
    %v5030 = vpop.f32.mrf.mxu0
    %5031 = vmatprep.mubr.f32.mxu0 0.0
    %5032 = vmatmul.mubr.f32.gmra.mxu0 %v4660
    %v5033 = vpop.f32.mrf.mxu0
    %v5034 = vadd.f32 0.0, %v5033
    %v5035 = vpop.f32.mrf.mxu0
    %5036 = vmatprep.mubr.f32.mxu0 0.0
    %5037 = vmatmul.mubr.f32.gmra.mxu0 %v4662
    %v5038 = vpop.f32.mrf.mxu0
    %v5039 = vadd.f32 0.0, %v5038
    %v5040 = vpop.f32.mrf.mxu0
    %5041 = vmatprep.mubr.f32.mxu0 0.0
    %5042 = vmatmul.mubr.f32.gmra.mxu0 %v4664
    %v5043 = vpop.f32.mrf.mxu0
    %v5044 = vadd.f32 0.0, %v5043
    %v5045 = vpop.f32.mrf.mxu0
    %5046 = vmatprep.mubr.f32.mxu0 0.0
    %5047 = vmatmul.mubr.f32.gmra.mxu0 %v4666
    %v5048 = vpop.f32.mrf.mxu0
    %v5049 = vadd.f32 0.0, %v5048
    %v5050 = vpop.f32.mrf.mxu0
    %5051 = vmatprep.mubr.f32.mxu0 0.0
    %5052 = vmatmul.mubr.f32.gmra.mxu0 %v4668
    %v5053 = vpop.f32.mrf.mxu0
    %v5054 = vadd.f32 0.0, %v5053
    %v5055 = vpop.f32.mrf.mxu0
    %5056 = vmatprep.mubr.f32.mxu0 0.0
    %5057 = vmatmul.mubr.f32.gmra.mxu0 %v4883
    %v5058 = vpop.f32.mrf.mxu0
    %v5059 = vadd.f32 0.0, %v5058
    %v5060 = vpop.f32.mrf.mxu0
    %5061 = vmatprep.mubr.f32.mxu0 0.0
    %5062 = vmatmul.mubr.f32.gmra.mxu0 %v4885
    %v5063 = vpop.f32.mrf.mxu0
    %v5064 = vadd.f32 0.0, %v5063
    %v5065 = vpop.f32.mrf.mxu0
    %5066 = vdwg.mxu0
    %v5067 = vadd.f32 %v4852, %v4954
    %v5068 = vadd.f32 %v4853, %v4959
    %v5069 = vadd.f32 %v4854, %v4964
    %v5070 = vadd.f32 %v4855, %v4969
    %v5071 = vadd.f32 %v4856, %v4974
    %v5072 = vadd.f32 %v4857, %v4979
    %v5073 = vadd.f32 %v4858, %v4984
    %v5074 = vadd.f32 %v4859, %v4989
    %v5075 = vadd.f32 %v4860, %v4994
    %v5076 = vadd.f32 %v4861, %v4999
    %v5077 = vadd.f32 %v4862, %v5004
    %v5078 = vadd.f32 %v4863, %v5009
    %v5079 = vadd.f32 %v4864, %v5014
    %v5080 = vadd.f32 %v4865, %v5019
    %v5081 = vadd.f32 %v4866, %v5024
    %v5082 = vadd.f32 %v4867, %v5029
    %v5083 = vadd.f32 %v4868, %v5034
    %v5084 = vadd.f32 %v4869, %v5039
    %v5085 = vadd.f32 %v4870, %v5044
    %v5086 = vadd.f32 %v4871, %v5049
    %v5087 = vadd.f32 %v4872, %v5054
    %v5088 = vadd.f32 %v4873, %v5059
    %v5089 = vadd.f32 %v4874, %v5064
    %s5090 = scalar_lea.vmem %s7, 224
    %v5091 = vld [vmem:[%s5090] sm:$0xff]
    %v5092 = vld [vmem:[%s5090 + $0x8] sm:$0xff]
    %v5093 = vld [vmem:[%s5090 + $0x10] sm:$0xff]
    %v5094 = vld [vmem:[%s5090 + $0x18] sm:$0xff]
    %vm5095 = vcmask 1042432
    %v5096 = vrot.slane %v3118, 5
    %v5097 = vrot.slane %v3123, 5
    %v5098 = vsel %vm5095, %v5096, %v5097
    %v5099 = vrot.slane %v3128, 5
    %v5100 = vsel %vm5095, %v5097, %v5099
    %v5101 = vrot.slane %v3133, 5
    %v5102 = vsel %vm5095, %v5099, %v5101
    %v5103 = vrot.slane %v3138, 5
    %v5104 = vsel %vm5095, %v5101, %v5103
    %v5105 = vrot.slane %v3143, 5
    %v5106 = vsel %vm5095, %v5103, %v5105
    %v5107 = vrot.slane %v3148, 5
    %v5108 = vsel %vm5095, %v5105, %v5107
    %v5109 = vrot.slane %v3153, 5
    %v5110 = vsel %vm5095, %v5107, %v5109
    %v5111 = vrot.slane %v3158, 5
    %v5112 = vsel %vm5095, %v5109, %v5111
    %v5113 = vrot.slane %v3163, 5
    %v5114 = vsel %vm5095, %v5111, %v5113
    %v5115 = vrot.slane %v3168, 5
    %v5116 = vsel %vm5095, %v5113, %v5115
    %v5117 = vrot.slane %v3173, 5
    %v5118 = vsel %vm5095, %v5115, %v5117
    %v5119 = vrot.slane %v3178, 5
    %v5120 = vsel %vm5095, %v5117, %v5119
    %v5121 = vrot.slane %v3183, 5
    %v5122 = vsel %vm5095, %v5119, %v5121
    %v5123 = vrot.slane %v3188, 5
    %v5124 = vsel %vm5095, %v5121, %v5123
    %v5125 = vrot.slane %v3193, 5
    %v5126 = vsel %vm5095, %v5123, %v5125
    %v5127 = vrot.slane %v3198, 5
    %v5128 = vsel %vm5095, %v5125, %v5127
    %v5129 = vrot.slane %v3203, 5
    %v5130 = vsel %vm5095, %v5127, %v5129
    %v5131 = vrot.slane %v3208, 5
    %v5132 = vsel %vm5095, %v5129, %v5131
    %v5133 = vrot.slane %v3213, 5
    %v5134 = vsel %vm5095, %v5131, %v5133
    %v5135 = vrot.slane %v3218, 5
    %v5136 = vsel %vm5095, %v5133, %v5135
    %v5137 = vrot.slane %v3223, 5
    %v5138 = vsel %vm5095, %v5135, %v5137
    %v5139 = vrot.slane %v3228, 5
    %v5140 = vsel %vm5095, %v5137, %v5139
    %v5141 = vsel %vm3308, %v5098, 0
    %v5143 = vsel %vm3308, %v5100, 0
    %v5145 = vsel %vm3308, %v5102, 0
    %v5147 = vsel %vm3308, %v5104, 0
    %v5149 = vsel %vm3308, %v5106, 0
    %v5151 = vsel %vm3308, %v5108, 0
    %v5153 = vsel %vm3308, %v5110, 0
    %v5155 = vsel %vm3308, %v5112, 0
    %v5157 = vsel %vm3308, %v5114, 0
    %v5159 = vsel %vm3308, %v5116, 0
    %v5161 = vsel %vm3308, %v5118, 0
    %v5163 = vsel %vm3308, %v5120, 0
    %v5165 = vsel %vm3308, %v5122, 0
    %v5167 = vsel %vm3308, %v5124, 0
    %v5169 = vsel %vm3308, %v5126, 0
    %v5171 = vsel %vm3308, %v5128, 0
    %v5173 = vsel %vm3308, %v5130, 0
    %v5175 = vsel %vm3308, %v5132, 0
    %v5177 = vsel %vm3308, %v5134, 0
    %v5179 = vsel %vm3308, %v5136, 0
    %v5181 = vsel %vm3308, %v5138, 0
    %v5183 = vsel %vm3308, %v5140, 0
    %v5185 = vsel %vm3308, %v5139, 0
    %5187 = vmatprep.subr.mxu0 0.0
    %5188 = vmatpush1.msra.mxu0 0.0
    %5189 = vmatprep.subr.mxu0 0.0
    %5190 = vmatpush1.msra.mxu0 0.0
    %5191 = vmatprep.subr.mxu0 0.0
    %5192 = vmatpush1.msra.mxu0 0.0
    %5193 = vmatprep.subr.mxu0 0.0
    %5194 = vmatpush1.msra.mxu0 0.0
    %5195 = vmatprep.subr.mxu0 0.0
    %5196 = vmatpush1.msra.mxu0 0.0
    %5197 = vmatprep.subr.mxu0 0.0
    %5198 = vmatpush1.msra.mxu0 0.0
    %5199 = vmatprep.subr.mxu0 0.0
    %5200 = vmatpush1.msra.mxu0 0.0
    %5201 = vmatprep.subr.mxu0 0.0
    %5202 = vmatpush1.msra.mxu0 0.0
    %5203 = vmatprep.subr.mxu0 0.0
    %5204 = vmatpush1.msra.mxu0 0.0
    %5205 = vmatprep.subr.mxu0 0.0
    %5206 = vmatpush1.msra.mxu0 0.0
    %5207 = vmatprep.subr.mxu0 0.0
    %5208 = vmatpush1.msra.mxu0 0.0
    %5209 = vmatprep.subr.mxu0 0.0
    %5210 = vmatpush1.msra.mxu0 0.0
    %5211 = vmatprep.subr.mxu0 0.0
    %5212 = vmatpush1.msra.mxu0 %v5094
    %5213 = vmatprep.subr.mxu0 0.0
    %5214 = vmatpush1.msra.mxu0 %v5093
    %5215 = vmatprep.subr.mxu0 0.0
    %5216 = vmatpush1.msra.mxu0 %v5092
    %5217 = vmatprep.subr.mxu0 0.0
    %5218 = vmatpush1.msra.mxu0 %v5091
    %5219 = vmatprep.subr.mxu0 0.0
    %5220 = vmatpush2.msra.mxu0 0.0
    %5221 = vmatprep.subr.mxu0 0.0
    %5222 = vmatpush2.msra.mxu0 0.0
    %5223 = vmatprep.subr.mxu0 0.0
    %5224 = vmatpush2.msra.mxu0 0.0
    %5225 = vmatprep.subr.mxu0 0.0
    %5226 = vmatpush2.msra.mxu0 0.0
    %5227 = vmatprep.subr.mxu0 0.0
    %5228 = vmatpush2.msra.mxu0 0.0
    %5229 = vmatprep.subr.mxu0 0.0
    %5230 = vmatpush2.msra.mxu0 0.0
    %5231 = vmatprep.subr.mxu0 0.0
    %5232 = vmatpush2.msra.mxu0 0.0
    %5233 = vmatprep.subr.mxu0 0.0
    %5234 = vmatpush2.msra.mxu0 0.0
    %5235 = vmatprep.subr.mxu0 0.0
    %5236 = vmatpush2.msra.mxu0 0.0
    %5237 = vmatprep.subr.mxu0 0.0
    %5238 = vmatpush2.msra.mxu0 0.0
    %5239 = vmatprep.subr.mxu0 0.0
    %5240 = vmatpush2.msra.mxu0 0.0
    %5241 = vmatprep.subr.mxu0 0.0
    %5242 = vmatpush2.msra.mxu0 0.0
    %5243 = vmatprep.subr.mxu0 0.0
    %5244 = vmatpush2.msra.mxu0 0.0
    %5245 = vmatprep.subr.mxu0 0.0
    %5246 = vmatpush2.msra.mxu0 0.0
    %5247 = vmatprep.subr.mxu0 0.0
    %5248 = vmatpush2.msra.mxu0 0.0
    %5249 = vmatprep.subr.mxu0 0.0
    %5250 = vmatpush2.msra.mxu0 0.0
    %5251 = vmatprep.mubr.f32.mxu0 0.0
    %5252 = vmatmul.mubr.f32.gmra.mxu0 %v5141
    %v5253 = vpop.f32.mrf.mxu0
    %v5254 = vadd.f32 0.0, %v5253
    %v5255 = vpop.f32.mrf.mxu0
    %5256 = vmatprep.mubr.f32.mxu0 0.0
    %5257 = vmatmul.mubr.f32.gmra.mxu0 %v5143
    %v5258 = vpop.f32.mrf.mxu0
    %v5259 = vadd.f32 0.0, %v5258
    %v5260 = vpop.f32.mrf.mxu0
    %5261 = vmatprep.mubr.f32.mxu0 0.0
    %5262 = vmatmul.mubr.f32.gmra.mxu0 %v5145
    %v5263 = vpop.f32.mrf.mxu0
    %v5264 = vadd.f32 0.0, %v5263
    %v5265 = vpop.f32.mrf.mxu0
    %5266 = vmatprep.mubr.f32.mxu0 0.0
    %5267 = vmatmul.mubr.f32.gmra.mxu0 %v5147
    %v5268 = vpop.f32.mrf.mxu0
    %v5269 = vadd.f32 0.0, %v5268
    %v5270 = vpop.f32.mrf.mxu0
    %5271 = vmatprep.mubr.f32.mxu0 0.0
    %5272 = vmatmul.mubr.f32.gmra.mxu0 %v5149
    %v5273 = vpop.f32.mrf.mxu0
    %v5274 = vadd.f32 0.0, %v5273
    %v5275 = vpop.f32.mrf.mxu0
    %5276 = vmatprep.mubr.f32.mxu0 0.0
    %5277 = vmatmul.mubr.f32.gmra.mxu0 %v5151
    %v5278 = vpop.f32.mrf.mxu0
    %v5279 = vadd.f32 0.0, %v5278
    %v5280 = vpop.f32.mrf.mxu0
    %5281 = vmatprep.mubr.f32.mxu0 0.0
    %5282 = vmatmul.mubr.f32.gmra.mxu0 %v5153
    %v5283 = vpop.f32.mrf.mxu0
    %v5284 = vadd.f32 0.0, %v5283
    %v5285 = vpop.f32.mrf.mxu0
    %5286 = vmatprep.mubr.f32.mxu0 0.0
    %5287 = vmatmul.mubr.f32.gmra.mxu0 %v5155
    %v5288 = vpop.f32.mrf.mxu0
    %v5289 = vadd.f32 0.0, %v5288
    %v5290 = vpop.f32.mrf.mxu0
    %5291 = vmatprep.mubr.f32.mxu0 0.0
    %5292 = vmatmul.mubr.f32.gmra.mxu0 %v5157
    %v5293 = vpop.f32.mrf.mxu0
    %v5294 = vadd.f32 0.0, %v5293
    %v5295 = vpop.f32.mrf.mxu0
    %5296 = vmatprep.mubr.f32.mxu0 0.0
    %5297 = vmatmul.mubr.f32.gmra.mxu0 %v5159
    %v5298 = vpop.f32.mrf.mxu0
    %v5299 = vadd.f32 0.0, %v5298
    %v5300 = vpop.f32.mrf.mxu0
    %5301 = vmatprep.mubr.f32.mxu0 0.0
    %5302 = vmatmul.mubr.f32.gmra.mxu0 %v5161
    %v5303 = vpop.f32.mrf.mxu0
    %v5304 = vadd.f32 0.0, %v5303
    %v5305 = vpop.f32.mrf.mxu0
    %5306 = vmatprep.mubr.f32.mxu0 0.0
    %5307 = vmatmul.mubr.f32.gmra.mxu0 %v5163
    %v5308 = vpop.f32.mrf.mxu0
    %v5309 = vadd.f32 0.0, %v5308
    %v5310 = vpop.f32.mrf.mxu0
    %5311 = vmatprep.mubr.f32.mxu0 0.0
    %5312 = vmatmul.mubr.f32.gmra.mxu0 %v5165
    %v5313 = vpop.f32.mrf.mxu0
    %v5314 = vadd.f32 0.0, %v5313
    %v5315 = vpop.f32.mrf.mxu0
    %5316 = vmatprep.mubr.f32.mxu0 0.0
    %5317 = vmatmul.mubr.f32.gmra.mxu0 %v5167
    %v5318 = vpop.f32.mrf.mxu0
    %v5319 = vadd.f32 0.0, %v5318
    %v5320 = vpop.f32.mrf.mxu0
    %5321 = vmatprep.mubr.f32.mxu0 0.0
    %5322 = vmatmul.mubr.f32.gmra.mxu0 %v5169
    %v5323 = vpop.f32.mrf.mxu0
    %v5324 = vadd.f32 0.0, %v5323
    %v5325 = vpop.f32.mrf.mxu0
    %5326 = vmatprep.mubr.f32.mxu0 0.0
    %5327 = vmatmul.mubr.f32.gmra.mxu0 %v5171
    %v5328 = vpop.f32.mrf.mxu0
    %v5329 = vadd.f32 0.0, %v5328
    %v5330 = vpop.f32.mrf.mxu0
    %5331 = vmatprep.mubr.f32.mxu0 0.0
    %5332 = vmatmul.mubr.f32.gmra.mxu0 %v5173
    %v5333 = vpop.f32.mrf.mxu0
    %v5334 = vadd.f32 0.0, %v5333
    %v5335 = vpop.f32.mrf.mxu0
    %5336 = vmatprep.mubr.f32.mxu0 0.0
    %5337 = vmatmul.mubr.f32.gmra.mxu0 %v5175
    %v5338 = vpop.f32.mrf.mxu0
    %v5339 = vadd.f32 0.0, %v5338
    %v5340 = vpop.f32.mrf.mxu0
    %5341 = vmatprep.mubr.f32.mxu0 0.0
    %5342 = vmatmul.mubr.f32.gmra.mxu0 %v5177
    %v5343 = vpop.f32.mrf.mxu0
    %v5344 = vadd.f32 0.0, %v5343
    %v5345 = vpop.f32.mrf.mxu0
    %5346 = vmatprep.mubr.f32.mxu0 0.0
    %5347 = vmatmul.mubr.f32.gmra.mxu0 %v5179
    %v5348 = vpop.f32.mrf.mxu0
    %v5349 = vadd.f32 0.0, %v5348
    %v5350 = vpop.f32.mrf.mxu0
    %5351 = vmatprep.mubr.f32.mxu0 0.0
    %5352 = vmatmul.mubr.f32.gmra.mxu0 %v5181
    %v5353 = vpop.f32.mrf.mxu0
    %v5354 = vadd.f32 0.0, %v5353
    %v5355 = vpop.f32.mrf.mxu0
    %5356 = vmatprep.mubr.f32.mxu0 0.0
    %5357 = vmatmul.mubr.f32.gmra.mxu0 %v5183
    %v5358 = vpop.f32.mrf.mxu0
    %v5359 = vadd.f32 0.0, %v5358
    %v5360 = vpop.f32.mrf.mxu0
    %5361 = vmatprep.mubr.f32.mxu0 0.0
    %5362 = vmatmul.mubr.f32.gmra.mxu0 %v5185
    %v5363 = vpop.f32.mrf.mxu0
    %v5364 = vadd.f32 0.0, %v5363
    %v5365 = vpop.f32.mrf.mxu0
    %5366 = vdwg.mxu0
    %v5367 = vadd.f32 %v5067, %v5254
    %v5368 = vadd.f32 %v5068, %v5259
    %v5369 = vadd.f32 %v5069, %v5264
    %v5370 = vadd.f32 %v5070, %v5269
    %v5371 = vadd.f32 %v5071, %v5274
    %v5372 = vadd.f32 %v5072, %v5279
    %v5373 = vadd.f32 %v5073, %v5284
    %v5374 = vadd.f32 %v5074, %v5289
    %v5375 = vadd.f32 %v5075, %v5294
    %v5376 = vadd.f32 %v5076, %v5299
    %v5377 = vadd.f32 %v5077, %v5304
    %v5378 = vadd.f32 %v5078, %v5309
    %v5379 = vadd.f32 %v5079, %v5314
    %v5380 = vadd.f32 %v5080, %v5319
    %v5381 = vadd.f32 %v5081, %v5324
    %v5382 = vadd.f32 %v5082, %v5329
    %v5383 = vadd.f32 %v5083, %v5334
    %v5384 = vadd.f32 %v5084, %v5339
    %v5385 = vadd.f32 %v5085, %v5344
    %v5386 = vadd.f32 %v5086, %v5349
    %v5387 = vadd.f32 %v5087, %v5354
    %v5388 = vadd.f32 %v5088, %v5359
    %v5389 = vadd.f32 %v5089, %v5364
    %s5390 = scalar_lea.vmem %s7, 256
    %v5391 = vld [vmem:[%s5390] sm:$0xff]
    %v5392 = vld [vmem:[%s5390 + $0x8] sm:$0xff]
    %v5393 = vld [vmem:[%s5390 + $0x10] sm:$0xff]
    %v5394 = vld [vmem:[%s5390 + $0x18] sm:$0xff]
    %v5395 = vrot.slane %v3118, 6
    %v5396 = vrot.slane %v3123, 6
    %v5397 = vsel %vm867, %v5395, %v5396
    %v5398 = vrot.slane %v3128, 6
    %v5399 = vsel %vm867, %v5396, %v5398
    %v5400 = vrot.slane %v3133, 6
    %v5401 = vsel %vm867, %v5398, %v5400
    %v5402 = vrot.slane %v3138, 6
    %v5403 = vsel %vm867, %v5400, %v5402
    %v5404 = vrot.slane %v3143, 6
    %v5405 = vsel %vm867, %v5402, %v5404
    %v5406 = vrot.slane %v3148, 6
    %v5407 = vsel %vm867, %v5404, %v5406
    %v5408 = vrot.slane %v3153, 6
    %v5409 = vsel %vm867, %v5406, %v5408
    %v5410 = vrot.slane %v3158, 6
    %v5411 = vsel %vm867, %v5408, %v5410
    %v5412 = vrot.slane %v3163, 6
    %v5413 = vsel %vm867, %v5410, %v5412
    %v5414 = vrot.slane %v3168, 6
    %v5415 = vsel %vm867, %v5412, %v5414
    %v5416 = vrot.slane %v3173, 6
    %v5417 = vsel %vm867, %v5414, %v5416
    %v5418 = vrot.slane %v3178, 6
    %v5419 = vsel %vm867, %v5416, %v5418
    %v5420 = vrot.slane %v3183, 6
    %v5421 = vsel %vm867, %v5418, %v5420
    %v5422 = vrot.slane %v3188, 6
    %v5423 = vsel %vm867, %v5420, %v5422
    %v5424 = vrot.slane %v3193, 6
    %v5425 = vsel %vm867, %v5422, %v5424
    %v5426 = vrot.slane %v3198, 6
    %v5427 = vsel %vm867, %v5424, %v5426
    %v5428 = vrot.slane %v3203, 6
    %v5429 = vsel %vm867, %v5426, %v5428
    %v5430 = vrot.slane %v3208, 6
    %v5431 = vsel %vm867, %v5428, %v5430
    %v5432 = vrot.slane %v3213, 6
    %v5433 = vsel %vm867, %v5430, %v5432
    %v5434 = vrot.slane %v3218, 6
    %v5435 = vsel %vm867, %v5432, %v5434
    %v5436 = vrot.slane %v3223, 6
    %v5437 = vsel %vm867, %v5434, %v5436
    %v5438 = vrot.slane %v3228, 6
    %v5439 = vsel %vm867, %v5436, %v5438
    %v5440 = vsel %vm3308, %v5397, 0
    %v5442 = vsel %vm3308, %v5399, 0
    %v5444 = vsel %vm3308, %v5401, 0
    %v5446 = vsel %vm3308, %v5403, 0
    %v5448 = vsel %vm3308, %v5405, 0
    %v5450 = vsel %vm3308, %v5407, 0
    %v5452 = vsel %vm3308, %v5409, 0
    %v5454 = vsel %vm3308, %v5411, 0
    %v5456 = vsel %vm3308, %v5413, 0
    %v5458 = vsel %vm3308, %v5415, 0
    %v5460 = vsel %vm3308, %v5417, 0
    %v5462 = vsel %vm3308, %v5419, 0
    %v5464 = vsel %vm3308, %v5421, 0
    %v5466 = vsel %vm3308, %v5423, 0
    %v5468 = vsel %vm3308, %v5425, 0
    %v5470 = vsel %vm3308, %v5427, 0
    %v5472 = vsel %vm3308, %v5429, 0
    %v5474 = vsel %vm3308, %v5431, 0
    %v5476 = vsel %vm3308, %v5433, 0
    %v5478 = vsel %vm3308, %v5435, 0
    %v5480 = vsel %vm3308, %v5437, 0
    %v5482 = vsel %vm3308, %v5439, 0
    %v5484 = vsel %vm3308, %v5438, 0
    %5486 = vmatprep.subr.mxu0 0.0
    %5487 = vmatpush1.msra.mxu0 0.0
    %5488 = vmatprep.subr.mxu0 0.0
    %5489 = vmatpush1.msra.mxu0 0.0
    %5490 = vmatprep.subr.mxu0 0.0
    %5491 = vmatpush1.msra.mxu0 0.0
    %5492 = vmatprep.subr.mxu0 0.0
    %5493 = vmatpush1.msra.mxu0 0.0
    %5494 = vmatprep.subr.mxu0 0.0
    %5495 = vmatpush1.msra.mxu0 0.0
    %5496 = vmatprep.subr.mxu0 0.0
    %5497 = vmatpush1.msra.mxu0 0.0
    %5498 = vmatprep.subr.mxu0 0.0
    %5499 = vmatpush1.msra.mxu0 0.0
    %5500 = vmatprep.subr.mxu0 0.0
    %5501 = vmatpush1.msra.mxu0 0.0
    %5502 = vmatprep.subr.mxu0 0.0
    %5503 = vmatpush1.msra.mxu0 0.0
    %5504 = vmatprep.subr.mxu0 0.0
    %5505 = vmatpush1.msra.mxu0 0.0
    %5506 = vmatprep.subr.mxu0 0.0
    %5507 = vmatpush1.msra.mxu0 0.0
    %5508 = vmatprep.subr.mxu0 0.0
    %5509 = vmatpush1.msra.mxu0 0.0
    %5510 = vmatprep.subr.mxu0 0.0
    %5511 = vmatpush1.msra.mxu0 %v5394
    %5512 = vmatprep.subr.mxu0 0.0
    %5513 = vmatpush1.msra.mxu0 %v5393
    %5514 = vmatprep.subr.mxu0 0.0
    %5515 = vmatpush1.msra.mxu0 %v5392
    %5516 = vmatprep.subr.mxu0 0.0
    %5517 = vmatpush1.msra.mxu0 %v5391
    %5518 = vmatprep.subr.mxu0 0.0
    %5519 = vmatpush2.msra.mxu0 0.0
    %5520 = vmatprep.subr.mxu0 0.0
    %5521 = vmatpush2.msra.mxu0 0.0
    %5522 = vmatprep.subr.mxu0 0.0
    %5523 = vmatpush2.msra.mxu0 0.0
    %5524 = vmatprep.subr.mxu0 0.0
    %5525 = vmatpush2.msra.mxu0 0.0
    %5526 = vmatprep.subr.mxu0 0.0
    %5527 = vmatpush2.msra.mxu0 0.0
    %5528 = vmatprep.subr.mxu0 0.0
    %5529 = vmatpush2.msra.mxu0 0.0
    %5530 = vmatprep.subr.mxu0 0.0
    %5531 = vmatpush2.msra.mxu0 0.0
    %5532 = vmatprep.subr.mxu0 0.0
    %5533 = vmatpush2.msra.mxu0 0.0
    %5534 = vmatprep.subr.mxu0 0.0
    %5535 = vmatpush2.msra.mxu0 0.0
    %5536 = vmatprep.subr.mxu0 0.0
    %5537 = vmatpush2.msra.mxu0 0.0
    %5538 = vmatprep.subr.mxu0 0.0
    %5539 = vmatpush2.msra.mxu0 0.0
    %5540 = vmatprep.subr.mxu0 0.0
    %5541 = vmatpush2.msra.mxu0 0.0
    %5542 = vmatprep.subr.mxu0 0.0
    %5543 = vmatpush2.msra.mxu0 0.0
    %5544 = vmatprep.subr.mxu0 0.0
    %5545 = vmatpush2.msra.mxu0 0.0
    %5546 = vmatprep.subr.mxu0 0.0
    %5547 = vmatpush2.msra.mxu0 0.0
    %5548 = vmatprep.subr.mxu0 0.0
    %5549 = vmatpush2.msra.mxu0 0.0
    %5550 = vmatprep.mubr.f32.mxu0 0.0
    %5551 = vmatmul.mubr.f32.gmra.mxu0 %v5440
    %v5552 = vpop.f32.mrf.mxu0
    %v5553 = vadd.f32 0.0, %v5552
    %v5554 = vpop.f32.mrf.mxu0
    %5555 = vmatprep.mubr.f32.mxu0 0.0
    %5556 = vmatmul.mubr.f32.gmra.mxu0 %v5442
    %v5557 = vpop.f32.mrf.mxu0
    %v5558 = vadd.f32 0.0, %v5557
    %v5559 = vpop.f32.mrf.mxu0
    %5560 = vmatprep.mubr.f32.mxu0 0.0
    %5561 = vmatmul.mubr.f32.gmra.mxu0 %v5444
    %v5562 = vpop.f32.mrf.mxu0
    %v5563 = vadd.f32 0.0, %v5562
    %v5564 = vpop.f32.mrf.mxu0
    %5565 = vmatprep.mubr.f32.mxu0 0.0
    %5566 = vmatmul.mubr.f32.gmra.mxu0 %v5446
    %v5567 = vpop.f32.mrf.mxu0
    %v5568 = vadd.f32 0.0, %v5567
    %v5569 = vpop.f32.mrf.mxu0
    %5570 = vmatprep.mubr.f32.mxu0 0.0
    %5571 = vmatmul.mubr.f32.gmra.mxu0 %v5448
    %v5572 = vpop.f32.mrf.mxu0
    %v5573 = vadd.f32 0.0, %v5572
    %v5574 = vpop.f32.mrf.mxu0
    %5575 = vmatprep.mubr.f32.mxu0 0.0
    %5576 = vmatmul.mubr.f32.gmra.mxu0 %v5450
    %v5577 = vpop.f32.mrf.mxu0
    %v5578 = vadd.f32 0.0, %v5577
    %v5579 = vpop.f32.mrf.mxu0
    %5580 = vmatprep.mubr.f32.mxu0 0.0
    %5581 = vmatmul.mubr.f32.gmra.mxu0 %v5452
    %v5582 = vpop.f32.mrf.mxu0
    %v5583 = vadd.f32 0.0, %v5582
    %v5584 = vpop.f32.mrf.mxu0
    %5585 = vmatprep.mubr.f32.mxu0 0.0
    %5586 = vmatmul.mubr.f32.gmra.mxu0 %v5454
    %v5587 = vpop.f32.mrf.mxu0
    %v5588 = vadd.f32 0.0, %v5587
    %v5589 = vpop.f32.mrf.mxu0
    %5590 = vmatprep.mubr.f32.mxu0 0.0
    %5591 = vmatmul.mubr.f32.gmra.mxu0 %v5456
    %v5592 = vpop.f32.mrf.mxu0
    %v5593 = vadd.f32 0.0, %v5592
    %v5594 = vpop.f32.mrf.mxu0
    %5595 = vmatprep.mubr.f32.mxu0 0.0
    %5596 = vmatmul.mubr.f32.gmra.mxu0 %v5458
    %v5597 = vpop.f32.mrf.mxu0
    %v5598 = vadd.f32 0.0, %v5597
    %v5599 = vpop.f32.mrf.mxu0
    %5600 = vmatprep.mubr.f32.mxu0 0.0
    %5601 = vmatmul.mubr.f32.gmra.mxu0 %v5460
    %v5602 = vpop.f32.mrf.mxu0
    %v5603 = vadd.f32 0.0, %v5602
    %v5604 = vpop.f32.mrf.mxu0
    %5605 = vmatprep.mubr.f32.mxu0 0.0
    %5606 = vmatmul.mubr.f32.gmra.mxu0 %v5462
    %v5607 = vpop.f32.mrf.mxu0
    %v5608 = vadd.f32 0.0, %v5607
    %v5609 = vpop.f32.mrf.mxu0
    %5610 = vmatprep.mubr.f32.mxu0 0.0
    %5611 = vmatmul.mubr.f32.gmra.mxu0 %v5464
    %v5612 = vpop.f32.mrf.mxu0
    %v5613 = vadd.f32 0.0, %v5612
    %v5614 = vpop.f32.mrf.mxu0
    %5615 = vmatprep.mubr.f32.mxu0 0.0
    %5616 = vmatmul.mubr.f32.gmra.mxu0 %v5466
    %v5617 = vpop.f32.mrf.mxu0
    %v5618 = vadd.f32 0.0, %v5617
    %v5619 = vpop.f32.mrf.mxu0
    %5620 = vmatprep.mubr.f32.mxu0 0.0
    %5621 = vmatmul.mubr.f32.gmra.mxu0 %v5468
    %v5622 = vpop.f32.mrf.mxu0
    %v5623 = vadd.f32 0.0, %v5622
    %v5624 = vpop.f32.mrf.mxu0
    %5625 = vmatprep.mubr.f32.mxu0 0.0
    %5626 = vmatmul.mubr.f32.gmra.mxu0 %v5470
    %v5627 = vpop.f32.mrf.mxu0
    %v5628 = vadd.f32 0.0, %v5627
    %v5629 = vpop.f32.mrf.mxu0
    %5630 = vmatprep.mubr.f32.mxu0 0.0
    %5631 = vmatmul.mubr.f32.gmra.mxu0 %v5472
    %v5632 = vpop.f32.mrf.mxu0
    %v5633 = vadd.f32 0.0, %v5632
    %v5634 = vpop.f32.mrf.mxu0
    %5635 = vmatprep.mubr.f32.mxu0 0.0
    %5636 = vmatmul.mubr.f32.gmra.mxu0 %v5474
    %v5637 = vpop.f32.mrf.mxu0
    %v5638 = vadd.f32 0.0, %v5637
    %v5639 = vpop.f32.mrf.mxu0
    %5640 = vmatprep.mubr.f32.mxu0 0.0
    %5641 = vmatmul.mubr.f32.gmra.mxu0 %v5476
    %v5642 = vpop.f32.mrf.mxu0
    %v5643 = vadd.f32 0.0, %v5642
    %v5644 = vpop.f32.mrf.mxu0
    %5645 = vmatprep.mubr.f32.mxu0 0.0
    %5646 = vmatmul.mubr.f32.gmra.mxu0 %v5478
    %v5647 = vpop.f32.mrf.mxu0
    %v5648 = vadd.f32 0.0, %v5647
    %v5649 = vpop.f32.mrf.mxu0
    %5650 = vmatprep.mubr.f32.mxu0 0.0
    %5651 = vmatmul.mubr.f32.gmra.mxu0 %v5480
    %v5652 = vpop.f32.mrf.mxu0
    %v5653 = vadd.f32 0.0, %v5652
    %v5654 = vpop.f32.mrf.mxu0
    %5655 = vmatprep.mubr.f32.mxu0 0.0
    %5656 = vmatmul.mubr.f32.gmra.mxu0 %v5482
    %v5657 = vpop.f32.mrf.mxu0
    %v5658 = vadd.f32 0.0, %v5657
    %v5659 = vpop.f32.mrf.mxu0
    %5660 = vmatprep.mubr.f32.mxu0 0.0
    %5661 = vmatmul.mubr.f32.gmra.mxu0 %v5484
    %v5662 = vpop.f32.mrf.mxu0
    %v5663 = vadd.f32 0.0, %v5662
    %v5664 = vpop.f32.mrf.mxu0
    %5665 = vdwg.mxu0
    %v5666 = vadd.f32 %v5367, %v5553
    %v5667 = vadd.f32 %v5368, %v5558
    %v5668 = vadd.f32 %v5369, %v5563
    %v5669 = vadd.f32 %v5370, %v5568
    %v5670 = vadd.f32 %v5371, %v5573
    %v5671 = vadd.f32 %v5372, %v5578
    %v5672 = vadd.f32 %v5373, %v5583
    %v5673 = vadd.f32 %v5374, %v5588
    %v5674 = vadd.f32 %v5375, %v5593
    %v5675 = vadd.f32 %v5376, %v5598
    %v5676 = vadd.f32 %v5377, %v5603
    %v5677 = vadd.f32 %v5378, %v5608
    %v5678 = vadd.f32 %v5379, %v5613
    %v5679 = vadd.f32 %v5380, %v5618
    %v5680 = vadd.f32 %v5381, %v5623
    %v5681 = vadd.f32 %v5382, %v5628
    %v5682 = vadd.f32 %v5383, %v5633
    %v5683 = vadd.f32 %v5384, %v5638
    %v5684 = vadd.f32 %v5385, %v5643
    %v5685 = vadd.f32 %v5386, %v5648
    %v5686 = vadd.f32 %v5387, %v5653
    %v5687 = vadd.f32 %v5388, %v5658
    %v5688 = vadd.f32 %v5389, %v5663
    %v5689 = vld [vmem:[%s8] sm:$0x1]
    %v5691 = vlaneseq
    %v5692 = vshrl.u32 %v5691, 7
    %v5693 = vsub.s32 0, %v5692
    %v5694 = vrot.slane %v5689, %v5693
    %v5696 = vadd.f32 %v5666, %v5694
    %v5697 = vadd.f32 %v5667, %v5694
    %v5698 = vadd.f32 %v5668, %v5694
    %v5699 = vadd.f32 %v5669, %v5694
    %v5700 = vadd.f32 %v5670, %v5694
    %v5701 = vadd.f32 %v5671, %v5694
    %v5702 = vadd.f32 %v5672, %v5694
    %v5703 = vadd.f32 %v5673, %v5694
    %v5704 = vadd.f32 %v5674, %v5694
    %v5705 = vadd.f32 %v5675, %v5694
    %v5706 = vadd.f32 %v5676, %v5694
    %v5707 = vadd.f32 %v5677, %v5694
    %v5708 = vadd.f32 %v5678, %v5694
    %v5709 = vadd.f32 %v5679, %v5694
    %v5710 = vadd.f32 %v5680, %v5694
    %v5711 = vadd.f32 %v5681, %v5694
    %v5712 = vadd.f32 %v5682, %v5694
    %v5713 = vadd.f32 %v5683, %v5694
    %v5714 = vadd.f32 %v5684, %v5694
    %v5715 = vadd.f32 %v5685, %v5694
    %v5716 = vadd.f32 %v5686, %v5694
    %v5717 = vadd.f32 %v5687, %v5694
    %v5718 = vadd.f32 %v5688, %v5694
    %v5719 = vld [vmem:[%s11] sm:$0x3]
    %v5721 = vlaneseq
    %v5722 = vshrl.u32 %v5721, 7
    %v5723 = vsub.s32 0, %v5722
    %v5724 = vrot.slane %v5719, %v5723
    %v5725 = vlaneseq
    %v5726 = vshrl.u32 %v5725, 7
    %v5727 = vsub.s32 1, %v5726
    %v5728 = vrot.slane %v5719, %v5727
    %vm5730 = vcmask 408576
    %v5731 = vsel %vm5730, %v5728, 0
    %v5734 = vsel %vm867, %v5718, 0
    %5736 = vmatprep.subr.mxu0 0.0
    %5737 = vmatpush1.msra.mxu0 %v5711
    %5738 = vmatprep.subr.mxu0 0.0
    %5739 = vmatpush1.msra.mxu0 %v5710
    %5740 = vmatprep.subr.mxu0 0.0
    %5741 = vmatpush1.msra.mxu0 %v5709
    %5742 = vmatprep.subr.mxu0 0.0
    %5743 = vmatpush1.msra.mxu0 %v5708
    %5744 = vmatprep.subr.mxu0 0.0
    %5745 = vmatpush1.msra.mxu0 %v5707
    %5746 = vmatprep.subr.mxu0 0.0
    %5747 = vmatpush1.msra.mxu0 %v5706
    %5748 = vmatprep.subr.mxu0 0.0
    %5749 = vmatpush1.msra.mxu0 %v5705
    %5750 = vmatprep.subr.mxu0 0.0
    %5751 = vmatpush1.msra.mxu0 %v5704
    %5752 = vmatprep.subr.mxu0 0.0
    %5753 = vmatpush1.msra.mxu0 %v5703
    %5754 = vmatprep.subr.mxu0 0.0
    %5755 = vmatpush1.msra.mxu0 %v5702
    %5756 = vmatprep.subr.mxu0 0.0
    %5757 = vmatpush1.msra.mxu0 %v5701
    %5758 = vmatprep.subr.mxu0 0.0
    %5759 = vmatpush1.msra.mxu0 %v5700
    %5760 = vmatprep.subr.mxu0 0.0
    %5761 = vmatpush1.msra.mxu0 %v5699
    %5762 = vmatprep.subr.mxu0 0.0
    %5763 = vmatpush1.msra.mxu0 %v5698
    %5764 = vmatprep.subr.mxu0 0.0
    %5765 = vmatpush1.msra.mxu0 %v5697
    %5766 = vmatprep.subr.mxu0 0.0
    %5767 = vmatpush1.msra.mxu0 %v5696
    %5768 = vmatprep.subr.mxu0 0.0
    %5769 = vmatpush2.msra.mxu0 0.0
    %5770 = vmatprep.subr.mxu0 0.0
    %5771 = vmatpush2.msra.mxu0 0.0
    %5772 = vmatprep.subr.mxu0 0.0
    %5773 = vmatpush2.msra.mxu0 0.0
    %5774 = vmatprep.subr.mxu0 0.0
    %5775 = vmatpush2.msra.mxu0 0.0
    %5776 = vmatprep.subr.mxu0 0.0
    %5777 = vmatpush2.msra.mxu0 0.0
    %5778 = vmatprep.subr.mxu0 0.0
    %5779 = vmatpush2.msra.mxu0 0.0
    %5780 = vmatprep.subr.mxu0 0.0
    %5781 = vmatpush2.msra.mxu0 0.0
    %5782 = vmatprep.subr.mxu0 0.0
    %5783 = vmatpush2.msra.mxu0 0.0
    %5784 = vmatprep.subr.mxu0 0.0
    %5785 = vmatpush2.msra.mxu0 0.0
    %5786 = vmatprep.subr.mxu0 0.0
    %5787 = vmatpush2.msra.mxu0 %v5734
    %5788 = vmatprep.subr.mxu0 0.0
    %5789 = vmatpush2.msra.mxu0 %v5717
    %5790 = vmatprep.subr.mxu0 0.0
    %5791 = vmatpush2.msra.mxu0 %v5716
    %5792 = vmatprep.subr.mxu0 0.0
    %5793 = vmatpush2.msra.mxu0 %v5715
    %5794 = vmatprep.subr.mxu0 0.0
    %5795 = vmatpush2.msra.mxu0 %v5714
    %5796 = vmatprep.subr.mxu0 0.0
    %5797 = vmatpush2.msra.mxu0 %v5713
    %5798 = vmatprep.subr.mxu0 0.0
    %5799 = vmatpush2.msra.mxu0 %v5712
    %5800 = vmatprep.mubr.f32.mxu0 %v5731
    %5801 = vmatmul.mubr.f32.gmra.mxu0 %v5724
    %v5802 = vpop.f32.mrf.mxu0
    %v5803 = vadd.f32 0.0, %v5802
    %v5804 = vpop.f32.mrf.mxu0
    %5805 = vdwg.mxu0
    %v5806 = vmul.f32 %v5803, 0.0078125
    %v5807 = vmul.f32 %v5696, %v5696
    %v5808 = vmul.f32 %v5697, %v5697
    %v5809 = vmul.f32 %v5698, %v5698
    %v5810 = vmul.f32 %v5699, %v5699
    %v5811 = vmul.f32 %v5700, %v5700
    %v5812 = vmul.f32 %v5701, %v5701
    %v5813 = vmul.f32 %v5702, %v5702
    %v5814 = vmul.f32 %v5703, %v5703
    %v5815 = vmul.f32 %v5704, %v5704
    %v5816 = vmul.f32 %v5705, %v5705
    %v5817 = vmul.f32 %v5706, %v5706
    %v5818 = vmul.f32 %v5707, %v5707
    %v5819 = vmul.f32 %v5708, %v5708
    %v5820 = vmul.f32 %v5709, %v5709
    %v5821 = vmul.f32 %v5710, %v5710
    %v5822 = vmul.f32 %v5711, %v5711
    %v5823 = vmul.f32 %v5712, %v5712
    %v5824 = vmul.f32 %v5713, %v5713
    %v5825 = vmul.f32 %v5714, %v5714
    %v5826 = vmul.f32 %v5715, %v5715
    %v5827 = vmul.f32 %v5716, %v5716
    %v5828 = vmul.f32 %v5717, %v5717
    %v5829 = vmul.f32 %v5718, %v5718
    %v5831 = vsel %vm867, %v5829, 0
    %5833 = vmatprep.subr.mxu0 0.0
    %5834 = vmatpush1.msra.mxu0 %v5822
    %5835 = vmatprep.subr.mxu0 0.0
    %5836 = vmatpush1.msra.mxu0 %v5821
    %5837 = vmatprep.subr.mxu0 0.0
    %5838 = vmatpush1.msra.mxu0 %v5820
    %5839 = vmatprep.subr.mxu0 0.0
    %5840 = vmatpush1.msra.mxu0 %v5819
    %5841 = vmatprep.subr.mxu0 0.0
    %5842 = vmatpush1.msra.mxu0 %v5818
    %5843 = vmatprep.subr.mxu0 0.0
    %5844 = vmatpush1.msra.mxu0 %v5817
    %5845 = vmatprep.subr.mxu0 0.0
    %5846 = vmatpush1.msra.mxu0 %v5816
    %5847 = vmatprep.subr.mxu0 0.0
    %5848 = vmatpush1.msra.mxu0 %v5815
    %5849 = vmatprep.subr.mxu0 0.0
    %5850 = vmatpush1.msra.mxu0 %v5814
    %5851 = vmatprep.subr.mxu0 0.0
    %5852 = vmatpush1.msra.mxu0 %v5813
    %5853 = vmatprep.subr.mxu0 0.0
    %5854 = vmatpush1.msra.mxu0 %v5812
    %5855 = vmatprep.subr.mxu0 0.0
    %5856 = vmatpush1.msra.mxu0 %v5811
    %5857 = vmatprep.subr.mxu0 0.0
    %5858 = vmatpush1.msra.mxu0 %v5810
    %5859 = vmatprep.subr.mxu0 0.0
    %5860 = vmatpush1.msra.mxu0 %v5809
    %5861 = vmatprep.subr.mxu0 0.0
    %5862 = vmatpush1.msra.mxu0 %v5808
    %5863 = vmatprep.subr.mxu0 0.0
    %5864 = vmatpush1.msra.mxu0 %v5807
    %5865 = vmatprep.subr.mxu0 0.0
    %5866 = vmatpush2.msra.mxu0 0.0
    %5867 = vmatprep.subr.mxu0 0.0
    %5868 = vmatpush2.msra.mxu0 0.0
    %5869 = vmatprep.subr.mxu0 0.0
    %5870 = vmatpush2.msra.mxu0 0.0
    %5871 = vmatprep.subr.mxu0 0.0
    %5872 = vmatpush2.msra.mxu0 0.0
    %5873 = vmatprep.subr.mxu0 0.0
    %5874 = vmatpush2.msra.mxu0 0.0
    %5875 = vmatprep.subr.mxu0 0.0
    %5876 = vmatpush2.msra.mxu0 0.0
    %5877 = vmatprep.subr.mxu0 0.0
    %5878 = vmatpush2.msra.mxu0 0.0
    %5879 = vmatprep.subr.mxu0 0.0
    %5880 = vmatpush2.msra.mxu0 0.0
    %5881 = vmatprep.subr.mxu0 0.0
    %5882 = vmatpush2.msra.mxu0 0.0
    %5883 = vmatprep.subr.mxu0 0.0
    %5884 = vmatpush2.msra.mxu0 %v5831
    %5885 = vmatprep.subr.mxu0 0.0
    %5886 = vmatpush2.msra.mxu0 %v5828
    %5887 = vmatprep.subr.mxu0 0.0
    %5888 = vmatpush2.msra.mxu0 %v5827
    %5889 = vmatprep.subr.mxu0 0.0
    %5890 = vmatpush2.msra.mxu0 %v5826
    %5891 = vmatprep.subr.mxu0 0.0
    %5892 = vmatpush2.msra.mxu0 %v5825
    %5893 = vmatprep.subr.mxu0 0.0
    %5894 = vmatpush2.msra.mxu0 %v5824
    %5895 = vmatprep.subr.mxu0 0.0
    %5896 = vmatpush2.msra.mxu0 %v5823
    %5897 = vmatprep.mubr.f32.mxu0 %v5731
    %5898 = vmatmul.mubr.f32.gmra.mxu0 %v5724
    %v5899 = vpop.f32.mrf.mxu0
    %v5900 = vadd.f32 0.0, %v5899
    %v5901 = vpop.f32.mrf.mxu0
    %5902 = vdwg.mxu0
    %v5903 = vmul.f32 %v5900, 0.0078125
    %v5904 = vmul.f32 %v5806, %v5806
    %v5905 = vsub.f32 %v5903, %v5904
    %v5906 = vmax.f32 %v5905, 0.0
    %v5907 = vadd.f32 %v5906, 1e-05
    %v5908 = vrsqrt.pop %v5907
    %v5909 = vld [vmem:[%s9] sm:$0x1]
    %v5910 = vmul.f32 %v5908, %v5909
    %v5911 = vld [vmem:[%s10] sm:$0x1]
    %v5912 = vmul.f32 %v5806, %v5910
    %v5913 = vsub.f32 %v5911, %v5912
    %v5914 = vlaneseq
    %v5915 = vshrl.u32 %v5914, 7
    %v5916 = vsub.s32 0, %v5915
    %v5917 = vrot.slane %v5910, %v5916
    %v5918 = vmul.f32 %v5696, %v5917
    %v5919 = vmul.f32 %v5697, %v5917
    %v5920 = vmul.f32 %v5698, %v5917
    %v5921 = vmul.f32 %v5699, %v5917
    %v5922 = vmul.f32 %v5700, %v5917
    %v5923 = vmul.f32 %v5701, %v5917
    %v5924 = vmul.f32 %v5702, %v5917
    %v5925 = vmul.f32 %v5703, %v5917
    %v5926 = vmul.f32 %v5704, %v5917
    %v5927 = vmul.f32 %v5705, %v5917
    %v5928 = vmul.f32 %v5706, %v5917
    %v5929 = vmul.f32 %v5707, %v5917
    %v5930 = vmul.f32 %v5708, %v5917
    %v5931 = vmul.f32 %v5709, %v5917
    %v5932 = vmul.f32 %v5710, %v5917
    %v5933 = vmul.f32 %v5711, %v5917
    %v5934 = vmul.f32 %v5712, %v5917
    %v5935 = vmul.f32 %v5713, %v5917
    %v5936 = vmul.f32 %v5714, %v5917
    %v5937 = vmul.f32 %v5715, %v5917
    %v5938 = vmul.f32 %v5716, %v5917
    %v5939 = vmul.f32 %v5717, %v5917
    %v5940 = vmul.f32 %v5718, %v5917
    %v5942 = vlaneseq
    %v5943 = vshrl.u32 %v5942, 7
    %v5944 = vsub.s32 0, %v5943
    %v5945 = vrot.slane %v5913, %v5944
    %v5947 = vadd.f32 %v5918, %v5945
    %v5948 = vadd.f32 %v5919, %v5945
    %v5949 = vadd.f32 %v5920, %v5945
    %v5950 = vadd.f32 %v5921, %v5945
    %v5951 = vadd.f32 %v5922, %v5945
    %v5952 = vadd.f32 %v5923, %v5945
    %v5953 = vadd.f32 %v5924, %v5945
    %v5954 = vadd.f32 %v5925, %v5945
    %v5955 = vadd.f32 %v5926, %v5945
    %v5956 = vadd.f32 %v5927, %v5945
    %v5957 = vadd.f32 %v5928, %v5945
    %v5958 = vadd.f32 %v5929, %v5945
    %v5959 = vadd.f32 %v5930, %v5945
    %v5960 = vadd.f32 %v5931, %v5945
    %v5961 = vadd.f32 %v5932, %v5945
    %v5962 = vadd.f32 %v5933, %v5945
    %v5963 = vadd.f32 %v5934, %v5945
    %v5964 = vadd.f32 %v5935, %v5945
    %v5965 = vadd.f32 %v5936, %v5945
    %v5966 = vadd.f32 %v5937, %v5945
    %v5967 = vadd.f32 %v5938, %v5945
    %v5968 = vadd.f32 %v5939, %v5945
    %v5969 = vadd.f32 %v5940, %v5945
    %v5970 = vtanh.pop %v5947
    %v5971 = vtanh.pop %v5948
    %v5972 = vtanh.pop %v5949
    %v5973 = vtanh.pop %v5950
    %v5974 = vtanh.pop %v5951
    %v5975 = vtanh.pop %v5952
    %v5976 = vtanh.pop %v5953
    %v5977 = vtanh.pop %v5954
    %v5978 = vtanh.pop %v5955
    %v5979 = vtanh.pop %v5956
    %v5980 = vtanh.pop %v5957
    %v5981 = vtanh.pop %v5958
    %v5982 = vtanh.pop %v5959
    %v5983 = vtanh.pop %v5960
    %v5984 = vtanh.pop %v5961
    %v5985 = vtanh.pop %v5962
    %v5986 = vtanh.pop %v5963
    %v5987 = vtanh.pop %v5964
    %v5988 = vtanh.pop %v5965
    %v5989 = vtanh.pop %v5966
    %v5990 = vtanh.pop %v5967
    %v5991 = vtanh.pop %v5968
    %v5992 = vtanh.pop %v5969
    %v6016 = vrot.slane %v5970, 1
    %v6017 = vrot.slane %v5971, 1
    %v6018 = vsel %vm1701, %v6016, %v6017
    %v6019 = vrot.slane %v5972, 1
    %v6020 = vsel %vm1701, %v6017, %v6019
    %v6021 = vrot.slane %v5973, 1
    %v6022 = vsel %vm1701, %v6019, %v6021
    %v6023 = vrot.slane %v5974, 1
    %v6024 = vsel %vm1701, %v6021, %v6023
    %v6025 = vrot.slane %v5975, 1
    %v6026 = vsel %vm1701, %v6023, %v6025
    %v6027 = vrot.slane %v5976, 1
    %v6028 = vsel %vm1701, %v6025, %v6027
    %v6029 = vrot.slane %v5977, 1
    %v6030 = vsel %vm1701, %v6027, %v6029
    %v6031 = vrot.slane %v5978, 1
    %v6032 = vsel %vm1701, %v6029, %v6031
    %v6033 = vrot.slane %v5979, 1
    %v6034 = vsel %vm1701, %v6031, %v6033
    %v6035 = vrot.slane %v5980, 1
    %v6036 = vsel %vm1701, %v6033, %v6035
    %v6037 = vrot.slane %v5981, 1
    %v6038 = vsel %vm1701, %v6035, %v6037
    %v6039 = vrot.slane %v5982, 1
    %v6040 = vsel %vm1701, %v6037, %v6039
    %v6041 = vrot.slane %v5983, 1
    %v6042 = vsel %vm1701, %v6039, %v6041
    %v6043 = vrot.slane %v5984, 1
    %v6044 = vsel %vm1701, %v6041, %v6043
    %v6045 = vrot.slane %v5985, 1
    %v6046 = vsel %vm1701, %v6043, %v6045
    %v6047 = vrot.slane %v5986, 1
    %v6048 = vsel %vm1701, %v6045, %v6047
    %v6049 = vrot.slane %v5987, 1
    %v6050 = vsel %vm1701, %v6047, %v6049
    %v6051 = vrot.slane %v5988, 1
    %v6052 = vsel %vm1701, %v6049, %v6051
    %v6053 = vrot.slane %v5989, 1
    %v6054 = vsel %vm1701, %v6051, %v6053
    %v6055 = vrot.slane %v5990, 1
    %v6056 = vsel %vm1701, %v6053, %v6055
    %v6057 = vrot.slane %v5991, 1
    %v6058 = vsel %vm1701, %v6055, %v6057
    %v6059 = vrot.slane %v5992, 1
    %v6060 = vsel %vm1701, %v6057, %v6059
    %v6084 = vmax.f32 %v5970, %v6018
    %v6085 = vmax.f32 %v5971, %v6020
    %v6086 = vmax.f32 %v5972, %v6022
    %v6087 = vmax.f32 %v5973, %v6024
    %v6088 = vmax.f32 %v5974, %v6026
    %v6089 = vmax.f32 %v5975, %v6028
    %v6090 = vmax.f32 %v5976, %v6030
    %v6091 = vmax.f32 %v5977, %v6032
    %v6092 = vmax.f32 %v5978, %v6034
    %v6093 = vmax.f32 %v5979, %v6036
    %v6094 = vmax.f32 %v5980, %v6038
    %v6095 = vmax.f32 %v5981, %v6040
    %v6096 = vmax.f32 %v5982, %v6042
    %v6097 = vmax.f32 %v5983, %v6044
    %v6098 = vmax.f32 %v5984, %v6046
    %v6099 = vmax.f32 %v5985, %v6048
    %v6100 = vmax.f32 %v5986, %v6050
    %v6101 = vmax.f32 %v5987, %v6052
    %v6102 = vmax.f32 %v5988, %v6054
    %v6103 = vmax.f32 %v5989, %v6056
    %v6104 = vmax.f32 %v5990, %v6058
    %v6105 = vmax.f32 %v5991, %v6060
    %v6106 = vmax.f32 %v5992, %v6059
    %v6129 = vrot.slane %v6085, 2
    %v6130 = vrot.slane %v6086, 2
    %v6131 = vsel %vm2084, %v6129, %v6130
    %v6132 = vrot.slane %v6087, 2
    %v6133 = vsel %vm2084, %v6130, %v6132
    %v6134 = vrot.slane %v6088, 2
    %v6135 = vsel %vm2084, %v6132, %v6134
    %v6136 = vrot.slane %v6089, 2
    %v6137 = vsel %vm2084, %v6134, %v6136
    %v6138 = vrot.slane %v6090, 2
    %v6139 = vsel %vm2084, %v6136, %v6138
    %v6140 = vrot.slane %v6091, 2
    %v6141 = vsel %vm2084, %v6138, %v6140
    %v6142 = vrot.slane %v6092, 2
    %v6143 = vsel %vm2084, %v6140, %v6142
    %v6144 = vrot.slane %v6093, 2
    %v6145 = vsel %vm2084, %v6142, %v6144
    %v6146 = vrot.slane %v6094, 2
    %v6147 = vsel %vm2084, %v6144, %v6146
    %v6148 = vrot.slane %v6095, 2
    %v6149 = vsel %vm2084, %v6146, %v6148
    %v6150 = vrot.slane %v6096, 2
    %v6151 = vsel %vm2084, %v6148, %v6150
    %v6152 = vrot.slane %v6097, 2
    %v6153 = vsel %vm2084, %v6150, %v6152
    %v6154 = vrot.slane %v6098, 2
    %v6155 = vsel %vm2084, %v6152, %v6154
    %v6156 = vrot.slane %v6099, 2
    %v6157 = vsel %vm2084, %v6154, %v6156
    %v6158 = vrot.slane %v6100, 2
    %v6159 = vsel %vm2084, %v6156, %v6158
    %v6160 = vrot.slane %v6101, 2
    %v6161 = vsel %vm2084, %v6158, %v6160
    %v6162 = vrot.slane %v6102, 2
    %v6163 = vsel %vm2084, %v6160, %v6162
    %v6164 = vrot.slane %v6103, 2
    %v6165 = vsel %vm2084, %v6162, %v6164
    %v6166 = vrot.slane %v6104, 2
    %v6167 = vsel %vm2084, %v6164, %v6166
    %v6168 = vrot.slane %v6105, 2
    %v6169 = vsel %vm2084, %v6166, %v6168
    %v6170 = vrot.slane %v6106, 2
    %v6171 = vsel %vm2084, %v6168, %v6170
    %v6193 = vmax.f32 %v6084, %v6131
    %v6194 = vmax.f32 %v6085, %v6133
    %v6195 = vmax.f32 %v6086, %v6135
    %v6196 = vmax.f32 %v6087, %v6137
    %v6197 = vmax.f32 %v6088, %v6139
    %v6198 = vmax.f32 %v6089, %v6141
    %v6199 = vmax.f32 %v6090, %v6143
    %v6200 = vmax.f32 %v6091, %v6145
    %v6201 = vmax.f32 %v6092, %v6147
    %v6202 = vmax.f32 %v6093, %v6149
    %v6203 = vmax.f32 %v6094, %v6151
    %v6204 = vmax.f32 %v6095, %v6153
    %v6205 = vmax.f32 %v6096, %v6155
    %v6206 = vmax.f32 %v6097, %v6157
    %v6207 = vmax.f32 %v6098, %v6159
    %v6208 = vmax.f32 %v6099, %v6161
    %v6209 = vmax.f32 %v6100, %v6163
    %v6210 = vmax.f32 %v6101, %v6165
    %v6211 = vmax.f32 %v6102, %v6167
    %v6212 = vmax.f32 %v6103, %v6169
    %v6213 = vmax.f32 %v6104, %v6171
    %v6214 = vld [vmem:[%s12] sm:$0xff]
    %v6215 = vld [vmem:[%s12 + $0x8] sm:$0xff]
    %v6216 = vld [vmem:[%s12 + $0x10] sm:$0xff]
    %v6217 = vld [vmem:[%s12 + $0x18] sm:$0xff]
    %v6218 = vld [vmem:[%s12 + $0x20] sm:$0xff]
    %v6219 = vld [vmem:[%s12 + $0x28] sm:$0xff]
    %v6220 = vld [vmem:[%s12 + $0x30] sm:$0xff]
    %v6221 = vld [vmem:[%s12 + $0x38] sm:$0xff]
    %vm6222 = vcmask 318464
    %v6224 = vsel %vm6222, %v6215, 0
    %v6227 = vsel %vm6222, %v6217, 0
    %v6230 = vsel %vm6222, %v6219, 0
    %v6233 = vsel %vm6222, %v6221, 0
    %v6236 = vsel %vm1701, %v6213, 0
    %6238 = vmatprep.subr.mxu0 0.0
    %6239 = vmatpush1.msra.mxu0 %v6208
    %6240 = vmatprep.subr.mxu0 0.0
    %6241 = vmatpush1.msra.mxu0 %v6207
    %6242 = vmatprep.subr.mxu0 0.0
    %6243 = vmatpush1.msra.mxu0 %v6206
    %6244 = vmatprep.subr.mxu0 0.0
    %6245 = vmatpush1.msra.mxu0 %v6205
    %6246 = vmatprep.subr.mxu0 0.0
    %6247 = vmatpush1.msra.mxu0 %v6204
    %6248 = vmatprep.subr.mxu0 0.0
    %6249 = vmatpush1.msra.mxu0 %v6203
    %6250 = vmatprep.subr.mxu0 0.0
    %6251 = vmatpush1.msra.mxu0 %v6202
    %6252 = vmatprep.subr.mxu0 0.0
    %6253 = vmatpush1.msra.mxu0 %v6201
    %6254 = vmatprep.subr.mxu0 0.0
    %6255 = vmatpush1.msra.mxu0 %v6200
    %6256 = vmatprep.subr.mxu0 0.0
    %6257 = vmatpush1.msra.mxu0 %v6199
    %6258 = vmatprep.subr.mxu0 0.0
    %6259 = vmatpush1.msra.mxu0 %v6198
    %6260 = vmatprep.subr.mxu0 0.0
    %6261 = vmatpush1.msra.mxu0 %v6197
    %6262 = vmatprep.subr.mxu0 0.0
    %6263 = vmatpush1.msra.mxu0 %v6196
    %6264 = vmatprep.subr.mxu0 0.0
    %6265 = vmatpush1.msra.mxu0 %v6195
    %6266 = vmatprep.subr.mxu0 0.0
    %6267 = vmatpush1.msra.mxu0 %v6194
    %6268 = vmatprep.subr.mxu0 0.0
    %6269 = vmatpush1.msra.mxu0 %v6193
    %6270 = vmatprep.subr.mxu0 0.0
    %6271 = vmatpush2.msra.mxu0 0.0
    %6272 = vmatprep.subr.mxu0 0.0
    %6273 = vmatpush2.msra.mxu0 0.0
    %6274 = vmatprep.subr.mxu0 0.0
    %6275 = vmatpush2.msra.mxu0 0.0
    %6276 = vmatprep.subr.mxu0 0.0
    %6277 = vmatpush2.msra.mxu0 0.0
    %6278 = vmatprep.subr.mxu0 0.0
    %6279 = vmatpush2.msra.mxu0 0.0
    %6280 = vmatprep.subr.mxu0 0.0
    %6281 = vmatpush2.msra.mxu0 0.0
    %6282 = vmatprep.subr.mxu0 0.0
    %6283 = vmatpush2.msra.mxu0 0.0
    %6284 = vmatprep.subr.mxu0 0.0
    %6285 = vmatpush2.msra.mxu0 0.0
    %6286 = vmatprep.subr.mxu0 0.0
    %6287 = vmatpush2.msra.mxu0 0.0
    %6288 = vmatprep.subr.mxu0 0.0
    %6289 = vmatpush2.msra.mxu0 0.0
    %6290 = vmatprep.subr.mxu0 0.0
    %6291 = vmatpush2.msra.mxu0 0.0
    %6292 = vmatprep.subr.mxu0 0.0
    %6293 = vmatpush2.msra.mxu0 %v6236
    %6294 = vmatprep.subr.mxu0 0.0
    %6295 = vmatpush2.msra.mxu0 %v6212
    %6296 = vmatprep.subr.mxu0 0.0
    %6297 = vmatpush2.msra.mxu0 %v6211
    %6298 = vmatprep.subr.mxu0 0.0
    %6299 = vmatpush2.msra.mxu0 %v6210
    %6300 = vmatprep.subr.mxu0 0.0
    %6301 = vmatpush2.msra.mxu0 %v6209
    %6302 = vmatprep.mubr.f32.mxu0 %v6224
    %6303 = vmatmul.mubr.f32.gmra.mxu0 %v6214
    %v6304 = vpop.f32.mrf.mxu0
    %v6305 = vadd.f32 0.0, %v6304
    %v6306 = vpop.f32.mrf.mxu0
    %6307 = vmatprep.mubr.f32.mxu0 %v6227
    %6308 = vmatmul.mubr.f32.gmra.mxu0 %v6216
    %v6309 = vpop.f32.mrf.mxu0
    %v6310 = vadd.f32 0.0, %v6309
    %v6311 = vpop.f32.mrf.mxu0
    %6312 = vmatprep.mubr.f32.mxu0 %v6230
    %6313 = vmatmul.mubr.f32.gmra.mxu0 %v6218
    %v6314 = vpop.f32.mrf.mxu0
    %v6315 = vadd.f32 0.0, %v6314
    %v6316 = vpop.f32.mrf.mxu0
    %6317 = vmatprep.mubr.f32.mxu0 %v6233
    %6318 = vmatmul.mubr.f32.gmra.mxu0 %v6220
    %v6319 = vpop.f32.mrf.mxu0
    %v6320 = vadd.f32 0.0, %v6319
    %v6321 = vpop.f32.mrf.mxu0
    %6322 = vdwg.mxu0
    %v6323 = vld [vmem:[%s13] sm:$0xff]
    %v6324 = vld [vmem:[%s13 + $0x8] sm:$0xff]
    %v6325 = vld [vmem:[%s13 + $0x10] sm:$0xff]
    %v6326 = vld [vmem:[%s13 + $0x18] sm:$0xff]
    %v6327 = vld [vmem:[%s13 + $0x20] sm:$0xff]
    %v6328 = vld [vmem:[%s13 + $0x28] sm:$0xff]
    %v6329 = vld [vmem:[%s13 + $0x30] sm:$0xff]
    %v6330 = vld [vmem:[%s13 + $0x38] sm:$0xff]
    %vm6331 = vcmask 130048
    %v6333 = vsel %vm6331, %v6305, 0
    %v6336 = vsel %vm6331, %v6310, 0
    %v6339 = vsel %vm6331, %v6315, 0
    %v6342 = vsel %vm6331, %v6320, 0
    %6344 = vmatprep.subr.mxu0 0.0
    %6345 = vmatpush1.msra.mxu0 0.0
    %6346 = vmatprep.subr.mxu0 0.0
    %6347 = vmatpush1.msra.mxu0 0.0
    %6348 = vmatprep.subr.mxu0 0.0
    %6349 = vmatpush1.msra.mxu0 0.0
    %6350 = vmatprep.subr.mxu0 0.0
    %6351 = vmatpush1.msra.mxu0 0.0
    %6352 = vmatprep.subr.mxu0 0.0
    %6353 = vmatpush1.msra.mxu0 0.0
    %6354 = vmatprep.subr.mxu0 0.0
    %6355 = vmatpush1.msra.mxu0 0.0
    %6356 = vmatprep.subr.mxu0 0.0
    %6357 = vmatpush1.msra.mxu0 0.0
    %6358 = vmatprep.subr.mxu0 0.0
    %6359 = vmatpush1.msra.mxu0 0.0
    %6360 = vmatprep.subr.mxu0 0.0
    %6361 = vmatpush1.msra.mxu0 0.0
    %6362 = vmatprep.subr.mxu0 0.0
    %6363 = vmatpush1.msra.mxu0 0.0
    %6364 = vmatprep.subr.mxu0 0.0
    %6365 = vmatpush1.msra.mxu0 0.0
    %6366 = vmatprep.subr.mxu0 0.0
    %6367 = vmatpush1.msra.mxu0 0.0
    %6368 = vmatprep.subr.mxu0 0.0
    %6369 = vmatpush1.msra.mxu0 0.0
    %6370 = vmatprep.subr.mxu0 0.0
    %6371 = vmatpush1.msra.mxu0 0.0
    %6372 = vmatprep.subr.mxu0 %v6328
    %6373 = vmatpush1.msra.mxu0 %v6327
    %6374 = vmatprep.subr.mxu0 %v6324
    %6375 = vmatpush1.msra.mxu0 %v6323
    %6376 = vmatprep.subr.mxu0 0.0
    %6377 = vmatpush2.msra.mxu0 0.0
    %6378 = vmatprep.subr.mxu0 0.0
    %6379 = vmatpush2.msra.mxu0 0.0
    %6380 = vmatprep.subr.mxu0 0.0
    %6381 = vmatpush2.msra.mxu0 0.0
    %6382 = vmatprep.subr.mxu0 0.0
    %6383 = vmatpush2.msra.mxu0 0.0
    %6384 = vmatprep.subr.mxu0 0.0
    %6385 = vmatpush2.msra.mxu0 0.0
    %6386 = vmatprep.subr.mxu0 0.0
    %6387 = vmatpush2.msra.mxu0 0.0
    %6388 = vmatprep.subr.mxu0 0.0
    %6389 = vmatpush2.msra.mxu0 0.0
    %6390 = vmatprep.subr.mxu0 0.0
    %6391 = vmatpush2.msra.mxu0 0.0
    %6392 = vmatprep.subr.mxu0 0.0
    %6393 = vmatpush2.msra.mxu0 0.0
    %6394 = vmatprep.subr.mxu0 0.0
    %6395 = vmatpush2.msra.mxu0 0.0
    %6396 = vmatprep.subr.mxu0 0.0
    %6397 = vmatpush2.msra.mxu0 0.0
    %6398 = vmatprep.subr.mxu0 0.0
    %6399 = vmatpush2.msra.mxu0 0.0
    %6400 = vmatprep.subr.mxu0 0.0
    %6401 = vmatpush2.msra.mxu0 0.0
    %6402 = vmatprep.subr.mxu0 0.0
    %6403 = vmatpush2.msra.mxu0 0.0
    %6404 = vmatprep.subr.mxu0 0.0
    %6405 = vmatpush2.msra.mxu0 0.0
    %6406 = vmatprep.subr.mxu0 0.0
    %6407 = vmatpush2.msra.mxu0 0.0
    %6408 = vmatprep.mubr.f32.mxu0 0.0
    %6409 = vmatmul.mubr.f32.gmra.mxu0 %v6333
    %v6410 = vpop.f32.mrf.mxu0
    %v6411 = vadd.f32 0.0, %v6410
    %v6412 = vpop.f32.mrf.mxu0
    %v6413 = vadd.f32 0.0, %v6412
    %6414 = vmatprep.mubr.f32.mxu0 0.0
    %6415 = vmatmul.mubr.f32.gmra.mxu0 %v6336
    %v6416 = vpop.f32.mrf.mxu0
    %v6417 = vadd.f32 0.0, %v6416
    %v6418 = vpop.f32.mrf.mxu0
    %v6419 = vadd.f32 0.0, %v6418
    %6420 = vmatprep.mubr.f32.mxu0 0.0
    %6421 = vmatmul.mubr.f32.gmra.mxu0 %v6339
    %v6422 = vpop.f32.mrf.mxu0
    %v6423 = vadd.f32 0.0, %v6422
    %v6424 = vpop.f32.mrf.mxu0
    %v6425 = vadd.f32 0.0, %v6424
    %6426 = vmatprep.mubr.f32.mxu0 0.0
    %6427 = vmatmul.mubr.f32.gmra.mxu0 %v6342
    %v6428 = vpop.f32.mrf.mxu0
    %v6429 = vadd.f32 0.0, %v6428
    %v6430 = vpop.f32.mrf.mxu0
    %v6431 = vadd.f32 0.0, %v6430
    %6432 = vdwg.mxu0
    %6433 = vmatprep.subr.mxu0 0.0
    %6434 = vmatpush1.msra.mxu0 0.0
    %6435 = vmatprep.subr.mxu0 0.0
    %6436 = vmatpush1.msra.mxu0 0.0
    %6437 = vmatprep.subr.mxu0 0.0
    %6438 = vmatpush1.msra.mxu0 0.0
    %6439 = vmatprep.subr.mxu0 0.0
    %6440 = vmatpush1.msra.mxu0 0.0
    %6441 = vmatprep.subr.mxu0 0.0
    %6442 = vmatpush1.msra.mxu0 0.0
    %6443 = vmatprep.subr.mxu0 0.0
    %6444 = vmatpush1.msra.mxu0 0.0
    %6445 = vmatprep.subr.mxu0 0.0
    %6446 = vmatpush1.msra.mxu0 0.0
    %6447 = vmatprep.subr.mxu0 0.0
    %6448 = vmatpush1.msra.mxu0 0.0
    %6449 = vmatprep.subr.mxu0 0.0
    %6450 = vmatpush1.msra.mxu0 0.0
    %6451 = vmatprep.subr.mxu0 0.0
    %6452 = vmatpush1.msra.mxu0 0.0
    %6453 = vmatprep.subr.mxu0 0.0
    %6454 = vmatpush1.msra.mxu0 0.0
    %6455 = vmatprep.subr.mxu0 0.0
    %6456 = vmatpush1.msra.mxu0 0.0
    %6457 = vmatprep.subr.mxu0 0.0
    %6458 = vmatpush1.msra.mxu0 0.0
    %6459 = vmatprep.subr.mxu0 0.0
    %6460 = vmatpush1.msra.mxu0 0.0
    %6461 = vmatprep.subr.mxu0 %v6330
    %6462 = vmatpush1.msra.mxu0 %v6329
    %6463 = vmatprep.subr.mxu0 %v6326
    %6464 = vmatpush1.msra.mxu0 %v6325
    %6465 = vmatprep.subr.mxu0 0.0
    %6466 = vmatpush2.msra.mxu0 0.0
    %6467 = vmatprep.subr.mxu0 0.0
    %6468 = vmatpush2.msra.mxu0 0.0
    %6469 = vmatprep.subr.mxu0 0.0
    %6470 = vmatpush2.msra.mxu0 0.0
    %6471 = vmatprep.subr.mxu0 0.0
    %6472 = vmatpush2.msra.mxu0 0.0
    %6473 = vmatprep.subr.mxu0 0.0
    %6474 = vmatpush2.msra.mxu0 0.0
    %6475 = vmatprep.subr.mxu0 0.0
    %6476 = vmatpush2.msra.mxu0 0.0
    %6477 = vmatprep.subr.mxu0 0.0
    %6478 = vmatpush2.msra.mxu0 0.0
    %6479 = vmatprep.subr.mxu0 0.0
    %6480 = vmatpush2.msra.mxu0 0.0
    %6481 = vmatprep.subr.mxu0 0.0
    %6482 = vmatpush2.msra.mxu0 0.0
    %6483 = vmatprep.subr.mxu0 0.0
    %6484 = vmatpush2.msra.mxu0 0.0
    %6485 = vmatprep.subr.mxu0 0.0
    %6486 = vmatpush2.msra.mxu0 0.0
    %6487 = vmatprep.subr.mxu0 0.0
    %6488 = vmatpush2.msra.mxu0 0.0
    %6489 = vmatprep.subr.mxu0 0.0
    %6490 = vmatpush2.msra.mxu0 0.0
    %6491 = vmatprep.subr.mxu0 0.0
    %6492 = vmatpush2.msra.mxu0 0.0
    %6493 = vmatprep.subr.mxu0 0.0
    %6494 = vmatpush2.msra.mxu0 0.0
    %6495 = vmatprep.subr.mxu0 0.0
    %6496 = vmatpush2.msra.mxu0 0.0
    %6497 = vmatprep.mubr.f32.mxu0 0.0
    %6498 = vmatmul.mubr.f32.gmra.mxu0 %v6333
    %v6499 = vpop.f32.mrf.mxu0
    %v6500 = vadd.f32 0.0, %v6499
    %v6501 = vpop.f32.mrf.mxu0
    %v6502 = vadd.f32 0.0, %v6501
    %6503 = vmatprep.mubr.f32.mxu0 0.0
    %6504 = vmatmul.mubr.f32.gmra.mxu0 %v6336
    %v6505 = vpop.f32.mrf.mxu0
    %v6506 = vadd.f32 0.0, %v6505
    %v6507 = vpop.f32.mrf.mxu0
    %v6508 = vadd.f32 0.0, %v6507
    %6509 = vmatprep.mubr.f32.mxu0 0.0
    %6510 = vmatmul.mubr.f32.gmra.mxu0 %v6339
    %v6511 = vpop.f32.mrf.mxu0
    %v6512 = vadd.f32 0.0, %v6511
    %v6513 = vpop.f32.mrf.mxu0
    %v6514 = vadd.f32 0.0, %v6513
    %6515 = vmatprep.mubr.f32.mxu0 0.0
    %6516 = vmatmul.mubr.f32.gmra.mxu0 %v6342
    %v6517 = vpop.f32.mrf.mxu0
    %v6518 = vadd.f32 0.0, %v6517
    %v6519 = vpop.f32.mrf.mxu0
    %v6520 = vadd.f32 0.0, %v6519
    %6521 = vdwg.mxu0
    %v6522 = vld [vmem:[%s14] sm:$0xff]
    %v6523 = vld [vmem:[%s14 + $0x8] sm:$0xff]
    %v6524 = vld [vmem:[%s14 + $0x10] sm:$0xff]
    %v6525 = vld [vmem:[%s14 + $0x18] sm:$0xff]
    %v6526 = vld [vmem:[%s14 + $0x20] sm:$0xff]
    %v6527 = vld [vmem:[%s14 + $0x28] sm:$0xff]
    %v6528 = vld [vmem:[%s14 + $0x30] sm:$0xff]
    %v6529 = vld [vmem:[%s14 + $0x38] sm:$0xff]
    %v6530 = vld [vmem:[%s14 + $0x40] sm:$0xff]
    %v6531 = vld [vmem:[%s14 + $0x48] sm:$0xff]
    %v6532 = vld [vmem:[%s14 + $0x50] sm:$0xff]
    %v6533 = vld [vmem:[%s14 + $0x58] sm:$0xff]
    %v6534 = vld [vmem:[%s14 + $0x60] sm:$0xff]
    %v6535 = vld [vmem:[%s14 + $0x68] sm:$0xff]
    %v6536 = vld [vmem:[%s14 + $0x70] sm:$0xff]
    %v6537 = vld [vmem:[%s14 + $0x78] sm:$0xff]
    %v6538 = vmul.f32 %v6411, %v6522
    %v6539 = vmul.f32 %v6413, %v6523
    %v6540 = vmul.f32 %v6500, %v6524
    %v6541 = vmul.f32 %v6502, %v6525
    %v6542 = vmul.f32 %v6417, %v6526
    %v6543 = vmul.f32 %v6419, %v6527
    %v6544 = vmul.f32 %v6506, %v6528
    %v6545 = vmul.f32 %v6508, %v6529
    %v6546 = vmul.f32 %v6423, %v6530
    %v6547 = vmul.f32 %v6425, %v6531
    %v6548 = vmul.f32 %v6512, %v6532
    %v6549 = vmul.f32 %v6514, %v6533
    %v6550 = vmul.f32 %v6429, %v6534
    %v6551 = vmul.f32 %v6431, %v6535
    %v6552 = vmul.f32 %v6518, %v6536
    %v6553 = vmul.f32 %v6520, %v6537
    %v6554 = vld [vmem:[%s15] sm:$0x3]
    %v6556 = vsel %vm3308, %v6554, 0
    %6558 = vmatprep.subr.mxu0 0.0
    %6559 = vmatpush1.msra.mxu0 0.0
    %6560 = vmatprep.subr.mxu0 0.0
    %6561 = vmatpush1.msra.mxu0 0.0
    %6562 = vmatprep.subr.mxu0 0.0
    %6563 = vmatpush1.msra.mxu0 0.0
    %6564 = vmatprep.subr.mxu0 0.0
    %6565 = vmatpush1.msra.mxu0 0.0
    %6566 = vmatprep.subr.mxu0 0.0
    %6567 = vmatpush1.msra.mxu0 0.0
    %6568 = vmatprep.subr.mxu0 0.0
    %6569 = vmatpush1.msra.mxu0 0.0
    %6570 = vmatprep.subr.mxu0 0.0
    %6571 = vmatpush1.msra.mxu0 0.0
    %6572 = vmatprep.subr.mxu0 0.0
    %6573 = vmatpush1.msra.mxu0 0.0
    %6574 = vmatprep.subr.mxu0 0.0
    %6575 = vmatpush1.msra.mxu0 0.0
    %6576 = vmatprep.subr.mxu0 0.0
    %6577 = vmatpush1.msra.mxu0 0.0
    %6578 = vmatprep.subr.mxu0 0.0
    %6579 = vmatpush1.msra.mxu0 0.0
    %6580 = vmatprep.subr.mxu0 0.0
    %6581 = vmatpush1.msra.mxu0 0.0
    %6582 = vmatprep.subr.mxu0 %v6551
    %6583 = vmatpush1.msra.mxu0 %v6550
    %6584 = vmatprep.subr.mxu0 %v6547
    %6585 = vmatpush1.msra.mxu0 %v6546
    %6586 = vmatprep.subr.mxu0 %v6543
    %6587 = vmatpush1.msra.mxu0 %v6542
    %6588 = vmatprep.subr.mxu0 %v6539
    %6589 = vmatpush1.msra.mxu0 %v6538
    %6590 = vmatprep.subr.mxu0 0.0
    %6591 = vmatpush2.msra.mxu0 0.0
    %6592 = vmatprep.subr.mxu0 0.0
    %6593 = vmatpush2.msra.mxu0 0.0
    %6594 = vmatprep.subr.mxu0 0.0
    %6595 = vmatpush2.msra.mxu0 0.0
    %6596 = vmatprep.subr.mxu0 0.0
    %6597 = vmatpush2.msra.mxu0 0.0
    %6598 = vmatprep.subr.mxu0 0.0
    %6599 = vmatpush2.msra.mxu0 0.0
    %6600 = vmatprep.subr.mxu0 0.0
    %6601 = vmatpush2.msra.mxu0 0.0
    %6602 = vmatprep.subr.mxu0 0.0
    %6603 = vmatpush2.msra.mxu0 0.0
    %6604 = vmatprep.subr.mxu0 0.0
    %6605 = vmatpush2.msra.mxu0 0.0
    %6606 = vmatprep.subr.mxu0 0.0
    %6607 = vmatpush2.msra.mxu0 0.0
    %6608 = vmatprep.subr.mxu0 0.0
    %6609 = vmatpush2.msra.mxu0 0.0
    %6610 = vmatprep.subr.mxu0 0.0
    %6611 = vmatpush2.msra.mxu0 0.0
    %6612 = vmatprep.subr.mxu0 0.0
    %6613 = vmatpush2.msra.mxu0 0.0
    %6614 = vmatprep.subr.mxu0 0.0
    %6615 = vmatpush2.msra.mxu0 0.0
    %6616 = vmatprep.subr.mxu0 0.0
    %6617 = vmatpush2.msra.mxu0 0.0
    %6618 = vmatprep.subr.mxu0 0.0
    %6619 = vmatpush2.msra.mxu0 0.0
    %6620 = vmatprep.subr.mxu0 0.0
    %6621 = vmatpush2.msra.mxu0 0.0
    %6622 = vmatprep.mubr.f32.mxu0 0.0
    %6623 = vmatmul.mubr.f32.gmra.mxu0 %v6556
    %v6624 = vpop.f32.mrf.mxu0
    %v6625 = vadd.f32 0.0, %v6624
    %v6626 = vpop.f32.mrf.mxu0
    %v6627 = vadd.f32 0.0, %v6626
    %6628 = vdwg.mxu0
    %6629 = vmatprep.subr.mxu0 0.0
    %6630 = vmatpush1.msra.mxu0 0.0
    %6631 = vmatprep.subr.mxu0 0.0
    %6632 = vmatpush1.msra.mxu0 0.0
    %6633 = vmatprep.subr.mxu0 0.0
    %6634 = vmatpush1.msra.mxu0 0.0
    %6635 = vmatprep.subr.mxu0 0.0
    %6636 = vmatpush1.msra.mxu0 0.0
    %6637 = vmatprep.subr.mxu0 0.0
    %6638 = vmatpush1.msra.mxu0 0.0
    %6639 = vmatprep.subr.mxu0 0.0
    %6640 = vmatpush1.msra.mxu0 0.0
    %6641 = vmatprep.subr.mxu0 0.0
    %6642 = vmatpush1.msra.mxu0 0.0
    %6643 = vmatprep.subr.mxu0 0.0
    %6644 = vmatpush1.msra.mxu0 0.0
    %6645 = vmatprep.subr.mxu0 0.0
    %6646 = vmatpush1.msra.mxu0 0.0
    %6647 = vmatprep.subr.mxu0 0.0
    %6648 = vmatpush1.msra.mxu0 0.0
    %6649 = vmatprep.subr.mxu0 0.0
    %6650 = vmatpush1.msra.mxu0 0.0
    %6651 = vmatprep.subr.mxu0 0.0
    %6652 = vmatpush1.msra.mxu0 0.0
    %6653 = vmatprep.subr.mxu0 %v6553
    %6654 = vmatpush1.msra.mxu0 %v6552
    %6655 = vmatprep.subr.mxu0 %v6549
    %6656 = vmatpush1.msra.mxu0 %v6548
    %6657 = vmatprep.subr.mxu0 %v6545
    %6658 = vmatpush1.msra.mxu0 %v6544
    %6659 = vmatprep.subr.mxu0 %v6541
    %6660 = vmatpush1.msra.mxu0 %v6540
    %6661 = vmatprep.subr.mxu0 0.0
    %6662 = vmatpush2.msra.mxu0 0.0
    %6663 = vmatprep.subr.mxu0 0.0
    %6664 = vmatpush2.msra.mxu0 0.0
    %6665 = vmatprep.subr.mxu0 0.0
    %6666 = vmatpush2.msra.mxu0 0.0
    %6667 = vmatprep.subr.mxu0 0.0
    %6668 = vmatpush2.msra.mxu0 0.0
    %6669 = vmatprep.subr.mxu0 0.0
    %6670 = vmatpush2.msra.mxu0 0.0
    %6671 = vmatprep.subr.mxu0 0.0
    %6672 = vmatpush2.msra.mxu0 0.0
    %6673 = vmatprep.subr.mxu0 0.0
    %6674 = vmatpush2.msra.mxu0 0.0
    %6675 = vmatprep.subr.mxu0 0.0
    %6676 = vmatpush2.msra.mxu0 0.0
    %6677 = vmatprep.subr.mxu0 0.0
    %6678 = vmatpush2.msra.mxu0 0.0
    %6679 = vmatprep.subr.mxu0 0.0
    %6680 = vmatpush2.msra.mxu0 0.0
    %6681 = vmatprep.subr.mxu0 0.0
    %6682 = vmatpush2.msra.mxu0 0.0
    %6683 = vmatprep.subr.mxu0 0.0
    %6684 = vmatpush2.msra.mxu0 0.0
    %6685 = vmatprep.subr.mxu0 0.0
    %6686 = vmatpush2.msra.mxu0 0.0
    %6687 = vmatprep.subr.mxu0 0.0
    %6688 = vmatpush2.msra.mxu0 0.0
    %6689 = vmatprep.subr.mxu0 0.0
    %6690 = vmatpush2.msra.mxu0 0.0
    %6691 = vmatprep.subr.mxu0 0.0
    %6692 = vmatpush2.msra.mxu0 0.0
    %6693 = vmatprep.mubr.f32.mxu0 0.0
    %6694 = vmatmul.mubr.f32.gmra.mxu0 %v6556
    %v6695 = vpop.f32.mrf.mxu0
    %v6696 = vadd.f32 0.0, %v6695
    %v6697 = vpop.f32.mrf.mxu0
    %v6698 = vadd.f32 0.0, %v6697
    %6699 = vdwg.mxu0
    %v6700 = vld [vmem:[%s16] sm:$0xff]
    %v6701 = vld [vmem:[%s16 + $0x8] sm:$0xff]
    %v6702 = vld [vmem:[%s16 + $0x10] sm:$0xff]
    %v6703 = vld [vmem:[%s16 + $0x18] sm:$0xff]
    %v6704 = vld [vmem:[%s16 + $0x20] sm:$0xff]
    %v6705 = vld [vmem:[%s16 + $0x28] sm:$0xff]
    %v6706 = vld [vmem:[%s16 + $0x30] sm:$0xff]
    %v6707 = vld [vmem:[%s16 + $0x38] sm:$0xff]
    %v6708 = vld [vmem:[%s16 + $0x40] sm:$0xff]
    %v6709 = vld [vmem:[%s16 + $0x48] sm:$0xff]
    %v6710 = vld [vmem:[%s16 + $0x50] sm:$0xff]
    %v6711 = vld [vmem:[%s16 + $0x58] sm:$0xff]
    %v6712 = vld [vmem:[%s16 + $0x60] sm:$0xff]
    %v6713 = vld [vmem:[%s16 + $0x68] sm:$0xff]
    %v6714 = vld [vmem:[%s16 + $0x70] sm:$0xff]
    %v6715 = vld [vmem:[%s16 + $0x78] sm:$0xff]
    %v6716 = vld [vmem:[%s16 + $0x80] sm:$0xff]
    %v6717 = vld [vmem:[%s16 + $0x88] sm:$0xff]
    %v6718 = vld [vmem:[%s16 + $0x90] sm:$0xff]
    %v6719 = vld [vmem:[%s16 + $0x98] sm:$0xff]
    %v6720 = vld [vmem:[%s16 + $0xa0] sm:$0xff]
    %v6721 = vld [vmem:[%s16 + $0xa8] sm:$0xff]
    %v6722 = vld [vmem:[%s16 + $0xb0] sm:$0xff]
    %v6723 = vld [vmem:[%s16 + $0xb8] sm:$0xff]
    %v6724 = vld [vmem:[%s16 + $0xc0] sm:$0xff]
    %v6725 = vld [vmem:[%s16 + $0xc8] sm:$0xff]
    %v6726 = vld [vmem:[%s16 + $0xd0] sm:$0xff]
    %v6727 = vld [vmem:[%s16 + $0xd8] sm:$0xff]
    %v6728 = vld [vmem:[%s16 + $0xe0] sm:$0xff]
    %v6729 = vld [vmem:[%s16 + $0xe8] sm:$0xff]
    %v6730 = vld [vmem:[%s16 + $0xf0] sm:$0xff]
    %v6731 = vld [vmem:[%s16 + $0xf8] sm:$0xff]
    %v6732 = vld [vmem:[%s16 + $0x100] sm:$0xff]
    %v6733 = vld [vmem:[%s16 + $0x108] sm:$0xff]
    %v6734 = vld [vmem:[%s16 + $0x110] sm:$0xff]
    %v6735 = vld [vmem:[%s16 + $0x118] sm:$0xff]
    %v6736 = vld [vmem:[%s16 + $0x120] sm:$0xff]
    %v6737 = vld [vmem:[%s16 + $0x128] sm:$0xff]
    %v6738 = vld [vmem:[%s16 + $0x130] sm:$0xff]
    %v6739 = vld [vmem:[%s16 + $0x138] sm:$0xff]
    %v6740 = vld [vmem:[%s16 + $0x140] sm:$0xff]
    %v6741 = vld [vmem:[%s16 + $0x148] sm:$0xff]
    %v6742 = vld [vmem:[%s16 + $0x150] sm:$0xff]
    %v6743 = vld [vmem:[%s16 + $0x158] sm:$0xff]
    %v6744 = vld [vmem:[%s16 + $0x160] sm:$0xff]
    %v6745 = vld [vmem:[%s16 + $0x168] sm:$0xff]
    %v6746 = vld [vmem:[%s16 + $0x170] sm:$0xff]
    %v6747 = vld [vmem:[%s16 + $0x178] sm:$0xff]
    %v6748 = vld [vmem:[%s16 + $0x180] sm:$0xff]
    %v6749 = vld [vmem:[%s16 + $0x188] sm:$0xff]
    %v6750 = vld [vmem:[%s16 + $0x190] sm:$0xff]
    %v6751 = vld [vmem:[%s16 + $0x198] sm:$0xff]
    %v6752 = vld [vmem:[%s16 + $0x1a0] sm:$0xff]
    %v6753 = vld [vmem:[%s16 + $0x1a8] sm:$0xff]
    %v6754 = vld [vmem:[%s16 + $0x1b0] sm:$0xff]
    %v6755 = vld [vmem:[%s16 + $0x1b8] sm:$0xff]
    %v6756 = vld [vmem:[%s16 + $0x1c0] sm:$0xff]
    %v6757 = vld [vmem:[%s16 + $0x1c8] sm:$0xff]
    %v6758 = vld [vmem:[%s16 + $0x1d0] sm:$0xff]
    %v6759 = vld [vmem:[%s16 + $0x1d8] sm:$0xff]
    %v6760 = vld [vmem:[%s16 + $0x1e0] sm:$0xff]
    %v6761 = vld [vmem:[%s16 + $0x1e8] sm:$0xff]
    %v6762 = vld [vmem:[%s16 + $0x1f0] sm:$0xff]
    %v6763 = vld [vmem:[%s16 + $0x1f8] sm:$0xff]
    %v6764 = vld [vmem:[%s17] sm:$0x1]
    %v6766 = vlaneseq
    %v6767 = vshrl.u32 %v6766, 7
    %v6768 = vsub.s32 0, %v6767
    %v6769 = vrot.slane %v6764, %v6768
    %6771 = vmatprep.subr.mxu0 0.0
    %6772 = vmatpush1.msra.mxu0 %v6715
    %6773 = vmatprep.subr.mxu0 0.0
    %6774 = vmatpush1.msra.mxu0 %v6714
    %6775 = vmatprep.subr.mxu0 0.0
    %6776 = vmatpush1.msra.mxu0 %v6713
    %6777 = vmatprep.subr.mxu0 0.0
    %6778 = vmatpush1.msra.mxu0 %v6712
    %6779 = vmatprep.subr.mxu0 0.0
    %6780 = vmatpush1.msra.mxu0 %v6711
    %6781 = vmatprep.subr.mxu0 0.0
    %6782 = vmatpush1.msra.mxu0 %v6710
    %6783 = vmatprep.subr.mxu0 0.0
    %6784 = vmatpush1.msra.mxu0 %v6709
    %6785 = vmatprep.subr.mxu0 0.0
    %6786 = vmatpush1.msra.mxu0 %v6708
    %6787 = vmatprep.subr.mxu0 0.0
    %6788 = vmatpush1.msra.mxu0 %v6707
    %6789 = vmatprep.subr.mxu0 0.0
    %6790 = vmatpush1.msra.mxu0 %v6706
    %6791 = vmatprep.subr.mxu0 0.0
    %6792 = vmatpush1.msra.mxu0 %v6705
    %6793 = vmatprep.subr.mxu0 0.0
    %6794 = vmatpush1.msra.mxu0 %v6704
    %6795 = vmatprep.subr.mxu0 0.0
    %6796 = vmatpush1.msra.mxu0 %v6703
    %6797 = vmatprep.subr.mxu0 0.0
    %6798 = vmatpush1.msra.mxu0 %v6702
    %6799 = vmatprep.subr.mxu0 0.0
    %6800 = vmatpush1.msra.mxu0 %v6701
    %6801 = vmatprep.subr.mxu0 0.0
    %6802 = vmatpush1.msra.mxu0 %v6700
    %6803 = vmatprep.subr.mxu0 0.0
    %6804 = vmatpush2.msra.mxu0 %v6731
    %6805 = vmatprep.subr.mxu0 0.0
    %6806 = vmatpush2.msra.mxu0 %v6730
    %6807 = vmatprep.subr.mxu0 0.0
    %6808 = vmatpush2.msra.mxu0 %v6729
    %6809 = vmatprep.subr.mxu0 0.0
    %6810 = vmatpush2.msra.mxu0 %v6728
    %6811 = vmatprep.subr.mxu0 0.0
    %6812 = vmatpush2.msra.mxu0 %v6727
    %6813 = vmatprep.subr.mxu0 0.0
    %6814 = vmatpush2.msra.mxu0 %v6726
    %6815 = vmatprep.subr.mxu0 0.0
    %6816 = vmatpush2.msra.mxu0 %v6725
    %6817 = vmatprep.subr.mxu0 0.0
    %6818 = vmatpush2.msra.mxu0 %v6724
    %6819 = vmatprep.subr.mxu0 0.0
    %6820 = vmatpush2.msra.mxu0 %v6723
    %6821 = vmatprep.subr.mxu0 0.0
    %6822 = vmatpush2.msra.mxu0 %v6722
    %6823 = vmatprep.subr.mxu0 0.0
    %6824 = vmatpush2.msra.mxu0 %v6721
    %6825 = vmatprep.subr.mxu0 0.0
    %6826 = vmatpush2.msra.mxu0 %v6720
    %6827 = vmatprep.subr.mxu0 0.0
    %6828 = vmatpush2.msra.mxu0 %v6719
    %6829 = vmatprep.subr.mxu0 0.0
    %6830 = vmatpush2.msra.mxu0 %v6718
    %6831 = vmatprep.subr.mxu0 0.0
    %6832 = vmatpush2.msra.mxu0 %v6717
    %6833 = vmatprep.subr.mxu0 0.0
    %6834 = vmatpush2.msra.mxu0 %v6716
    %6835 = vmatprep.mubr.f32.mxu0 %v6627
    %6836 = vmatmul.mubr.f32.gmra.mxu0 %v6625
    %v6837 = vpop.f32.mrf.mxu0
    %v6838 = vadd.f32 %v6769, %v6837
    %v6839 = vpop.f32.mrf.mxu0
    %6840 = vdwg.mxu0
    %6841 = vmatprep.subr.mxu0 0.0
    %6842 = vmatpush1.msra.mxu0 %v6747
    %6843 = vmatprep.subr.mxu0 0.0
    %6844 = vmatpush1.msra.mxu0 %v6746
    %6845 = vmatprep.subr.mxu0 0.0
    %6846 = vmatpush1.msra.mxu0 %v6745
    %6847 = vmatprep.subr.mxu0 0.0
    %6848 = vmatpush1.msra.mxu0 %v6744
    %6849 = vmatprep.subr.mxu0 0.0
    %6850 = vmatpush1.msra.mxu0 %v6743
    %6851 = vmatprep.subr.mxu0 0.0
    %6852 = vmatpush1.msra.mxu0 %v6742
    %6853 = vmatprep.subr.mxu0 0.0
    %6854 = vmatpush1.msra.mxu0 %v6741
    %6855 = vmatprep.subr.mxu0 0.0
    %6856 = vmatpush1.msra.mxu0 %v6740
    %6857 = vmatprep.subr.mxu0 0.0
    %6858 = vmatpush1.msra.mxu0 %v6739
    %6859 = vmatprep.subr.mxu0 0.0
    %6860 = vmatpush1.msra.mxu0 %v6738
    %6861 = vmatprep.subr.mxu0 0.0
    %6862 = vmatpush1.msra.mxu0 %v6737
    %6863 = vmatprep.subr.mxu0 0.0
    %6864 = vmatpush1.msra.mxu0 %v6736
    %6865 = vmatprep.subr.mxu0 0.0
    %6866 = vmatpush1.msra.mxu0 %v6735
    %6867 = vmatprep.subr.mxu0 0.0
    %6868 = vmatpush1.msra.mxu0 %v6734
    %6869 = vmatprep.subr.mxu0 0.0
    %6870 = vmatpush1.msra.mxu0 %v6733
    %6871 = vmatprep.subr.mxu0 0.0
    %6872 = vmatpush1.msra.mxu0 %v6732
    %6873 = vmatprep.subr.mxu0 0.0
    %6874 = vmatpush2.msra.mxu0 %v6763
    %6875 = vmatprep.subr.mxu0 0.0
    %6876 = vmatpush2.msra.mxu0 %v6762
    %6877 = vmatprep.subr.mxu0 0.0
    %6878 = vmatpush2.msra.mxu0 %v6761
    %6879 = vmatprep.subr.mxu0 0.0
    %6880 = vmatpush2.msra.mxu0 %v6760
    %6881 = vmatprep.subr.mxu0 0.0
    %6882 = vmatpush2.msra.mxu0 %v6759
    %6883 = vmatprep.subr.mxu0 0.0
    %6884 = vmatpush2.msra.mxu0 %v6758
    %6885 = vmatprep.subr.mxu0 0.0
    %6886 = vmatpush2.msra.mxu0 %v6757
    %6887 = vmatprep.subr.mxu0 0.0
    %6888 = vmatpush2.msra.mxu0 %v6756
    %6889 = vmatprep.subr.mxu0 0.0
    %6890 = vmatpush2.msra.mxu0 %v6755
    %6891 = vmatprep.subr.mxu0 0.0
    %6892 = vmatpush2.msra.mxu0 %v6754
    %6893 = vmatprep.subr.mxu0 0.0
    %6894 = vmatpush2.msra.mxu0 %v6753
    %6895 = vmatprep.subr.mxu0 0.0
    %6896 = vmatpush2.msra.mxu0 %v6752
    %6897 = vmatprep.subr.mxu0 0.0
    %6898 = vmatpush2.msra.mxu0 %v6751
    %6899 = vmatprep.subr.mxu0 0.0
    %6900 = vmatpush2.msra.mxu0 %v6750
    %6901 = vmatprep.subr.mxu0 0.0
    %6902 = vmatpush2.msra.mxu0 %v6749
    %6903 = vmatprep.subr.mxu0 0.0
    %6904 = vmatpush2.msra.mxu0 %v6748
    %6905 = vmatprep.mubr.f32.mxu0 %v6698
    %6906 = vmatmul.mubr.f32.gmra.mxu0 %v6696
    %v6907 = vpop.f32.mrf.mxu0
    %v6908 = vadd.f32 %v6838, %v6907
    %v6909 = vpop.f32.mrf.mxu0
    %6910 = vdwg.mxu0
    %v6911 = vtanh.pop %v6908
    %v6912 = vld [vmem:[%s18] sm:$0xff]
    %v6913 = vld [vmem:[%s18 + $0x8] sm:$0xff]
    %v6914 = vld [vmem:[%s18 + $0x10] sm:$0xff]
    %v6915 = vld [vmem:[%s18 + $0x18] sm:$0xff]
    %v6916 = vld [vmem:[%s19] sm:$0x1]
    %v6918 = vlaneseq
    %v6919 = vshrl.u32 %v6918, 7
    %v6920 = vsub.s32 0, %v6919
    %v6921 = vrot.slane %v6916, %v6920
    %v6924 = vsel %vm3308, %v6911, 0
    %6926 = vmatprep.subr.mxu0 0.0
    %6927 = vmatpush1.msra.mxu0 0.0
    %6928 = vmatprep.subr.mxu0 0.0
    %6929 = vmatpush1.msra.mxu0 0.0
    %6930 = vmatprep.subr.mxu0 0.0
    %6931 = vmatpush1.msra.mxu0 0.0
    %6932 = vmatprep.subr.mxu0 0.0
    %6933 = vmatpush1.msra.mxu0 0.0
    %6934 = vmatprep.subr.mxu0 0.0
    %6935 = vmatpush1.msra.mxu0 0.0
    %6936 = vmatprep.subr.mxu0 0.0
    %6937 = vmatpush1.msra.mxu0 0.0
    %6938 = vmatprep.subr.mxu0 0.0
    %6939 = vmatpush1.msra.mxu0 0.0
    %6940 = vmatprep.subr.mxu0 0.0
    %6941 = vmatpush1.msra.mxu0 0.0
    %6942 = vmatprep.subr.mxu0 0.0
    %6943 = vmatpush1.msra.mxu0 0.0
    %6944 = vmatprep.subr.mxu0 0.0
    %6945 = vmatpush1.msra.mxu0 0.0
    %6946 = vmatprep.subr.mxu0 0.0
    %6947 = vmatpush1.msra.mxu0 0.0
    %6948 = vmatprep.subr.mxu0 0.0
    %6949 = vmatpush1.msra.mxu0 0.0
    %6950 = vmatprep.subr.mxu0 0.0
    %6951 = vmatpush1.msra.mxu0 %v6915
    %6952 = vmatprep.subr.mxu0 0.0
    %6953 = vmatpush1.msra.mxu0 %v6914
    %6954 = vmatprep.subr.mxu0 0.0
    %6955 = vmatpush1.msra.mxu0 %v6913
    %6956 = vmatprep.subr.mxu0 0.0
    %6957 = vmatpush1.msra.mxu0 %v6912
    %6958 = vmatprep.subr.mxu0 0.0
    %6959 = vmatpush2.msra.mxu0 0.0
    %6960 = vmatprep.subr.mxu0 0.0
    %6961 = vmatpush2.msra.mxu0 0.0
    %6962 = vmatprep.subr.mxu0 0.0
    %6963 = vmatpush2.msra.mxu0 0.0
    %6964 = vmatprep.subr.mxu0 0.0
    %6965 = vmatpush2.msra.mxu0 0.0
    %6966 = vmatprep.subr.mxu0 0.0
    %6967 = vmatpush2.msra.mxu0 0.0
    %6968 = vmatprep.subr.mxu0 0.0
    %6969 = vmatpush2.msra.mxu0 0.0
    %6970 = vmatprep.subr.mxu0 0.0
    %6971 = vmatpush2.msra.mxu0 0.0
    %6972 = vmatprep.subr.mxu0 0.0
    %6973 = vmatpush2.msra.mxu0 0.0
    %6974 = vmatprep.subr.mxu0 0.0
    %6975 = vmatpush2.msra.mxu0 0.0
    %6976 = vmatprep.subr.mxu0 0.0
    %6977 = vmatpush2.msra.mxu0 0.0
    %6978 = vmatprep.subr.mxu0 0.0
    %6979 = vmatpush2.msra.mxu0 0.0
    %6980 = vmatprep.subr.mxu0 0.0
    %6981 = vmatpush2.msra.mxu0 0.0
    %6982 = vmatprep.subr.mxu0 0.0
    %6983 = vmatpush2.msra.mxu0 0.0
    %6984 = vmatprep.subr.mxu0 0.0
    %6985 = vmatpush2.msra.mxu0 0.0
    %6986 = vmatprep.subr.mxu0 0.0
    %6987 = vmatpush2.msra.mxu0 0.0
    %6988 = vmatprep.subr.mxu0 0.0
    %6989 = vmatpush2.msra.mxu0 0.0
    %6990 = vmatprep.mubr.f32.mxu0 0.0
    %6991 = vmatmul.mubr.f32.gmra.mxu0 %v6924
    %v6992 = vpop.f32.mrf.mxu0
    %v6993 = vadd.f32 %v6921, %v6992
    %v6994 = vpop.f32.mrf.mxu0
    %6995 = vdwg.mxu0
    %vm6996 = vcmask 74752
    %6997 = vst.msk [vmem:[#allocation2] sm:$0x3] %vm6996, %v6993
    // Predicated region
    $region82: #{tpu_custom_call.1} parent=1 // pred_check
      _
    $region83: #{tpu_custom_call.1} parent=1 // pred_check_branch
      %6999 = sbr.rel (0) target = $region85
    $region84: #{tpu_custom_call.1} parent=1 // pred_region
      %s7001 = ssub.s32 32, 32
      %7002 = vsyncadd [#allocation3], %s7001
      %s7004 = sshll.u32 [#allocation2], 4
      %s7005 = int_to_ptr.vmem [resolvable:$true] %s7004
      %7007 = dma.vmem_to_hbm [thread:$0]  %s7005, 32, %s20, [#allocation3]
    $region85: #{tpu_custom_call.1} parent=1 // pred_fallthru
      _
    // Predicated region
    $region86: #{tpu_custom_call.1} parent=1 // pred_check
      _
    $region87: #{tpu_custom_call.1} parent=1 // pred_check_branch
      %7009 = sbr.rel (0) target = $region89
    $region88: #{tpu_custom_call.1} parent=1 // pred_region
      %7010 = dma.done [#allocation3], 32
    $region89: #{tpu_custom_call.1} parent=1 // pred_fallthru
      _
    %7011 = vsyncpa [#allocation3], 1

</llo_original>
